<compile_context>
chip_gen: v6e
topology: v6e:2x2x1
jax: 0.10.0
libtpu: 0.0.40
codegen_flags: <defaults>
</compile_context>

<pallas_src>
import functools

import jax
import jax.numpy as jnp
from jax.experimental import pallas as pl
from jax.experimental.pallas import tpu as pltpu

LANES = 128
MAX_ROW_TILE = 16384          # hard cap on rows per block (8 MiB f32)
SMALL_N_FALLBACK = 1 << 18    # below this, a fused XLA reduction wins


def _round_up(x: int, m: int) -> int:
    return (x + m - 1) // m * m


def _device_kind() -> str:
    try:
        return jax.devices()[0].device_kind.lower()
    except Exception:  # CPU tracing / mocks
        return ""


def _pick_row_tile(rows: int, isz_p: int, isz_t: int, pack: int) -> int:
    """Largest (row_tile, 128) block whose double-buffered input DMA buffers
    plus the f32 accumulator scratch fit the default scoped VMEM."""
    kind = _device_kind()
    # v6e / v7x default scoped VMEM is 32 MiB; v5e and older are 16 MiB.
    budget = (24 << 20) if ("v6" in kind or "v7" in kind) else (10 << 20)
    per_row = 2 * LANES * (isz_p + isz_t) + 4 * LANES  # 2 bufs/input + f32 acc
    rt = budget // per_row
    rows_cap = max(pack, rows // pack * pack)          # never exceed the array
    rt = min(rt, MAX_ROW_TILE, rows_cap)
    rt = max(pack, rt // pack * pack)
    return int(rt)


def _num_partials(rows: int, row_tile: int) -> int:
    """One partial per TensorCore: 2 on v7x, 1 on single-TC chips (v5e/v6e)."""
    kind = _device_kind()
    n_tc = 2 if "v7" in kind else 1
    num_blocks = pl.cdiv(rows, row_tile)
    return n_tc if num_blocks >= n_tc else 1


def _mse_partial_kernel(p_ref, t_ref, out_ref, acc_ref, *, rows, row_tile,
                        blocks_per_partial, apply_mask):
    c = pl.program_id(0)   # partial index (one per TensorCore on v7x)
    i = pl.program_id(1)   # reduction axis over row blocks

    @pl.when(i == 0)
    def _():
        acc_ref[...] = jnp.zeros_like(acc_ref)

    # Cast on the VPU so sub-32-bit inputs stream from HBM at native width.
    diff = p_ref[...].astype(jnp.float32) - t_ref[...].astype(jnp.float32)
    sq = diff * diff

    if apply_mask:
        # Only the boundary block and any clamped "excess" blocks need masking;
        # gate the iota/compare/select behind a scalar predicate so interior
        # steps stay at the minimal sub/mul/add.
        row0 = (c * blocks_per_partial + i) * row_tile  # unclamped logical row
        full = row0 + row_tile <= rows

        @pl.when(full)
        def _():
            acc_ref[...] += sq

        @pl.when(jnp.logical_not(full))
        def _():
            local = jax.lax.broadcasted_iota(jnp.int32, (row_tile, LANES), 0)
            acc_ref[...] += jnp.where(row0 + local < rows, sq, 0.0)
    else:
        acc_ref[...] += sq

    @pl.when(i == pl.num_programs(1) - 1)
    def _():
        # One-time sublane reduce -> tiny (1, 128) writeback per partial.
        out_ref[...] = jnp.sum(acc_ref[...], axis=0, keepdims=True)[None]


def no_masked_mse_loss(y_pred, y_true, mask=None, reduction="mean"):
    """MSE loss; `mask` is accepted but ignored (faithful to NoMaskedMSELoss)."""
    assert y_pred.shape == y_true.shape
    del mask  # NoMaskedMSELoss ignores the mask entirely.

    out_dtype = jnp.result_type(y_pred.dtype, y_true.dtype)

    if reduction == "none":
        # Elementwise squared error; nothing to reduce, keep it in plain JAX.
        d = y_pred.astype(jnp.float32) - y_true.astype(jnp.float32)
        return (d * d).astype(out_dtype)

    n = y_pred.size
    # NOTE: accumulation / divisor are plain f32; for n >> 2^24 the mean loses
    # a few ulps, acceptable for a scalar loss.

    if n < SMALL_N_FALLBACK:
        # Tiny inputs: pallas_call launch + the follow-up reduce dominate; a
        # fused XLA reduction is strictly faster.
        d = y_pred.astype(jnp.float32) - y_true.astype(jnp.float32)
        total = jnp.sum(d * d)
    else:
        isz_p = jnp.dtype(y_pred.dtype).itemsize
        isz_t = jnp.dtype(y_true.dtype).itemsize
        # Sublane packing of the narrowest streamed dtype (f32:8, bf16:16, i8:32).
        pack = max(8, 32 // min(isz_p, isz_t))

        flat_p = y_pred.reshape(-1)
        flat_t = y_true.reshape(-1)

        rem = n % LANES
        n_main = n - rem
        rows = n_main // LANES
        # Kernel runs on the lane-aligned prefix (no full-array jnp.pad); the
        # <=127-element tail is summed in glue below.
        # TODO(synk): XLA may still materialize the prefix slice for rem != 0;
        # a fully copy-free misaligned path would need 1-D blocks + flat-index
        # masking.
        p2d = (flat_p if rem == 0 else flat_p[:n_main]).reshape(rows, LANES)
        t2d = (flat_t if rem == 0 else flat_t[:n_main]).reshape(rows, LANES)

        row_tile = _pick_row_tile(rows, isz_p, isz_t, pack)
        num_blocks = pl.cdiv(rows, row_tile)
        num_partials = _num_partials(rows, row_tile)
        blocks_per_partial = pl.cdiv(num_blocks, num_partials)
        # Masking only needed if the grid covers more rows than really exist.
        apply_mask = num_partials * blocks_per_partial * row_tile != rows

        def in_map(c, i):
            # Clamp so any trailing "excess" step of an uneven partial split
            # re-reads the last real block (its contribution is masked to zero
            # inside the kernel) instead of issuing an out-of-bounds DMA.
            blk = jnp.minimum(c * blocks_per_partial + i, num_blocks - 1)
            return (blk, 0)

        kernel = functools.partial(
            _mse_partial_kernel,
            rows=rows,
            row_tile=row_tile,
            blocks_per_partial=blocks_per_partial,
            apply_mask=apply_mask,
        )

        cost = pl.CostEstimate(
            flops=3 * n_main,
            transcendentals=0,
            bytes_accessed=n_main * (isz_p + isz_t) + num_partials * LANES * 4,
        )

        partials = pl.pallas_call(
            kernel,
            out_shape=jax.ShapeDtypeStruct((num_partials, 1, LANES), jnp.float32),
            grid_spec=pltpu.PrefetchScalarGridSpec(
                num_scalar_prefetch=0,
                grid=(num_partials, blocks_per_partial),
                in_specs=[
                    pl.BlockSpec((row_tile, LANES), in_map),
                    pl.BlockSpec((row_tile, LANES), in_map),
                ],
                out_specs=pl.BlockSpec((1, 1, LANES), lambda c, i: (c, 0, 0)),
                scratch_shapes=[pltpu.VMEM((row_tile, LANES), jnp.float32)],
            ),
            compiler_params=pltpu.CompilerParams(
                # TODO(synk): on v7x, verify in xprof that axis 0 shards across
                # both TensorCores; if not, switch it to pltpu.CORE_PARALLEL.
                dimension_semantics=("parallel", "arbitrary"),
            ),
            cost_estimate=cost,
        )(p2d, t2d)

        total = jnp.sum(partials, dtype=jnp.float32)
        if rem:
            tp = flat_p[n_main:].astype(jnp.float32)
            tt = flat_t[n_main:].astype(jnp.float32)
            total = total + jnp.sum((tp - tt) ** 2)

    if reduction == "sum":
        return total.astype(out_dtype)
    return (total / jnp.float32(n)).astype(out_dtype)


if __name__ == "__main__":
    key = jax.random.PRNGKey(0)
    k1, k2, k3, k4, k5, k6, k7 = jax.random.split(key, 7)

    # 1) Small NCHW input like the PyTorch module would see (XLA fallback path).
    shape = (2, 4, 16, 16)
    y_pred = jax.random.normal(k1, shape, dtype=jnp.float32)
    y_true = jax.random.normal(k2, shape, dtype=jnp.float32)
    mask = jax.random.bernoulli(k3, 0.5, shape)  # ignored, like the module
    loss = no_masked_mse_loss(y_pred, y_true, mask, reduction="mean")
    jax.block_until_ready(loss)
    ref = jnp.mean((y_pred - y_true) ** 2)
    assert jnp.allclose(loss, ref, rtol=1e-5, atol=1e-5), (loss, ref)

    # 2) Non-lane-aligned size -> Pallas path with boundary mask + glue tail
    #    (525000 elements, 525000 % 128 == 72).
    shape2 = (3, 7, 125, 200)
    y_pred2 = jax.random.normal(k4, shape2, dtype=jnp.float32)
    y_true2 = jax.random.normal(k5, shape2, dtype=jnp.float32)
    loss2 = no_masked_mse_loss(y_pred2, y_true2, None, reduction="mean")
    jax.block_until_ready(loss2)
    ref2 = jnp.mean((y_pred2 - y_true2) ** 2)
    assert jnp.allclose(loss2, ref2, rtol=1e-5, atol=1e-5), (loss2, ref2)

    # 3) Lane-aligned bf16 input -> Pallas path, in-kernel upcast, 16-row packing.
    shape3 = (8, 16, 64, 128)  # 1,048,576 elements
    y_pred3 = jax.random.normal(k6, shape3, dtype=jnp.float32).astype(jnp.bfloat16)
    y_true3 = jax.random.normal(k7, shape3, dtype=jnp.float32).astype(jnp.bfloat16)
    loss3 = no_masked_mse_loss(y_pred3, y_true3, None, reduction="mean")
    jax.block_until_ready(loss3)
    ref3 = jnp.mean(
        (y_pred3.astype(jnp.float32) - y_true3.astype(jnp.float32)) ** 2)
    assert jnp.allclose(loss3.astype(jnp.float32), ref3, rtol=2e-2, atol=1e-3), (
        loss3, ref3)

    print("KERNEL_OK")
</pallas_src>

<mosaic_0001>
module attributes {stable_mosaic.version = 11 : i64} {
  func.func @_mse_partial_kernel(%arg0: i32, %arg1: i32, %arg2: memref<4096x128xf32, #tpu.memory_space<vmem>>, %arg3: memref<4096x128xf32, #tpu.memory_space<vmem>>, %arg4: memref<1x1x128xf32, #tpu.memory_space<vmem>>, %arg5: memref<4096x128xf32, #tpu.memory_space<vmem>>) attributes {dimension_semantics = [#tpu.dimension_semantics<parallel>, #tpu.dimension_semantics<arbitrary>], iteration_bounds = array<i64: 1, 2>, scalar_prefetch = 0 : i64, scratch_operands = 1 : i64, tpu.core_type = #tpu.core_type<tc>, window_params = [{transform_indices = @transform_0, window_bounds = array<i64: 4096, 128>}, {transform_indices = @transform_1, window_bounds = array<i64: 4096, 128>}, {transform_indices = @transform_2, window_bounds = array<i64: 1, 1, 128>}]} {
    %c0_i32 = arith.constant 0 : i32
    %0 = arith.cmpi eq, %arg1, %c0_i32 : i32
    %1 = arith.extui %0 : i1 to i32
    %c0_i32_0 = arith.constant 0 : i32
    %2 = arith.cmpi ne, %1, %c0_i32_0 : i32
    scf.if %2 {
      %cst = arith.constant 0.000000e+00 : f32
      %20 = vector.broadcast %cst : f32 to vector<4096x128xf32>
      %c0_8 = arith.constant 0 : index
      %c0_9 = arith.constant 0 : index
      %21 = vector.load %arg5[%c0_8, %c0_9] : memref<4096x128xf32, #tpu.memory_space<vmem>>, vector<4096x128xf32>
      tpu.vector_store %arg5[%c0_8, %c0_9], %20 {strides = array<i32>} : memref<4096x128xf32, #tpu.memory_space<vmem>>, vector<4096x128xf32>,
    } else {
    }
    %c0 = arith.constant 0 : index
    %c0_1 = arith.constant 0 : index
    %3 = vector.load %arg2[%c0, %c0_1] : memref<4096x128xf32, #tpu.memory_space<vmem>>, vector<4096x128xf32>
    %c0_2 = arith.constant 0 : index
    %c0_3 = arith.constant 0 : index
    %4 = vector.load %arg3[%c0_2, %c0_3] : memref<4096x128xf32, #tpu.memory_space<vmem>>, vector<4096x128xf32>
    %5 = arith.subf %3, %4 : vector<4096x128xf32>
    %6 = arith.mulf %5, %5 : vector<4096x128xf32>
    %c2_i32 = arith.constant 2 : i32
    %7 = arith.muli %arg0, %c2_i32 : i32
    %8 = arith.addi %7, %arg1 : i32
    %c4096_i32 = arith.constant 4096 : i32
    %9 = arith.muli %8, %c4096_i32 : i32
    %c4096_i32_4 = arith.constant 4096 : i32
    %10 = arith.addi %9, %c4096_i32_4 : i32
    %c4101_i32 = arith.constant 4101 : i32
    %11 = arith.cmpi sle, %10, %c4101_i32 : i32
    %12 = arith.extui %11 : i1 to i32
    %c0_i32_5 = arith.constant 0 : i32
    %13 = arith.cmpi ne, %12, %c0_i32_5 : i32
    scf.if %13 {
      %c0_8 = arith.constant 0 : index
      %c0_9 = arith.constant 0 : index
      %20 = vector.load %arg5[%c0_8, %c0_9] : memref<4096x128xf32, #tpu.memory_space<vmem>>, vector<4096x128xf32>
      %21 = arith.addf %20, %6 : vector<4096x128xf32>
      %c0_10 = arith.constant 0 : index
      %c0_11 = arith.constant 0 : index
      %22 = vector.load %arg5[%c0_10, %c0_11] : memref<4096x128xf32, #tpu.memory_space<vmem>>, vector<4096x128xf32>
      tpu.vector_store %arg5[%c0_10, %c0_11], %21 {strides = array<i32>} : memref<4096x128xf32, #tpu.memory_space<vmem>>, vector<4096x128xf32>,
    } else {
    }
    %true = arith.constant true
    %14 = arith.xori %11, %true : i1
    %15 = arith.extui %14 : i1 to i32
    %c0_i32_6 = arith.constant 0 : i32
    %16 = arith.cmpi ne, %15, %c0_i32_6 : i32
    scf.if %16 {
      %20 = tpu.iota {dimensions = array<i32: 0>} : vector<4096x128xi32>
      %c0_8 = arith.constant 0 : index
      %c0_9 = arith.constant 0 : index
      %21 = vector.load %arg5[%c0_8, %c0_9] : memref<4096x128xf32, #tpu.memory_space<vmem>>, vector<4096x128xf32>
      %22 = vector.broadcast %9 : i32 to vector<4096x128xi32>
      %23 = arith.addi %22, %20 : vector<4096x128xi32>
      %c4101_i32_10 = arith.constant 4101 : i32
      %24 = vector.broadcast %c4101_i32_10 : i32 to vector<4096x128xi32>
      %25 = arith.cmpi slt, %23, %24 : vector<4096x128xi32>
      %cst = arith.constant 0.000000e+00 : f32
      %26 = vector.broadcast %cst : f32 to vector<4096x128xf32>
      %27 = arith.select %25, %6, %26 : vector<4096x128xi1>, vector<4096x128xf32>
      %28 = arith.addf %21, %27 : vector<4096x128xf32>
      %c0_11 = arith.constant 0 : index
      %c0_12 = arith.constant 0 : index
      %29 = vector.load %arg5[%c0_11, %c0_12] : memref<4096x128xf32, #tpu.memory_space<vmem>>, vector<4096x128xf32>
      tpu.vector_store %arg5[%c0_11, %c0_12], %28 {strides = array<i32>} : memref<4096x128xf32, #tpu.memory_space<vmem>>, vector<4096x128xf32>,
    } else {
    }
    %c1_i32 = arith.constant 1 : i32
    %17 = arith.cmpi eq, %arg1, %c1_i32 : i32
    %18 = arith.extui %17 : i1 to i32
    %c0_i32_7 = arith.constant 0 : i32
    %19 = arith.cmpi ne, %18, %c0_i32_7 : i32
    scf.if %19 {
      %c0_8 = arith.constant 0 : index
      %c0_9 = arith.constant 0 : index
      %20 = vector.load %arg5[%c0_8, %c0_9] : memref<4096x128xf32, #tpu.memory_space<vmem>>, vector<4096x128xf32>
      %cst = arith.constant dense<0.000000e+00> : vector<128xf32>
      %21 = vector.multi_reduction <add>, %20, %cst [0] : vector<4096x128xf32> to vector<128xf32>
      %22 = vector.shape_cast %21 : vector<128xf32> to vector<1x128xf32>
      %23 = vector.shape_cast %22 : vector<1x128xf32> to vector<1x1x128xf32>
      %c0_10 = arith.constant 0 : index
      %c0_11 = arith.constant 0 : index
      %c0_12 = arith.constant 0 : index
      %24 = vector.load %arg4[%c0_10, %c0_11, %c0_12] : memref<1x1x128xf32, #tpu.memory_space<vmem>>, vector<1x1x128xf32>
      tpu.vector_store %arg4[%c0_10, %c0_11, %c0_12], %23 {strides = array<i32>} : memref<1x1x128xf32, #tpu.memory_space<vmem>>, vector<1x1x128xf32>,
    } else {
    }
    return
  }
  func.func @transform_0(%arg0: i32, %arg1: i32) -> (i32, i32) {
    %c2_i32 = arith.constant 2 : i32
    %0 = arith.muli %arg0, %c2_i32 : i32
    %1 = arith.addi %0, %arg1 : i32
    %c1_i32 = arith.constant 1 : i32
    %2 = arith.minsi %1, %c1_i32 : i32
    %c0_i32 = arith.constant 0 : i32
    %c0_i32_0 = arith.constant 0 : i32
    return %2, %c0_i32 : i32, i32
  }
  func.func @transform_1(%arg0: i32, %arg1: i32) -> (i32, i32) {
    %c2_i32 = arith.constant 2 : i32
    %0 = arith.muli %arg0, %c2_i32 : i32
    %1 = arith.addi %0, %arg1 : i32
    %c1_i32 = arith.constant 1 : i32
    %2 = arith.minsi %1, %c1_i32 : i32
    %c0_i32 = arith.constant 0 : i32
    %c0_i32_0 = arith.constant 0 : i32
    return %2, %c0_i32 : i32, i32
  }
  func.func @transform_2(%arg0: i32, %arg1: i32) -> (i32, i32, i32) {
    %c0_i32 = arith.constant 0 : i32
    %c0_i32_0 = arith.constant 0 : i32
    %c0_i32_1 = arith.constant 0 : i32
    return %arg0, %c0_i32, %c0_i32_0 : i32, i32, i32
  }
}

</mosaic_0001>

<llo_original>
// kernel: tpu_custom_call.1
$region0: #{tpu_custom_call.1}
  #allocation0 [shape = 'u32[]', space=smem, size = 0x4, offset = 0x4, fixed_abs, tag = 'smem constant byte address 0x4 - core index']
  #allocation1 [shape = 'u32[144,128]{1,0:T(1,128)}', space=vmem, size = 0x12000, scoped, tag = 'internal scratch']
  #allocation2 [shape = 'f32[4096,128]{1,0:T(8,128)}', space=vmem, size = 0x200000, scoped, tag = 'scratch operand']
  %s0 = inlined_call_operand.hbm [shape: f32[4101,128], index: 0, kind: input, shape index: {}]
  %s1 = inlined_call_operand.hbm [shape: f32[4101,128], index: 1, kind: input, shape index: {}]
  %s2 = inlined_call_operand.hbm [shape: f32[1,1,128], index: 2, kind: output, shape index: {}]
  %s3 = sld [smem:[#allocation0]]
  $region65: #{tpu_custom_call.1} parent=0
    _
  %s5 = ssub.s32 1, %s3
  %s6 = scalar_select 0, %s5, %s3
  $region1: #{tpu_custom_call.1} parent=0
    #allocation3 [shape = 'u8[4194304]{0}', space=vmem, size = 0x400000, scoped, tag = 'input window, operand 0']
    #allocation4 [shape = 's32[2]{0}', space=sflag, size = 0x8, scoped, tag = 'scoped memory for tpu_custom_call.1']
    #allocation5 [shape = 's32[2]{0}', space=sflag, size = 0x8, scoped, tag = 'scoped memory for tpu_custom_call.1']
    #allocation6 [shape = 'u8[4194304]{0}', space=vmem, size = 0x400000, scoped, tag = 'input window, operand 1']
    #allocation7 [shape = 's32[2]{0}', space=sflag, size = 0x8, scoped, tag = 'scoped memory for tpu_custom_call.1']
    #allocation8 [shape = 'u8[512]{0}', space=vmem, size = 0x400, scoped, tag = 'output window, operand 0, single buffered']
    %7 = vsyncpa [#allocation4], 0
    %s8 = scalar_lea.sflag [#allocation4], 1
    %9 = vsyncpa %s8, 0
    %10 = vsyncpa [#allocation7], 0
    %s11 = scalar_lea.sflag [#allocation7], 1
    %12 = vsyncpa %s11, 0
    %13 = vsyncpa [#allocation5], 0
    loop: start=0, step=1, limit=4
    $region2: #{tpu_custom_call.1} parent=1 // loop_pre_header
      _
    $region3: #{tpu_custom_call.1} parent=1 // loop_header
      %s15 = sphi 0, %s19
      %p16 = scmp.ge.s32.totalorder %s15, 4
      %s22 = sphi 0, %s34
      %s23 = sphi 0, %s30
      %s24 = sphi 0, %s22
      %s25 = sphi 0, %s23
      %s26 = sphi 0, %s24
      %s27 = sphi 0, %s25
      %s45 = sphi 0, %s47
      %s48 = sphi 0, %s45
      %s49 = sphi 0, %s48
      %s65 = sphi 0, %s49
      %s79 = sphi 0, %s81
      %s82 = sphi 0, %s79
      %s83 = sphi 0, %s82
      %s99 = sphi 0, %s83
      %s105 = sphi 0, %s107
      %s108 = sphi 0, %s105
      %s109 = sphi 0, %s108
      %s125 = sphi 0, %s109
    $region4: #{tpu_custom_call.1} parent=1 // loop_header_branch
      %18 = sbr.rel (%p16) target = $region8
    $region5: #{tpu_custom_call.1} parent=1 // loop_body
      %s20 = ssub.s32 %s15, 1
      %s21 = ssub.s32 %s15, 2
      %s28 = sadd.s32 1, %s23
      %p29 = scmp.ge.s32.totalorder %s28, 2
      %s30 = scalar_select %p29, 0, %s28
      %s31 = sadd.s32 1, %s22
      %s32 = scalar_select %p29, %s31, %s22
      %p33 = scmp.ge.s32.totalorder %s32, 1
      %s34 = scalar_select %p33, 0, %s32
      %s35 = smul.u32 %s22, 2
      %s36 = sadd.s32 %s35, %s23
      %p37 = scmp.lt.s32.totalorder %s36, 1
      %s38 = scalar_select %p37, %s36, 1
      %s39 = smul.u32 %s34, 2
      %s40 = sadd.s32 %s39, %s30
      %p41 = scmp.lt.s32.totalorder %s40, 1
      %s42 = scalar_select %p41, %s40, 1
      %s43 = ssub.s32 %s38, %s42
      %p44 = scmp.eq.s32.totalorder %s43, 0
      %s46 = sadd.s32 %s45, 1
      %s47 = scalar_select %p44, %s45, %s46
      %p50 = pneg %p44
      %p51 = scmp.eq.s32.totalorder %s15, 1
      %p52 = por %p50, %p51
      %p53 = scmp.ne.s32.totalorder %s45, %s48
      %p54 = scmp.eq.s32.totalorder %s15, 0
      %p55 = por %p53, %p54
      %p56 = scmp.ne.s32.totalorder %s45, %s48
      %p57 = scmp.eq.s32.totalorder %s20, 1
      %p58 = por %p56, %p57
      %p59 = scmp.ne.s32.totalorder %s48, %s49
      %p60 = scmp.eq.s32.totalorder %s20, 0
      %p61 = por %p59, %p60
      %p62 = scmp.ne.s32.totalorder %s48, %s49
      %p63 = scmp.eq.s32.totalorder %s21, 1
      %p64 = por %p62, %p63
      %p66 = scmp.ne.s32.totalorder %s49, %s65
      %p67 = scmp.eq.s32.totalorder %s21, 0
      %p68 = por %p66, %p67
      %s69 = smul.u32 %s22, 2
      %s70 = sadd.s32 %s69, %s23
      %p71 = scmp.lt.s32.totalorder %s70, 1
      %s72 = scalar_select %p71, %s70, 1
      %s73 = smul.u32 %s34, 2
      %s74 = sadd.s32 %s73, %s30
      %p75 = scmp.lt.s32.totalorder %s74, 1
      %s76 = scalar_select %p75, %s74, 1
      %s77 = ssub.s32 %s72, %s76
      %p78 = scmp.eq.s32.totalorder %s77, 0
      %s80 = sadd.s32 %s79, 1
      %s81 = scalar_select %p78, %s79, %s80
      %p84 = pneg %p78
      %p85 = scmp.eq.s32.totalorder %s15, 1
      %p86 = por %p84, %p85
      %p87 = scmp.ne.s32.totalorder %s79, %s82
      %p88 = scmp.eq.s32.totalorder %s15, 0
      %p89 = por %p87, %p88
      %p90 = scmp.ne.s32.totalorder %s79, %s82
      %p91 = scmp.eq.s32.totalorder %s20, 1
      %p92 = por %p90, %p91
      %p93 = scmp.ne.s32.totalorder %s82, %s83
      %p94 = scmp.eq.s32.totalorder %s20, 0
      %p95 = por %p93, %p94
      %p96 = scmp.ne.s32.totalorder %s82, %s83
      %p97 = scmp.eq.s32.totalorder %s21, 1
      %p98 = por %p96, %p97
      %p100 = scmp.ne.s32.totalorder %s83, %s99
      %p101 = scmp.eq.s32.totalorder %s21, 0
      %p102 = por %p100, %p101
      %s103 = ssub.s32 %s22, %s34
      %p104 = scmp.eq.s32.totalorder %s103, 0
      %s106 = sadd.s32 %s105, 1
      %s107 = scalar_select %p104, %s105, %s106
      %p110 = pneg %p104
      %p111 = scmp.eq.s32.totalorder %s15, 1
      %p112 = por %p110, %p111
      %p113 = scmp.ne.s32.totalorder %s105, %s108
      %p114 = scmp.eq.s32.totalorder %s15, 0
      %p115 = por %p113, %p114
      %p116 = scmp.ne.s32.totalorder %s105, %s108
      %p117 = scmp.eq.s32.totalorder %s20, 1
      %p118 = por %p116, %p117
      %p119 = scmp.ne.s32.totalorder %s108, %s109
      %p120 = scmp.eq.s32.totalorder %s20, 0
      %p121 = por %p119, %p120
      %p122 = scmp.ne.s32.totalorder %s108, %s109
      %p123 = scmp.eq.s32.totalorder %s21, 1
      %p124 = por %p122, %p123
      %p126 = scmp.ne.s32.totalorder %s109, %s125
      %p127 = scmp.eq.s32.totalorder %s21, 0
      %p128 = por %p126, %p127
      %p129 = scmp.le.s32.totalorder 1, %s15
      %p130 = scmp.lt.s32.totalorder %s15, 3
      %p131 = pnand %p129, %p130
      %p132 = pneg %p131
      // Predicated region
      $region9: #{tpu_custom_call.1} parent=5 // pred_check
        _
      $region10: #{tpu_custom_call.1} parent=5 // pred_check_branch
        %134 = sbr.rel (%p131) target = $region12
      $region11: #{tpu_custom_call.1} parent=5 // pred_region
        %s135 = ssub.s32 %s15, 1
      $region12: #{tpu_custom_call.1} parent=5 // pred_fallthru
        _
      %p136 = scmp.lt.s32.totalorder %s15, 2
      // Predicated region
      $region13: #{tpu_custom_call.1} parent=5 // pred_check
        %p137 = pneg %p136
      $region14: #{tpu_custom_call.1} parent=5 // pred_check_branch
        %139 = sbr.rel (%p137) target = $region16
      $region15: #{tpu_custom_call.1} parent=5 // pred_region
        // Predicated region
        $region17: #{tpu_custom_call.1} parent=15 // pred_check
          %p140 = pneg %p55
        $region18: #{tpu_custom_call.1} parent=15 // pred_check_branch
          %142 = sbr.rel (%p140) target = $region20
        $region19: #{tpu_custom_call.1} parent=15 // pred_region
          %s143 = sand.u32 %s45, 1
          %s144 = scalar_lea.sflag [#allocation4], %s143
          %s145 = sand.u32 %s45, 1
          %s146 = smul.addr %s145, 4096
          %s147 = scalar_lea.vmem [#allocation3], %s146
          %s148 = smul.u32 %s22, 2
          %s149 = sadd.s32 %s148, %s23
          %p150 = scmp.lt.s32.totalorder %s149, 1
          %s151 = scalar_select %p150, %s149, 1
          %s152 = smul.u32 512, %s151
          %s153 = ssub.s32 513, %s152
          %p154 = scmp.lt.s32.totalorder %s153, 512
          %s155 = scalar_select %p154, %s153, 512
          %s156 = smul.u32 128, %s155
          %s158 = ssub.s32 65536, %s156
          %159 = vsyncadd %s144, %s158
          %p160 = scmp.ne.s32.totalorder 0, %s156
          %s161 = smul.addr %s152, 128
          %s162 = scalar_lea.hbm %s0, %s161
          %s163 = smul.u32 8, %s155
          %s164 = sshll.u32 %s147, 4
          %s165 = int_to_ptr.vmem [resolvable:$true] %s164
          %s166 = sshll.u32 %s163, 4
          %170 = dma.hbm_to_vmem [thread:$0]  (%p160), %s162, %s166, %s165, %s144, 128, 128, 8
        $region20: #{tpu_custom_call.1} parent=15 // pred_fallthru
          _
        // Predicated region
        $region21: #{tpu_custom_call.1} parent=15 // pred_check
          %p171 = pneg %p89
        $region22: #{tpu_custom_call.1} parent=15 // pred_check_branch
          %173 = sbr.rel (%p171) target = $region24
        $region23: #{tpu_custom_call.1} parent=15 // pred_region
          %s174 = sand.u32 %s79, 1
          %s175 = scalar_lea.sflag [#allocation7], %s174
          %s176 = sand.u32 %s79, 1
          %s177 = smul.addr %s176, 4096
          %s178 = scalar_lea.vmem [#allocation6], %s177
          %s179 = smul.u32 %s22, 2
          %s180 = sadd.s32 %s179, %s23
          %p181 = scmp.lt.s32.totalorder %s180, 1
          %s182 = scalar_select %p181, %s180, 1
          %s183 = smul.u32 512, %s182
          %s184 = ssub.s32 513, %s183
          %p185 = scmp.lt.s32.totalorder %s184, 512
          %s186 = scalar_select %p185, %s184, 512
          %s187 = smul.u32 128, %s186
          %s189 = ssub.s32 65536, %s187
          %190 = vsyncadd %s175, %s189
          %p191 = scmp.ne.s32.totalorder 0, %s187
          %s192 = smul.addr %s183, 128
          %s193 = scalar_lea.hbm %s1, %s192
          %s194 = smul.u32 8, %s186
          %s195 = sshll.u32 %s178, 4
          %s196 = int_to_ptr.vmem [resolvable:$true] %s195
          %s197 = sshll.u32 %s194, 4
          %201 = dma.hbm_to_vmem [thread:$0]  (%p191), %s193, %s197, %s196, %s175, 128, 128, 8
        $region24: #{tpu_custom_call.1} parent=15 // pred_fallthru
          _
      $region16: #{tpu_custom_call.1} parent=5 // pred_fallthru
        _
      %p202 = scmp.le.s32.totalorder 1, %s15
      %p203 = scmp.lt.s32.totalorder %s15, 3
      %p204 = pnand %p202, %p203
      %p205 = pneg %p204
      // Predicated region
      $region25: #{tpu_custom_call.1} parent=5 // pred_check
        _
      $region26: #{tpu_custom_call.1} parent=5 // pred_check_branch
        %207 = sbr.rel (%p204) target = $region28
      $region27: #{tpu_custom_call.1} parent=5 // pred_region
        %s208 = ssub.s32 %s15, 1
        %s209 = sand.u32 %s48, 1
        %s210 = scalar_lea.sflag [#allocation4], %s209
        %s211 = sand.u32 %s48, 1
        %s212 = smul.addr %s211, 4096
        %s213 = scalar_lea.vmem [#allocation3], %s212
        // Predicated region
        $region29: #{tpu_custom_call.1} parent=27 // pred_check
          %p214 = pneg %p61
        $region30: #{tpu_custom_call.1} parent=27 // pred_check_branch
          %216 = sbr.rel (%p214) target = $region32
        $region31: #{tpu_custom_call.1} parent=27 // pred_region
          %217 = dma.done %s210, 65536
        $region32: #{tpu_custom_call.1} parent=27 // pred_fallthru
          _
        %s218 = sand.u32 %s82, 1
        %s219 = scalar_lea.sflag [#allocation7], %s218
        %s220 = sand.u32 %s82, 1
        %s221 = smul.addr %s220, 4096
        %s222 = scalar_lea.vmem [#allocation6], %s221
        // Predicated region
        $region33: #{tpu_custom_call.1} parent=27 // pred_check
          %p223 = pneg %p95
        $region34: #{tpu_custom_call.1} parent=27 // pred_check_branch
          %225 = sbr.rel (%p223) target = $region36
        $region35: #{tpu_custom_call.1} parent=27 // pred_region
          %226 = dma.done %s219, 65536
        $region36: #{tpu_custom_call.1} parent=27 // pred_fallthru
          _
        %s227 = sand.u32 %s48, 1
        %s228 = scalar_lea.sflag [#allocation4], %s227
        %s229 = sand.u32 %s48, 1
        %s230 = smul.addr %s229, 4096
        %s231 = scalar_lea.vmem [#allocation3], %s230
        %p232 = pneg %p61
        %p233 = pneg %p58
        %s234 = sand.u32 %s82, 1
        %s235 = scalar_lea.sflag [#allocation7], %s234
        %s236 = sand.u32 %s82, 1
        %s237 = smul.addr %s236, 4096
        %s238 = scalar_lea.vmem [#allocation6], %s237
        %p239 = pneg %p95
        %p240 = pneg %p92
        %p241 = pneg %p121
        %p242 = pneg %p118
        %s243 = smul.u32 %s24, 2
        %s244 = sadd.s32 %s243, %s25
        %p245 = scmp.lt.s32.totalorder %s244, 1
        %s246 = scalar_select %p245, %s244, 1
        %s247 = smul.u32 512, %s246
        %s248 = ssub.s32 513, %s247
        %p249 = scmp.lt.s32.totalorder %s248, 512
        %s250 = scalar_select %p249, %s248, 512
        %s251 = smul.u32 128, %s250
        %s252 = smul.u32 %s24, 2
        %s253 = sadd.s32 %s252, %s25
        %p254 = scmp.lt.s32.totalorder %s253, 1
        %s255 = scalar_select %p254, %s253, 1
        %s256 = smul.u32 512, %s255
        %s257 = ssub.s32 513, %s256
        %p258 = scmp.lt.s32.totalorder %s257, 512
        %s259 = scalar_select %p258, %s257, 512
        %s260 = smul.u32 128, %s259
        %p261 = scmp.eq.s32.totalorder %s25, 0
        // Predicated region
        $region37: #{tpu_custom_call.1} parent=27 // pred_check
          %p262 = pneg %p261
        $region38: #{tpu_custom_call.1} parent=27 // pred_check_branch
          %264 = sbr.rel (%p262) target = $region40
        $region39: #{tpu_custom_call.1} parent=27 // pred_region
          %265 = vst [vmem:[#allocation2] sm:$0xff] 0.0
          %266 = vst [vmem:[#allocation2 + $0x8] sm:$0xff] 0.0
          %267 = vst [vmem:[#allocation2 + $0x10] sm:$0xff] 0.0
          %268 = vst [vmem:[#allocation2 + $0x18] sm:$0xff] 0.0
          %269 = vst [vmem:[#allocation2 + $0x20] sm:$0xff] 0.0
          %270 = vst [vmem:[#allocation2 + $0x28] sm:$0xff] 0.0
          %271 = vst [vmem:[#allocation2 + $0x30] sm:$0xff] 0.0
          %272 = vst [vmem:[#allocation2 + $0x38] sm:$0xff] 0.0
          %273 = vst [vmem:[#allocation2 + $0x40] sm:$0xff] 0.0
          %274 = vst [vmem:[#allocation2 + $0x48] sm:$0xff] 0.0
          %275 = vst [vmem:[#allocation2 + $0x50] sm:$0xff] 0.0
          %276 = vst [vmem:[#allocation2 + $0x58] sm:$0xff] 0.0
          %277 = vst [vmem:[#allocation2 + $0x60] sm:$0xff] 0.0
          %278 = vst [vmem:[#allocation2 + $0x68] sm:$0xff] 0.0
          %279 = vst [vmem:[#allocation2 + $0x70] sm:$0xff] 0.0
          %280 = vst [vmem:[#allocation2 + $0x78] sm:$0xff] 0.0
          %281 = vst [vmem:[#allocation2 + $0x80] sm:$0xff] 0.0
          %282 = vst [vmem:[#allocation2 + $0x88] sm:$0xff] 0.0
          %283 = vst [vmem:[#allocation2 + $0x90] sm:$0xff] 0.0
          %284 = vst [vmem:[#allocation2 + $0x98] sm:$0xff] 0.0
          %285 = vst [vmem:[#allocation2 + $0xa0] sm:$0xff] 0.0
          %286 = vst [vmem:[#allocation2 + $0xa8] sm:$0xff] 0.0
          %287 = vst [vmem:[#allocation2 + $0xb0] sm:$0xff] 0.0
          %288 = vst [vmem:[#allocation2 + $0xb8] sm:$0xff] 0.0
          %289 = vst [vmem:[#allocation2 + $0xc0] sm:$0xff] 0.0
          %290 = vst [vmem:[#allocation2 + $0xc8] sm:$0xff] 0.0
          %291 = vst [vmem:[#allocation2 + $0xd0] sm:$0xff] 0.0
          %292 = vst [vmem:[#allocation2 + $0xd8] sm:$0xff] 0.0
          %293 = vst [vmem:[#allocation2 + $0xe0] sm:$0xff] 0.0
          %294 = vst [vmem:[#allocation2 + $0xe8] sm:$0xff] 0.0
          %295 = vst [vmem:[#allocation2 + $0xf0] sm:$0xff] 0.0
          %296 = vst [vmem:[#allocation2 + $0xf8] sm:$0xff] 0.0
          %297 = vst [vmem:[#allocation2 + $0x100] sm:$0xff] 0.0
          %298 = vst [vmem:[#allocation2 + $0x108] sm:$0xff] 0.0
          %299 = vst [vmem:[#allocation2 + $0x110] sm:$0xff] 0.0
          %300 = vst [vmem:[#allocation2 + $0x118] sm:$0xff] 0.0
          %301 = vst [vmem:[#allocation2 + $0x120] sm:$0xff] 0.0
          %302 = vst [vmem:[#allocation2 + $0x128] sm:$0xff] 0.0
          %303 = vst [vmem:[#allocation2 + $0x130] sm:$0xff] 0.0
          %304 = vst [vmem:[#allocation2 + $0x138] sm:$0xff] 0.0
          %305 = vst [vmem:[#allocation2 + $0x140] sm:$0xff] 0.0
          %306 = vst [vmem:[#allocation2 + $0x148] sm:$0xff] 0.0
          %307 = vst [vmem:[#allocation2 + $0x150] sm:$0xff] 0.0
          %308 = vst [vmem:[#allocation2 + $0x158] sm:$0xff] 0.0
          %309 = vst [vmem:[#allocation2 + $0x160] sm:$0xff] 0.0
          %310 = vst [vmem:[#allocation2 + $0x168] sm:$0xff] 0.0
          %311 = vst [vmem:[#allocation2 + $0x170] sm:$0xff] 0.0
          %312 = vst [vmem:[#allocation2 + $0x178] sm:$0xff] 0.0
          %313 = vst [vmem:[#allocation2 + $0x180] sm:$0xff] 0.0
          %314 = vst [vmem:[#allocation2 + $0x188] sm:$0xff] 0.0
          %315 = vst [vmem:[#allocation2 + $0x190] sm:$0xff] 0.0
          %316 = vst [vmem:[#allocation2 + $0x198] sm:$0xff] 0.0
          %317 = vst [vmem:[#allocation2 + $0x1a0] sm:$0xff] 0.0
          %318 = vst [vmem:[#allocation2 + $0x1a8] sm:$0xff] 0.0
          %319 = vst [vmem:[#allocation2 + $0x1b0] sm:$0xff] 0.0
          %320 = vst [vmem:[#allocation2 + $0x1b8] sm:$0xff] 0.0
          %321 = vst [vmem:[#allocation2 + $0x1c0] sm:$0xff] 0.0
          %322 = vst [vmem:[#allocation2 + $0x1c8] sm:$0xff] 0.0
          %323 = vst [vmem:[#allocation2 + $0x1d0] sm:$0xff] 0.0
          %324 = vst [vmem:[#allocation2 + $0x1d8] sm:$0xff] 0.0
          %325 = vst [vmem:[#allocation2 + $0x1e0] sm:$0xff] 0.0
          %326 = vst [vmem:[#allocation2 + $0x1e8] sm:$0xff] 0.0
          %327 = vst [vmem:[#allocation2 + $0x1f0] sm:$0xff] 0.0
          %328 = vst [vmem:[#allocation2 + $0x1f8] sm:$0xff] 0.0
          %329 = vst [vmem:[#allocation2 + $0x200] sm:$0xff] 0.0
          %330 = vst [vmem:[#allocation2 + $0x208] sm:$0xff] 0.0
          %331 = vst [vmem:[#allocation2 + $0x210] sm:$0xff] 0.0
          %332 = vst [vmem:[#allocation2 + $0x218] sm:$0xff] 0.0
          %333 = vst [vmem:[#allocation2 + $0x220] sm:$0xff] 0.0
          %334 = vst [vmem:[#allocation2 + $0x228] sm:$0xff] 0.0
          %335 = vst [vmem:[#allocation2 + $0x230] sm:$0xff] 0.0
          %336 = vst [vmem:[#allocation2 + $0x238] sm:$0xff] 0.0
          %337 = vst [vmem:[#allocation2 + $0x240] sm:$0xff] 0.0
          %338 = vst [vmem:[#allocation2 + $0x248] sm:$0xff] 0.0
          %339 = vst [vmem:[#allocation2 + $0x250] sm:$0xff] 0.0
          %340 = vst [vmem:[#allocation2 + $0x258] sm:$0xff] 0.0
          %341 = vst [vmem:[#allocation2 + $0x260] sm:$0xff] 0.0
          %342 = vst [vmem:[#allocation2 + $0x268] sm:$0xff] 0.0
          %343 = vst [vmem:[#allocation2 + $0x270] sm:$0xff] 0.0
          %344 = vst [vmem:[#allocation2 + $0x278] sm:$0xff] 0.0
          %345 = vst [vmem:[#allocation2 + $0x280] sm:$0xff] 0.0
          %346 = vst [vmem:[#allocation2 + $0x288] sm:$0xff] 0.0
          %347 = vst [vmem:[#allocation2 + $0x290] sm:$0xff] 0.0
          %348 = vst [vmem:[#allocation2 + $0x298] sm:$0xff] 0.0
          %349 = vst [vmem:[#allocation2 + $0x2a0] sm:$0xff] 0.0
          %350 = vst [vmem:[#allocation2 + $0x2a8] sm:$0xff] 0.0
          %351 = vst [vmem:[#allocation2 + $0x2b0] sm:$0xff] 0.0
          %352 = vst [vmem:[#allocation2 + $0x2b8] sm:$0xff] 0.0
          %353 = vst [vmem:[#allocation2 + $0x2c0] sm:$0xff] 0.0
          %354 = vst [vmem:[#allocation2 + $0x2c8] sm:$0xff] 0.0
          %355 = vst [vmem:[#allocation2 + $0x2d0] sm:$0xff] 0.0
          %356 = vst [vmem:[#allocation2 + $0x2d8] sm:$0xff] 0.0
          %357 = vst [vmem:[#allocation2 + $0x2e0] sm:$0xff] 0.0
          %358 = vst [vmem:[#allocation2 + $0x2e8] sm:$0xff] 0.0
          %359 = vst [vmem:[#allocation2 + $0x2f0] sm:$0xff] 0.0
          %360 = vst [vmem:[#allocation2 + $0x2f8] sm:$0xff] 0.0
          %361 = vst [vmem:[#allocation2 + $0x300] sm:$0xff] 0.0
          %362 = vst [vmem:[#allocation2 + $0x308] sm:$0xff] 0.0
          %363 = vst [vmem:[#allocation2 + $0x310] sm:$0xff] 0.0
          %364 = vst [vmem:[#allocation2 + $0x318] sm:$0xff] 0.0
          %365 = vst [vmem:[#allocation2 + $0x320] sm:$0xff] 0.0
          %366 = vst [vmem:[#allocation2 + $0x328] sm:$0xff] 0.0
          %367 = vst [vmem:[#allocation2 + $0x330] sm:$0xff] 0.0
          %368 = vst [vmem:[#allocation2 + $0x338] sm:$0xff] 0.0
          %369 = vst [vmem:[#allocation2 + $0x340] sm:$0xff] 0.0
          %370 = vst [vmem:[#allocation2 + $0x348] sm:$0xff] 0.0
          %371 = vst [vmem:[#allocation2 + $0x350] sm:$0xff] 0.0
          %372 = vst [vmem:[#allocation2 + $0x358] sm:$0xff] 0.0
          %373 = vst [vmem:[#allocation2 + $0x360] sm:$0xff] 0.0
          %374 = vst [vmem:[#allocation2 + $0x368] sm:$0xff] 0.0
          %375 = vst [vmem:[#allocation2 + $0x370] sm:$0xff] 0.0
          %376 = vst [vmem:[#allocation2 + $0x378] sm:$0xff] 0.0
          %377 = vst [vmem:[#allocation2 + $0x380] sm:$0xff] 0.0
          %378 = vst [vmem:[#allocation2 + $0x388] sm:$0xff] 0.0
          %379 = vst [vmem:[#allocation2 + $0x390] sm:$0xff] 0.0
          %380 = vst [vmem:[#allocation2 + $0x398] sm:$0xff] 0.0
          %381 = vst [vmem:[#allocation2 + $0x3a0] sm:$0xff] 0.0
          %382 = vst [vmem:[#allocation2 + $0x3a8] sm:$0xff] 0.0
          %383 = vst [vmem:[#allocation2 + $0x3b0] sm:$0xff] 0.0
          %384 = vst [vmem:[#allocation2 + $0x3b8] sm:$0xff] 0.0
          %385 = vst [vmem:[#allocation2 + $0x3c0] sm:$0xff] 0.0
          %386 = vst [vmem:[#allocation2 + $0x3c8] sm:$0xff] 0.0
          %387 = vst [vmem:[#allocation2 + $0x3d0] sm:$0xff] 0.0
          %388 = vst [vmem:[#allocation2 + $0x3d8] sm:$0xff] 0.0
          %389 = vst [vmem:[#allocation2 + $0x3e0] sm:$0xff] 0.0
          %390 = vst [vmem:[#allocation2 + $0x3e8] sm:$0xff] 0.0
          %391 = vst [vmem:[#allocation2 + $0x3f0] sm:$0xff] 0.0
          %392 = vst [vmem:[#allocation2 + $0x3f8] sm:$0xff] 0.0
          %393 = vst [vmem:[#allocation2 + $0x400] sm:$0xff] 0.0
          %394 = vst [vmem:[#allocation2 + $0x408] sm:$0xff] 0.0
          %395 = vst [vmem:[#allocation2 + $0x410] sm:$0xff] 0.0
          %396 = vst [vmem:[#allocation2 + $0x418] sm:$0xff] 0.0
          %397 = vst [vmem:[#allocation2 + $0x420] sm:$0xff] 0.0
          %398 = vst [vmem:[#allocation2 + $0x428] sm:$0xff] 0.0
          %399 = vst [vmem:[#allocation2 + $0x430] sm:$0xff] 0.0
          %400 = vst [vmem:[#allocation2 + $0x438] sm:$0xff] 0.0
          %401 = vst [vmem:[#allocation2 + $0x440] sm:$0xff] 0.0
          %402 = vst [vmem:[#allocation2 + $0x448] sm:$0xff] 0.0
          %403 = vst [vmem:[#allocation2 + $0x450] sm:$0xff] 0.0
          %404 = vst [vmem:[#allocation2 + $0x458] sm:$0xff] 0.0
          %405 = vst [vmem:[#allocation2 + $0x460] sm:$0xff] 0.0
          %406 = vst [vmem:[#allocation2 + $0x468] sm:$0xff] 0.0
          %407 = vst [vmem:[#allocation2 + $0x470] sm:$0xff] 0.0
          %408 = vst [vmem:[#allocation2 + $0x478] sm:$0xff] 0.0
          %409 = vst [vmem:[#allocation2 + $0x480] sm:$0xff] 0.0
          %410 = vst [vmem:[#allocation2 + $0x488] sm:$0xff] 0.0
          %411 = vst [vmem:[#allocation2 + $0x490] sm:$0xff] 0.0
          %412 = vst [vmem:[#allocation2 + $0x498] sm:$0xff] 0.0
          %413 = vst [vmem:[#allocation2 + $0x4a0] sm:$0xff] 0.0
          %414 = vst [vmem:[#allocation2 + $0x4a8] sm:$0xff] 0.0
          %415 = vst [vmem:[#allocation2 + $0x4b0] sm:$0xff] 0.0
          %416 = vst [vmem:[#allocation2 + $0x4b8] sm:$0xff] 0.0
          %417 = vst [vmem:[#allocation2 + $0x4c0] sm:$0xff] 0.0
          %418 = vst [vmem:[#allocation2 + $0x4c8] sm:$0xff] 0.0
          %419 = vst [vmem:[#allocation2 + $0x4d0] sm:$0xff] 0.0
          %420 = vst [vmem:[#allocation2 + $0x4d8] sm:$0xff] 0.0
          %421 = vst [vmem:[#allocation2 + $0x4e0] sm:$0xff] 0.0
          %422 = vst [vmem:[#allocation2 + $0x4e8] sm:$0xff] 0.0
          %423 = vst [vmem:[#allocation2 + $0x4f0] sm:$0xff] 0.0
          %424 = vst [vmem:[#allocation2 + $0x4f8] sm:$0xff] 0.0
          %425 = vst [vmem:[#allocation2 + $0x500] sm:$0xff] 0.0
          %426 = vst [vmem:[#allocation2 + $0x508] sm:$0xff] 0.0
          %427 = vst [vmem:[#allocation2 + $0x510] sm:$0xff] 0.0
          %428 = vst [vmem:[#allocation2 + $0x518] sm:$0xff] 0.0
          %429 = vst [vmem:[#allocation2 + $0x520] sm:$0xff] 0.0
          %430 = vst [vmem:[#allocation2 + $0x528] sm:$0xff] 0.0
          %431 = vst [vmem:[#allocation2 + $0x530] sm:$0xff] 0.0
          %432 = vst [vmem:[#allocation2 + $0x538] sm:$0xff] 0.0
          %433 = vst [vmem:[#allocation2 + $0x540] sm:$0xff] 0.0
          %434 = vst [vmem:[#allocation2 + $0x548] sm:$0xff] 0.0
          %435 = vst [vmem:[#allocation2 + $0x550] sm:$0xff] 0.0
          %436 = vst [vmem:[#allocation2 + $0x558] sm:$0xff] 0.0
          %437 = vst [vmem:[#allocation2 + $0x560] sm:$0xff] 0.0
          %438 = vst [vmem:[#allocation2 + $0x568] sm:$0xff] 0.0
          %439 = vst [vmem:[#allocation2 + $0x570] sm:$0xff] 0.0
          %440 = vst [vmem:[#allocation2 + $0x578] sm:$0xff] 0.0
          %441 = vst [vmem:[#allocation2 + $0x580] sm:$0xff] 0.0
          %442 = vst [vmem:[#allocation2 + $0x588] sm:$0xff] 0.0
          %443 = vst [vmem:[#allocation2 + $0x590] sm:$0xff] 0.0
          %444 = vst [vmem:[#allocation2 + $0x598] sm:$0xff] 0.0
          %445 = vst [vmem:[#allocation2 + $0x5a0] sm:$0xff] 0.0
          %446 = vst [vmem:[#allocation2 + $0x5a8] sm:$0xff] 0.0
          %447 = vst [vmem:[#allocation2 + $0x5b0] sm:$0xff] 0.0
          %448 = vst [vmem:[#allocation2 + $0x5b8] sm:$0xff] 0.0
          %449 = vst [vmem:[#allocation2 + $0x5c0] sm:$0xff] 0.0
          %450 = vst [vmem:[#allocation2 + $0x5c8] sm:$0xff] 0.0
          %451 = vst [vmem:[#allocation2 + $0x5d0] sm:$0xff] 0.0
          %452 = vst [vmem:[#allocation2 + $0x5d8] sm:$0xff] 0.0
          %453 = vst [vmem:[#allocation2 + $0x5e0] sm:$0xff] 0.0
          %454 = vst [vmem:[#allocation2 + $0x5e8] sm:$0xff] 0.0
          %455 = vst [vmem:[#allocation2 + $0x5f0] sm:$0xff] 0.0
          %456 = vst [vmem:[#allocation2 + $0x5f8] sm:$0xff] 0.0
          %457 = vst [vmem:[#allocation2 + $0x600] sm:$0xff] 0.0
          %458 = vst [vmem:[#allocation2 + $0x608] sm:$0xff] 0.0
          %459 = vst [vmem:[#allocation2 + $0x610] sm:$0xff] 0.0
          %460 = vst [vmem:[#allocation2 + $0x618] sm:$0xff] 0.0
          %461 = vst [vmem:[#allocation2 + $0x620] sm:$0xff] 0.0
          %462 = vst [vmem:[#allocation2 + $0x628] sm:$0xff] 0.0
          %463 = vst [vmem:[#allocation2 + $0x630] sm:$0xff] 0.0
          %464 = vst [vmem:[#allocation2 + $0x638] sm:$0xff] 0.0
          %465 = vst [vmem:[#allocation2 + $0x640] sm:$0xff] 0.0
          %466 = vst [vmem:[#allocation2 + $0x648] sm:$0xff] 0.0
          %467 = vst [vmem:[#allocation2 + $0x650] sm:$0xff] 0.0
          %468 = vst [vmem:[#allocation2 + $0x658] sm:$0xff] 0.0
          %469 = vst [vmem:[#allocation2 + $0x660] sm:$0xff] 0.0
          %470 = vst [vmem:[#allocation2 + $0x668] sm:$0xff] 0.0
          %471 = vst [vmem:[#allocation2 + $0x670] sm:$0xff] 0.0
          %472 = vst [vmem:[#allocation2 + $0x678] sm:$0xff] 0.0
          %473 = vst [vmem:[#allocation2 + $0x680] sm:$0xff] 0.0
          %474 = vst [vmem:[#allocation2 + $0x688] sm:$0xff] 0.0
          %475 = vst [vmem:[#allocation2 + $0x690] sm:$0xff] 0.0
          %476 = vst [vmem:[#allocation2 + $0x698] sm:$0xff] 0.0
          %477 = vst [vmem:[#allocation2 + $0x6a0] sm:$0xff] 0.0
          %478 = vst [vmem:[#allocation2 + $0x6a8] sm:$0xff] 0.0
          %479 = vst [vmem:[#allocation2 + $0x6b0] sm:$0xff] 0.0
          %480 = vst [vmem:[#allocation2 + $0x6b8] sm:$0xff] 0.0
          %481 = vst [vmem:[#allocation2 + $0x6c0] sm:$0xff] 0.0
          %482 = vst [vmem:[#allocation2 + $0x6c8] sm:$0xff] 0.0
          %483 = vst [vmem:[#allocation2 + $0x6d0] sm:$0xff] 0.0
          %484 = vst [vmem:[#allocation2 + $0x6d8] sm:$0xff] 0.0
          %485 = vst [vmem:[#allocation2 + $0x6e0] sm:$0xff] 0.0
          %486 = vst [vmem:[#allocation2 + $0x6e8] sm:$0xff] 0.0
          %487 = vst [vmem:[#allocation2 + $0x6f0] sm:$0xff] 0.0
          %488 = vst [vmem:[#allocation2 + $0x6f8] sm:$0xff] 0.0
          %489 = vst [vmem:[#allocation2 + $0x700] sm:$0xff] 0.0
          %490 = vst [vmem:[#allocation2 + $0x708] sm:$0xff] 0.0
          %491 = vst [vmem:[#allocation2 + $0x710] sm:$0xff] 0.0
          %492 = vst [vmem:[#allocation2 + $0x718] sm:$0xff] 0.0
          %493 = vst [vmem:[#allocation2 + $0x720] sm:$0xff] 0.0
          %494 = vst [vmem:[#allocation2 + $0x728] sm:$0xff] 0.0
          %495 = vst [vmem:[#allocation2 + $0x730] sm:$0xff] 0.0
          %496 = vst [vmem:[#allocation2 + $0x738] sm:$0xff] 0.0
          %497 = vst [vmem:[#allocation2 + $0x740] sm:$0xff] 0.0
          %498 = vst [vmem:[#allocation2 + $0x748] sm:$0xff] 0.0
          %499 = vst [vmem:[#allocation2 + $0x750] sm:$0xff] 0.0
          %500 = vst [vmem:[#allocation2 + $0x758] sm:$0xff] 0.0
          %501 = vst [vmem:[#allocation2 + $0x760] sm:$0xff] 0.0
          %502 = vst [vmem:[#allocation2 + $0x768] sm:$0xff] 0.0
          %503 = vst [vmem:[#allocation2 + $0x770] sm:$0xff] 0.0
          %504 = vst [vmem:[#allocation2 + $0x778] sm:$0xff] 0.0
          %505 = vst [vmem:[#allocation2 + $0x780] sm:$0xff] 0.0
          %506 = vst [vmem:[#allocation2 + $0x788] sm:$0xff] 0.0
          %507 = vst [vmem:[#allocation2 + $0x790] sm:$0xff] 0.0
          %508 = vst [vmem:[#allocation2 + $0x798] sm:$0xff] 0.0
          %509 = vst [vmem:[#allocation2 + $0x7a0] sm:$0xff] 0.0
          %510 = vst [vmem:[#allocation2 + $0x7a8] sm:$0xff] 0.0
          %511 = vst [vmem:[#allocation2 + $0x7b0] sm:$0xff] 0.0
          %512 = vst [vmem:[#allocation2 + $0x7b8] sm:$0xff] 0.0
          %513 = vst [vmem:[#allocation2 + $0x7c0] sm:$0xff] 0.0
          %514 = vst [vmem:[#allocation2 + $0x7c8] sm:$0xff] 0.0
          %515 = vst [vmem:[#allocation2 + $0x7d0] sm:$0xff] 0.0
          %516 = vst [vmem:[#allocation2 + $0x7d8] sm:$0xff] 0.0
          %517 = vst [vmem:[#allocation2 + $0x7e0] sm:$0xff] 0.0
          %518 = vst [vmem:[#allocation2 + $0x7e8] sm:$0xff] 0.0
          %519 = vst [vmem:[#allocation2 + $0x7f0] sm:$0xff] 0.0
          %520 = vst [vmem:[#allocation2 + $0x7f8] sm:$0xff] 0.0
          %521 = vst [vmem:[#allocation2 + $0x800] sm:$0xff] 0.0
          %522 = vst [vmem:[#allocation2 + $0x808] sm:$0xff] 0.0
          %523 = vst [vmem:[#allocation2 + $0x810] sm:$0xff] 0.0
          %524 = vst [vmem:[#allocation2 + $0x818] sm:$0xff] 0.0
          %525 = vst [vmem:[#allocation2 + $0x820] sm:$0xff] 0.0
          %526 = vst [vmem:[#allocation2 + $0x828] sm:$0xff] 0.0
          %527 = vst [vmem:[#allocation2 + $0x830] sm:$0xff] 0.0
          %528 = vst [vmem:[#allocation2 + $0x838] sm:$0xff] 0.0
          %529 = vst [vmem:[#allocation2 + $0x840] sm:$0xff] 0.0
          %530 = vst [vmem:[#allocation2 + $0x848] sm:$0xff] 0.0
          %531 = vst [vmem:[#allocation2 + $0x850] sm:$0xff] 0.0
          %532 = vst [vmem:[#allocation2 + $0x858] sm:$0xff] 0.0
          %533 = vst [vmem:[#allocation2 + $0x860] sm:$0xff] 0.0
          %534 = vst [vmem:[#allocation2 + $0x868] sm:$0xff] 0.0
          %535 = vst [vmem:[#allocation2 + $0x870] sm:$0xff] 0.0
          %536 = vst [vmem:[#allocation2 + $0x878] sm:$0xff] 0.0
          %537 = vst [vmem:[#allocation2 + $0x880] sm:$0xff] 0.0
          %538 = vst [vmem:[#allocation2 + $0x888] sm:$0xff] 0.0
          %539 = vst [vmem:[#allocation2 + $0x890] sm:$0xff] 0.0
          %540 = vst [vmem:[#allocation2 + $0x898] sm:$0xff] 0.0
          %541 = vst [vmem:[#allocation2 + $0x8a0] sm:$0xff] 0.0
          %542 = vst [vmem:[#allocation2 + $0x8a8] sm:$0xff] 0.0
          %543 = vst [vmem:[#allocation2 + $0x8b0] sm:$0xff] 0.0
          %544 = vst [vmem:[#allocation2 + $0x8b8] sm:$0xff] 0.0
          %545 = vst [vmem:[#allocation2 + $0x8c0] sm:$0xff] 0.0
          %546 = vst [vmem:[#allocation2 + $0x8c8] sm:$0xff] 0.0
          %547 = vst [vmem:[#allocation2 + $0x8d0] sm:$0xff] 0.0
          %548 = vst [vmem:[#allocation2 + $0x8d8] sm:$0xff] 0.0
          %549 = vst [vmem:[#allocation2 + $0x8e0] sm:$0xff] 0.0
          %550 = vst [vmem:[#allocation2 + $0x8e8] sm:$0xff] 0.0
          %551 = vst [vmem:[#allocation2 + $0x8f0] sm:$0xff] 0.0
          %552 = vst [vmem:[#allocation2 + $0x8f8] sm:$0xff] 0.0
          %553 = vst [vmem:[#allocation2 + $0x900] sm:$0xff] 0.0
          %554 = vst [vmem:[#allocation2 + $0x908] sm:$0xff] 0.0
          %555 = vst [vmem:[#allocation2 + $0x910] sm:$0xff] 0.0
          %556 = vst [vmem:[#allocation2 + $0x918] sm:$0xff] 0.0
          %557 = vst [vmem:[#allocation2 + $0x920] sm:$0xff] 0.0
          %558 = vst [vmem:[#allocation2 + $0x928] sm:$0xff] 0.0
          %559 = vst [vmem:[#allocation2 + $0x930] sm:$0xff] 0.0
          %560 = vst [vmem:[#allocation2 + $0x938] sm:$0xff] 0.0
          %561 = vst [vmem:[#allocation2 + $0x940] sm:$0xff] 0.0
          %562 = vst [vmem:[#allocation2 + $0x948] sm:$0xff] 0.0
          %563 = vst [vmem:[#allocation2 + $0x950] sm:$0xff] 0.0
          %564 = vst [vmem:[#allocation2 + $0x958] sm:$0xff] 0.0
          %565 = vst [vmem:[#allocation2 + $0x960] sm:$0xff] 0.0
          %566 = vst [vmem:[#allocation2 + $0x968] sm:$0xff] 0.0
          %567 = vst [vmem:[#allocation2 + $0x970] sm:$0xff] 0.0
          %568 = vst [vmem:[#allocation2 + $0x978] sm:$0xff] 0.0
          %569 = vst [vmem:[#allocation2 + $0x980] sm:$0xff] 0.0
          %570 = vst [vmem:[#allocation2 + $0x988] sm:$0xff] 0.0
          %571 = vst [vmem:[#allocation2 + $0x990] sm:$0xff] 0.0
          %572 = vst [vmem:[#allocation2 + $0x998] sm:$0xff] 0.0
          %573 = vst [vmem:[#allocation2 + $0x9a0] sm:$0xff] 0.0
          %574 = vst [vmem:[#allocation2 + $0x9a8] sm:$0xff] 0.0
          %575 = vst [vmem:[#allocation2 + $0x9b0] sm:$0xff] 0.0
          %576 = vst [vmem:[#allocation2 + $0x9b8] sm:$0xff] 0.0
          %577 = vst [vmem:[#allocation2 + $0x9c0] sm:$0xff] 0.0
          %578 = vst [vmem:[#allocation2 + $0x9c8] sm:$0xff] 0.0
          %579 = vst [vmem:[#allocation2 + $0x9d0] sm:$0xff] 0.0
          %580 = vst [vmem:[#allocation2 + $0x9d8] sm:$0xff] 0.0
          %581 = vst [vmem:[#allocation2 + $0x9e0] sm:$0xff] 0.0
          %582 = vst [vmem:[#allocation2 + $0x9e8] sm:$0xff] 0.0
          %583 = vst [vmem:[#allocation2 + $0x9f0] sm:$0xff] 0.0
          %584 = vst [vmem:[#allocation2 + $0x9f8] sm:$0xff] 0.0
          %585 = vst [vmem:[#allocation2 + $0xa00] sm:$0xff] 0.0
          %586 = vst [vmem:[#allocation2 + $0xa08] sm:$0xff] 0.0
          %587 = vst [vmem:[#allocation2 + $0xa10] sm:$0xff] 0.0
          %588 = vst [vmem:[#allocation2 + $0xa18] sm:$0xff] 0.0
          %589 = vst [vmem:[#allocation2 + $0xa20] sm:$0xff] 0.0
          %590 = vst [vmem:[#allocation2 + $0xa28] sm:$0xff] 0.0
          %591 = vst [vmem:[#allocation2 + $0xa30] sm:$0xff] 0.0
          %592 = vst [vmem:[#allocation2 + $0xa38] sm:$0xff] 0.0
          %593 = vst [vmem:[#allocation2 + $0xa40] sm:$0xff] 0.0
          %594 = vst [vmem:[#allocation2 + $0xa48] sm:$0xff] 0.0
          %595 = vst [vmem:[#allocation2 + $0xa50] sm:$0xff] 0.0
          %596 = vst [vmem:[#allocation2 + $0xa58] sm:$0xff] 0.0
          %597 = vst [vmem:[#allocation2 + $0xa60] sm:$0xff] 0.0
          %598 = vst [vmem:[#allocation2 + $0xa68] sm:$0xff] 0.0
          %599 = vst [vmem:[#allocation2 + $0xa70] sm:$0xff] 0.0
          %600 = vst [vmem:[#allocation2 + $0xa78] sm:$0xff] 0.0
          %601 = vst [vmem:[#allocation2 + $0xa80] sm:$0xff] 0.0
          %602 = vst [vmem:[#allocation2 + $0xa88] sm:$0xff] 0.0
          %603 = vst [vmem:[#allocation2 + $0xa90] sm:$0xff] 0.0
          %604 = vst [vmem:[#allocation2 + $0xa98] sm:$0xff] 0.0
          %605 = vst [vmem:[#allocation2 + $0xaa0] sm:$0xff] 0.0
          %606 = vst [vmem:[#allocation2 + $0xaa8] sm:$0xff] 0.0
          %607 = vst [vmem:[#allocation2 + $0xab0] sm:$0xff] 0.0
          %608 = vst [vmem:[#allocation2 + $0xab8] sm:$0xff] 0.0
          %609 = vst [vmem:[#allocation2 + $0xac0] sm:$0xff] 0.0
          %610 = vst [vmem:[#allocation2 + $0xac8] sm:$0xff] 0.0
          %611 = vst [vmem:[#allocation2 + $0xad0] sm:$0xff] 0.0
          %612 = vst [vmem:[#allocation2 + $0xad8] sm:$0xff] 0.0
          %613 = vst [vmem:[#allocation2 + $0xae0] sm:$0xff] 0.0
          %614 = vst [vmem:[#allocation2 + $0xae8] sm:$0xff] 0.0
          %615 = vst [vmem:[#allocation2 + $0xaf0] sm:$0xff] 0.0
          %616 = vst [vmem:[#allocation2 + $0xaf8] sm:$0xff] 0.0
          %617 = vst [vmem:[#allocation2 + $0xb00] sm:$0xff] 0.0
          %618 = vst [vmem:[#allocation2 + $0xb08] sm:$0xff] 0.0
          %619 = vst [vmem:[#allocation2 + $0xb10] sm:$0xff] 0.0
          %620 = vst [vmem:[#allocation2 + $0xb18] sm:$0xff] 0.0
          %621 = vst [vmem:[#allocation2 + $0xb20] sm:$0xff] 0.0
          %622 = vst [vmem:[#allocation2 + $0xb28] sm:$0xff] 0.0
          %623 = vst [vmem:[#allocation2 + $0xb30] sm:$0xff] 0.0
          %624 = vst [vmem:[#allocation2 + $0xb38] sm:$0xff] 0.0
          %625 = vst [vmem:[#allocation2 + $0xb40] sm:$0xff] 0.0
          %626 = vst [vmem:[#allocation2 + $0xb48] sm:$0xff] 0.0
          %627 = vst [vmem:[#allocation2 + $0xb50] sm:$0xff] 0.0
          %628 = vst [vmem:[#allocation2 + $0xb58] sm:$0xff] 0.0
          %629 = vst [vmem:[#allocation2 + $0xb60] sm:$0xff] 0.0
          %630 = vst [vmem:[#allocation2 + $0xb68] sm:$0xff] 0.0
          %631 = vst [vmem:[#allocation2 + $0xb70] sm:$0xff] 0.0
          %632 = vst [vmem:[#allocation2 + $0xb78] sm:$0xff] 0.0
          %633 = vst [vmem:[#allocation2 + $0xb80] sm:$0xff] 0.0
          %634 = vst [vmem:[#allocation2 + $0xb88] sm:$0xff] 0.0
          %635 = vst [vmem:[#allocation2 + $0xb90] sm:$0xff] 0.0
          %636 = vst [vmem:[#allocation2 + $0xb98] sm:$0xff] 0.0
          %637 = vst [vmem:[#allocation2 + $0xba0] sm:$0xff] 0.0
          %638 = vst [vmem:[#allocation2 + $0xba8] sm:$0xff] 0.0
          %639 = vst [vmem:[#allocation2 + $0xbb0] sm:$0xff] 0.0
          %640 = vst [vmem:[#allocation2 + $0xbb8] sm:$0xff] 0.0
          %641 = vst [vmem:[#allocation2 + $0xbc0] sm:$0xff] 0.0
          %642 = vst [vmem:[#allocation2 + $0xbc8] sm:$0xff] 0.0
          %643 = vst [vmem:[#allocation2 + $0xbd0] sm:$0xff] 0.0
          %644 = vst [vmem:[#allocation2 + $0xbd8] sm:$0xff] 0.0
          %645 = vst [vmem:[#allocation2 + $0xbe0] sm:$0xff] 0.0
          %646 = vst [vmem:[#allocation2 + $0xbe8] sm:$0xff] 0.0
          %647 = vst [vmem:[#allocation2 + $0xbf0] sm:$0xff] 0.0
          %648 = vst [vmem:[#allocation2 + $0xbf8] sm:$0xff] 0.0
          %649 = vst [vmem:[#allocation2 + $0xc00] sm:$0xff] 0.0
          %650 = vst [vmem:[#allocation2 + $0xc08] sm:$0xff] 0.0
          %651 = vst [vmem:[#allocation2 + $0xc10] sm:$0xff] 0.0
          %652 = vst [vmem:[#allocation2 + $0xc18] sm:$0xff] 0.0
          %653 = vst [vmem:[#allocation2 + $0xc20] sm:$0xff] 0.0
          %654 = vst [vmem:[#allocation2 + $0xc28] sm:$0xff] 0.0
          %655 = vst [vmem:[#allocation2 + $0xc30] sm:$0xff] 0.0
          %656 = vst [vmem:[#allocation2 + $0xc38] sm:$0xff] 0.0
          %657 = vst [vmem:[#allocation2 + $0xc40] sm:$0xff] 0.0
          %658 = vst [vmem:[#allocation2 + $0xc48] sm:$0xff] 0.0
          %659 = vst [vmem:[#allocation2 + $0xc50] sm:$0xff] 0.0
          %660 = vst [vmem:[#allocation2 + $0xc58] sm:$0xff] 0.0
          %661 = vst [vmem:[#allocation2 + $0xc60] sm:$0xff] 0.0
          %662 = vst [vmem:[#allocation2 + $0xc68] sm:$0xff] 0.0
          %663 = vst [vmem:[#allocation2 + $0xc70] sm:$0xff] 0.0
          %664 = vst [vmem:[#allocation2 + $0xc78] sm:$0xff] 0.0
          %665 = vst [vmem:[#allocation2 + $0xc80] sm:$0xff] 0.0
          %666 = vst [vmem:[#allocation2 + $0xc88] sm:$0xff] 0.0
          %667 = vst [vmem:[#allocation2 + $0xc90] sm:$0xff] 0.0
          %668 = vst [vmem:[#allocation2 + $0xc98] sm:$0xff] 0.0
          %669 = vst [vmem:[#allocation2 + $0xca0] sm:$0xff] 0.0
          %670 = vst [vmem:[#allocation2 + $0xca8] sm:$0xff] 0.0
          %671 = vst [vmem:[#allocation2 + $0xcb0] sm:$0xff] 0.0
          %672 = vst [vmem:[#allocation2 + $0xcb8] sm:$0xff] 0.0
          %673 = vst [vmem:[#allocation2 + $0xcc0] sm:$0xff] 0.0
          %674 = vst [vmem:[#allocation2 + $0xcc8] sm:$0xff] 0.0
          %675 = vst [vmem:[#allocation2 + $0xcd0] sm:$0xff] 0.0
          %676 = vst [vmem:[#allocation2 + $0xcd8] sm:$0xff] 0.0
          %677 = vst [vmem:[#allocation2 + $0xce0] sm:$0xff] 0.0
          %678 = vst [vmem:[#allocation2 + $0xce8] sm:$0xff] 0.0
          %679 = vst [vmem:[#allocation2 + $0xcf0] sm:$0xff] 0.0
          %680 = vst [vmem:[#allocation2 + $0xcf8] sm:$0xff] 0.0
          %681 = vst [vmem:[#allocation2 + $0xd00] sm:$0xff] 0.0
          %682 = vst [vmem:[#allocation2 + $0xd08] sm:$0xff] 0.0
          %683 = vst [vmem:[#allocation2 + $0xd10] sm:$0xff] 0.0
          %684 = vst [vmem:[#allocation2 + $0xd18] sm:$0xff] 0.0
          %685 = vst [vmem:[#allocation2 + $0xd20] sm:$0xff] 0.0
          %686 = vst [vmem:[#allocation2 + $0xd28] sm:$0xff] 0.0
          %687 = vst [vmem:[#allocation2 + $0xd30] sm:$0xff] 0.0
          %688 = vst [vmem:[#allocation2 + $0xd38] sm:$0xff] 0.0
          %689 = vst [vmem:[#allocation2 + $0xd40] sm:$0xff] 0.0
          %690 = vst [vmem:[#allocation2 + $0xd48] sm:$0xff] 0.0
          %691 = vst [vmem:[#allocation2 + $0xd50] sm:$0xff] 0.0
          %692 = vst [vmem:[#allocation2 + $0xd58] sm:$0xff] 0.0
          %693 = vst [vmem:[#allocation2 + $0xd60] sm:$0xff] 0.0
          %694 = vst [vmem:[#allocation2 + $0xd68] sm:$0xff] 0.0
          %695 = vst [vmem:[#allocation2 + $0xd70] sm:$0xff] 0.0
          %696 = vst [vmem:[#allocation2 + $0xd78] sm:$0xff] 0.0
          %697 = vst [vmem:[#allocation2 + $0xd80] sm:$0xff] 0.0
          %698 = vst [vmem:[#allocation2 + $0xd88] sm:$0xff] 0.0
          %699 = vst [vmem:[#allocation2 + $0xd90] sm:$0xff] 0.0
          %700 = vst [vmem:[#allocation2 + $0xd98] sm:$0xff] 0.0
          %701 = vst [vmem:[#allocation2 + $0xda0] sm:$0xff] 0.0
          %702 = vst [vmem:[#allocation2 + $0xda8] sm:$0xff] 0.0
          %703 = vst [vmem:[#allocation2 + $0xdb0] sm:$0xff] 0.0
          %704 = vst [vmem:[#allocation2 + $0xdb8] sm:$0xff] 0.0
          %705 = vst [vmem:[#allocation2 + $0xdc0] sm:$0xff] 0.0
          %706 = vst [vmem:[#allocation2 + $0xdc8] sm:$0xff] 0.0
          %707 = vst [vmem:[#allocation2 + $0xdd0] sm:$0xff] 0.0
          %708 = vst [vmem:[#allocation2 + $0xdd8] sm:$0xff] 0.0
          %709 = vst [vmem:[#allocation2 + $0xde0] sm:$0xff] 0.0
          %710 = vst [vmem:[#allocation2 + $0xde8] sm:$0xff] 0.0
          %711 = vst [vmem:[#allocation2 + $0xdf0] sm:$0xff] 0.0
          %712 = vst [vmem:[#allocation2 + $0xdf8] sm:$0xff] 0.0
          %713 = vst [vmem:[#allocation2 + $0xe00] sm:$0xff] 0.0
          %714 = vst [vmem:[#allocation2 + $0xe08] sm:$0xff] 0.0
          %715 = vst [vmem:[#allocation2 + $0xe10] sm:$0xff] 0.0
          %716 = vst [vmem:[#allocation2 + $0xe18] sm:$0xff] 0.0
          %717 = vst [vmem:[#allocation2 + $0xe20] sm:$0xff] 0.0
          %718 = vst [vmem:[#allocation2 + $0xe28] sm:$0xff] 0.0
          %719 = vst [vmem:[#allocation2 + $0xe30] sm:$0xff] 0.0
          %720 = vst [vmem:[#allocation2 + $0xe38] sm:$0xff] 0.0
          %721 = vst [vmem:[#allocation2 + $0xe40] sm:$0xff] 0.0
          %722 = vst [vmem:[#allocation2 + $0xe48] sm:$0xff] 0.0
          %723 = vst [vmem:[#allocation2 + $0xe50] sm:$0xff] 0.0
          %724 = vst [vmem:[#allocation2 + $0xe58] sm:$0xff] 0.0
          %725 = vst [vmem:[#allocation2 + $0xe60] sm:$0xff] 0.0
          %726 = vst [vmem:[#allocation2 + $0xe68] sm:$0xff] 0.0
          %727 = vst [vmem:[#allocation2 + $0xe70] sm:$0xff] 0.0
          %728 = vst [vmem:[#allocation2 + $0xe78] sm:$0xff] 0.0
          %729 = vst [vmem:[#allocation2 + $0xe80] sm:$0xff] 0.0
          %730 = vst [vmem:[#allocation2 + $0xe88] sm:$0xff] 0.0
          %731 = vst [vmem:[#allocation2 + $0xe90] sm:$0xff] 0.0
          %732 = vst [vmem:[#allocation2 + $0xe98] sm:$0xff] 0.0
          %733 = vst [vmem:[#allocation2 + $0xea0] sm:$0xff] 0.0
          %734 = vst [vmem:[#allocation2 + $0xea8] sm:$0xff] 0.0
          %735 = vst [vmem:[#allocation2 + $0xeb0] sm:$0xff] 0.0
          %736 = vst [vmem:[#allocation2 + $0xeb8] sm:$0xff] 0.0
          %737 = vst [vmem:[#allocation2 + $0xec0] sm:$0xff] 0.0
          %738 = vst [vmem:[#allocation2 + $0xec8] sm:$0xff] 0.0
          %739 = vst [vmem:[#allocation2 + $0xed0] sm:$0xff] 0.0
          %740 = vst [vmem:[#allocation2 + $0xed8] sm:$0xff] 0.0
          %741 = vst [vmem:[#allocation2 + $0xee0] sm:$0xff] 0.0
          %742 = vst [vmem:[#allocation2 + $0xee8] sm:$0xff] 0.0
          %743 = vst [vmem:[#allocation2 + $0xef0] sm:$0xff] 0.0
          %744 = vst [vmem:[#allocation2 + $0xef8] sm:$0xff] 0.0
          %745 = vst [vmem:[#allocation2 + $0xf00] sm:$0xff] 0.0
          %746 = vst [vmem:[#allocation2 + $0xf08] sm:$0xff] 0.0
          %747 = vst [vmem:[#allocation2 + $0xf10] sm:$0xff] 0.0
          %748 = vst [vmem:[#allocation2 + $0xf18] sm:$0xff] 0.0
          %749 = vst [vmem:[#allocation2 + $0xf20] sm:$0xff] 0.0
          %750 = vst [vmem:[#allocation2 + $0xf28] sm:$0xff] 0.0
          %751 = vst [vmem:[#allocation2 + $0xf30] sm:$0xff] 0.0
          %752 = vst [vmem:[#allocation2 + $0xf38] sm:$0xff] 0.0
          %753 = vst [vmem:[#allocation2 + $0xf40] sm:$0xff] 0.0
          %754 = vst [vmem:[#allocation2 + $0xf48] sm:$0xff] 0.0
          %755 = vst [vmem:[#allocation2 + $0xf50] sm:$0xff] 0.0
          %756 = vst [vmem:[#allocation2 + $0xf58] sm:$0xff] 0.0
          %757 = vst [vmem:[#allocation2 + $0xf60] sm:$0xff] 0.0
          %758 = vst [vmem:[#allocation2 + $0xf68] sm:$0xff] 0.0
          %759 = vst [vmem:[#allocation2 + $0xf70] sm:$0xff] 0.0
          %760 = vst [vmem:[#allocation2 + $0xf78] sm:$0xff] 0.0
          %761 = vst [vmem:[#allocation2 + $0xf80] sm:$0xff] 0.0
          %762 = vst [vmem:[#allocation2 + $0xf88] sm:$0xff] 0.0
          %763 = vst [vmem:[#allocation2 + $0xf90] sm:$0xff] 0.0
          %764 = vst [vmem:[#allocation2 + $0xf98] sm:$0xff] 0.0
          %765 = vst [vmem:[#allocation2 + $0xfa0] sm:$0xff] 0.0
          %766 = vst [vmem:[#allocation2 + $0xfa8] sm:$0xff] 0.0
          %767 = vst [vmem:[#allocation2 + $0xfb0] sm:$0xff] 0.0
          %768 = vst [vmem:[#allocation2 + $0xfb8] sm:$0xff] 0.0
          %769 = vst [vmem:[#allocation2 + $0xfc0] sm:$0xff] 0.0
          %770 = vst [vmem:[#allocation2 + $0xfc8] sm:$0xff] 0.0
          %771 = vst [vmem:[#allocation2 + $0xfd0] sm:$0xff] 0.0
          %772 = vst [vmem:[#allocation2 + $0xfd8] sm:$0xff] 0.0
          %773 = vst [vmem:[#allocation2 + $0xfe0] sm:$0xff] 0.0
          %774 = vst [vmem:[#allocation2 + $0xfe8] sm:$0xff] 0.0
          %775 = vst [vmem:[#allocation2 + $0xff0] sm:$0xff] 0.0
          %776 = vst [vmem:[#allocation2 + $0xff8] sm:$0xff] 0.0
        $region40: #{tpu_custom_call.1} parent=27 // pred_fallthru
          _
        %v777 = vld [vmem:[%s213] sm:$0xff]
        %v778 = vld [vmem:[%s213 + $0x8] sm:$0xff]
        %v779 = vld [vmem:[%s213 + $0x10] sm:$0xff]
        %v780 = vld [vmem:[%s213 + $0x18] sm:$0xff]
        %v781 = vld [vmem:[%s213 + $0x20] sm:$0xff]
        %v782 = vld [vmem:[%s213 + $0x28] sm:$0xff]
        %v783 = vld [vmem:[%s213 + $0x30] sm:$0xff]
        %v784 = vld [vmem:[%s213 + $0x38] sm:$0xff]
        %v785 = vld [vmem:[%s213 + $0x40] sm:$0xff]
        %v786 = vld [vmem:[%s213 + $0x48] sm:$0xff]
        %v787 = vld [vmem:[%s213 + $0x50] sm:$0xff]
        %v788 = vld [vmem:[%s213 + $0x58] sm:$0xff]
        %v789 = vld [vmem:[%s213 + $0x60] sm:$0xff]
        %v790 = vld [vmem:[%s213 + $0x68] sm:$0xff]
        %v791 = vld [vmem:[%s213 + $0x70] sm:$0xff]
        %v792 = vld [vmem:[%s213 + $0x78] sm:$0xff]
        %v793 = vld [vmem:[%s213 + $0x80] sm:$0xff]
        %v794 = vld [vmem:[%s213 + $0x88] sm:$0xff]
        %v795 = vld [vmem:[%s213 + $0x90] sm:$0xff]
        %v796 = vld [vmem:[%s213 + $0x98] sm:$0xff]
        %v797 = vld [vmem:[%s213 + $0xa0] sm:$0xff]
        %v798 = vld [vmem:[%s213 + $0xa8] sm:$0xff]
        %v799 = vld [vmem:[%s213 + $0xb0] sm:$0xff]
        %v800 = vld [vmem:[%s213 + $0xb8] sm:$0xff]
        %v801 = vld [vmem:[%s213 + $0xc0] sm:$0xff]
        %v802 = vld [vmem:[%s213 + $0xc8] sm:$0xff]
        %v803 = vld [vmem:[%s213 + $0xd0] sm:$0xff]
        %v804 = vld [vmem:[%s213 + $0xd8] sm:$0xff]
        %v805 = vld [vmem:[%s213 + $0xe0] sm:$0xff]
        %v806 = vld [vmem:[%s213 + $0xe8] sm:$0xff]
        %v807 = vld [vmem:[%s213 + $0xf0] sm:$0xff]
        %v808 = vld [vmem:[%s213 + $0xf8] sm:$0xff]
        %v809 = vld [vmem:[%s213 + $0x100] sm:$0xff]
        %v810 = vld [vmem:[%s213 + $0x108] sm:$0xff]
        %v811 = vld [vmem:[%s213 + $0x110] sm:$0xff]
        %v812 = vld [vmem:[%s213 + $0x118] sm:$0xff]
        %v813 = vld [vmem:[%s213 + $0x120] sm:$0xff]
        %v814 = vld [vmem:[%s213 + $0x128] sm:$0xff]
        %v815 = vld [vmem:[%s213 + $0x130] sm:$0xff]
        %v816 = vld [vmem:[%s213 + $0x138] sm:$0xff]
        %v817 = vld [vmem:[%s213 + $0x140] sm:$0xff]
        %v818 = vld [vmem:[%s213 + $0x148] sm:$0xff]
        %v819 = vld [vmem:[%s213 + $0x150] sm:$0xff]
        %v820 = vld [vmem:[%s213 + $0x158] sm:$0xff]
        %v821 = vld [vmem:[%s213 + $0x160] sm:$0xff]
        %v822 = vld [vmem:[%s213 + $0x168] sm:$0xff]
        %v823 = vld [vmem:[%s213 + $0x170] sm:$0xff]
        %v824 = vld [vmem:[%s213 + $0x178] sm:$0xff]
        %v825 = vld [vmem:[%s213 + $0x180] sm:$0xff]
        %v826 = vld [vmem:[%s213 + $0x188] sm:$0xff]
        %v827 = vld [vmem:[%s213 + $0x190] sm:$0xff]
        %v828 = vld [vmem:[%s213 + $0x198] sm:$0xff]
        %v829 = vld [vmem:[%s213 + $0x1a0] sm:$0xff]
        %v830 = vld [vmem:[%s213 + $0x1a8] sm:$0xff]
        %v831 = vld [vmem:[%s213 + $0x1b0] sm:$0xff]
        %v832 = vld [vmem:[%s213 + $0x1b8] sm:$0xff]
        %v833 = vld [vmem:[%s213 + $0x1c0] sm:$0xff]
        %v834 = vld [vmem:[%s213 + $0x1c8] sm:$0xff]
        %v835 = vld [vmem:[%s213 + $0x1d0] sm:$0xff]
        %v836 = vld [vmem:[%s213 + $0x1d8] sm:$0xff]
        %v837 = vld [vmem:[%s213 + $0x1e0] sm:$0xff]
        %v838 = vld [vmem:[%s213 + $0x1e8] sm:$0xff]
        %v839 = vld [vmem:[%s213 + $0x1f0] sm:$0xff]
        %v840 = vld [vmem:[%s213 + $0x1f8] sm:$0xff]
        %v841 = vld [vmem:[%s213 + $0x200] sm:$0xff]
        %v842 = vld [vmem:[%s213 + $0x208] sm:$0xff]
        %v843 = vld [vmem:[%s213 + $0x210] sm:$0xff]
        %v844 = vld [vmem:[%s213 + $0x218] sm:$0xff]
        %v845 = vld [vmem:[%s213 + $0x220] sm:$0xff]
        %v846 = vld [vmem:[%s213 + $0x228] sm:$0xff]
        %v847 = vld [vmem:[%s213 + $0x230] sm:$0xff]
        %v848 = vld [vmem:[%s213 + $0x238] sm:$0xff]
        %v849 = vld [vmem:[%s213 + $0x240] sm:$0xff]
        %v850 = vld [vmem:[%s213 + $0x248] sm:$0xff]
        %v851 = vld [vmem:[%s213 + $0x250] sm:$0xff]
        %v852 = vld [vmem:[%s213 + $0x258] sm:$0xff]
        %v853 = vld [vmem:[%s213 + $0x260] sm:$0xff]
        %v854 = vld [vmem:[%s213 + $0x268] sm:$0xff]
        %v855 = vld [vmem:[%s213 + $0x270] sm:$0xff]
        %v856 = vld [vmem:[%s213 + $0x278] sm:$0xff]
        %v857 = vld [vmem:[%s213 + $0x280] sm:$0xff]
        %v858 = vld [vmem:[%s213 + $0x288] sm:$0xff]
        %v859 = vld [vmem:[%s213 + $0x290] sm:$0xff]
        %v860 = vld [vmem:[%s213 + $0x298] sm:$0xff]
        %v861 = vld [vmem:[%s213 + $0x2a0] sm:$0xff]
        %v862 = vld [vmem:[%s213 + $0x2a8] sm:$0xff]
        %v863 = vld [vmem:[%s213 + $0x2b0] sm:$0xff]
        %v864 = vld [vmem:[%s213 + $0x2b8] sm:$0xff]
        %v865 = vld [vmem:[%s213 + $0x2c0] sm:$0xff]
        %v866 = vld [vmem:[%s213 + $0x2c8] sm:$0xff]
        %v867 = vld [vmem:[%s213 + $0x2d0] sm:$0xff]
        %v868 = vld [vmem:[%s213 + $0x2d8] sm:$0xff]
        %v869 = vld [vmem:[%s213 + $0x2e0] sm:$0xff]
        %v870 = vld [vmem:[%s213 + $0x2e8] sm:$0xff]
        %v871 = vld [vmem:[%s213 + $0x2f0] sm:$0xff]
        %v872 = vld [vmem:[%s213 + $0x2f8] sm:$0xff]
        %v873 = vld [vmem:[%s213 + $0x300] sm:$0xff]
        %v874 = vld [vmem:[%s213 + $0x308] sm:$0xff]
        %v875 = vld [vmem:[%s213 + $0x310] sm:$0xff]
        %v876 = vld [vmem:[%s213 + $0x318] sm:$0xff]
        %v877 = vld [vmem:[%s213 + $0x320] sm:$0xff]
        %v878 = vld [vmem:[%s213 + $0x328] sm:$0xff]
        %v879 = vld [vmem:[%s213 + $0x330] sm:$0xff]
        %v880 = vld [vmem:[%s213 + $0x338] sm:$0xff]
        %v881 = vld [vmem:[%s213 + $0x340] sm:$0xff]
        %v882 = vld [vmem:[%s213 + $0x348] sm:$0xff]
        %v883 = vld [vmem:[%s213 + $0x350] sm:$0xff]
        %v884 = vld [vmem:[%s213 + $0x358] sm:$0xff]
        %v885 = vld [vmem:[%s213 + $0x360] sm:$0xff]
        %v886 = vld [vmem:[%s213 + $0x368] sm:$0xff]
        %v887 = vld [vmem:[%s213 + $0x370] sm:$0xff]
        %v888 = vld [vmem:[%s213 + $0x378] sm:$0xff]
        %v889 = vld [vmem:[%s213 + $0x380] sm:$0xff]
        %v890 = vld [vmem:[%s213 + $0x388] sm:$0xff]
        %v891 = vld [vmem:[%s213 + $0x390] sm:$0xff]
        %v892 = vld [vmem:[%s213 + $0x398] sm:$0xff]
        %v893 = vld [vmem:[%s213 + $0x3a0] sm:$0xff]
        %v894 = vld [vmem:[%s213 + $0x3a8] sm:$0xff]
        %v895 = vld [vmem:[%s213 + $0x3b0] sm:$0xff]
        %v896 = vld [vmem:[%s213 + $0x3b8] sm:$0xff]
        %v897 = vld [vmem:[%s213 + $0x3c0] sm:$0xff]
        %v898 = vld [vmem:[%s213 + $0x3c8] sm:$0xff]
        %v899 = vld [vmem:[%s213 + $0x3d0] sm:$0xff]
        %v900 = vld [vmem:[%s213 + $0x3d8] sm:$0xff]
        %v901 = vld [vmem:[%s213 + $0x3e0] sm:$0xff]
        %v902 = vld [vmem:[%s213 + $0x3e8] sm:$0xff]
        %v903 = vld [vmem:[%s213 + $0x3f0] sm:$0xff]
        %v904 = vld [vmem:[%s213 + $0x3f8] sm:$0xff]
        %v905 = vld [vmem:[%s213 + $0x400] sm:$0xff]
        %v906 = vld [vmem:[%s213 + $0x408] sm:$0xff]
        %v907 = vld [vmem:[%s213 + $0x410] sm:$0xff]
        %v908 = vld [vmem:[%s213 + $0x418] sm:$0xff]
        %v909 = vld [vmem:[%s213 + $0x420] sm:$0xff]
        %v910 = vld [vmem:[%s213 + $0x428] sm:$0xff]
        %v911 = vld [vmem:[%s213 + $0x430] sm:$0xff]
        %v912 = vld [vmem:[%s213 + $0x438] sm:$0xff]
        %v913 = vld [vmem:[%s213 + $0x440] sm:$0xff]
        %v914 = vld [vmem:[%s213 + $0x448] sm:$0xff]
        %v915 = vld [vmem:[%s213 + $0x450] sm:$0xff]
        %v916 = vld [vmem:[%s213 + $0x458] sm:$0xff]
        %v917 = vld [vmem:[%s213 + $0x460] sm:$0xff]
        %v918 = vld [vmem:[%s213 + $0x468] sm:$0xff]
        %v919 = vld [vmem:[%s213 + $0x470] sm:$0xff]
        %v920 = vld [vmem:[%s213 + $0x478] sm:$0xff]
        %v921 = vld [vmem:[%s213 + $0x480] sm:$0xff]
        %v922 = vld [vmem:[%s213 + $0x488] sm:$0xff]
        %v923 = vld [vmem:[%s213 + $0x490] sm:$0xff]
        %v924 = vld [vmem:[%s213 + $0x498] sm:$0xff]
        %v925 = vld [vmem:[%s213 + $0x4a0] sm:$0xff]
        %v926 = vld [vmem:[%s213 + $0x4a8] sm:$0xff]
        %v927 = vld [vmem:[%s213 + $0x4b0] sm:$0xff]
        %v928 = vld [vmem:[%s213 + $0x4b8] sm:$0xff]
        %v929 = vld [vmem:[%s213 + $0x4c0] sm:$0xff]
        %v930 = vld [vmem:[%s213 + $0x4c8] sm:$0xff]
        %v931 = vld [vmem:[%s213 + $0x4d0] sm:$0xff]
        %v932 = vld [vmem:[%s213 + $0x4d8] sm:$0xff]
        %v933 = vld [vmem:[%s213 + $0x4e0] sm:$0xff]
        %v934 = vld [vmem:[%s213 + $0x4e8] sm:$0xff]
        %v935 = vld [vmem:[%s213 + $0x4f0] sm:$0xff]
        %v936 = vld [vmem:[%s213 + $0x4f8] sm:$0xff]
        %v937 = vld [vmem:[%s213 + $0x500] sm:$0xff]
        %v938 = vld [vmem:[%s213 + $0x508] sm:$0xff]
        %v939 = vld [vmem:[%s213 + $0x510] sm:$0xff]
        %v940 = vld [vmem:[%s213 + $0x518] sm:$0xff]
        %v941 = vld [vmem:[%s213 + $0x520] sm:$0xff]
        %v942 = vld [vmem:[%s213 + $0x528] sm:$0xff]
        %v943 = vld [vmem:[%s213 + $0x530] sm:$0xff]
        %v944 = vld [vmem:[%s213 + $0x538] sm:$0xff]
        %v945 = vld [vmem:[%s213 + $0x540] sm:$0xff]
        %v946 = vld [vmem:[%s213 + $0x548] sm:$0xff]
        %v947 = vld [vmem:[%s213 + $0x550] sm:$0xff]
        %v948 = vld [vmem:[%s213 + $0x558] sm:$0xff]
        %v949 = vld [vmem:[%s213 + $0x560] sm:$0xff]
        %v950 = vld [vmem:[%s213 + $0x568] sm:$0xff]
        %v951 = vld [vmem:[%s213 + $0x570] sm:$0xff]
        %v952 = vld [vmem:[%s213 + $0x578] sm:$0xff]
        %v953 = vld [vmem:[%s213 + $0x580] sm:$0xff]
        %v954 = vld [vmem:[%s213 + $0x588] sm:$0xff]
        %v955 = vld [vmem:[%s213 + $0x590] sm:$0xff]
        %v956 = vld [vmem:[%s213 + $0x598] sm:$0xff]
        %v957 = vld [vmem:[%s213 + $0x5a0] sm:$0xff]
        %v958 = vld [vmem:[%s213 + $0x5a8] sm:$0xff]
        %v959 = vld [vmem:[%s213 + $0x5b0] sm:$0xff]
        %v960 = vld [vmem:[%s213 + $0x5b8] sm:$0xff]
        %v961 = vld [vmem:[%s213 + $0x5c0] sm:$0xff]
        %v962 = vld [vmem:[%s213 + $0x5c8] sm:$0xff]
        %v963 = vld [vmem:[%s213 + $0x5d0] sm:$0xff]
        %v964 = vld [vmem:[%s213 + $0x5d8] sm:$0xff]
        %v965 = vld [vmem:[%s213 + $0x5e0] sm:$0xff]
        %v966 = vld [vmem:[%s213 + $0x5e8] sm:$0xff]
        %v967 = vld [vmem:[%s213 + $0x5f0] sm:$0xff]
        %v968 = vld [vmem:[%s213 + $0x5f8] sm:$0xff]
        %v969 = vld [vmem:[%s213 + $0x600] sm:$0xff]
        %v970 = vld [vmem:[%s213 + $0x608] sm:$0xff]
        %v971 = vld [vmem:[%s213 + $0x610] sm:$0xff]
        %v972 = vld [vmem:[%s213 + $0x618] sm:$0xff]
        %v973 = vld [vmem:[%s213 + $0x620] sm:$0xff]
        %v974 = vld [vmem:[%s213 + $0x628] sm:$0xff]
        %v975 = vld [vmem:[%s213 + $0x630] sm:$0xff]
        %v976 = vld [vmem:[%s213 + $0x638] sm:$0xff]
        %v977 = vld [vmem:[%s213 + $0x640] sm:$0xff]
        %v978 = vld [vmem:[%s213 + $0x648] sm:$0xff]
        %v979 = vld [vmem:[%s213 + $0x650] sm:$0xff]
        %v980 = vld [vmem:[%s213 + $0x658] sm:$0xff]
        %v981 = vld [vmem:[%s213 + $0x660] sm:$0xff]
        %v982 = vld [vmem:[%s213 + $0x668] sm:$0xff]
        %v983 = vld [vmem:[%s213 + $0x670] sm:$0xff]
        %v984 = vld [vmem:[%s213 + $0x678] sm:$0xff]
        %v985 = vld [vmem:[%s213 + $0x680] sm:$0xff]
        %v986 = vld [vmem:[%s213 + $0x688] sm:$0xff]
        %v987 = vld [vmem:[%s213 + $0x690] sm:$0xff]
        %v988 = vld [vmem:[%s213 + $0x698] sm:$0xff]
        %v989 = vld [vmem:[%s213 + $0x6a0] sm:$0xff]
        %v990 = vld [vmem:[%s213 + $0x6a8] sm:$0xff]
        %v991 = vld [vmem:[%s213 + $0x6b0] sm:$0xff]
        %v992 = vld [vmem:[%s213 + $0x6b8] sm:$0xff]
        %v993 = vld [vmem:[%s213 + $0x6c0] sm:$0xff]
        %v994 = vld [vmem:[%s213 + $0x6c8] sm:$0xff]
        %v995 = vld [vmem:[%s213 + $0x6d0] sm:$0xff]
        %v996 = vld [vmem:[%s213 + $0x6d8] sm:$0xff]
        %v997 = vld [vmem:[%s213 + $0x6e0] sm:$0xff]
        %v998 = vld [vmem:[%s213 + $0x6e8] sm:$0xff]
        %v999 = vld [vmem:[%s213 + $0x6f0] sm:$0xff]
        %v1000 = vld [vmem:[%s213 + $0x6f8] sm:$0xff]
        %v1001 = vld [vmem:[%s213 + $0x700] sm:$0xff]
        %v1002 = vld [vmem:[%s213 + $0x708] sm:$0xff]
        %v1003 = vld [vmem:[%s213 + $0x710] sm:$0xff]
        %v1004 = vld [vmem:[%s213 + $0x718] sm:$0xff]
        %v1005 = vld [vmem:[%s213 + $0x720] sm:$0xff]
        %v1006 = vld [vmem:[%s213 + $0x728] sm:$0xff]
        %v1007 = vld [vmem:[%s213 + $0x730] sm:$0xff]
        %v1008 = vld [vmem:[%s213 + $0x738] sm:$0xff]
        %v1009 = vld [vmem:[%s213 + $0x740] sm:$0xff]
        %v1010 = vld [vmem:[%s213 + $0x748] sm:$0xff]
        %v1011 = vld [vmem:[%s213 + $0x750] sm:$0xff]
        %v1012 = vld [vmem:[%s213 + $0x758] sm:$0xff]
        %v1013 = vld [vmem:[%s213 + $0x760] sm:$0xff]
        %v1014 = vld [vmem:[%s213 + $0x768] sm:$0xff]
        %v1015 = vld [vmem:[%s213 + $0x770] sm:$0xff]
        %v1016 = vld [vmem:[%s213 + $0x778] sm:$0xff]
        %v1017 = vld [vmem:[%s213 + $0x780] sm:$0xff]
        %v1018 = vld [vmem:[%s213 + $0x788] sm:$0xff]
        %v1019 = vld [vmem:[%s213 + $0x790] sm:$0xff]
        %v1020 = vld [vmem:[%s213 + $0x798] sm:$0xff]
        %v1021 = vld [vmem:[%s213 + $0x7a0] sm:$0xff]
        %v1022 = vld [vmem:[%s213 + $0x7a8] sm:$0xff]
        %v1023 = vld [vmem:[%s213 + $0x7b0] sm:$0xff]
        %v1024 = vld [vmem:[%s213 + $0x7b8] sm:$0xff]
        %v1025 = vld [vmem:[%s213 + $0x7c0] sm:$0xff]
        %v1026 = vld [vmem:[%s213 + $0x7c8] sm:$0xff]
        %v1027 = vld [vmem:[%s213 + $0x7d0] sm:$0xff]
        %v1028 = vld [vmem:[%s213 + $0x7d8] sm:$0xff]
        %v1029 = vld [vmem:[%s213 + $0x7e0] sm:$0xff]
        %v1030 = vld [vmem:[%s213 + $0x7e8] sm:$0xff]
        %v1031 = vld [vmem:[%s213 + $0x7f0] sm:$0xff]
        %v1032 = vld [vmem:[%s213 + $0x7f8] sm:$0xff]
        %v1033 = vld [vmem:[%s213 + $0x800] sm:$0xff]
        %v1034 = vld [vmem:[%s213 + $0x808] sm:$0xff]
        %v1035 = vld [vmem:[%s213 + $0x810] sm:$0xff]
        %v1036 = vld [vmem:[%s213 + $0x818] sm:$0xff]
        %v1037 = vld [vmem:[%s213 + $0x820] sm:$0xff]
        %v1038 = vld [vmem:[%s213 + $0x828] sm:$0xff]
        %v1039 = vld [vmem:[%s213 + $0x830] sm:$0xff]
        %v1040 = vld [vmem:[%s213 + $0x838] sm:$0xff]
        %v1041 = vld [vmem:[%s213 + $0x840] sm:$0xff]
        %v1042 = vld [vmem:[%s213 + $0x848] sm:$0xff]
        %v1043 = vld [vmem:[%s213 + $0x850] sm:$0xff]
        %v1044 = vld [vmem:[%s213 + $0x858] sm:$0xff]
        %v1045 = vld [vmem:[%s213 + $0x860] sm:$0xff]
        %v1046 = vld [vmem:[%s213 + $0x868] sm:$0xff]
        %v1047 = vld [vmem:[%s213 + $0x870] sm:$0xff]
        %v1048 = vld [vmem:[%s213 + $0x878] sm:$0xff]
        %v1049 = vld [vmem:[%s213 + $0x880] sm:$0xff]
        %v1050 = vld [vmem:[%s213 + $0x888] sm:$0xff]
        %v1051 = vld [vmem:[%s213 + $0x890] sm:$0xff]
        %v1052 = vld [vmem:[%s213 + $0x898] sm:$0xff]
        %v1053 = vld [vmem:[%s213 + $0x8a0] sm:$0xff]
        %v1054 = vld [vmem:[%s213 + $0x8a8] sm:$0xff]
        %v1055 = vld [vmem:[%s213 + $0x8b0] sm:$0xff]
        %v1056 = vld [vmem:[%s213 + $0x8b8] sm:$0xff]
        %v1057 = vld [vmem:[%s213 + $0x8c0] sm:$0xff]
        %v1058 = vld [vmem:[%s213 + $0x8c8] sm:$0xff]
        %v1059 = vld [vmem:[%s213 + $0x8d0] sm:$0xff]
        %v1060 = vld [vmem:[%s213 + $0x8d8] sm:$0xff]
        %v1061 = vld [vmem:[%s213 + $0x8e0] sm:$0xff]
        %v1062 = vld [vmem:[%s213 + $0x8e8] sm:$0xff]
        %v1063 = vld [vmem:[%s213 + $0x8f0] sm:$0xff]
        %v1064 = vld [vmem:[%s213 + $0x8f8] sm:$0xff]
        %v1065 = vld [vmem:[%s213 + $0x900] sm:$0xff]
        %v1066 = vld [vmem:[%s213 + $0x908] sm:$0xff]
        %v1067 = vld [vmem:[%s213 + $0x910] sm:$0xff]
        %v1068 = vld [vmem:[%s213 + $0x918] sm:$0xff]
        %v1069 = vld [vmem:[%s213 + $0x920] sm:$0xff]
        %v1070 = vld [vmem:[%s213 + $0x928] sm:$0xff]
        %v1071 = vld [vmem:[%s213 + $0x930] sm:$0xff]
        %v1072 = vld [vmem:[%s213 + $0x938] sm:$0xff]
        %v1073 = vld [vmem:[%s213 + $0x940] sm:$0xff]
        %v1074 = vld [vmem:[%s213 + $0x948] sm:$0xff]
        %v1075 = vld [vmem:[%s213 + $0x950] sm:$0xff]
        %v1076 = vld [vmem:[%s213 + $0x958] sm:$0xff]
        %v1077 = vld [vmem:[%s213 + $0x960] sm:$0xff]
        %v1078 = vld [vmem:[%s213 + $0x968] sm:$0xff]
        %v1079 = vld [vmem:[%s213 + $0x970] sm:$0xff]
        %v1080 = vld [vmem:[%s213 + $0x978] sm:$0xff]
        %v1081 = vld [vmem:[%s213 + $0x980] sm:$0xff]
        %v1082 = vld [vmem:[%s213 + $0x988] sm:$0xff]
        %v1083 = vld [vmem:[%s213 + $0x990] sm:$0xff]
        %v1084 = vld [vmem:[%s213 + $0x998] sm:$0xff]
        %v1085 = vld [vmem:[%s213 + $0x9a0] sm:$0xff]
        %v1086 = vld [vmem:[%s213 + $0x9a8] sm:$0xff]
        %v1087 = vld [vmem:[%s213 + $0x9b0] sm:$0xff]
        %v1088 = vld [vmem:[%s213 + $0x9b8] sm:$0xff]
        %v1089 = vld [vmem:[%s213 + $0x9c0] sm:$0xff]
        %v1090 = vld [vmem:[%s213 + $0x9c8] sm:$0xff]
        %v1091 = vld [vmem:[%s213 + $0x9d0] sm:$0xff]
        %v1092 = vld [vmem:[%s213 + $0x9d8] sm:$0xff]
        %v1093 = vld [vmem:[%s213 + $0x9e0] sm:$0xff]
        %v1094 = vld [vmem:[%s213 + $0x9e8] sm:$0xff]
        %v1095 = vld [vmem:[%s213 + $0x9f0] sm:$0xff]
        %v1096 = vld [vmem:[%s213 + $0x9f8] sm:$0xff]
        %v1097 = vld [vmem:[%s213 + $0xa00] sm:$0xff]
        %v1098 = vld [vmem:[%s213 + $0xa08] sm:$0xff]
        %v1099 = vld [vmem:[%s213 + $0xa10] sm:$0xff]
        %v1100 = vld [vmem:[%s213 + $0xa18] sm:$0xff]
        %v1101 = vld [vmem:[%s213 + $0xa20] sm:$0xff]
        %v1102 = vld [vmem:[%s213 + $0xa28] sm:$0xff]
        %v1103 = vld [vmem:[%s213 + $0xa30] sm:$0xff]
        %v1104 = vld [vmem:[%s213 + $0xa38] sm:$0xff]
        %v1105 = vld [vmem:[%s213 + $0xa40] sm:$0xff]
        %v1106 = vld [vmem:[%s213 + $0xa48] sm:$0xff]
        %v1107 = vld [vmem:[%s213 + $0xa50] sm:$0xff]
        %v1108 = vld [vmem:[%s213 + $0xa58] sm:$0xff]
        %v1109 = vld [vmem:[%s213 + $0xa60] sm:$0xff]
        %v1110 = vld [vmem:[%s213 + $0xa68] sm:$0xff]
        %v1111 = vld [vmem:[%s213 + $0xa70] sm:$0xff]
        %v1112 = vld [vmem:[%s213 + $0xa78] sm:$0xff]
        %v1113 = vld [vmem:[%s213 + $0xa80] sm:$0xff]
        %v1114 = vld [vmem:[%s213 + $0xa88] sm:$0xff]
        %v1115 = vld [vmem:[%s213 + $0xa90] sm:$0xff]
        %v1116 = vld [vmem:[%s213 + $0xa98] sm:$0xff]
        %v1117 = vld [vmem:[%s213 + $0xaa0] sm:$0xff]
        %v1118 = vld [vmem:[%s213 + $0xaa8] sm:$0xff]
        %v1119 = vld [vmem:[%s213 + $0xab0] sm:$0xff]
        %v1120 = vld [vmem:[%s213 + $0xab8] sm:$0xff]
        %v1121 = vld [vmem:[%s213 + $0xac0] sm:$0xff]
        %v1122 = vld [vmem:[%s213 + $0xac8] sm:$0xff]
        %v1123 = vld [vmem:[%s213 + $0xad0] sm:$0xff]
        %v1124 = vld [vmem:[%s213 + $0xad8] sm:$0xff]
        %v1125 = vld [vmem:[%s213 + $0xae0] sm:$0xff]
        %v1126 = vld [vmem:[%s213 + $0xae8] sm:$0xff]
        %v1127 = vld [vmem:[%s213 + $0xaf0] sm:$0xff]
        %v1128 = vld [vmem:[%s213 + $0xaf8] sm:$0xff]
        %v1129 = vld [vmem:[%s213 + $0xb00] sm:$0xff]
        %v1130 = vld [vmem:[%s213 + $0xb08] sm:$0xff]
        %v1131 = vld [vmem:[%s213 + $0xb10] sm:$0xff]
        %v1132 = vld [vmem:[%s213 + $0xb18] sm:$0xff]
        %v1133 = vld [vmem:[%s213 + $0xb20] sm:$0xff]
        %v1134 = vld [vmem:[%s213 + $0xb28] sm:$0xff]
        %v1135 = vld [vmem:[%s213 + $0xb30] sm:$0xff]
        %v1136 = vld [vmem:[%s213 + $0xb38] sm:$0xff]
        %v1137 = vld [vmem:[%s213 + $0xb40] sm:$0xff]
        %v1138 = vld [vmem:[%s213 + $0xb48] sm:$0xff]
        %v1139 = vld [vmem:[%s213 + $0xb50] sm:$0xff]
        %v1140 = vld [vmem:[%s213 + $0xb58] sm:$0xff]
        %v1141 = vld [vmem:[%s213 + $0xb60] sm:$0xff]
        %v1142 = vld [vmem:[%s213 + $0xb68] sm:$0xff]
        %v1143 = vld [vmem:[%s213 + $0xb70] sm:$0xff]
        %v1144 = vld [vmem:[%s213 + $0xb78] sm:$0xff]
        %v1145 = vld [vmem:[%s213 + $0xb80] sm:$0xff]
        %v1146 = vld [vmem:[%s213 + $0xb88] sm:$0xff]
        %v1147 = vld [vmem:[%s213 + $0xb90] sm:$0xff]
        %v1148 = vld [vmem:[%s213 + $0xb98] sm:$0xff]
        %v1149 = vld [vmem:[%s213 + $0xba0] sm:$0xff]
        %v1150 = vld [vmem:[%s213 + $0xba8] sm:$0xff]
        %v1151 = vld [vmem:[%s213 + $0xbb0] sm:$0xff]
        %v1152 = vld [vmem:[%s213 + $0xbb8] sm:$0xff]
        %v1153 = vld [vmem:[%s213 + $0xbc0] sm:$0xff]
        %v1154 = vld [vmem:[%s213 + $0xbc8] sm:$0xff]
        %v1155 = vld [vmem:[%s213 + $0xbd0] sm:$0xff]
        %v1156 = vld [vmem:[%s213 + $0xbd8] sm:$0xff]
        %v1157 = vld [vmem:[%s213 + $0xbe0] sm:$0xff]
        %v1158 = vld [vmem:[%s213 + $0xbe8] sm:$0xff]
        %v1159 = vld [vmem:[%s213 + $0xbf0] sm:$0xff]
        %v1160 = vld [vmem:[%s213 + $0xbf8] sm:$0xff]
        %v1161 = vld [vmem:[%s213 + $0xc00] sm:$0xff]
        %v1162 = vld [vmem:[%s213 + $0xc08] sm:$0xff]
        %v1163 = vld [vmem:[%s213 + $0xc10] sm:$0xff]
        %v1164 = vld [vmem:[%s213 + $0xc18] sm:$0xff]
        %v1165 = vld [vmem:[%s213 + $0xc20] sm:$0xff]
        %v1166 = vld [vmem:[%s213 + $0xc28] sm:$0xff]
        %v1167 = vld [vmem:[%s213 + $0xc30] sm:$0xff]
        %v1168 = vld [vmem:[%s213 + $0xc38] sm:$0xff]
        %v1169 = vld [vmem:[%s213 + $0xc40] sm:$0xff]
        %v1170 = vld [vmem:[%s213 + $0xc48] sm:$0xff]
        %v1171 = vld [vmem:[%s213 + $0xc50] sm:$0xff]
        %v1172 = vld [vmem:[%s213 + $0xc58] sm:$0xff]
        %v1173 = vld [vmem:[%s213 + $0xc60] sm:$0xff]
        %v1174 = vld [vmem:[%s213 + $0xc68] sm:$0xff]
        %v1175 = vld [vmem:[%s213 + $0xc70] sm:$0xff]
        %v1176 = vld [vmem:[%s213 + $0xc78] sm:$0xff]
        %v1177 = vld [vmem:[%s213 + $0xc80] sm:$0xff]
        %v1178 = vld [vmem:[%s213 + $0xc88] sm:$0xff]
        %v1179 = vld [vmem:[%s213 + $0xc90] sm:$0xff]
        %v1180 = vld [vmem:[%s213 + $0xc98] sm:$0xff]
        %v1181 = vld [vmem:[%s213 + $0xca0] sm:$0xff]
        %v1182 = vld [vmem:[%s213 + $0xca8] sm:$0xff]
        %v1183 = vld [vmem:[%s213 + $0xcb0] sm:$0xff]
        %v1184 = vld [vmem:[%s213 + $0xcb8] sm:$0xff]
        %v1185 = vld [vmem:[%s213 + $0xcc0] sm:$0xff]
        %v1186 = vld [vmem:[%s213 + $0xcc8] sm:$0xff]
        %v1187 = vld [vmem:[%s213 + $0xcd0] sm:$0xff]
        %v1188 = vld [vmem:[%s213 + $0xcd8] sm:$0xff]
        %v1189 = vld [vmem:[%s213 + $0xce0] sm:$0xff]
        %v1190 = vld [vmem:[%s213 + $0xce8] sm:$0xff]
        %v1191 = vld [vmem:[%s213 + $0xcf0] sm:$0xff]
        %v1192 = vld [vmem:[%s213 + $0xcf8] sm:$0xff]
        %v1193 = vld [vmem:[%s213 + $0xd00] sm:$0xff]
        %v1194 = vld [vmem:[%s213 + $0xd08] sm:$0xff]
        %v1195 = vld [vmem:[%s213 + $0xd10] sm:$0xff]
        %v1196 = vld [vmem:[%s213 + $0xd18] sm:$0xff]
        %v1197 = vld [vmem:[%s213 + $0xd20] sm:$0xff]
        %v1198 = vld [vmem:[%s213 + $0xd28] sm:$0xff]
        %v1199 = vld [vmem:[%s213 + $0xd30] sm:$0xff]
        %v1200 = vld [vmem:[%s213 + $0xd38] sm:$0xff]
        %v1201 = vld [vmem:[%s213 + $0xd40] sm:$0xff]
        %v1202 = vld [vmem:[%s213 + $0xd48] sm:$0xff]
        %v1203 = vld [vmem:[%s213 + $0xd50] sm:$0xff]
        %v1204 = vld [vmem:[%s213 + $0xd58] sm:$0xff]
        %v1205 = vld [vmem:[%s213 + $0xd60] sm:$0xff]
        %v1206 = vld [vmem:[%s213 + $0xd68] sm:$0xff]
        %v1207 = vld [vmem:[%s213 + $0xd70] sm:$0xff]
        %v1208 = vld [vmem:[%s213 + $0xd78] sm:$0xff]
        %v1209 = vld [vmem:[%s213 + $0xd80] sm:$0xff]
        %v1210 = vld [vmem:[%s213 + $0xd88] sm:$0xff]
        %v1211 = vld [vmem:[%s213 + $0xd90] sm:$0xff]
        %v1212 = vld [vmem:[%s213 + $0xd98] sm:$0xff]
        %v1213 = vld [vmem:[%s213 + $0xda0] sm:$0xff]
        %v1214 = vld [vmem:[%s213 + $0xda8] sm:$0xff]
        %v1215 = vld [vmem:[%s213 + $0xdb0] sm:$0xff]
        %v1216 = vld [vmem:[%s213 + $0xdb8] sm:$0xff]
        %v1217 = vld [vmem:[%s213 + $0xdc0] sm:$0xff]
        %v1218 = vld [vmem:[%s213 + $0xdc8] sm:$0xff]
        %v1219 = vld [vmem:[%s213 + $0xdd0] sm:$0xff]
        %v1220 = vld [vmem:[%s213 + $0xdd8] sm:$0xff]
        %v1221 = vld [vmem:[%s213 + $0xde0] sm:$0xff]
        %v1222 = vld [vmem:[%s213 + $0xde8] sm:$0xff]
        %v1223 = vld [vmem:[%s213 + $0xdf0] sm:$0xff]
        %v1224 = vld [vmem:[%s213 + $0xdf8] sm:$0xff]
        %v1225 = vld [vmem:[%s213 + $0xe00] sm:$0xff]
        %v1226 = vld [vmem:[%s213 + $0xe08] sm:$0xff]
        %v1227 = vld [vmem:[%s213 + $0xe10] sm:$0xff]
        %v1228 = vld [vmem:[%s213 + $0xe18] sm:$0xff]
        %v1229 = vld [vmem:[%s213 + $0xe20] sm:$0xff]
        %v1230 = vld [vmem:[%s213 + $0xe28] sm:$0xff]
        %v1231 = vld [vmem:[%s213 + $0xe30] sm:$0xff]
        %v1232 = vld [vmem:[%s213 + $0xe38] sm:$0xff]
        %v1233 = vld [vmem:[%s213 + $0xe40] sm:$0xff]
        %v1234 = vld [vmem:[%s213 + $0xe48] sm:$0xff]
        %v1235 = vld [vmem:[%s213 + $0xe50] sm:$0xff]
        %v1236 = vld [vmem:[%s213 + $0xe58] sm:$0xff]
        %v1237 = vld [vmem:[%s213 + $0xe60] sm:$0xff]
        %v1238 = vld [vmem:[%s213 + $0xe68] sm:$0xff]
        %v1239 = vld [vmem:[%s213 + $0xe70] sm:$0xff]
        %v1240 = vld [vmem:[%s213 + $0xe78] sm:$0xff]
        %v1241 = vld [vmem:[%s213 + $0xe80] sm:$0xff]
        %v1242 = vld [vmem:[%s213 + $0xe88] sm:$0xff]
        %v1243 = vld [vmem:[%s213 + $0xe90] sm:$0xff]
        %v1244 = vld [vmem:[%s213 + $0xe98] sm:$0xff]
        %v1245 = vld [vmem:[%s213 + $0xea0] sm:$0xff]
        %v1246 = vld [vmem:[%s213 + $0xea8] sm:$0xff]
        %v1247 = vld [vmem:[%s213 + $0xeb0] sm:$0xff]
        %v1248 = vld [vmem:[%s213 + $0xeb8] sm:$0xff]
        %v1249 = vld [vmem:[%s213 + $0xec0] sm:$0xff]
        %v1250 = vld [vmem:[%s213 + $0xec8] sm:$0xff]
        %v1251 = vld [vmem:[%s213 + $0xed0] sm:$0xff]
        %v1252 = vld [vmem:[%s213 + $0xed8] sm:$0xff]
        %v1253 = vld [vmem:[%s213 + $0xee0] sm:$0xff]
        %v1254 = vld [vmem:[%s213 + $0xee8] sm:$0xff]
        %v1255 = vld [vmem:[%s213 + $0xef0] sm:$0xff]
        %v1256 = vld [vmem:[%s213 + $0xef8] sm:$0xff]
        %v1257 = vld [vmem:[%s213 + $0xf00] sm:$0xff]
        %v1258 = vld [vmem:[%s213 + $0xf08] sm:$0xff]
        %v1259 = vld [vmem:[%s213 + $0xf10] sm:$0xff]
        %v1260 = vld [vmem:[%s213 + $0xf18] sm:$0xff]
        %v1261 = vld [vmem:[%s213 + $0xf20] sm:$0xff]
        %v1262 = vld [vmem:[%s213 + $0xf28] sm:$0xff]
        %v1263 = vld [vmem:[%s213 + $0xf30] sm:$0xff]
        %v1264 = vld [vmem:[%s213 + $0xf38] sm:$0xff]
        %v1265 = vld [vmem:[%s213 + $0xf40] sm:$0xff]
        %v1266 = vld [vmem:[%s213 + $0xf48] sm:$0xff]
        %v1267 = vld [vmem:[%s213 + $0xf50] sm:$0xff]
        %v1268 = vld [vmem:[%s213 + $0xf58] sm:$0xff]
        %v1269 = vld [vmem:[%s213 + $0xf60] sm:$0xff]
        %v1270 = vld [vmem:[%s213 + $0xf68] sm:$0xff]
        %v1271 = vld [vmem:[%s213 + $0xf70] sm:$0xff]
        %v1272 = vld [vmem:[%s213 + $0xf78] sm:$0xff]
        %v1273 = vld [vmem:[%s213 + $0xf80] sm:$0xff]
        %v1274 = vld [vmem:[%s213 + $0xf88] sm:$0xff]
        %v1275 = vld [vmem:[%s213 + $0xf90] sm:$0xff]
        %v1276 = vld [vmem:[%s213 + $0xf98] sm:$0xff]
        %v1277 = vld [vmem:[%s213 + $0xfa0] sm:$0xff]
        %v1278 = vld [vmem:[%s213 + $0xfa8] sm:$0xff]
        %v1279 = vld [vmem:[%s213 + $0xfb0] sm:$0xff]
        %v1280 = vld [vmem:[%s213 + $0xfb8] sm:$0xff]
        %v1281 = vld [vmem:[%s213 + $0xfc0] sm:$0xff]
        %v1282 = vld [vmem:[%s213 + $0xfc8] sm:$0xff]
        %v1283 = vld [vmem:[%s213 + $0xfd0] sm:$0xff]
        %v1284 = vld [vmem:[%s213 + $0xfd8] sm:$0xff]
        %v1285 = vld [vmem:[%s213 + $0xfe0] sm:$0xff]
        %v1286 = vld [vmem:[%s213 + $0xfe8] sm:$0xff]
        %v1287 = vld [vmem:[%s213 + $0xff0] sm:$0xff]
        %v1288 = vld [vmem:[%s213 + $0xff8] sm:$0xff]
        %v1289 = vld [vmem:[%s222] sm:$0xff]
        %v1290 = vld [vmem:[%s222 + $0x8] sm:$0xff]
        %v1291 = vld [vmem:[%s222 + $0x10] sm:$0xff]
        %v1292 = vld [vmem:[%s222 + $0x18] sm:$0xff]
        %v1293 = vld [vmem:[%s222 + $0x20] sm:$0xff]
        %v1294 = vld [vmem:[%s222 + $0x28] sm:$0xff]
        %v1295 = vld [vmem:[%s222 + $0x30] sm:$0xff]
        %v1296 = vld [vmem:[%s222 + $0x38] sm:$0xff]
        %v1297 = vld [vmem:[%s222 + $0x40] sm:$0xff]
        %v1298 = vld [vmem:[%s222 + $0x48] sm:$0xff]
        %v1299 = vld [vmem:[%s222 + $0x50] sm:$0xff]
        %v1300 = vld [vmem:[%s222 + $0x58] sm:$0xff]
        %v1301 = vld [vmem:[%s222 + $0x60] sm:$0xff]
        %v1302 = vld [vmem:[%s222 + $0x68] sm:$0xff]
        %v1303 = vld [vmem:[%s222 + $0x70] sm:$0xff]
        %v1304 = vld [vmem:[%s222 + $0x78] sm:$0xff]
        %v1305 = vld [vmem:[%s222 + $0x80] sm:$0xff]
        %v1306 = vld [vmem:[%s222 + $0x88] sm:$0xff]
        %v1307 = vld [vmem:[%s222 + $0x90] sm:$0xff]
        %v1308 = vld [vmem:[%s222 + $0x98] sm:$0xff]
        %v1309 = vld [vmem:[%s222 + $0xa0] sm:$0xff]
        %v1310 = vld [vmem:[%s222 + $0xa8] sm:$0xff]
        %v1311 = vld [vmem:[%s222 + $0xb0] sm:$0xff]
        %v1312 = vld [vmem:[%s222 + $0xb8] sm:$0xff]
        %v1313 = vld [vmem:[%s222 + $0xc0] sm:$0xff]
        %v1314 = vld [vmem:[%s222 + $0xc8] sm:$0xff]
        %v1315 = vld [vmem:[%s222 + $0xd0] sm:$0xff]
        %v1316 = vld [vmem:[%s222 + $0xd8] sm:$0xff]
        %v1317 = vld [vmem:[%s222 + $0xe0] sm:$0xff]
        %v1318 = vld [vmem:[%s222 + $0xe8] sm:$0xff]
        %v1319 = vld [vmem:[%s222 + $0xf0] sm:$0xff]
        %v1320 = vld [vmem:[%s222 + $0xf8] sm:$0xff]
        %v1321 = vld [vmem:[%s222 + $0x100] sm:$0xff]
        %v1322 = vld [vmem:[%s222 + $0x108] sm:$0xff]
        %v1323 = vld [vmem:[%s222 + $0x110] sm:$0xff]
        %v1324 = vld [vmem:[%s222 + $0x118] sm:$0xff]
        %v1325 = vld [vmem:[%s222 + $0x120] sm:$0xff]
        %v1326 = vld [vmem:[%s222 + $0x128] sm:$0xff]
        %v1327 = vld [vmem:[%s222 + $0x130] sm:$0xff]
        %v1328 = vld [vmem:[%s222 + $0x138] sm:$0xff]
        %v1329 = vld [vmem:[%s222 + $0x140] sm:$0xff]
        %v1330 = vld [vmem:[%s222 + $0x148] sm:$0xff]
        %v1331 = vld [vmem:[%s222 + $0x150] sm:$0xff]
        %v1332 = vld [vmem:[%s222 + $0x158] sm:$0xff]
        %v1333 = vld [vmem:[%s222 + $0x160] sm:$0xff]
        %v1334 = vld [vmem:[%s222 + $0x168] sm:$0xff]
        %v1335 = vld [vmem:[%s222 + $0x170] sm:$0xff]
        %v1336 = vld [vmem:[%s222 + $0x178] sm:$0xff]
        %v1337 = vld [vmem:[%s222 + $0x180] sm:$0xff]
        %v1338 = vld [vmem:[%s222 + $0x188] sm:$0xff]
        %v1339 = vld [vmem:[%s222 + $0x190] sm:$0xff]
        %v1340 = vld [vmem:[%s222 + $0x198] sm:$0xff]
        %v1341 = vld [vmem:[%s222 + $0x1a0] sm:$0xff]
        %v1342 = vld [vmem:[%s222 + $0x1a8] sm:$0xff]
        %v1343 = vld [vmem:[%s222 + $0x1b0] sm:$0xff]
        %v1344 = vld [vmem:[%s222 + $0x1b8] sm:$0xff]
        %v1345 = vld [vmem:[%s222 + $0x1c0] sm:$0xff]
        %v1346 = vld [vmem:[%s222 + $0x1c8] sm:$0xff]
        %v1347 = vld [vmem:[%s222 + $0x1d0] sm:$0xff]
        %v1348 = vld [vmem:[%s222 + $0x1d8] sm:$0xff]
        %v1349 = vld [vmem:[%s222 + $0x1e0] sm:$0xff]
        %v1350 = vld [vmem:[%s222 + $0x1e8] sm:$0xff]
        %v1351 = vld [vmem:[%s222 + $0x1f0] sm:$0xff]
        %v1352 = vld [vmem:[%s222 + $0x1f8] sm:$0xff]
        %v1353 = vld [vmem:[%s222 + $0x200] sm:$0xff]
        %v1354 = vld [vmem:[%s222 + $0x208] sm:$0xff]
        %v1355 = vld [vmem:[%s222 + $0x210] sm:$0xff]
        %v1356 = vld [vmem:[%s222 + $0x218] sm:$0xff]
        %v1357 = vld [vmem:[%s222 + $0x220] sm:$0xff]
        %v1358 = vld [vmem:[%s222 + $0x228] sm:$0xff]
        %v1359 = vld [vmem:[%s222 + $0x230] sm:$0xff]
        %v1360 = vld [vmem:[%s222 + $0x238] sm:$0xff]
        %v1361 = vld [vmem:[%s222 + $0x240] sm:$0xff]
        %v1362 = vld [vmem:[%s222 + $0x248] sm:$0xff]
        %v1363 = vld [vmem:[%s222 + $0x250] sm:$0xff]
        %v1364 = vld [vmem:[%s222 + $0x258] sm:$0xff]
        %v1365 = vld [vmem:[%s222 + $0x260] sm:$0xff]
        %v1366 = vld [vmem:[%s222 + $0x268] sm:$0xff]
        %v1367 = vld [vmem:[%s222 + $0x270] sm:$0xff]
        %v1368 = vld [vmem:[%s222 + $0x278] sm:$0xff]
        %v1369 = vld [vmem:[%s222 + $0x280] sm:$0xff]
        %v1370 = vld [vmem:[%s222 + $0x288] sm:$0xff]
        %v1371 = vld [vmem:[%s222 + $0x290] sm:$0xff]
        %v1372 = vld [vmem:[%s222 + $0x298] sm:$0xff]
        %v1373 = vld [vmem:[%s222 + $0x2a0] sm:$0xff]
        %v1374 = vld [vmem:[%s222 + $0x2a8] sm:$0xff]
        %v1375 = vld [vmem:[%s222 + $0x2b0] sm:$0xff]
        %v1376 = vld [vmem:[%s222 + $0x2b8] sm:$0xff]
        %v1377 = vld [vmem:[%s222 + $0x2c0] sm:$0xff]
        %v1378 = vld [vmem:[%s222 + $0x2c8] sm:$0xff]
        %v1379 = vld [vmem:[%s222 + $0x2d0] sm:$0xff]
        %v1380 = vld [vmem:[%s222 + $0x2d8] sm:$0xff]
        %v1381 = vld [vmem:[%s222 + $0x2e0] sm:$0xff]
        %v1382 = vld [vmem:[%s222 + $0x2e8] sm:$0xff]
        %v1383 = vld [vmem:[%s222 + $0x2f0] sm:$0xff]
        %v1384 = vld [vmem:[%s222 + $0x2f8] sm:$0xff]
        %v1385 = vld [vmem:[%s222 + $0x300] sm:$0xff]
        %v1386 = vld [vmem:[%s222 + $0x308] sm:$0xff]
        %v1387 = vld [vmem:[%s222 + $0x310] sm:$0xff]
        %v1388 = vld [vmem:[%s222 + $0x318] sm:$0xff]
        %v1389 = vld [vmem:[%s222 + $0x320] sm:$0xff]
        %v1390 = vld [vmem:[%s222 + $0x328] sm:$0xff]
        %v1391 = vld [vmem:[%s222 + $0x330] sm:$0xff]
        %v1392 = vld [vmem:[%s222 + $0x338] sm:$0xff]
        %v1393 = vld [vmem:[%s222 + $0x340] sm:$0xff]
        %v1394 = vld [vmem:[%s222 + $0x348] sm:$0xff]
        %v1395 = vld [vmem:[%s222 + $0x350] sm:$0xff]
        %v1396 = vld [vmem:[%s222 + $0x358] sm:$0xff]
        %v1397 = vld [vmem:[%s222 + $0x360] sm:$0xff]
        %v1398 = vld [vmem:[%s222 + $0x368] sm:$0xff]
        %v1399 = vld [vmem:[%s222 + $0x370] sm:$0xff]
        %v1400 = vld [vmem:[%s222 + $0x378] sm:$0xff]
        %v1401 = vld [vmem:[%s222 + $0x380] sm:$0xff]
        %v1402 = vld [vmem:[%s222 + $0x388] sm:$0xff]
        %v1403 = vld [vmem:[%s222 + $0x390] sm:$0xff]
        %v1404 = vld [vmem:[%s222 + $0x398] sm:$0xff]
        %v1405 = vld [vmem:[%s222 + $0x3a0] sm:$0xff]
        %v1406 = vld [vmem:[%s222 + $0x3a8] sm:$0xff]
        %v1407 = vld [vmem:[%s222 + $0x3b0] sm:$0xff]
        %v1408 = vld [vmem:[%s222 + $0x3b8] sm:$0xff]
        %v1409 = vld [vmem:[%s222 + $0x3c0] sm:$0xff]
        %v1410 = vld [vmem:[%s222 + $0x3c8] sm:$0xff]
        %v1411 = vld [vmem:[%s222 + $0x3d0] sm:$0xff]
        %v1412 = vld [vmem:[%s222 + $0x3d8] sm:$0xff]
        %v1413 = vld [vmem:[%s222 + $0x3e0] sm:$0xff]
        %v1414 = vld [vmem:[%s222 + $0x3e8] sm:$0xff]
        %v1415 = vld [vmem:[%s222 + $0x3f0] sm:$0xff]
        %v1416 = vld [vmem:[%s222 + $0x3f8] sm:$0xff]
        %v1417 = vld [vmem:[%s222 + $0x400] sm:$0xff]
        %v1418 = vld [vmem:[%s222 + $0x408] sm:$0xff]
        %v1419 = vld [vmem:[%s222 + $0x410] sm:$0xff]
        %v1420 = vld [vmem:[%s222 + $0x418] sm:$0xff]
        %v1421 = vld [vmem:[%s222 + $0x420] sm:$0xff]
        %v1422 = vld [vmem:[%s222 + $0x428] sm:$0xff]
        %v1423 = vld [vmem:[%s222 + $0x430] sm:$0xff]
        %v1424 = vld [vmem:[%s222 + $0x438] sm:$0xff]
        %v1425 = vld [vmem:[%s222 + $0x440] sm:$0xff]
        %v1426 = vld [vmem:[%s222 + $0x448] sm:$0xff]
        %v1427 = vld [vmem:[%s222 + $0x450] sm:$0xff]
        %v1428 = vld [vmem:[%s222 + $0x458] sm:$0xff]
        %v1429 = vld [vmem:[%s222 + $0x460] sm:$0xff]
        %v1430 = vld [vmem:[%s222 + $0x468] sm:$0xff]
        %v1431 = vld [vmem:[%s222 + $0x470] sm:$0xff]
        %v1432 = vld [vmem:[%s222 + $0x478] sm:$0xff]
        %v1433 = vld [vmem:[%s222 + $0x480] sm:$0xff]
        %v1434 = vld [vmem:[%s222 + $0x488] sm:$0xff]
        %v1435 = vld [vmem:[%s222 + $0x490] sm:$0xff]
        %v1436 = vld [vmem:[%s222 + $0x498] sm:$0xff]
        %v1437 = vld [vmem:[%s222 + $0x4a0] sm:$0xff]
        %v1438 = vld [vmem:[%s222 + $0x4a8] sm:$0xff]
        %v1439 = vld [vmem:[%s222 + $0x4b0] sm:$0xff]
        %v1440 = vld [vmem:[%s222 + $0x4b8] sm:$0xff]
        %v1441 = vld [vmem:[%s222 + $0x4c0] sm:$0xff]
        %v1442 = vld [vmem:[%s222 + $0x4c8] sm:$0xff]
        %v1443 = vld [vmem:[%s222 + $0x4d0] sm:$0xff]
        %v1444 = vld [vmem:[%s222 + $0x4d8] sm:$0xff]
        %v1445 = vld [vmem:[%s222 + $0x4e0] sm:$0xff]
        %v1446 = vld [vmem:[%s222 + $0x4e8] sm:$0xff]
        %v1447 = vld [vmem:[%s222 + $0x4f0] sm:$0xff]
        %v1448 = vld [vmem:[%s222 + $0x4f8] sm:$0xff]
        %v1449 = vld [vmem:[%s222 + $0x500] sm:$0xff]
        %v1450 = vld [vmem:[%s222 + $0x508] sm:$0xff]
        %v1451 = vld [vmem:[%s222 + $0x510] sm:$0xff]
        %v1452 = vld [vmem:[%s222 + $0x518] sm:$0xff]
        %v1453 = vld [vmem:[%s222 + $0x520] sm:$0xff]
        %v1454 = vld [vmem:[%s222 + $0x528] sm:$0xff]
        %v1455 = vld [vmem:[%s222 + $0x530] sm:$0xff]
        %v1456 = vld [vmem:[%s222 + $0x538] sm:$0xff]
        %v1457 = vld [vmem:[%s222 + $0x540] sm:$0xff]
        %v1458 = vld [vmem:[%s222 + $0x548] sm:$0xff]
        %v1459 = vld [vmem:[%s222 + $0x550] sm:$0xff]
        %v1460 = vld [vmem:[%s222 + $0x558] sm:$0xff]
        %v1461 = vld [vmem:[%s222 + $0x560] sm:$0xff]
        %v1462 = vld [vmem:[%s222 + $0x568] sm:$0xff]
        %v1463 = vld [vmem:[%s222 + $0x570] sm:$0xff]
        %v1464 = vld [vmem:[%s222 + $0x578] sm:$0xff]
        %v1465 = vld [vmem:[%s222 + $0x580] sm:$0xff]
        %v1466 = vld [vmem:[%s222 + $0x588] sm:$0xff]
        %v1467 = vld [vmem:[%s222 + $0x590] sm:$0xff]
        %v1468 = vld [vmem:[%s222 + $0x598] sm:$0xff]
        %v1469 = vld [vmem:[%s222 + $0x5a0] sm:$0xff]
        %v1470 = vld [vmem:[%s222 + $0x5a8] sm:$0xff]
        %v1471 = vld [vmem:[%s222 + $0x5b0] sm:$0xff]
        %v1472 = vld [vmem:[%s222 + $0x5b8] sm:$0xff]
        %v1473 = vld [vmem:[%s222 + $0x5c0] sm:$0xff]
        %v1474 = vld [vmem:[%s222 + $0x5c8] sm:$0xff]
        %v1475 = vld [vmem:[%s222 + $0x5d0] sm:$0xff]
        %v1476 = vld [vmem:[%s222 + $0x5d8] sm:$0xff]
        %v1477 = vld [vmem:[%s222 + $0x5e0] sm:$0xff]
        %v1478 = vld [vmem:[%s222 + $0x5e8] sm:$0xff]
        %v1479 = vld [vmem:[%s222 + $0x5f0] sm:$0xff]
        %v1480 = vld [vmem:[%s222 + $0x5f8] sm:$0xff]
        %v1481 = vld [vmem:[%s222 + $0x600] sm:$0xff]
        %v1482 = vld [vmem:[%s222 + $0x608] sm:$0xff]
        %v1483 = vld [vmem:[%s222 + $0x610] sm:$0xff]
        %v1484 = vld [vmem:[%s222 + $0x618] sm:$0xff]
        %v1485 = vld [vmem:[%s222 + $0x620] sm:$0xff]
        %v1486 = vld [vmem:[%s222 + $0x628] sm:$0xff]
        %v1487 = vld [vmem:[%s222 + $0x630] sm:$0xff]
        %v1488 = vld [vmem:[%s222 + $0x638] sm:$0xff]
        %v1489 = vld [vmem:[%s222 + $0x640] sm:$0xff]
        %v1490 = vld [vmem:[%s222 + $0x648] sm:$0xff]
        %v1491 = vld [vmem:[%s222 + $0x650] sm:$0xff]
        %v1492 = vld [vmem:[%s222 + $0x658] sm:$0xff]
        %v1493 = vld [vmem:[%s222 + $0x660] sm:$0xff]
        %v1494 = vld [vmem:[%s222 + $0x668] sm:$0xff]
        %v1495 = vld [vmem:[%s222 + $0x670] sm:$0xff]
        %v1496 = vld [vmem:[%s222 + $0x678] sm:$0xff]
        %v1497 = vld [vmem:[%s222 + $0x680] sm:$0xff]
        %v1498 = vld [vmem:[%s222 + $0x688] sm:$0xff]
        %v1499 = vld [vmem:[%s222 + $0x690] sm:$0xff]
        %v1500 = vld [vmem:[%s222 + $0x698] sm:$0xff]
        %v1501 = vld [vmem:[%s222 + $0x6a0] sm:$0xff]
        %v1502 = vld [vmem:[%s222 + $0x6a8] sm:$0xff]
        %v1503 = vld [vmem:[%s222 + $0x6b0] sm:$0xff]
        %v1504 = vld [vmem:[%s222 + $0x6b8] sm:$0xff]
        %v1505 = vld [vmem:[%s222 + $0x6c0] sm:$0xff]
        %v1506 = vld [vmem:[%s222 + $0x6c8] sm:$0xff]
        %v1507 = vld [vmem:[%s222 + $0x6d0] sm:$0xff]
        %v1508 = vld [vmem:[%s222 + $0x6d8] sm:$0xff]
        %v1509 = vld [vmem:[%s222 + $0x6e0] sm:$0xff]
        %v1510 = vld [vmem:[%s222 + $0x6e8] sm:$0xff]
        %v1511 = vld [vmem:[%s222 + $0x6f0] sm:$0xff]
        %v1512 = vld [vmem:[%s222 + $0x6f8] sm:$0xff]
        %v1513 = vld [vmem:[%s222 + $0x700] sm:$0xff]
        %v1514 = vld [vmem:[%s222 + $0x708] sm:$0xff]
        %v1515 = vld [vmem:[%s222 + $0x710] sm:$0xff]
        %v1516 = vld [vmem:[%s222 + $0x718] sm:$0xff]
        %v1517 = vld [vmem:[%s222 + $0x720] sm:$0xff]
        %v1518 = vld [vmem:[%s222 + $0x728] sm:$0xff]
        %v1519 = vld [vmem:[%s222 + $0x730] sm:$0xff]
        %v1520 = vld [vmem:[%s222 + $0x738] sm:$0xff]
        %v1521 = vld [vmem:[%s222 + $0x740] sm:$0xff]
        %v1522 = vld [vmem:[%s222 + $0x748] sm:$0xff]
        %v1523 = vld [vmem:[%s222 + $0x750] sm:$0xff]
        %v1524 = vld [vmem:[%s222 + $0x758] sm:$0xff]
        %v1525 = vld [vmem:[%s222 + $0x760] sm:$0xff]
        %v1526 = vld [vmem:[%s222 + $0x768] sm:$0xff]
        %v1527 = vld [vmem:[%s222 + $0x770] sm:$0xff]
        %v1528 = vld [vmem:[%s222 + $0x778] sm:$0xff]
        %v1529 = vld [vmem:[%s222 + $0x780] sm:$0xff]
        %v1530 = vld [vmem:[%s222 + $0x788] sm:$0xff]
        %v1531 = vld [vmem:[%s222 + $0x790] sm:$0xff]
        %v1532 = vld [vmem:[%s222 + $0x798] sm:$0xff]
        %v1533 = vld [vmem:[%s222 + $0x7a0] sm:$0xff]
        %v1534 = vld [vmem:[%s222 + $0x7a8] sm:$0xff]
        %v1535 = vld [vmem:[%s222 + $0x7b0] sm:$0xff]
        %v1536 = vld [vmem:[%s222 + $0x7b8] sm:$0xff]
        %v1537 = vld [vmem:[%s222 + $0x7c0] sm:$0xff]
        %v1538 = vld [vmem:[%s222 + $0x7c8] sm:$0xff]
        %v1539 = vld [vmem:[%s222 + $0x7d0] sm:$0xff]
        %v1540 = vld [vmem:[%s222 + $0x7d8] sm:$0xff]
        %v1541 = vld [vmem:[%s222 + $0x7e0] sm:$0xff]
        %v1542 = vld [vmem:[%s222 + $0x7e8] sm:$0xff]
        %v1543 = vld [vmem:[%s222 + $0x7f0] sm:$0xff]
        %v1544 = vld [vmem:[%s222 + $0x7f8] sm:$0xff]
        %v1545 = vld [vmem:[%s222 + $0x800] sm:$0xff]
        %v1546 = vld [vmem:[%s222 + $0x808] sm:$0xff]
        %v1547 = vld [vmem:[%s222 + $0x810] sm:$0xff]
        %v1548 = vld [vmem:[%s222 + $0x818] sm:$0xff]
        %v1549 = vld [vmem:[%s222 + $0x820] sm:$0xff]
        %v1550 = vld [vmem:[%s222 + $0x828] sm:$0xff]
        %v1551 = vld [vmem:[%s222 + $0x830] sm:$0xff]
        %v1552 = vld [vmem:[%s222 + $0x838] sm:$0xff]
        %v1553 = vld [vmem:[%s222 + $0x840] sm:$0xff]
        %v1554 = vld [vmem:[%s222 + $0x848] sm:$0xff]
        %v1555 = vld [vmem:[%s222 + $0x850] sm:$0xff]
        %v1556 = vld [vmem:[%s222 + $0x858] sm:$0xff]
        %v1557 = vld [vmem:[%s222 + $0x860] sm:$0xff]
        %v1558 = vld [vmem:[%s222 + $0x868] sm:$0xff]
        %v1559 = vld [vmem:[%s222 + $0x870] sm:$0xff]
        %v1560 = vld [vmem:[%s222 + $0x878] sm:$0xff]
        %v1561 = vld [vmem:[%s222 + $0x880] sm:$0xff]
        %v1562 = vld [vmem:[%s222 + $0x888] sm:$0xff]
        %v1563 = vld [vmem:[%s222 + $0x890] sm:$0xff]
        %v1564 = vld [vmem:[%s222 + $0x898] sm:$0xff]
        %v1565 = vld [vmem:[%s222 + $0x8a0] sm:$0xff]
        %v1566 = vld [vmem:[%s222 + $0x8a8] sm:$0xff]
        %v1567 = vld [vmem:[%s222 + $0x8b0] sm:$0xff]
        %v1568 = vld [vmem:[%s222 + $0x8b8] sm:$0xff]
        %v1569 = vld [vmem:[%s222 + $0x8c0] sm:$0xff]
        %v1570 = vld [vmem:[%s222 + $0x8c8] sm:$0xff]
        %v1571 = vld [vmem:[%s222 + $0x8d0] sm:$0xff]
        %v1572 = vld [vmem:[%s222 + $0x8d8] sm:$0xff]
        %v1573 = vld [vmem:[%s222 + $0x8e0] sm:$0xff]
        %v1574 = vld [vmem:[%s222 + $0x8e8] sm:$0xff]
        %v1575 = vld [vmem:[%s222 + $0x8f0] sm:$0xff]
        %v1576 = vld [vmem:[%s222 + $0x8f8] sm:$0xff]
        %v1577 = vld [vmem:[%s222 + $0x900] sm:$0xff]
        %v1578 = vld [vmem:[%s222 + $0x908] sm:$0xff]
        %v1579 = vld [vmem:[%s222 + $0x910] sm:$0xff]
        %v1580 = vld [vmem:[%s222 + $0x918] sm:$0xff]
        %v1581 = vld [vmem:[%s222 + $0x920] sm:$0xff]
        %v1582 = vld [vmem:[%s222 + $0x928] sm:$0xff]
        %v1583 = vld [vmem:[%s222 + $0x930] sm:$0xff]
        %v1584 = vld [vmem:[%s222 + $0x938] sm:$0xff]
        %v1585 = vld [vmem:[%s222 + $0x940] sm:$0xff]
        %v1586 = vld [vmem:[%s222 + $0x948] sm:$0xff]
        %v1587 = vld [vmem:[%s222 + $0x950] sm:$0xff]
        %v1588 = vld [vmem:[%s222 + $0x958] sm:$0xff]
        %v1589 = vld [vmem:[%s222 + $0x960] sm:$0xff]
        %v1590 = vld [vmem:[%s222 + $0x968] sm:$0xff]
        %v1591 = vld [vmem:[%s222 + $0x970] sm:$0xff]
        %v1592 = vld [vmem:[%s222 + $0x978] sm:$0xff]
        %v1593 = vld [vmem:[%s222 + $0x980] sm:$0xff]
        %v1594 = vld [vmem:[%s222 + $0x988] sm:$0xff]
        %v1595 = vld [vmem:[%s222 + $0x990] sm:$0xff]
        %v1596 = vld [vmem:[%s222 + $0x998] sm:$0xff]
        %v1597 = vld [vmem:[%s222 + $0x9a0] sm:$0xff]
        %v1598 = vld [vmem:[%s222 + $0x9a8] sm:$0xff]
        %v1599 = vld [vmem:[%s222 + $0x9b0] sm:$0xff]
        %v1600 = vld [vmem:[%s222 + $0x9b8] sm:$0xff]
        %v1601 = vld [vmem:[%s222 + $0x9c0] sm:$0xff]
        %v1602 = vld [vmem:[%s222 + $0x9c8] sm:$0xff]
        %v1603 = vld [vmem:[%s222 + $0x9d0] sm:$0xff]
        %v1604 = vld [vmem:[%s222 + $0x9d8] sm:$0xff]
        %v1605 = vld [vmem:[%s222 + $0x9e0] sm:$0xff]
        %v1606 = vld [vmem:[%s222 + $0x9e8] sm:$0xff]
        %v1607 = vld [vmem:[%s222 + $0x9f0] sm:$0xff]
        %v1608 = vld [vmem:[%s222 + $0x9f8] sm:$0xff]
        %v1609 = vld [vmem:[%s222 + $0xa00] sm:$0xff]
        %v1610 = vld [vmem:[%s222 + $0xa08] sm:$0xff]
        %v1611 = vld [vmem:[%s222 + $0xa10] sm:$0xff]
        %v1612 = vld [vmem:[%s222 + $0xa18] sm:$0xff]
        %v1613 = vld [vmem:[%s222 + $0xa20] sm:$0xff]
        %v1614 = vld [vmem:[%s222 + $0xa28] sm:$0xff]
        %v1615 = vld [vmem:[%s222 + $0xa30] sm:$0xff]
        %v1616 = vld [vmem:[%s222 + $0xa38] sm:$0xff]
        %v1617 = vld [vmem:[%s222 + $0xa40] sm:$0xff]
        %v1618 = vld [vmem:[%s222 + $0xa48] sm:$0xff]
        %v1619 = vld [vmem:[%s222 + $0xa50] sm:$0xff]
        %v1620 = vld [vmem:[%s222 + $0xa58] sm:$0xff]
        %v1621 = vld [vmem:[%s222 + $0xa60] sm:$0xff]
        %v1622 = vld [vmem:[%s222 + $0xa68] sm:$0xff]
        %v1623 = vld [vmem:[%s222 + $0xa70] sm:$0xff]
        %v1624 = vld [vmem:[%s222 + $0xa78] sm:$0xff]
        %v1625 = vld [vmem:[%s222 + $0xa80] sm:$0xff]
        %v1626 = vld [vmem:[%s222 + $0xa88] sm:$0xff]
        %v1627 = vld [vmem:[%s222 + $0xa90] sm:$0xff]
        %v1628 = vld [vmem:[%s222 + $0xa98] sm:$0xff]
        %v1629 = vld [vmem:[%s222 + $0xaa0] sm:$0xff]
        %v1630 = vld [vmem:[%s222 + $0xaa8] sm:$0xff]
        %v1631 = vld [vmem:[%s222 + $0xab0] sm:$0xff]
        %v1632 = vld [vmem:[%s222 + $0xab8] sm:$0xff]
        %v1633 = vld [vmem:[%s222 + $0xac0] sm:$0xff]
        %v1634 = vld [vmem:[%s222 + $0xac8] sm:$0xff]
        %v1635 = vld [vmem:[%s222 + $0xad0] sm:$0xff]
        %v1636 = vld [vmem:[%s222 + $0xad8] sm:$0xff]
        %v1637 = vld [vmem:[%s222 + $0xae0] sm:$0xff]
        %v1638 = vld [vmem:[%s222 + $0xae8] sm:$0xff]
        %v1639 = vld [vmem:[%s222 + $0xaf0] sm:$0xff]
        %v1640 = vld [vmem:[%s222 + $0xaf8] sm:$0xff]
        %v1641 = vld [vmem:[%s222 + $0xb00] sm:$0xff]
        %v1642 = vld [vmem:[%s222 + $0xb08] sm:$0xff]
        %v1643 = vld [vmem:[%s222 + $0xb10] sm:$0xff]
        %v1644 = vld [vmem:[%s222 + $0xb18] sm:$0xff]
        %v1645 = vld [vmem:[%s222 + $0xb20] sm:$0xff]
        %v1646 = vld [vmem:[%s222 + $0xb28] sm:$0xff]
        %v1647 = vld [vmem:[%s222 + $0xb30] sm:$0xff]
        %v1648 = vld [vmem:[%s222 + $0xb38] sm:$0xff]
        %v1649 = vld [vmem:[%s222 + $0xb40] sm:$0xff]
        %v1650 = vld [vmem:[%s222 + $0xb48] sm:$0xff]
        %v1651 = vld [vmem:[%s222 + $0xb50] sm:$0xff]
        %v1652 = vld [vmem:[%s222 + $0xb58] sm:$0xff]
        %v1653 = vld [vmem:[%s222 + $0xb60] sm:$0xff]
        %v1654 = vld [vmem:[%s222 + $0xb68] sm:$0xff]
        %v1655 = vld [vmem:[%s222 + $0xb70] sm:$0xff]
        %v1656 = vld [vmem:[%s222 + $0xb78] sm:$0xff]
        %v1657 = vld [vmem:[%s222 + $0xb80] sm:$0xff]
        %v1658 = vld [vmem:[%s222 + $0xb88] sm:$0xff]
        %v1659 = vld [vmem:[%s222 + $0xb90] sm:$0xff]
        %v1660 = vld [vmem:[%s222 + $0xb98] sm:$0xff]
        %v1661 = vld [vmem:[%s222 + $0xba0] sm:$0xff]
        %v1662 = vld [vmem:[%s222 + $0xba8] sm:$0xff]
        %v1663 = vld [vmem:[%s222 + $0xbb0] sm:$0xff]
        %v1664 = vld [vmem:[%s222 + $0xbb8] sm:$0xff]
        %v1665 = vld [vmem:[%s222 + $0xbc0] sm:$0xff]
        %v1666 = vld [vmem:[%s222 + $0xbc8] sm:$0xff]
        %v1667 = vld [vmem:[%s222 + $0xbd0] sm:$0xff]
        %v1668 = vld [vmem:[%s222 + $0xbd8] sm:$0xff]
        %v1669 = vld [vmem:[%s222 + $0xbe0] sm:$0xff]
        %v1670 = vld [vmem:[%s222 + $0xbe8] sm:$0xff]
        %v1671 = vld [vmem:[%s222 + $0xbf0] sm:$0xff]
        %v1672 = vld [vmem:[%s222 + $0xbf8] sm:$0xff]
        %v1673 = vld [vmem:[%s222 + $0xc00] sm:$0xff]
        %v1674 = vld [vmem:[%s222 + $0xc08] sm:$0xff]
        %v1675 = vld [vmem:[%s222 + $0xc10] sm:$0xff]
        %v1676 = vld [vmem:[%s222 + $0xc18] sm:$0xff]
        %v1677 = vld [vmem:[%s222 + $0xc20] sm:$0xff]
        %v1678 = vld [vmem:[%s222 + $0xc28] sm:$0xff]
        %v1679 = vld [vmem:[%s222 + $0xc30] sm:$0xff]
        %v1680 = vld [vmem:[%s222 + $0xc38] sm:$0xff]
        %v1681 = vld [vmem:[%s222 + $0xc40] sm:$0xff]
        %v1682 = vld [vmem:[%s222 + $0xc48] sm:$0xff]
        %v1683 = vld [vmem:[%s222 + $0xc50] sm:$0xff]
        %v1684 = vld [vmem:[%s222 + $0xc58] sm:$0xff]
        %v1685 = vld [vmem:[%s222 + $0xc60] sm:$0xff]
        %v1686 = vld [vmem:[%s222 + $0xc68] sm:$0xff]
        %v1687 = vld [vmem:[%s222 + $0xc70] sm:$0xff]
        %v1688 = vld [vmem:[%s222 + $0xc78] sm:$0xff]
        %v1689 = vld [vmem:[%s222 + $0xc80] sm:$0xff]
        %v1690 = vld [vmem:[%s222 + $0xc88] sm:$0xff]
        %v1691 = vld [vmem:[%s222 + $0xc90] sm:$0xff]
        %v1692 = vld [vmem:[%s222 + $0xc98] sm:$0xff]
        %v1693 = vld [vmem:[%s222 + $0xca0] sm:$0xff]
        %v1694 = vld [vmem:[%s222 + $0xca8] sm:$0xff]
        %v1695 = vld [vmem:[%s222 + $0xcb0] sm:$0xff]
        %v1696 = vld [vmem:[%s222 + $0xcb8] sm:$0xff]
        %v1697 = vld [vmem:[%s222 + $0xcc0] sm:$0xff]
        %v1698 = vld [vmem:[%s222 + $0xcc8] sm:$0xff]
        %v1699 = vld [vmem:[%s222 + $0xcd0] sm:$0xff]
        %v1700 = vld [vmem:[%s222 + $0xcd8] sm:$0xff]
        %v1701 = vld [vmem:[%s222 + $0xce0] sm:$0xff]
        %v1702 = vld [vmem:[%s222 + $0xce8] sm:$0xff]
        %v1703 = vld [vmem:[%s222 + $0xcf0] sm:$0xff]
        %v1704 = vld [vmem:[%s222 + $0xcf8] sm:$0xff]
        %v1705 = vld [vmem:[%s222 + $0xd00] sm:$0xff]
        %v1706 = vld [vmem:[%s222 + $0xd08] sm:$0xff]
        %v1707 = vld [vmem:[%s222 + $0xd10] sm:$0xff]
        %v1708 = vld [vmem:[%s222 + $0xd18] sm:$0xff]
        %v1709 = vld [vmem:[%s222 + $0xd20] sm:$0xff]
        %v1710 = vld [vmem:[%s222 + $0xd28] sm:$0xff]
        %v1711 = vld [vmem:[%s222 + $0xd30] sm:$0xff]
        %v1712 = vld [vmem:[%s222 + $0xd38] sm:$0xff]
        %v1713 = vld [vmem:[%s222 + $0xd40] sm:$0xff]
        %v1714 = vld [vmem:[%s222 + $0xd48] sm:$0xff]
        %v1715 = vld [vmem:[%s222 + $0xd50] sm:$0xff]
        %v1716 = vld [vmem:[%s222 + $0xd58] sm:$0xff]
        %v1717 = vld [vmem:[%s222 + $0xd60] sm:$0xff]
        %v1718 = vld [vmem:[%s222 + $0xd68] sm:$0xff]
        %v1719 = vld [vmem:[%s222 + $0xd70] sm:$0xff]
        %v1720 = vld [vmem:[%s222 + $0xd78] sm:$0xff]
        %v1721 = vld [vmem:[%s222 + $0xd80] sm:$0xff]
        %v1722 = vld [vmem:[%s222 + $0xd88] sm:$0xff]
        %v1723 = vld [vmem:[%s222 + $0xd90] sm:$0xff]
        %v1724 = vld [vmem:[%s222 + $0xd98] sm:$0xff]
        %v1725 = vld [vmem:[%s222 + $0xda0] sm:$0xff]
        %v1726 = vld [vmem:[%s222 + $0xda8] sm:$0xff]
        %v1727 = vld [vmem:[%s222 + $0xdb0] sm:$0xff]
        %v1728 = vld [vmem:[%s222 + $0xdb8] sm:$0xff]
        %v1729 = vld [vmem:[%s222 + $0xdc0] sm:$0xff]
        %v1730 = vld [vmem:[%s222 + $0xdc8] sm:$0xff]
        %v1731 = vld [vmem:[%s222 + $0xdd0] sm:$0xff]
        %v1732 = vld [vmem:[%s222 + $0xdd8] sm:$0xff]
        %v1733 = vld [vmem:[%s222 + $0xde0] sm:$0xff]
        %v1734 = vld [vmem:[%s222 + $0xde8] sm:$0xff]
        %v1735 = vld [vmem:[%s222 + $0xdf0] sm:$0xff]
        %v1736 = vld [vmem:[%s222 + $0xdf8] sm:$0xff]
        %v1737 = vld [vmem:[%s222 + $0xe00] sm:$0xff]
        %v1738 = vld [vmem:[%s222 + $0xe08] sm:$0xff]
        %v1739 = vld [vmem:[%s222 + $0xe10] sm:$0xff]
        %v1740 = vld [vmem:[%s222 + $0xe18] sm:$0xff]
        %v1741 = vld [vmem:[%s222 + $0xe20] sm:$0xff]
        %v1742 = vld [vmem:[%s222 + $0xe28] sm:$0xff]
        %v1743 = vld [vmem:[%s222 + $0xe30] sm:$0xff]
        %v1744 = vld [vmem:[%s222 + $0xe38] sm:$0xff]
        %v1745 = vld [vmem:[%s222 + $0xe40] sm:$0xff]
        %v1746 = vld [vmem:[%s222 + $0xe48] sm:$0xff]
        %v1747 = vld [vmem:[%s222 + $0xe50] sm:$0xff]
        %v1748 = vld [vmem:[%s222 + $0xe58] sm:$0xff]
        %v1749 = vld [vmem:[%s222 + $0xe60] sm:$0xff]
        %v1750 = vld [vmem:[%s222 + $0xe68] sm:$0xff]
        %v1751 = vld [vmem:[%s222 + $0xe70] sm:$0xff]
        %v1752 = vld [vmem:[%s222 + $0xe78] sm:$0xff]
        %v1753 = vld [vmem:[%s222 + $0xe80] sm:$0xff]
        %v1754 = vld [vmem:[%s222 + $0xe88] sm:$0xff]
        %v1755 = vld [vmem:[%s222 + $0xe90] sm:$0xff]
        %v1756 = vld [vmem:[%s222 + $0xe98] sm:$0xff]
        %v1757 = vld [vmem:[%s222 + $0xea0] sm:$0xff]
        %v1758 = vld [vmem:[%s222 + $0xea8] sm:$0xff]
        %v1759 = vld [vmem:[%s222 + $0xeb0] sm:$0xff]
        %v1760 = vld [vmem:[%s222 + $0xeb8] sm:$0xff]
        %v1761 = vld [vmem:[%s222 + $0xec0] sm:$0xff]
        %v1762 = vld [vmem:[%s222 + $0xec8] sm:$0xff]
        %v1763 = vld [vmem:[%s222 + $0xed0] sm:$0xff]
        %v1764 = vld [vmem:[%s222 + $0xed8] sm:$0xff]
        %v1765 = vld [vmem:[%s222 + $0xee0] sm:$0xff]
        %v1766 = vld [vmem:[%s222 + $0xee8] sm:$0xff]
        %v1767 = vld [vmem:[%s222 + $0xef0] sm:$0xff]
        %v1768 = vld [vmem:[%s222 + $0xef8] sm:$0xff]
        %v1769 = vld [vmem:[%s222 + $0xf00] sm:$0xff]
        %v1770 = vld [vmem:[%s222 + $0xf08] sm:$0xff]
        %v1771 = vld [vmem:[%s222 + $0xf10] sm:$0xff]
        %v1772 = vld [vmem:[%s222 + $0xf18] sm:$0xff]
        %v1773 = vld [vmem:[%s222 + $0xf20] sm:$0xff]
        %v1774 = vld [vmem:[%s222 + $0xf28] sm:$0xff]
        %v1775 = vld [vmem:[%s222 + $0xf30] sm:$0xff]
        %v1776 = vld [vmem:[%s222 + $0xf38] sm:$0xff]
        %v1777 = vld [vmem:[%s222 + $0xf40] sm:$0xff]
        %v1778 = vld [vmem:[%s222 + $0xf48] sm:$0xff]
        %v1779 = vld [vmem:[%s222 + $0xf50] sm:$0xff]
        %v1780 = vld [vmem:[%s222 + $0xf58] sm:$0xff]
        %v1781 = vld [vmem:[%s222 + $0xf60] sm:$0xff]
        %v1782 = vld [vmem:[%s222 + $0xf68] sm:$0xff]
        %v1783 = vld [vmem:[%s222 + $0xf70] sm:$0xff]
        %v1784 = vld [vmem:[%s222 + $0xf78] sm:$0xff]
        %v1785 = vld [vmem:[%s222 + $0xf80] sm:$0xff]
        %v1786 = vld [vmem:[%s222 + $0xf88] sm:$0xff]
        %v1787 = vld [vmem:[%s222 + $0xf90] sm:$0xff]
        %v1788 = vld [vmem:[%s222 + $0xf98] sm:$0xff]
        %v1789 = vld [vmem:[%s222 + $0xfa0] sm:$0xff]
        %v1790 = vld [vmem:[%s222 + $0xfa8] sm:$0xff]
        %v1791 = vld [vmem:[%s222 + $0xfb0] sm:$0xff]
        %v1792 = vld [vmem:[%s222 + $0xfb8] sm:$0xff]
        %v1793 = vld [vmem:[%s222 + $0xfc0] sm:$0xff]
        %v1794 = vld [vmem:[%s222 + $0xfc8] sm:$0xff]
        %v1795 = vld [vmem:[%s222 + $0xfd0] sm:$0xff]
        %v1796 = vld [vmem:[%s222 + $0xfd8] sm:$0xff]
        %v1797 = vld [vmem:[%s222 + $0xfe0] sm:$0xff]
        %v1798 = vld [vmem:[%s222 + $0xfe8] sm:$0xff]
        %v1799 = vld [vmem:[%s222 + $0xff0] sm:$0xff]
        %v1800 = vld [vmem:[%s222 + $0xff8] sm:$0xff]
        %v1801 = vsub.f32 %v777, %v1289
        %v1802 = vsub.f32 %v778, %v1290
        %v1803 = vsub.f32 %v779, %v1291
        %v1804 = vsub.f32 %v780, %v1292
        %v1805 = vsub.f32 %v781, %v1293
        %v1806 = vsub.f32 %v782, %v1294
        %v1807 = vsub.f32 %v783, %v1295
        %v1808 = vsub.f32 %v784, %v1296
        %v1809 = vsub.f32 %v785, %v1297
        %v1810 = vsub.f32 %v786, %v1298
        %v1811 = vsub.f32 %v787, %v1299
        %v1812 = vsub.f32 %v788, %v1300
        %v1813 = vsub.f32 %v789, %v1301
        %v1814 = vsub.f32 %v790, %v1302
        %v1815 = vsub.f32 %v791, %v1303
        %v1816 = vsub.f32 %v792, %v1304
        %v1817 = vsub.f32 %v793, %v1305
        %v1818 = vsub.f32 %v794, %v1306
        %v1819 = vsub.f32 %v795, %v1307
        %v1820 = vsub.f32 %v796, %v1308
        %v1821 = vsub.f32 %v797, %v1309
        %v1822 = vsub.f32 %v798, %v1310
        %v1823 = vsub.f32 %v799, %v1311
        %v1824 = vsub.f32 %v800, %v1312
        %v1825 = vsub.f32 %v801, %v1313
        %v1826 = vsub.f32 %v802, %v1314
        %v1827 = vsub.f32 %v803, %v1315
        %v1828 = vsub.f32 %v804, %v1316
        %v1829 = vsub.f32 %v805, %v1317
        %v1830 = vsub.f32 %v806, %v1318
        %v1831 = vsub.f32 %v807, %v1319
        %v1832 = vsub.f32 %v808, %v1320
        %v1833 = vsub.f32 %v809, %v1321
        %v1834 = vsub.f32 %v810, %v1322
        %v1835 = vsub.f32 %v811, %v1323
        %v1836 = vsub.f32 %v812, %v1324
        %v1837 = vsub.f32 %v813, %v1325
        %v1838 = vsub.f32 %v814, %v1326
        %v1839 = vsub.f32 %v815, %v1327
        %v1840 = vsub.f32 %v816, %v1328
        %v1841 = vsub.f32 %v817, %v1329
        %v1842 = vsub.f32 %v818, %v1330
        %v1843 = vsub.f32 %v819, %v1331
        %v1844 = vsub.f32 %v820, %v1332
        %v1845 = vsub.f32 %v821, %v1333
        %v1846 = vsub.f32 %v822, %v1334
        %v1847 = vsub.f32 %v823, %v1335
        %v1848 = vsub.f32 %v824, %v1336
        %v1849 = vsub.f32 %v825, %v1337
        %v1850 = vsub.f32 %v826, %v1338
        %v1851 = vsub.f32 %v827, %v1339
        %v1852 = vsub.f32 %v828, %v1340
        %v1853 = vsub.f32 %v829, %v1341
        %v1854 = vsub.f32 %v830, %v1342
        %v1855 = vsub.f32 %v831, %v1343
        %v1856 = vsub.f32 %v832, %v1344
        %v1857 = vsub.f32 %v833, %v1345
        %v1858 = vsub.f32 %v834, %v1346
        %v1859 = vsub.f32 %v835, %v1347
        %v1860 = vsub.f32 %v836, %v1348
        %v1861 = vsub.f32 %v837, %v1349
        %v1862 = vsub.f32 %v838, %v1350
        %v1863 = vsub.f32 %v839, %v1351
        %v1864 = vsub.f32 %v840, %v1352
        %v1865 = vsub.f32 %v841, %v1353
        %v1866 = vsub.f32 %v842, %v1354
        %v1867 = vsub.f32 %v843, %v1355
        %v1868 = vsub.f32 %v844, %v1356
        %v1869 = vsub.f32 %v845, %v1357
        %v1870 = vsub.f32 %v846, %v1358
        %v1871 = vsub.f32 %v847, %v1359
        %v1872 = vsub.f32 %v848, %v1360
        %v1873 = vsub.f32 %v849, %v1361
        %v1874 = vsub.f32 %v850, %v1362
        %v1875 = vsub.f32 %v851, %v1363
        %v1876 = vsub.f32 %v852, %v1364
        %v1877 = vsub.f32 %v853, %v1365
        %v1878 = vsub.f32 %v854, %v1366
        %v1879 = vsub.f32 %v855, %v1367
        %v1880 = vsub.f32 %v856, %v1368
        %v1881 = vsub.f32 %v857, %v1369
        %v1882 = vsub.f32 %v858, %v1370
        %v1883 = vsub.f32 %v859, %v1371
        %v1884 = vsub.f32 %v860, %v1372
        %v1885 = vsub.f32 %v861, %v1373
        %v1886 = vsub.f32 %v862, %v1374
        %v1887 = vsub.f32 %v863, %v1375
        %v1888 = vsub.f32 %v864, %v1376
        %v1889 = vsub.f32 %v865, %v1377
        %v1890 = vsub.f32 %v866, %v1378
        %v1891 = vsub.f32 %v867, %v1379
        %v1892 = vsub.f32 %v868, %v1380
        %v1893 = vsub.f32 %v869, %v1381
        %v1894 = vsub.f32 %v870, %v1382
        %v1895 = vsub.f32 %v871, %v1383
        %v1896 = vsub.f32 %v872, %v1384
        %v1897 = vsub.f32 %v873, %v1385
        %v1898 = vsub.f32 %v874, %v1386
        %v1899 = vsub.f32 %v875, %v1387
        %v1900 = vsub.f32 %v876, %v1388
        %v1901 = vsub.f32 %v877, %v1389
        %v1902 = vsub.f32 %v878, %v1390
        %v1903 = vsub.f32 %v879, %v1391
        %v1904 = vsub.f32 %v880, %v1392
        %v1905 = vsub.f32 %v881, %v1393
        %v1906 = vsub.f32 %v882, %v1394
        %v1907 = vsub.f32 %v883, %v1395
        %v1908 = vsub.f32 %v884, %v1396
        %v1909 = vsub.f32 %v885, %v1397
        %v1910 = vsub.f32 %v886, %v1398
        %v1911 = vsub.f32 %v887, %v1399
        %v1912 = vsub.f32 %v888, %v1400
        %v1913 = vsub.f32 %v889, %v1401
        %v1914 = vsub.f32 %v890, %v1402
        %v1915 = vsub.f32 %v891, %v1403
        %v1916 = vsub.f32 %v892, %v1404
        %v1917 = vsub.f32 %v893, %v1405
        %v1918 = vsub.f32 %v894, %v1406
        %v1919 = vsub.f32 %v895, %v1407
        %v1920 = vsub.f32 %v896, %v1408
        %v1921 = vsub.f32 %v897, %v1409
        %v1922 = vsub.f32 %v898, %v1410
        %v1923 = vsub.f32 %v899, %v1411
        %v1924 = vsub.f32 %v900, %v1412
        %v1925 = vsub.f32 %v901, %v1413
        %v1926 = vsub.f32 %v902, %v1414
        %v1927 = vsub.f32 %v903, %v1415
        %v1928 = vsub.f32 %v904, %v1416
        %v1929 = vsub.f32 %v905, %v1417
        %v1930 = vsub.f32 %v906, %v1418
        %v1931 = vsub.f32 %v907, %v1419
        %v1932 = vsub.f32 %v908, %v1420
        %v1933 = vsub.f32 %v909, %v1421
        %v1934 = vsub.f32 %v910, %v1422
        %v1935 = vsub.f32 %v911, %v1423
        %v1936 = vsub.f32 %v912, %v1424
        %v1937 = vsub.f32 %v913, %v1425
        %v1938 = vsub.f32 %v914, %v1426
        %v1939 = vsub.f32 %v915, %v1427
        %v1940 = vsub.f32 %v916, %v1428
        %v1941 = vsub.f32 %v917, %v1429
        %v1942 = vsub.f32 %v918, %v1430
        %v1943 = vsub.f32 %v919, %v1431
        %v1944 = vsub.f32 %v920, %v1432
        %v1945 = vsub.f32 %v921, %v1433
        %v1946 = vsub.f32 %v922, %v1434
        %v1947 = vsub.f32 %v923, %v1435
        %v1948 = vsub.f32 %v924, %v1436
        %v1949 = vsub.f32 %v925, %v1437
        %v1950 = vsub.f32 %v926, %v1438
        %v1951 = vsub.f32 %v927, %v1439
        %v1952 = vsub.f32 %v928, %v1440
        %v1953 = vsub.f32 %v929, %v1441
        %v1954 = vsub.f32 %v930, %v1442
        %v1955 = vsub.f32 %v931, %v1443
        %v1956 = vsub.f32 %v932, %v1444
        %v1957 = vsub.f32 %v933, %v1445
        %v1958 = vsub.f32 %v934, %v1446
        %v1959 = vsub.f32 %v935, %v1447
        %v1960 = vsub.f32 %v936, %v1448
        %v1961 = vsub.f32 %v937, %v1449
        %v1962 = vsub.f32 %v938, %v1450
        %v1963 = vsub.f32 %v939, %v1451
        %v1964 = vsub.f32 %v940, %v1452
        %v1965 = vsub.f32 %v941, %v1453
        %v1966 = vsub.f32 %v942, %v1454
        %v1967 = vsub.f32 %v943, %v1455
        %v1968 = vsub.f32 %v944, %v1456
        %v1969 = vsub.f32 %v945, %v1457
        %v1970 = vsub.f32 %v946, %v1458
        %v1971 = vsub.f32 %v947, %v1459
        %v1972 = vsub.f32 %v948, %v1460
        %v1973 = vsub.f32 %v949, %v1461
        %v1974 = vsub.f32 %v950, %v1462
        %v1975 = vsub.f32 %v951, %v1463
        %v1976 = vsub.f32 %v952, %v1464
        %v1977 = vsub.f32 %v953, %v1465
        %v1978 = vsub.f32 %v954, %v1466
        %v1979 = vsub.f32 %v955, %v1467
        %v1980 = vsub.f32 %v956, %v1468
        %v1981 = vsub.f32 %v957, %v1469
        %v1982 = vsub.f32 %v958, %v1470
        %v1983 = vsub.f32 %v959, %v1471
        %v1984 = vsub.f32 %v960, %v1472
        %v1985 = vsub.f32 %v961, %v1473
        %v1986 = vsub.f32 %v962, %v1474
        %v1987 = vsub.f32 %v963, %v1475
        %v1988 = vsub.f32 %v964, %v1476
        %v1989 = vsub.f32 %v965, %v1477
        %v1990 = vsub.f32 %v966, %v1478
        %v1991 = vsub.f32 %v967, %v1479
        %v1992 = vsub.f32 %v968, %v1480
        %v1993 = vsub.f32 %v969, %v1481
        %v1994 = vsub.f32 %v970, %v1482
        %v1995 = vsub.f32 %v971, %v1483
        %v1996 = vsub.f32 %v972, %v1484
        %v1997 = vsub.f32 %v973, %v1485
        %v1998 = vsub.f32 %v974, %v1486
        %v1999 = vsub.f32 %v975, %v1487
        %v2000 = vsub.f32 %v976, %v1488
        %v2001 = vsub.f32 %v977, %v1489
        %v2002 = vsub.f32 %v978, %v1490
        %v2003 = vsub.f32 %v979, %v1491
        %v2004 = vsub.f32 %v980, %v1492
        %v2005 = vsub.f32 %v981, %v1493
        %v2006 = vsub.f32 %v982, %v1494
        %v2007 = vsub.f32 %v983, %v1495
        %v2008 = vsub.f32 %v984, %v1496
        %v2009 = vsub.f32 %v985, %v1497
        %v2010 = vsub.f32 %v986, %v1498
        %v2011 = vsub.f32 %v987, %v1499
        %v2012 = vsub.f32 %v988, %v1500
        %v2013 = vsub.f32 %v989, %v1501
        %v2014 = vsub.f32 %v990, %v1502
        %v2015 = vsub.f32 %v991, %v1503
        %v2016 = vsub.f32 %v992, %v1504
        %v2017 = vsub.f32 %v993, %v1505
        %v2018 = vsub.f32 %v994, %v1506
        %v2019 = vsub.f32 %v995, %v1507
        %v2020 = vsub.f32 %v996, %v1508
        %v2021 = vsub.f32 %v997, %v1509
        %v2022 = vsub.f32 %v998, %v1510
        %v2023 = vsub.f32 %v999, %v1511
        %v2024 = vsub.f32 %v1000, %v1512
        %v2025 = vsub.f32 %v1001, %v1513
        %v2026 = vsub.f32 %v1002, %v1514
        %v2027 = vsub.f32 %v1003, %v1515
        %v2028 = vsub.f32 %v1004, %v1516
        %v2029 = vsub.f32 %v1005, %v1517
        %v2030 = vsub.f32 %v1006, %v1518
        %v2031 = vsub.f32 %v1007, %v1519
        %v2032 = vsub.f32 %v1008, %v1520
        %v2033 = vsub.f32 %v1009, %v1521
        %v2034 = vsub.f32 %v1010, %v1522
        %v2035 = vsub.f32 %v1011, %v1523
        %v2036 = vsub.f32 %v1012, %v1524
        %v2037 = vsub.f32 %v1013, %v1525
        %v2038 = vsub.f32 %v1014, %v1526
        %v2039 = vsub.f32 %v1015, %v1527
        %v2040 = vsub.f32 %v1016, %v1528
        %v2041 = vsub.f32 %v1017, %v1529
        %v2042 = vsub.f32 %v1018, %v1530
        %v2043 = vsub.f32 %v1019, %v1531
        %v2044 = vsub.f32 %v1020, %v1532
        %v2045 = vsub.f32 %v1021, %v1533
        %v2046 = vsub.f32 %v1022, %v1534
        %v2047 = vsub.f32 %v1023, %v1535
        %v2048 = vsub.f32 %v1024, %v1536
        %v2049 = vsub.f32 %v1025, %v1537
        %v2050 = vsub.f32 %v1026, %v1538
        %v2051 = vsub.f32 %v1027, %v1539
        %v2052 = vsub.f32 %v1028, %v1540
        %v2053 = vsub.f32 %v1029, %v1541
        %v2054 = vsub.f32 %v1030, %v1542
        %v2055 = vsub.f32 %v1031, %v1543
        %v2056 = vsub.f32 %v1032, %v1544
        %v2057 = vsub.f32 %v1033, %v1545
        %v2058 = vsub.f32 %v1034, %v1546
        %v2059 = vsub.f32 %v1035, %v1547
        %v2060 = vsub.f32 %v1036, %v1548
        %v2061 = vsub.f32 %v1037, %v1549
        %v2062 = vsub.f32 %v1038, %v1550
        %v2063 = vsub.f32 %v1039, %v1551
        %v2064 = vsub.f32 %v1040, %v1552
        %v2065 = vsub.f32 %v1041, %v1553
        %v2066 = vsub.f32 %v1042, %v1554
        %v2067 = vsub.f32 %v1043, %v1555
        %v2068 = vsub.f32 %v1044, %v1556
        %v2069 = vsub.f32 %v1045, %v1557
        %v2070 = vsub.f32 %v1046, %v1558
        %v2071 = vsub.f32 %v1047, %v1559
        %v2072 = vsub.f32 %v1048, %v1560
        %v2073 = vsub.f32 %v1049, %v1561
        %v2074 = vsub.f32 %v1050, %v1562
        %v2075 = vsub.f32 %v1051, %v1563
        %v2076 = vsub.f32 %v1052, %v1564
        %v2077 = vsub.f32 %v1053, %v1565
        %v2078 = vsub.f32 %v1054, %v1566
        %v2079 = vsub.f32 %v1055, %v1567
        %v2080 = vsub.f32 %v1056, %v1568
        %v2081 = vsub.f32 %v1057, %v1569
        %v2082 = vsub.f32 %v1058, %v1570
        %v2083 = vsub.f32 %v1059, %v1571
        %v2084 = vsub.f32 %v1060, %v1572
        %v2085 = vsub.f32 %v1061, %v1573
        %v2086 = vsub.f32 %v1062, %v1574
        %v2087 = vsub.f32 %v1063, %v1575
        %v2088 = vsub.f32 %v1064, %v1576
        %v2089 = vsub.f32 %v1065, %v1577
        %v2090 = vsub.f32 %v1066, %v1578
        %v2091 = vsub.f32 %v1067, %v1579
        %v2092 = vsub.f32 %v1068, %v1580
        %v2093 = vsub.f32 %v1069, %v1581
        %v2094 = vsub.f32 %v1070, %v1582
        %v2095 = vsub.f32 %v1071, %v1583
        %v2096 = vsub.f32 %v1072, %v1584
        %v2097 = vsub.f32 %v1073, %v1585
        %v2098 = vsub.f32 %v1074, %v1586
        %v2099 = vsub.f32 %v1075, %v1587
        %v2100 = vsub.f32 %v1076, %v1588
        %v2101 = vsub.f32 %v1077, %v1589
        %v2102 = vsub.f32 %v1078, %v1590
        %v2103 = vsub.f32 %v1079, %v1591
        %v2104 = vsub.f32 %v1080, %v1592
        %v2105 = vsub.f32 %v1081, %v1593
        %v2106 = vsub.f32 %v1082, %v1594
        %v2107 = vsub.f32 %v1083, %v1595
        %v2108 = vsub.f32 %v1084, %v1596
        %v2109 = vsub.f32 %v1085, %v1597
        %v2110 = vsub.f32 %v1086, %v1598
        %v2111 = vsub.f32 %v1087, %v1599
        %v2112 = vsub.f32 %v1088, %v1600
        %v2113 = vsub.f32 %v1089, %v1601
        %v2114 = vsub.f32 %v1090, %v1602
        %v2115 = vsub.f32 %v1091, %v1603
        %v2116 = vsub.f32 %v1092, %v1604
        %v2117 = vsub.f32 %v1093, %v1605
        %v2118 = vsub.f32 %v1094, %v1606
        %v2119 = vsub.f32 %v1095, %v1607
        %v2120 = vsub.f32 %v1096, %v1608
        %v2121 = vsub.f32 %v1097, %v1609
        %v2122 = vsub.f32 %v1098, %v1610
        %v2123 = vsub.f32 %v1099, %v1611
        %v2124 = vsub.f32 %v1100, %v1612
        %v2125 = vsub.f32 %v1101, %v1613
        %v2126 = vsub.f32 %v1102, %v1614
        %v2127 = vsub.f32 %v1103, %v1615
        %v2128 = vsub.f32 %v1104, %v1616
        %v2129 = vsub.f32 %v1105, %v1617
        %v2130 = vsub.f32 %v1106, %v1618
        %v2131 = vsub.f32 %v1107, %v1619
        %v2132 = vsub.f32 %v1108, %v1620
        %v2133 = vsub.f32 %v1109, %v1621
        %v2134 = vsub.f32 %v1110, %v1622
        %v2135 = vsub.f32 %v1111, %v1623
        %v2136 = vsub.f32 %v1112, %v1624
        %v2137 = vsub.f32 %v1113, %v1625
        %v2138 = vsub.f32 %v1114, %v1626
        %v2139 = vsub.f32 %v1115, %v1627
        %v2140 = vsub.f32 %v1116, %v1628
        %v2141 = vsub.f32 %v1117, %v1629
        %v2142 = vsub.f32 %v1118, %v1630
        %v2143 = vsub.f32 %v1119, %v1631
        %v2144 = vsub.f32 %v1120, %v1632
        %v2145 = vsub.f32 %v1121, %v1633
        %v2146 = vsub.f32 %v1122, %v1634
        %v2147 = vsub.f32 %v1123, %v1635
        %v2148 = vsub.f32 %v1124, %v1636
        %v2149 = vsub.f32 %v1125, %v1637
        %v2150 = vsub.f32 %v1126, %v1638
        %v2151 = vsub.f32 %v1127, %v1639
        %v2152 = vsub.f32 %v1128, %v1640
        %v2153 = vsub.f32 %v1129, %v1641
        %v2154 = vsub.f32 %v1130, %v1642
        %v2155 = vsub.f32 %v1131, %v1643
        %v2156 = vsub.f32 %v1132, %v1644
        %v2157 = vsub.f32 %v1133, %v1645
        %v2158 = vsub.f32 %v1134, %v1646
        %v2159 = vsub.f32 %v1135, %v1647
        %v2160 = vsub.f32 %v1136, %v1648
        %v2161 = vsub.f32 %v1137, %v1649
        %v2162 = vsub.f32 %v1138, %v1650
        %v2163 = vsub.f32 %v1139, %v1651
        %v2164 = vsub.f32 %v1140, %v1652
        %v2165 = vsub.f32 %v1141, %v1653
        %v2166 = vsub.f32 %v1142, %v1654
        %v2167 = vsub.f32 %v1143, %v1655
        %v2168 = vsub.f32 %v1144, %v1656
        %v2169 = vsub.f32 %v1145, %v1657
        %v2170 = vsub.f32 %v1146, %v1658
        %v2171 = vsub.f32 %v1147, %v1659
        %v2172 = vsub.f32 %v1148, %v1660
        %v2173 = vsub.f32 %v1149, %v1661
        %v2174 = vsub.f32 %v1150, %v1662
        %v2175 = vsub.f32 %v1151, %v1663
        %v2176 = vsub.f32 %v1152, %v1664
        %v2177 = vsub.f32 %v1153, %v1665
        %v2178 = vsub.f32 %v1154, %v1666
        %v2179 = vsub.f32 %v1155, %v1667
        %v2180 = vsub.f32 %v1156, %v1668
        %v2181 = vsub.f32 %v1157, %v1669
        %v2182 = vsub.f32 %v1158, %v1670
        %v2183 = vsub.f32 %v1159, %v1671
        %v2184 = vsub.f32 %v1160, %v1672
        %v2185 = vsub.f32 %v1161, %v1673
        %v2186 = vsub.f32 %v1162, %v1674
        %v2187 = vsub.f32 %v1163, %v1675
        %v2188 = vsub.f32 %v1164, %v1676
        %v2189 = vsub.f32 %v1165, %v1677
        %v2190 = vsub.f32 %v1166, %v1678
        %v2191 = vsub.f32 %v1167, %v1679
        %v2192 = vsub.f32 %v1168, %v1680
        %v2193 = vsub.f32 %v1169, %v1681
        %v2194 = vsub.f32 %v1170, %v1682
        %v2195 = vsub.f32 %v1171, %v1683
        %v2196 = vsub.f32 %v1172, %v1684
        %v2197 = vsub.f32 %v1173, %v1685
        %v2198 = vsub.f32 %v1174, %v1686
        %v2199 = vsub.f32 %v1175, %v1687
        %v2200 = vsub.f32 %v1176, %v1688
        %v2201 = vsub.f32 %v1177, %v1689
        %v2202 = vsub.f32 %v1178, %v1690
        %v2203 = vsub.f32 %v1179, %v1691
        %v2204 = vsub.f32 %v1180, %v1692
        %v2205 = vsub.f32 %v1181, %v1693
        %v2206 = vsub.f32 %v1182, %v1694
        %v2207 = vsub.f32 %v1183, %v1695
        %v2208 = vsub.f32 %v1184, %v1696
        %v2209 = vsub.f32 %v1185, %v1697
        %v2210 = vsub.f32 %v1186, %v1698
        %v2211 = vsub.f32 %v1187, %v1699
        %v2212 = vsub.f32 %v1188, %v1700
        %v2213 = vsub.f32 %v1189, %v1701
        %v2214 = vsub.f32 %v1190, %v1702
        %v2215 = vsub.f32 %v1191, %v1703
        %v2216 = vsub.f32 %v1192, %v1704
        %v2217 = vsub.f32 %v1193, %v1705
        %v2218 = vsub.f32 %v1194, %v1706
        %v2219 = vsub.f32 %v1195, %v1707
        %v2220 = vsub.f32 %v1196, %v1708
        %v2221 = vsub.f32 %v1197, %v1709
        %v2222 = vsub.f32 %v1198, %v1710
        %v2223 = vsub.f32 %v1199, %v1711
        %v2224 = vsub.f32 %v1200, %v1712
        %v2225 = vsub.f32 %v1201, %v1713
        %v2226 = vsub.f32 %v1202, %v1714
        %v2227 = vsub.f32 %v1203, %v1715
        %v2228 = vsub.f32 %v1204, %v1716
        %v2229 = vsub.f32 %v1205, %v1717
        %v2230 = vsub.f32 %v1206, %v1718
        %v2231 = vsub.f32 %v1207, %v1719
        %v2232 = vsub.f32 %v1208, %v1720
        %v2233 = vsub.f32 %v1209, %v1721
        %v2234 = vsub.f32 %v1210, %v1722
        %v2235 = vsub.f32 %v1211, %v1723
        %v2236 = vsub.f32 %v1212, %v1724
        %v2237 = vsub.f32 %v1213, %v1725
        %v2238 = vsub.f32 %v1214, %v1726
        %v2239 = vsub.f32 %v1215, %v1727
        %v2240 = vsub.f32 %v1216, %v1728
        %v2241 = vsub.f32 %v1217, %v1729
        %v2242 = vsub.f32 %v1218, %v1730
        %v2243 = vsub.f32 %v1219, %v1731
        %v2244 = vsub.f32 %v1220, %v1732
        %v2245 = vsub.f32 %v1221, %v1733
        %v2246 = vsub.f32 %v1222, %v1734
        %v2247 = vsub.f32 %v1223, %v1735
        %v2248 = vsub.f32 %v1224, %v1736
        %v2249 = vsub.f32 %v1225, %v1737
        %v2250 = vsub.f32 %v1226, %v1738
        %v2251 = vsub.f32 %v1227, %v1739
        %v2252 = vsub.f32 %v1228, %v1740
        %v2253 = vsub.f32 %v1229, %v1741
        %v2254 = vsub.f32 %v1230, %v1742
        %v2255 = vsub.f32 %v1231, %v1743
        %v2256 = vsub.f32 %v1232, %v1744
        %v2257 = vsub.f32 %v1233, %v1745
        %v2258 = vsub.f32 %v1234, %v1746
        %v2259 = vsub.f32 %v1235, %v1747
        %v2260 = vsub.f32 %v1236, %v1748
        %v2261 = vsub.f32 %v1237, %v1749
        %v2262 = vsub.f32 %v1238, %v1750
        %v2263 = vsub.f32 %v1239, %v1751
        %v2264 = vsub.f32 %v1240, %v1752
        %v2265 = vsub.f32 %v1241, %v1753
        %v2266 = vsub.f32 %v1242, %v1754
        %v2267 = vsub.f32 %v1243, %v1755
        %v2268 = vsub.f32 %v1244, %v1756
        %v2269 = vsub.f32 %v1245, %v1757
        %v2270 = vsub.f32 %v1246, %v1758
        %v2271 = vsub.f32 %v1247, %v1759
        %v2272 = vsub.f32 %v1248, %v1760
        %v2273 = vsub.f32 %v1249, %v1761
        %v2274 = vsub.f32 %v1250, %v1762
        %v2275 = vsub.f32 %v1251, %v1763
        %v2276 = vsub.f32 %v1252, %v1764
        %v2277 = vsub.f32 %v1253, %v1765
        %v2278 = vsub.f32 %v1254, %v1766
        %v2279 = vsub.f32 %v1255, %v1767
        %v2280 = vsub.f32 %v1256, %v1768
        %v2281 = vsub.f32 %v1257, %v1769
        %v2282 = vsub.f32 %v1258, %v1770
        %v2283 = vsub.f32 %v1259, %v1771
        %v2284 = vsub.f32 %v1260, %v1772
        %v2285 = vsub.f32 %v1261, %v1773
        %v2286 = vsub.f32 %v1262, %v1774
        %v2287 = vsub.f32 %v1263, %v1775
        %v2288 = vsub.f32 %v1264, %v1776
        %v2289 = vsub.f32 %v1265, %v1777
        %v2290 = vsub.f32 %v1266, %v1778
        %v2291 = vsub.f32 %v1267, %v1779
        %v2292 = vsub.f32 %v1268, %v1780
        %v2293 = vsub.f32 %v1269, %v1781
        %v2294 = vsub.f32 %v1270, %v1782
        %v2295 = vsub.f32 %v1271, %v1783
        %v2296 = vsub.f32 %v1272, %v1784
        %v2297 = vsub.f32 %v1273, %v1785
        %v2298 = vsub.f32 %v1274, %v1786
        %v2299 = vsub.f32 %v1275, %v1787
        %v2300 = vsub.f32 %v1276, %v1788
        %v2301 = vsub.f32 %v1277, %v1789
        %v2302 = vsub.f32 %v1278, %v1790
        %v2303 = vsub.f32 %v1279, %v1791
        %v2304 = vsub.f32 %v1280, %v1792
        %v2305 = vsub.f32 %v1281, %v1793
        %v2306 = vsub.f32 %v1282, %v1794
        %v2307 = vsub.f32 %v1283, %v1795
        %v2308 = vsub.f32 %v1284, %v1796
        %v2309 = vsub.f32 %v1285, %v1797
        %v2310 = vsub.f32 %v1286, %v1798
        %v2311 = vsub.f32 %v1287, %v1799
        %v2312 = vsub.f32 %v1288, %v1800
        %v2313 = vmul.f32 %v1801, %v1801
        %v2314 = vmul.f32 %v1802, %v1802
        %v2315 = vmul.f32 %v1803, %v1803
        %v2316 = vmul.f32 %v1804, %v1804
        %v2317 = vmul.f32 %v1805, %v1805
        %v2318 = vmul.f32 %v1806, %v1806
        %v2319 = vmul.f32 %v1807, %v1807
        %v2320 = vmul.f32 %v1808, %v1808
        %v2321 = vmul.f32 %v1809, %v1809
        %v2322 = vmul.f32 %v1810, %v1810
        %v2323 = vmul.f32 %v1811, %v1811
        %v2324 = vmul.f32 %v1812, %v1812
        %v2325 = vmul.f32 %v1813, %v1813
        %v2326 = vmul.f32 %v1814, %v1814
        %v2327 = vmul.f32 %v1815, %v1815
        %v2328 = vmul.f32 %v1816, %v1816
        %v2329 = vmul.f32 %v1817, %v1817
        %v2330 = vmul.f32 %v1818, %v1818
        %v2331 = vmul.f32 %v1819, %v1819
        %v2332 = vmul.f32 %v1820, %v1820
        %v2333 = vmul.f32 %v1821, %v1821
        %v2334 = vmul.f32 %v1822, %v1822
        %v2335 = vmul.f32 %v1823, %v1823
        %v2336 = vmul.f32 %v1824, %v1824
        %v2337 = vmul.f32 %v1825, %v1825
        %v2338 = vmul.f32 %v1826, %v1826
        %v2339 = vmul.f32 %v1827, %v1827
        %v2340 = vmul.f32 %v1828, %v1828
        %v2341 = vmul.f32 %v1829, %v1829
        %v2342 = vmul.f32 %v1830, %v1830
        %v2343 = vmul.f32 %v1831, %v1831
        %v2344 = vmul.f32 %v1832, %v1832
        %v2345 = vmul.f32 %v1833, %v1833
        %v2346 = vmul.f32 %v1834, %v1834
        %v2347 = vmul.f32 %v1835, %v1835
        %v2348 = vmul.f32 %v1836, %v1836
        %v2349 = vmul.f32 %v1837, %v1837
        %v2350 = vmul.f32 %v1838, %v1838
        %v2351 = vmul.f32 %v1839, %v1839
        %v2352 = vmul.f32 %v1840, %v1840
        %v2353 = vmul.f32 %v1841, %v1841
        %v2354 = vmul.f32 %v1842, %v1842
        %v2355 = vmul.f32 %v1843, %v1843
        %v2356 = vmul.f32 %v1844, %v1844
        %v2357 = vmul.f32 %v1845, %v1845
        %v2358 = vmul.f32 %v1846, %v1846
        %v2359 = vmul.f32 %v1847, %v1847
        %v2360 = vmul.f32 %v1848, %v1848
        %v2361 = vmul.f32 %v1849, %v1849
        %v2362 = vmul.f32 %v1850, %v1850
        %v2363 = vmul.f32 %v1851, %v1851
        %v2364 = vmul.f32 %v1852, %v1852
        %v2365 = vmul.f32 %v1853, %v1853
        %v2366 = vmul.f32 %v1854, %v1854
        %v2367 = vmul.f32 %v1855, %v1855
        %v2368 = vmul.f32 %v1856, %v1856
        %v2369 = vmul.f32 %v1857, %v1857
        %v2370 = vmul.f32 %v1858, %v1858
        %v2371 = vmul.f32 %v1859, %v1859
        %v2372 = vmul.f32 %v1860, %v1860
        %v2373 = vmul.f32 %v1861, %v1861
        %v2374 = vmul.f32 %v1862, %v1862
        %v2375 = vmul.f32 %v1863, %v1863
        %v2376 = vmul.f32 %v1864, %v1864
        %v2377 = vmul.f32 %v1865, %v1865
        %v2378 = vmul.f32 %v1866, %v1866
        %v2379 = vmul.f32 %v1867, %v1867
        %v2380 = vmul.f32 %v1868, %v1868
        %v2381 = vmul.f32 %v1869, %v1869
        %v2382 = vmul.f32 %v1870, %v1870
        %v2383 = vmul.f32 %v1871, %v1871
        %v2384 = vmul.f32 %v1872, %v1872
        %v2385 = vmul.f32 %v1873, %v1873
        %v2386 = vmul.f32 %v1874, %v1874
        %v2387 = vmul.f32 %v1875, %v1875
        %v2388 = vmul.f32 %v1876, %v1876
        %v2389 = vmul.f32 %v1877, %v1877
        %v2390 = vmul.f32 %v1878, %v1878
        %v2391 = vmul.f32 %v1879, %v1879
        %v2392 = vmul.f32 %v1880, %v1880
        %v2393 = vmul.f32 %v1881, %v1881
        %v2394 = vmul.f32 %v1882, %v1882
        %v2395 = vmul.f32 %v1883, %v1883
        %v2396 = vmul.f32 %v1884, %v1884
        %v2397 = vmul.f32 %v1885, %v1885
        %v2398 = vmul.f32 %v1886, %v1886
        %v2399 = vmul.f32 %v1887, %v1887
        %v2400 = vmul.f32 %v1888, %v1888
        %v2401 = vmul.f32 %v1889, %v1889
        %v2402 = vmul.f32 %v1890, %v1890
        %v2403 = vmul.f32 %v1891, %v1891
        %v2404 = vmul.f32 %v1892, %v1892
        %v2405 = vmul.f32 %v1893, %v1893
        %v2406 = vmul.f32 %v1894, %v1894
        %v2407 = vmul.f32 %v1895, %v1895
        %v2408 = vmul.f32 %v1896, %v1896
        %v2409 = vmul.f32 %v1897, %v1897
        %v2410 = vmul.f32 %v1898, %v1898
        %v2411 = vmul.f32 %v1899, %v1899
        %v2412 = vmul.f32 %v1900, %v1900
        %v2413 = vmul.f32 %v1901, %v1901
        %v2414 = vmul.f32 %v1902, %v1902
        %v2415 = vmul.f32 %v1903, %v1903
        %v2416 = vmul.f32 %v1904, %v1904
        %v2417 = vmul.f32 %v1905, %v1905
        %v2418 = vmul.f32 %v1906, %v1906
        %v2419 = vmul.f32 %v1907, %v1907
        %v2420 = vmul.f32 %v1908, %v1908
        %v2421 = vmul.f32 %v1909, %v1909
        %v2422 = vmul.f32 %v1910, %v1910
        %v2423 = vmul.f32 %v1911, %v1911
        %v2424 = vmul.f32 %v1912, %v1912
        %v2425 = vmul.f32 %v1913, %v1913
        %v2426 = vmul.f32 %v1914, %v1914
        %v2427 = vmul.f32 %v1915, %v1915
        %v2428 = vmul.f32 %v1916, %v1916
        %v2429 = vmul.f32 %v1917, %v1917
        %v2430 = vmul.f32 %v1918, %v1918
        %v2431 = vmul.f32 %v1919, %v1919
        %v2432 = vmul.f32 %v1920, %v1920
        %v2433 = vmul.f32 %v1921, %v1921
        %v2434 = vmul.f32 %v1922, %v1922
        %v2435 = vmul.f32 %v1923, %v1923
        %v2436 = vmul.f32 %v1924, %v1924
        %v2437 = vmul.f32 %v1925, %v1925
        %v2438 = vmul.f32 %v1926, %v1926
        %v2439 = vmul.f32 %v1927, %v1927
        %v2440 = vmul.f32 %v1928, %v1928
        %v2441 = vmul.f32 %v1929, %v1929
        %v2442 = vmul.f32 %v1930, %v1930
        %v2443 = vmul.f32 %v1931, %v1931
        %v2444 = vmul.f32 %v1932, %v1932
        %v2445 = vmul.f32 %v1933, %v1933
        %v2446 = vmul.f32 %v1934, %v1934
        %v2447 = vmul.f32 %v1935, %v1935
        %v2448 = vmul.f32 %v1936, %v1936
        %v2449 = vmul.f32 %v1937, %v1937
        %v2450 = vmul.f32 %v1938, %v1938
        %v2451 = vmul.f32 %v1939, %v1939
        %v2452 = vmul.f32 %v1940, %v1940
        %v2453 = vmul.f32 %v1941, %v1941
        %v2454 = vmul.f32 %v1942, %v1942
        %v2455 = vmul.f32 %v1943, %v1943
        %v2456 = vmul.f32 %v1944, %v1944
        %v2457 = vmul.f32 %v1945, %v1945
        %v2458 = vmul.f32 %v1946, %v1946
        %v2459 = vmul.f32 %v1947, %v1947
        %v2460 = vmul.f32 %v1948, %v1948
        %v2461 = vmul.f32 %v1949, %v1949
        %v2462 = vmul.f32 %v1950, %v1950
        %v2463 = vmul.f32 %v1951, %v1951
        %v2464 = vmul.f32 %v1952, %v1952
        %v2465 = vmul.f32 %v1953, %v1953
        %v2466 = vmul.f32 %v1954, %v1954
        %v2467 = vmul.f32 %v1955, %v1955
        %v2468 = vmul.f32 %v1956, %v1956
        %v2469 = vmul.f32 %v1957, %v1957
        %v2470 = vmul.f32 %v1958, %v1958
        %v2471 = vmul.f32 %v1959, %v1959
        %v2472 = vmul.f32 %v1960, %v1960
        %v2473 = vmul.f32 %v1961, %v1961
        %v2474 = vmul.f32 %v1962, %v1962
        %v2475 = vmul.f32 %v1963, %v1963
        %v2476 = vmul.f32 %v1964, %v1964
        %v2477 = vmul.f32 %v1965, %v1965
        %v2478 = vmul.f32 %v1966, %v1966
        %v2479 = vmul.f32 %v1967, %v1967
        %v2480 = vmul.f32 %v1968, %v1968
        %v2481 = vmul.f32 %v1969, %v1969
        %v2482 = vmul.f32 %v1970, %v1970
        %v2483 = vmul.f32 %v1971, %v1971
        %v2484 = vmul.f32 %v1972, %v1972
        %v2485 = vmul.f32 %v1973, %v1973
        %v2486 = vmul.f32 %v1974, %v1974
        %v2487 = vmul.f32 %v1975, %v1975
        %v2488 = vmul.f32 %v1976, %v1976
        %v2489 = vmul.f32 %v1977, %v1977
        %v2490 = vmul.f32 %v1978, %v1978
        %v2491 = vmul.f32 %v1979, %v1979
        %v2492 = vmul.f32 %v1980, %v1980
        %v2493 = vmul.f32 %v1981, %v1981
        %v2494 = vmul.f32 %v1982, %v1982
        %v2495 = vmul.f32 %v1983, %v1983
        %v2496 = vmul.f32 %v1984, %v1984
        %v2497 = vmul.f32 %v1985, %v1985
        %v2498 = vmul.f32 %v1986, %v1986
        %v2499 = vmul.f32 %v1987, %v1987
        %v2500 = vmul.f32 %v1988, %v1988
        %v2501 = vmul.f32 %v1989, %v1989
        %v2502 = vmul.f32 %v1990, %v1990
        %v2503 = vmul.f32 %v1991, %v1991
        %v2504 = vmul.f32 %v1992, %v1992
        %v2505 = vmul.f32 %v1993, %v1993
        %v2506 = vmul.f32 %v1994, %v1994
        %v2507 = vmul.f32 %v1995, %v1995
        %v2508 = vmul.f32 %v1996, %v1996
        %v2509 = vmul.f32 %v1997, %v1997
        %v2510 = vmul.f32 %v1998, %v1998
        %v2511 = vmul.f32 %v1999, %v1999
        %v2512 = vmul.f32 %v2000, %v2000
        %v2513 = vmul.f32 %v2001, %v2001
        %v2514 = vmul.f32 %v2002, %v2002
        %v2515 = vmul.f32 %v2003, %v2003
        %v2516 = vmul.f32 %v2004, %v2004
        %v2517 = vmul.f32 %v2005, %v2005
        %v2518 = vmul.f32 %v2006, %v2006
        %v2519 = vmul.f32 %v2007, %v2007
        %v2520 = vmul.f32 %v2008, %v2008
        %v2521 = vmul.f32 %v2009, %v2009
        %v2522 = vmul.f32 %v2010, %v2010
        %v2523 = vmul.f32 %v2011, %v2011
        %v2524 = vmul.f32 %v2012, %v2012
        %v2525 = vmul.f32 %v2013, %v2013
        %v2526 = vmul.f32 %v2014, %v2014
        %v2527 = vmul.f32 %v2015, %v2015
        %v2528 = vmul.f32 %v2016, %v2016
        %v2529 = vmul.f32 %v2017, %v2017
        %v2530 = vmul.f32 %v2018, %v2018
        %v2531 = vmul.f32 %v2019, %v2019
        %v2532 = vmul.f32 %v2020, %v2020
        %v2533 = vmul.f32 %v2021, %v2021
        %v2534 = vmul.f32 %v2022, %v2022
        %v2535 = vmul.f32 %v2023, %v2023
        %v2536 = vmul.f32 %v2024, %v2024
        %v2537 = vmul.f32 %v2025, %v2025
        %v2538 = vmul.f32 %v2026, %v2026
        %v2539 = vmul.f32 %v2027, %v2027
        %v2540 = vmul.f32 %v2028, %v2028
        %v2541 = vmul.f32 %v2029, %v2029
        %v2542 = vmul.f32 %v2030, %v2030
        %v2543 = vmul.f32 %v2031, %v2031
        %v2544 = vmul.f32 %v2032, %v2032
        %v2545 = vmul.f32 %v2033, %v2033
        %v2546 = vmul.f32 %v2034, %v2034
        %v2547 = vmul.f32 %v2035, %v2035
        %v2548 = vmul.f32 %v2036, %v2036
        %v2549 = vmul.f32 %v2037, %v2037
        %v2550 = vmul.f32 %v2038, %v2038
        %v2551 = vmul.f32 %v2039, %v2039
        %v2552 = vmul.f32 %v2040, %v2040
        %v2553 = vmul.f32 %v2041, %v2041
        %v2554 = vmul.f32 %v2042, %v2042
        %v2555 = vmul.f32 %v2043, %v2043
        %v2556 = vmul.f32 %v2044, %v2044
        %v2557 = vmul.f32 %v2045, %v2045
        %v2558 = vmul.f32 %v2046, %v2046
        %v2559 = vmul.f32 %v2047, %v2047
        %v2560 = vmul.f32 %v2048, %v2048
        %v2561 = vmul.f32 %v2049, %v2049
        %v2562 = vmul.f32 %v2050, %v2050
        %v2563 = vmul.f32 %v2051, %v2051
        %v2564 = vmul.f32 %v2052, %v2052
        %v2565 = vmul.f32 %v2053, %v2053
        %v2566 = vmul.f32 %v2054, %v2054
        %v2567 = vmul.f32 %v2055, %v2055
        %v2568 = vmul.f32 %v2056, %v2056
        %v2569 = vmul.f32 %v2057, %v2057
        %v2570 = vmul.f32 %v2058, %v2058
        %v2571 = vmul.f32 %v2059, %v2059
        %v2572 = vmul.f32 %v2060, %v2060
        %v2573 = vmul.f32 %v2061, %v2061
        %v2574 = vmul.f32 %v2062, %v2062
        %v2575 = vmul.f32 %v2063, %v2063
        %v2576 = vmul.f32 %v2064, %v2064
        %v2577 = vmul.f32 %v2065, %v2065
        %v2578 = vmul.f32 %v2066, %v2066
        %v2579 = vmul.f32 %v2067, %v2067
        %v2580 = vmul.f32 %v2068, %v2068
        %v2581 = vmul.f32 %v2069, %v2069
        %v2582 = vmul.f32 %v2070, %v2070
        %v2583 = vmul.f32 %v2071, %v2071
        %v2584 = vmul.f32 %v2072, %v2072
        %v2585 = vmul.f32 %v2073, %v2073
        %v2586 = vmul.f32 %v2074, %v2074
        %v2587 = vmul.f32 %v2075, %v2075
        %v2588 = vmul.f32 %v2076, %v2076
        %v2589 = vmul.f32 %v2077, %v2077
        %v2590 = vmul.f32 %v2078, %v2078
        %v2591 = vmul.f32 %v2079, %v2079
        %v2592 = vmul.f32 %v2080, %v2080
        %v2593 = vmul.f32 %v2081, %v2081
        %v2594 = vmul.f32 %v2082, %v2082
        %v2595 = vmul.f32 %v2083, %v2083
        %v2596 = vmul.f32 %v2084, %v2084
        %v2597 = vmul.f32 %v2085, %v2085
        %v2598 = vmul.f32 %v2086, %v2086
        %v2599 = vmul.f32 %v2087, %v2087
        %v2600 = vmul.f32 %v2088, %v2088
        %v2601 = vmul.f32 %v2089, %v2089
        %v2602 = vmul.f32 %v2090, %v2090
        %v2603 = vmul.f32 %v2091, %v2091
        %v2604 = vmul.f32 %v2092, %v2092
        %v2605 = vmul.f32 %v2093, %v2093
        %v2606 = vmul.f32 %v2094, %v2094
        %v2607 = vmul.f32 %v2095, %v2095
        %v2608 = vmul.f32 %v2096, %v2096
        %v2609 = vmul.f32 %v2097, %v2097
        %v2610 = vmul.f32 %v2098, %v2098
        %v2611 = vmul.f32 %v2099, %v2099
        %v2612 = vmul.f32 %v2100, %v2100
        %v2613 = vmul.f32 %v2101, %v2101
        %v2614 = vmul.f32 %v2102, %v2102
        %v2615 = vmul.f32 %v2103, %v2103
        %v2616 = vmul.f32 %v2104, %v2104
        %v2617 = vmul.f32 %v2105, %v2105
        %v2618 = vmul.f32 %v2106, %v2106
        %v2619 = vmul.f32 %v2107, %v2107
        %v2620 = vmul.f32 %v2108, %v2108
        %v2621 = vmul.f32 %v2109, %v2109
        %v2622 = vmul.f32 %v2110, %v2110
        %v2623 = vmul.f32 %v2111, %v2111
        %v2624 = vmul.f32 %v2112, %v2112
        %v2625 = vmul.f32 %v2113, %v2113
        %v2626 = vmul.f32 %v2114, %v2114
        %v2627 = vmul.f32 %v2115, %v2115
        %v2628 = vmul.f32 %v2116, %v2116
        %v2629 = vmul.f32 %v2117, %v2117
        %v2630 = vmul.f32 %v2118, %v2118
        %v2631 = vmul.f32 %v2119, %v2119
        %v2632 = vmul.f32 %v2120, %v2120
        %v2633 = vmul.f32 %v2121, %v2121
        %v2634 = vmul.f32 %v2122, %v2122
        %v2635 = vmul.f32 %v2123, %v2123
        %v2636 = vmul.f32 %v2124, %v2124
        %v2637 = vmul.f32 %v2125, %v2125
        %v2638 = vmul.f32 %v2126, %v2126
        %v2639 = vmul.f32 %v2127, %v2127
        %v2640 = vmul.f32 %v2128, %v2128
        %v2641 = vmul.f32 %v2129, %v2129
        %v2642 = vmul.f32 %v2130, %v2130
        %v2643 = vmul.f32 %v2131, %v2131
        %v2644 = vmul.f32 %v2132, %v2132
        %v2645 = vmul.f32 %v2133, %v2133
        %v2646 = vmul.f32 %v2134, %v2134
        %v2647 = vmul.f32 %v2135, %v2135
        %v2648 = vmul.f32 %v2136, %v2136
        %v2649 = vmul.f32 %v2137, %v2137
        %v2650 = vmul.f32 %v2138, %v2138
        %v2651 = vmul.f32 %v2139, %v2139
        %v2652 = vmul.f32 %v2140, %v2140
        %v2653 = vmul.f32 %v2141, %v2141
        %v2654 = vmul.f32 %v2142, %v2142
        %v2655 = vmul.f32 %v2143, %v2143
        %v2656 = vmul.f32 %v2144, %v2144
        %v2657 = vmul.f32 %v2145, %v2145
        %v2658 = vmul.f32 %v2146, %v2146
        %v2659 = vmul.f32 %v2147, %v2147
        %v2660 = vmul.f32 %v2148, %v2148
        %v2661 = vmul.f32 %v2149, %v2149
        %v2662 = vmul.f32 %v2150, %v2150
        %v2663 = vmul.f32 %v2151, %v2151
        %v2664 = vmul.f32 %v2152, %v2152
        %v2665 = vmul.f32 %v2153, %v2153
        %v2666 = vmul.f32 %v2154, %v2154
        %v2667 = vmul.f32 %v2155, %v2155
        %v2668 = vmul.f32 %v2156, %v2156
        %v2669 = vmul.f32 %v2157, %v2157
        %v2670 = vmul.f32 %v2158, %v2158
        %v2671 = vmul.f32 %v2159, %v2159
        %v2672 = vmul.f32 %v2160, %v2160
        %v2673 = vmul.f32 %v2161, %v2161
        %v2674 = vmul.f32 %v2162, %v2162
        %v2675 = vmul.f32 %v2163, %v2163
        %v2676 = vmul.f32 %v2164, %v2164
        %v2677 = vmul.f32 %v2165, %v2165
        %v2678 = vmul.f32 %v2166, %v2166
        %v2679 = vmul.f32 %v2167, %v2167
        %v2680 = vmul.f32 %v2168, %v2168
        %v2681 = vmul.f32 %v2169, %v2169
        %v2682 = vmul.f32 %v2170, %v2170
        %v2683 = vmul.f32 %v2171, %v2171
        %v2684 = vmul.f32 %v2172, %v2172
        %v2685 = vmul.f32 %v2173, %v2173
        %v2686 = vmul.f32 %v2174, %v2174
        %v2687 = vmul.f32 %v2175, %v2175
        %v2688 = vmul.f32 %v2176, %v2176
        %v2689 = vmul.f32 %v2177, %v2177
        %v2690 = vmul.f32 %v2178, %v2178
        %v2691 = vmul.f32 %v2179, %v2179
        %v2692 = vmul.f32 %v2180, %v2180
        %v2693 = vmul.f32 %v2181, %v2181
        %v2694 = vmul.f32 %v2182, %v2182
        %v2695 = vmul.f32 %v2183, %v2183
        %v2696 = vmul.f32 %v2184, %v2184
        %v2697 = vmul.f32 %v2185, %v2185
        %v2698 = vmul.f32 %v2186, %v2186
        %v2699 = vmul.f32 %v2187, %v2187
        %v2700 = vmul.f32 %v2188, %v2188
        %v2701 = vmul.f32 %v2189, %v2189
        %v2702 = vmul.f32 %v2190, %v2190
        %v2703 = vmul.f32 %v2191, %v2191
        %v2704 = vmul.f32 %v2192, %v2192
        %v2705 = vmul.f32 %v2193, %v2193
        %v2706 = vmul.f32 %v2194, %v2194
        %v2707 = vmul.f32 %v2195, %v2195
        %v2708 = vmul.f32 %v2196, %v2196
        %v2709 = vmul.f32 %v2197, %v2197
        %v2710 = vmul.f32 %v2198, %v2198
        %v2711 = vmul.f32 %v2199, %v2199
        %v2712 = vmul.f32 %v2200, %v2200
        %v2713 = vmul.f32 %v2201, %v2201
        %v2714 = vmul.f32 %v2202, %v2202
        %v2715 = vmul.f32 %v2203, %v2203
        %v2716 = vmul.f32 %v2204, %v2204
        %v2717 = vmul.f32 %v2205, %v2205
        %v2718 = vmul.f32 %v2206, %v2206
        %v2719 = vmul.f32 %v2207, %v2207
        %v2720 = vmul.f32 %v2208, %v2208
        %v2721 = vmul.f32 %v2209, %v2209
        %v2722 = vmul.f32 %v2210, %v2210
        %v2723 = vmul.f32 %v2211, %v2211
        %v2724 = vmul.f32 %v2212, %v2212
        %v2725 = vmul.f32 %v2213, %v2213
        %v2726 = vmul.f32 %v2214, %v2214
        %v2727 = vmul.f32 %v2215, %v2215
        %v2728 = vmul.f32 %v2216, %v2216
        %v2729 = vmul.f32 %v2217, %v2217
        %v2730 = vmul.f32 %v2218, %v2218
        %v2731 = vmul.f32 %v2219, %v2219
        %v2732 = vmul.f32 %v2220, %v2220
        %v2733 = vmul.f32 %v2221, %v2221
        %v2734 = vmul.f32 %v2222, %v2222
        %v2735 = vmul.f32 %v2223, %v2223
        %v2736 = vmul.f32 %v2224, %v2224
        %v2737 = vmul.f32 %v2225, %v2225
        %v2738 = vmul.f32 %v2226, %v2226
        %v2739 = vmul.f32 %v2227, %v2227
        %v2740 = vmul.f32 %v2228, %v2228
        %v2741 = vmul.f32 %v2229, %v2229
        %v2742 = vmul.f32 %v2230, %v2230
        %v2743 = vmul.f32 %v2231, %v2231
        %v2744 = vmul.f32 %v2232, %v2232
        %v2745 = vmul.f32 %v2233, %v2233
        %v2746 = vmul.f32 %v2234, %v2234
        %v2747 = vmul.f32 %v2235, %v2235
        %v2748 = vmul.f32 %v2236, %v2236
        %v2749 = vmul.f32 %v2237, %v2237
        %v2750 = vmul.f32 %v2238, %v2238
        %v2751 = vmul.f32 %v2239, %v2239
        %v2752 = vmul.f32 %v2240, %v2240
        %v2753 = vmul.f32 %v2241, %v2241
        %v2754 = vmul.f32 %v2242, %v2242
        %v2755 = vmul.f32 %v2243, %v2243
        %v2756 = vmul.f32 %v2244, %v2244
        %v2757 = vmul.f32 %v2245, %v2245
        %v2758 = vmul.f32 %v2246, %v2246
        %v2759 = vmul.f32 %v2247, %v2247
        %v2760 = vmul.f32 %v2248, %v2248
        %v2761 = vmul.f32 %v2249, %v2249
        %v2762 = vmul.f32 %v2250, %v2250
        %v2763 = vmul.f32 %v2251, %v2251
        %v2764 = vmul.f32 %v2252, %v2252
        %v2765 = vmul.f32 %v2253, %v2253
        %v2766 = vmul.f32 %v2254, %v2254
        %v2767 = vmul.f32 %v2255, %v2255
        %v2768 = vmul.f32 %v2256, %v2256
        %v2769 = vmul.f32 %v2257, %v2257
        %v2770 = vmul.f32 %v2258, %v2258
        %v2771 = vmul.f32 %v2259, %v2259
        %v2772 = vmul.f32 %v2260, %v2260
        %v2773 = vmul.f32 %v2261, %v2261
        %v2774 = vmul.f32 %v2262, %v2262
        %v2775 = vmul.f32 %v2263, %v2263
        %v2776 = vmul.f32 %v2264, %v2264
        %v2777 = vmul.f32 %v2265, %v2265
        %v2778 = vmul.f32 %v2266, %v2266
        %v2779 = vmul.f32 %v2267, %v2267
        %v2780 = vmul.f32 %v2268, %v2268
        %v2781 = vmul.f32 %v2269, %v2269
        %v2782 = vmul.f32 %v2270, %v2270
        %v2783 = vmul.f32 %v2271, %v2271
        %v2784 = vmul.f32 %v2272, %v2272
        %v2785 = vmul.f32 %v2273, %v2273
        %v2786 = vmul.f32 %v2274, %v2274
        %v2787 = vmul.f32 %v2275, %v2275
        %v2788 = vmul.f32 %v2276, %v2276
        %v2789 = vmul.f32 %v2277, %v2277
        %v2790 = vmul.f32 %v2278, %v2278
        %v2791 = vmul.f32 %v2279, %v2279
        %v2792 = vmul.f32 %v2280, %v2280
        %v2793 = vmul.f32 %v2281, %v2281
        %v2794 = vmul.f32 %v2282, %v2282
        %v2795 = vmul.f32 %v2283, %v2283
        %v2796 = vmul.f32 %v2284, %v2284
        %v2797 = vmul.f32 %v2285, %v2285
        %v2798 = vmul.f32 %v2286, %v2286
        %v2799 = vmul.f32 %v2287, %v2287
        %v2800 = vmul.f32 %v2288, %v2288
        %v2801 = vmul.f32 %v2289, %v2289
        %v2802 = vmul.f32 %v2290, %v2290
        %v2803 = vmul.f32 %v2291, %v2291
        %v2804 = vmul.f32 %v2292, %v2292
        %v2805 = vmul.f32 %v2293, %v2293
        %v2806 = vmul.f32 %v2294, %v2294
        %v2807 = vmul.f32 %v2295, %v2295
        %v2808 = vmul.f32 %v2296, %v2296
        %v2809 = vmul.f32 %v2297, %v2297
        %v2810 = vmul.f32 %v2298, %v2298
        %v2811 = vmul.f32 %v2299, %v2299
        %v2812 = vmul.f32 %v2300, %v2300
        %v2813 = vmul.f32 %v2301, %v2301
        %v2814 = vmul.f32 %v2302, %v2302
        %v2815 = vmul.f32 %v2303, %v2303
        %v2816 = vmul.f32 %v2304, %v2304
        %v2817 = vmul.f32 %v2305, %v2305
        %v2818 = vmul.f32 %v2306, %v2306
        %v2819 = vmul.f32 %v2307, %v2307
        %v2820 = vmul.f32 %v2308, %v2308
        %v2821 = vmul.f32 %v2309, %v2309
        %v2822 = vmul.f32 %v2310, %v2310
        %v2823 = vmul.f32 %v2311, %v2311
        %v2824 = vmul.f32 %v2312, %v2312
        %s2825 = smul.u32 %s24, 2
        %s2826 = sadd.s32 %s2825, %s25
        %s2827 = smul.u32 %s2826, 4096
        %s2828 = sadd.s32 %s2827, 4096
        %p2829 = scmp.le.s32.totalorder %s2828, 4101
        // Predicated region
        $region41: #{tpu_custom_call.1} parent=27 // pred_check
          %p2830 = pneg %p2829
        $region42: #{tpu_custom_call.1} parent=27 // pred_check_branch
          %2832 = sbr.rel (%p2830) target = $region44
        $region43: #{tpu_custom_call.1} parent=27 // pred_region
          %v2833 = vld [vmem:[#allocation2] sm:$0xff]
          %v2834 = vld [vmem:[#allocation2 + $0x8] sm:$0xff]
          %v2835 = vld [vmem:[#allocation2 + $0x10] sm:$0xff]
          %v2836 = vld [vmem:[#allocation2 + $0x18] sm:$0xff]
          %v2837 = vld [vmem:[#allocation2 + $0x20] sm:$0xff]
          %v2838 = vld [vmem:[#allocation2 + $0x28] sm:$0xff]
          %v2839 = vld [vmem:[#allocation2 + $0x30] sm:$0xff]
          %v2840 = vld [vmem:[#allocation2 + $0x38] sm:$0xff]
          %v2841 = vld [vmem:[#allocation2 + $0x40] sm:$0xff]
          %v2842 = vld [vmem:[#allocation2 + $0x48] sm:$0xff]
          %v2843 = vld [vmem:[#allocation2 + $0x50] sm:$0xff]
          %v2844 = vld [vmem:[#allocation2 + $0x58] sm:$0xff]
          %v2845 = vld [vmem:[#allocation2 + $0x60] sm:$0xff]
          %v2846 = vld [vmem:[#allocation2 + $0x68] sm:$0xff]
          %v2847 = vld [vmem:[#allocation2 + $0x70] sm:$0xff]
          %v2848 = vld [vmem:[#allocation2 + $0x78] sm:$0xff]
          %v2849 = vld [vmem:[#allocation2 + $0x80] sm:$0xff]
          %v2850 = vld [vmem:[#allocation2 + $0x88] sm:$0xff]
          %v2851 = vld [vmem:[#allocation2 + $0x90] sm:$0xff]
          %v2852 = vld [vmem:[#allocation2 + $0x98] sm:$0xff]
          %v2853 = vld [vmem:[#allocation2 + $0xa0] sm:$0xff]
          %v2854 = vld [vmem:[#allocation2 + $0xa8] sm:$0xff]
          %v2855 = vld [vmem:[#allocation2 + $0xb0] sm:$0xff]
          %v2856 = vld [vmem:[#allocation2 + $0xb8] sm:$0xff]
          %v2857 = vld [vmem:[#allocation2 + $0xc0] sm:$0xff]
          %v2858 = vld [vmem:[#allocation2 + $0xc8] sm:$0xff]
          %v2859 = vld [vmem:[#allocation2 + $0xd0] sm:$0xff]
          %v2860 = vld [vmem:[#allocation2 + $0xd8] sm:$0xff]
          %v2861 = vld [vmem:[#allocation2 + $0xe0] sm:$0xff]
          %v2862 = vld [vmem:[#allocation2 + $0xe8] sm:$0xff]
          %v2863 = vld [vmem:[#allocation2 + $0xf0] sm:$0xff]
          %v2864 = vld [vmem:[#allocation2 + $0xf8] sm:$0xff]
          %v2865 = vld [vmem:[#allocation2 + $0x100] sm:$0xff]
          %v2866 = vld [vmem:[#allocation2 + $0x108] sm:$0xff]
          %v2867 = vld [vmem:[#allocation2 + $0x110] sm:$0xff]
          %v2868 = vld [vmem:[#allocation2 + $0x118] sm:$0xff]
          %v2869 = vld [vmem:[#allocation2 + $0x120] sm:$0xff]
          %v2870 = vld [vmem:[#allocation2 + $0x128] sm:$0xff]
          %v2871 = vld [vmem:[#allocation2 + $0x130] sm:$0xff]
          %v2872 = vld [vmem:[#allocation2 + $0x138] sm:$0xff]
          %v2873 = vld [vmem:[#allocation2 + $0x140] sm:$0xff]
          %v2874 = vld [vmem:[#allocation2 + $0x148] sm:$0xff]
          %v2875 = vld [vmem:[#allocation2 + $0x150] sm:$0xff]
          %v2876 = vld [vmem:[#allocation2 + $0x158] sm:$0xff]
          %v2877 = vld [vmem:[#allocation2 + $0x160] sm:$0xff]
          %v2878 = vld [vmem:[#allocation2 + $0x168] sm:$0xff]
          %v2879 = vld [vmem:[#allocation2 + $0x170] sm:$0xff]
          %v2880 = vld [vmem:[#allocation2 + $0x178] sm:$0xff]
          %v2881 = vld [vmem:[#allocation2 + $0x180] sm:$0xff]
          %v2882 = vld [vmem:[#allocation2 + $0x188] sm:$0xff]
          %v2883 = vld [vmem:[#allocation2 + $0x190] sm:$0xff]
          %v2884 = vld [vmem:[#allocation2 + $0x198] sm:$0xff]
          %v2885 = vld [vmem:[#allocation2 + $0x1a0] sm:$0xff]
          %v2886 = vld [vmem:[#allocation2 + $0x1a8] sm:$0xff]
          %v2887 = vld [vmem:[#allocation2 + $0x1b0] sm:$0xff]
          %v2888 = vld [vmem:[#allocation2 + $0x1b8] sm:$0xff]
          %v2889 = vld [vmem:[#allocation2 + $0x1c0] sm:$0xff]
          %v2890 = vld [vmem:[#allocation2 + $0x1c8] sm:$0xff]
          %v2891 = vld [vmem:[#allocation2 + $0x1d0] sm:$0xff]
          %v2892 = vld [vmem:[#allocation2 + $0x1d8] sm:$0xff]
          %v2893 = vld [vmem:[#allocation2 + $0x1e0] sm:$0xff]
          %v2894 = vld [vmem:[#allocation2 + $0x1e8] sm:$0xff]
          %v2895 = vld [vmem:[#allocation2 + $0x1f0] sm:$0xff]
          %v2896 = vld [vmem:[#allocation2 + $0x1f8] sm:$0xff]
          %v2897 = vld [vmem:[#allocation2 + $0x200] sm:$0xff]
          %v2898 = vld [vmem:[#allocation2 + $0x208] sm:$0xff]
          %v2899 = vld [vmem:[#allocation2 + $0x210] sm:$0xff]
          %v2900 = vld [vmem:[#allocation2 + $0x218] sm:$0xff]
          %v2901 = vld [vmem:[#allocation2 + $0x220] sm:$0xff]
          %v2902 = vld [vmem:[#allocation2 + $0x228] sm:$0xff]
          %v2903 = vld [vmem:[#allocation2 + $0x230] sm:$0xff]
          %v2904 = vld [vmem:[#allocation2 + $0x238] sm:$0xff]
          %v2905 = vld [vmem:[#allocation2 + $0x240] sm:$0xff]
          %v2906 = vld [vmem:[#allocation2 + $0x248] sm:$0xff]
          %v2907 = vld [vmem:[#allocation2 + $0x250] sm:$0xff]
          %v2908 = vld [vmem:[#allocation2 + $0x258] sm:$0xff]
          %v2909 = vld [vmem:[#allocation2 + $0x260] sm:$0xff]
          %v2910 = vld [vmem:[#allocation2 + $0x268] sm:$0xff]
          %v2911 = vld [vmem:[#allocation2 + $0x270] sm:$0xff]
          %v2912 = vld [vmem:[#allocation2 + $0x278] sm:$0xff]
          %v2913 = vld [vmem:[#allocation2 + $0x280] sm:$0xff]
          %v2914 = vld [vmem:[#allocation2 + $0x288] sm:$0xff]
          %v2915 = vld [vmem:[#allocation2 + $0x290] sm:$0xff]
          %v2916 = vld [vmem:[#allocation2 + $0x298] sm:$0xff]
          %v2917 = vld [vmem:[#allocation2 + $0x2a0] sm:$0xff]
          %v2918 = vld [vmem:[#allocation2 + $0x2a8] sm:$0xff]
          %v2919 = vld [vmem:[#allocation2 + $0x2b0] sm:$0xff]
          %v2920 = vld [vmem:[#allocation2 + $0x2b8] sm:$0xff]
          %v2921 = vld [vmem:[#allocation2 + $0x2c0] sm:$0xff]
          %v2922 = vld [vmem:[#allocation2 + $0x2c8] sm:$0xff]
          %v2923 = vld [vmem:[#allocation2 + $0x2d0] sm:$0xff]
          %v2924 = vld [vmem:[#allocation2 + $0x2d8] sm:$0xff]
          %v2925 = vld [vmem:[#allocation2 + $0x2e0] sm:$0xff]
          %v2926 = vld [vmem:[#allocation2 + $0x2e8] sm:$0xff]
          %v2927 = vld [vmem:[#allocation2 + $0x2f0] sm:$0xff]
          %v2928 = vld [vmem:[#allocation2 + $0x2f8] sm:$0xff]
          %v2929 = vld [vmem:[#allocation2 + $0x300] sm:$0xff]
          %v2930 = vld [vmem:[#allocation2 + $0x308] sm:$0xff]
          %v2931 = vld [vmem:[#allocation2 + $0x310] sm:$0xff]
          %v2932 = vld [vmem:[#allocation2 + $0x318] sm:$0xff]
          %v2933 = vld [vmem:[#allocation2 + $0x320] sm:$0xff]
          %v2934 = vld [vmem:[#allocation2 + $0x328] sm:$0xff]
          %v2935 = vld [vmem:[#allocation2 + $0x330] sm:$0xff]
          %v2936 = vld [vmem:[#allocation2 + $0x338] sm:$0xff]
          %v2937 = vld [vmem:[#allocation2 + $0x340] sm:$0xff]
          %v2938 = vld [vmem:[#allocation2 + $0x348] sm:$0xff]
          %v2939 = vld [vmem:[#allocation2 + $0x350] sm:$0xff]
          %v2940 = vld [vmem:[#allocation2 + $0x358] sm:$0xff]
          %v2941 = vld [vmem:[#allocation2 + $0x360] sm:$0xff]
          %v2942 = vld [vmem:[#allocation2 + $0x368] sm:$0xff]
          %v2943 = vld [vmem:[#allocation2 + $0x370] sm:$0xff]
          %v2944 = vld [vmem:[#allocation2 + $0x378] sm:$0xff]
          %v2945 = vld [vmem:[#allocation2 + $0x380] sm:$0xff]
          %v2946 = vld [vmem:[#allocation2 + $0x388] sm:$0xff]
          %v2947 = vld [vmem:[#allocation2 + $0x390] sm:$0xff]
          %v2948 = vld [vmem:[#allocation2 + $0x398] sm:$0xff]
          %v2949 = vld [vmem:[#allocation2 + $0x3a0] sm:$0xff]
          %v2950 = vld [vmem:[#allocation2 + $0x3a8] sm:$0xff]
          %v2951 = vld [vmem:[#allocation2 + $0x3b0] sm:$0xff]
          %v2952 = vld [vmem:[#allocation2 + $0x3b8] sm:$0xff]
          %v2953 = vld [vmem:[#allocation2 + $0x3c0] sm:$0xff]
          %v2954 = vld [vmem:[#allocation2 + $0x3c8] sm:$0xff]
          %v2955 = vld [vmem:[#allocation2 + $0x3d0] sm:$0xff]
          %v2956 = vld [vmem:[#allocation2 + $0x3d8] sm:$0xff]
          %v2957 = vld [vmem:[#allocation2 + $0x3e0] sm:$0xff]
          %v2958 = vld [vmem:[#allocation2 + $0x3e8] sm:$0xff]
          %v2959 = vld [vmem:[#allocation2 + $0x3f0] sm:$0xff]
          %v2960 = vld [vmem:[#allocation2 + $0x3f8] sm:$0xff]
          %v2961 = vld [vmem:[#allocation2 + $0x400] sm:$0xff]
          %v2962 = vld [vmem:[#allocation2 + $0x408] sm:$0xff]
          %v2963 = vld [vmem:[#allocation2 + $0x410] sm:$0xff]
          %v2964 = vld [vmem:[#allocation2 + $0x418] sm:$0xff]
          %v2965 = vld [vmem:[#allocation2 + $0x420] sm:$0xff]
          %v2966 = vld [vmem:[#allocation2 + $0x428] sm:$0xff]
          %v2967 = vld [vmem:[#allocation2 + $0x430] sm:$0xff]
          %v2968 = vld [vmem:[#allocation2 + $0x438] sm:$0xff]
          %v2969 = vld [vmem:[#allocation2 + $0x440] sm:$0xff]
          %v2970 = vld [vmem:[#allocation2 + $0x448] sm:$0xff]
          %v2971 = vld [vmem:[#allocation2 + $0x450] sm:$0xff]
          %v2972 = vld [vmem:[#allocation2 + $0x458] sm:$0xff]
          %v2973 = vld [vmem:[#allocation2 + $0x460] sm:$0xff]
          %v2974 = vld [vmem:[#allocation2 + $0x468] sm:$0xff]
          %v2975 = vld [vmem:[#allocation2 + $0x470] sm:$0xff]
          %v2976 = vld [vmem:[#allocation2 + $0x478] sm:$0xff]
          %v2977 = vld [vmem:[#allocation2 + $0x480] sm:$0xff]
          %v2978 = vld [vmem:[#allocation2 + $0x488] sm:$0xff]
          %v2979 = vld [vmem:[#allocation2 + $0x490] sm:$0xff]
          %v2980 = vld [vmem:[#allocation2 + $0x498] sm:$0xff]
          %v2981 = vld [vmem:[#allocation2 + $0x4a0] sm:$0xff]
          %v2982 = vld [vmem:[#allocation2 + $0x4a8] sm:$0xff]
          %v2983 = vld [vmem:[#allocation2 + $0x4b0] sm:$0xff]
          %v2984 = vld [vmem:[#allocation2 + $0x4b8] sm:$0xff]
          %v2985 = vld [vmem:[#allocation2 + $0x4c0] sm:$0xff]
          %v2986 = vld [vmem:[#allocation2 + $0x4c8] sm:$0xff]
          %v2987 = vld [vmem:[#allocation2 + $0x4d0] sm:$0xff]
          %v2988 = vld [vmem:[#allocation2 + $0x4d8] sm:$0xff]
          %v2989 = vld [vmem:[#allocation2 + $0x4e0] sm:$0xff]
          %v2990 = vld [vmem:[#allocation2 + $0x4e8] sm:$0xff]
          %v2991 = vld [vmem:[#allocation2 + $0x4f0] sm:$0xff]
          %v2992 = vld [vmem:[#allocation2 + $0x4f8] sm:$0xff]
          %v2993 = vld [vmem:[#allocation2 + $0x500] sm:$0xff]
          %v2994 = vld [vmem:[#allocation2 + $0x508] sm:$0xff]
          %v2995 = vld [vmem:[#allocation2 + $0x510] sm:$0xff]
          %v2996 = vld [vmem:[#allocation2 + $0x518] sm:$0xff]
          %v2997 = vld [vmem:[#allocation2 + $0x520] sm:$0xff]
          %v2998 = vld [vmem:[#allocation2 + $0x528] sm:$0xff]
          %v2999 = vld [vmem:[#allocation2 + $0x530] sm:$0xff]
          %v3000 = vld [vmem:[#allocation2 + $0x538] sm:$0xff]
          %v3001 = vld [vmem:[#allocation2 + $0x540] sm:$0xff]
          %v3002 = vld [vmem:[#allocation2 + $0x548] sm:$0xff]
          %v3003 = vld [vmem:[#allocation2 + $0x550] sm:$0xff]
          %v3004 = vld [vmem:[#allocation2 + $0x558] sm:$0xff]
          %v3005 = vld [vmem:[#allocation2 + $0x560] sm:$0xff]
          %v3006 = vld [vmem:[#allocation2 + $0x568] sm:$0xff]
          %v3007 = vld [vmem:[#allocation2 + $0x570] sm:$0xff]
          %v3008 = vld [vmem:[#allocation2 + $0x578] sm:$0xff]
          %v3009 = vld [vmem:[#allocation2 + $0x580] sm:$0xff]
          %v3010 = vld [vmem:[#allocation2 + $0x588] sm:$0xff]
          %v3011 = vld [vmem:[#allocation2 + $0x590] sm:$0xff]
          %v3012 = vld [vmem:[#allocation2 + $0x598] sm:$0xff]
          %v3013 = vld [vmem:[#allocation2 + $0x5a0] sm:$0xff]
          %v3014 = vld [vmem:[#allocation2 + $0x5a8] sm:$0xff]
          %v3015 = vld [vmem:[#allocation2 + $0x5b0] sm:$0xff]
          %v3016 = vld [vmem:[#allocation2 + $0x5b8] sm:$0xff]
          %v3017 = vld [vmem:[#allocation2 + $0x5c0] sm:$0xff]
          %v3018 = vld [vmem:[#allocation2 + $0x5c8] sm:$0xff]
          %v3019 = vld [vmem:[#allocation2 + $0x5d0] sm:$0xff]
          %v3020 = vld [vmem:[#allocation2 + $0x5d8] sm:$0xff]
          %v3021 = vld [vmem:[#allocation2 + $0x5e0] sm:$0xff]
          %v3022 = vld [vmem:[#allocation2 + $0x5e8] sm:$0xff]
          %v3023 = vld [vmem:[#allocation2 + $0x5f0] sm:$0xff]
          %v3024 = vld [vmem:[#allocation2 + $0x5f8] sm:$0xff]
          %v3025 = vld [vmem:[#allocation2 + $0x600] sm:$0xff]
          %v3026 = vld [vmem:[#allocation2 + $0x608] sm:$0xff]
          %v3027 = vld [vmem:[#allocation2 + $0x610] sm:$0xff]
          %v3028 = vld [vmem:[#allocation2 + $0x618] sm:$0xff]
          %v3029 = vld [vmem:[#allocation2 + $0x620] sm:$0xff]
          %v3030 = vld [vmem:[#allocation2 + $0x628] sm:$0xff]
          %v3031 = vld [vmem:[#allocation2 + $0x630] sm:$0xff]
          %v3032 = vld [vmem:[#allocation2 + $0x638] sm:$0xff]
          %v3033 = vld [vmem:[#allocation2 + $0x640] sm:$0xff]
          %v3034 = vld [vmem:[#allocation2 + $0x648] sm:$0xff]
          %v3035 = vld [vmem:[#allocation2 + $0x650] sm:$0xff]
          %v3036 = vld [vmem:[#allocation2 + $0x658] sm:$0xff]
          %v3037 = vld [vmem:[#allocation2 + $0x660] sm:$0xff]
          %v3038 = vld [vmem:[#allocation2 + $0x668] sm:$0xff]
          %v3039 = vld [vmem:[#allocation2 + $0x670] sm:$0xff]
          %v3040 = vld [vmem:[#allocation2 + $0x678] sm:$0xff]
          %v3041 = vld [vmem:[#allocation2 + $0x680] sm:$0xff]
          %v3042 = vld [vmem:[#allocation2 + $0x688] sm:$0xff]
          %v3043 = vld [vmem:[#allocation2 + $0x690] sm:$0xff]
          %v3044 = vld [vmem:[#allocation2 + $0x698] sm:$0xff]
          %v3045 = vld [vmem:[#allocation2 + $0x6a0] sm:$0xff]
          %v3046 = vld [vmem:[#allocation2 + $0x6a8] sm:$0xff]
          %v3047 = vld [vmem:[#allocation2 + $0x6b0] sm:$0xff]
          %v3048 = vld [vmem:[#allocation2 + $0x6b8] sm:$0xff]
          %v3049 = vld [vmem:[#allocation2 + $0x6c0] sm:$0xff]
          %v3050 = vld [vmem:[#allocation2 + $0x6c8] sm:$0xff]
          %v3051 = vld [vmem:[#allocation2 + $0x6d0] sm:$0xff]
          %v3052 = vld [vmem:[#allocation2 + $0x6d8] sm:$0xff]
          %v3053 = vld [vmem:[#allocation2 + $0x6e0] sm:$0xff]
          %v3054 = vld [vmem:[#allocation2 + $0x6e8] sm:$0xff]
          %v3055 = vld [vmem:[#allocation2 + $0x6f0] sm:$0xff]
          %v3056 = vld [vmem:[#allocation2 + $0x6f8] sm:$0xff]
          %v3057 = vld [vmem:[#allocation2 + $0x700] sm:$0xff]
          %v3058 = vld [vmem:[#allocation2 + $0x708] sm:$0xff]
          %v3059 = vld [vmem:[#allocation2 + $0x710] sm:$0xff]
          %v3060 = vld [vmem:[#allocation2 + $0x718] sm:$0xff]
          %v3061 = vld [vmem:[#allocation2 + $0x720] sm:$0xff]
          %v3062 = vld [vmem:[#allocation2 + $0x728] sm:$0xff]
          %v3063 = vld [vmem:[#allocation2 + $0x730] sm:$0xff]
          %v3064 = vld [vmem:[#allocation2 + $0x738] sm:$0xff]
          %v3065 = vld [vmem:[#allocation2 + $0x740] sm:$0xff]
          %v3066 = vld [vmem:[#allocation2 + $0x748] sm:$0xff]
          %v3067 = vld [vmem:[#allocation2 + $0x750] sm:$0xff]
          %v3068 = vld [vmem:[#allocation2 + $0x758] sm:$0xff]
          %v3069 = vld [vmem:[#allocation2 + $0x760] sm:$0xff]
          %v3070 = vld [vmem:[#allocation2 + $0x768] sm:$0xff]
          %v3071 = vld [vmem:[#allocation2 + $0x770] sm:$0xff]
          %v3072 = vld [vmem:[#allocation2 + $0x778] sm:$0xff]
          %v3073 = vld [vmem:[#allocation2 + $0x780] sm:$0xff]
          %v3074 = vld [vmem:[#allocation2 + $0x788] sm:$0xff]
          %v3075 = vld [vmem:[#allocation2 + $0x790] sm:$0xff]
          %v3076 = vld [vmem:[#allocation2 + $0x798] sm:$0xff]
          %v3077 = vld [vmem:[#allocation2 + $0x7a0] sm:$0xff]
          %v3078 = vld [vmem:[#allocation2 + $0x7a8] sm:$0xff]
          %v3079 = vld [vmem:[#allocation2 + $0x7b0] sm:$0xff]
          %v3080 = vld [vmem:[#allocation2 + $0x7b8] sm:$0xff]
          %v3081 = vld [vmem:[#allocation2 + $0x7c0] sm:$0xff]
          %v3082 = vld [vmem:[#allocation2 + $0x7c8] sm:$0xff]
          %v3083 = vld [vmem:[#allocation2 + $0x7d0] sm:$0xff]
          %v3084 = vld [vmem:[#allocation2 + $0x7d8] sm:$0xff]
          %v3085 = vld [vmem:[#allocation2 + $0x7e0] sm:$0xff]
          %v3086 = vld [vmem:[#allocation2 + $0x7e8] sm:$0xff]
          %v3087 = vld [vmem:[#allocation2 + $0x7f0] sm:$0xff]
          %v3088 = vld [vmem:[#allocation2 + $0x7f8] sm:$0xff]
          %v3089 = vld [vmem:[#allocation2 + $0x800] sm:$0xff]
          %v3090 = vld [vmem:[#allocation2 + $0x808] sm:$0xff]
          %v3091 = vld [vmem:[#allocation2 + $0x810] sm:$0xff]
          %v3092 = vld [vmem:[#allocation2 + $0x818] sm:$0xff]
          %v3093 = vld [vmem:[#allocation2 + $0x820] sm:$0xff]
          %v3094 = vld [vmem:[#allocation2 + $0x828] sm:$0xff]
          %v3095 = vld [vmem:[#allocation2 + $0x830] sm:$0xff]
          %v3096 = vld [vmem:[#allocation2 + $0x838] sm:$0xff]
          %v3097 = vld [vmem:[#allocation2 + $0x840] sm:$0xff]
          %v3098 = vld [vmem:[#allocation2 + $0x848] sm:$0xff]
          %v3099 = vld [vmem:[#allocation2 + $0x850] sm:$0xff]
          %v3100 = vld [vmem:[#allocation2 + $0x858] sm:$0xff]
          %v3101 = vld [vmem:[#allocation2 + $0x860] sm:$0xff]
          %v3102 = vld [vmem:[#allocation2 + $0x868] sm:$0xff]
          %v3103 = vld [vmem:[#allocation2 + $0x870] sm:$0xff]
          %v3104 = vld [vmem:[#allocation2 + $0x878] sm:$0xff]
          %v3105 = vld [vmem:[#allocation2 + $0x880] sm:$0xff]
          %v3106 = vld [vmem:[#allocation2 + $0x888] sm:$0xff]
          %v3107 = vld [vmem:[#allocation2 + $0x890] sm:$0xff]
          %v3108 = vld [vmem:[#allocation2 + $0x898] sm:$0xff]
          %v3109 = vld [vmem:[#allocation2 + $0x8a0] sm:$0xff]
          %v3110 = vld [vmem:[#allocation2 + $0x8a8] sm:$0xff]
          %v3111 = vld [vmem:[#allocation2 + $0x8b0] sm:$0xff]
          %v3112 = vld [vmem:[#allocation2 + $0x8b8] sm:$0xff]
          %v3113 = vld [vmem:[#allocation2 + $0x8c0] sm:$0xff]
          %v3114 = vld [vmem:[#allocation2 + $0x8c8] sm:$0xff]
          %v3115 = vld [vmem:[#allocation2 + $0x8d0] sm:$0xff]
          %v3116 = vld [vmem:[#allocation2 + $0x8d8] sm:$0xff]
          %v3117 = vld [vmem:[#allocation2 + $0x8e0] sm:$0xff]
          %v3118 = vld [vmem:[#allocation2 + $0x8e8] sm:$0xff]
          %v3119 = vld [vmem:[#allocation2 + $0x8f0] sm:$0xff]
          %v3120 = vld [vmem:[#allocation2 + $0x8f8] sm:$0xff]
          %v3121 = vld [vmem:[#allocation2 + $0x900] sm:$0xff]
          %v3122 = vld [vmem:[#allocation2 + $0x908] sm:$0xff]
          %v3123 = vld [vmem:[#allocation2 + $0x910] sm:$0xff]
          %v3124 = vld [vmem:[#allocation2 + $0x918] sm:$0xff]
          %v3125 = vld [vmem:[#allocation2 + $0x920] sm:$0xff]
          %v3126 = vld [vmem:[#allocation2 + $0x928] sm:$0xff]
          %v3127 = vld [vmem:[#allocation2 + $0x930] sm:$0xff]
          %v3128 = vld [vmem:[#allocation2 + $0x938] sm:$0xff]
          %v3129 = vld [vmem:[#allocation2 + $0x940] sm:$0xff]
          %v3130 = vld [vmem:[#allocation2 + $0x948] sm:$0xff]
          %v3131 = vld [vmem:[#allocation2 + $0x950] sm:$0xff]
          %v3132 = vld [vmem:[#allocation2 + $0x958] sm:$0xff]
          %v3133 = vld [vmem:[#allocation2 + $0x960] sm:$0xff]
          %v3134 = vld [vmem:[#allocation2 + $0x968] sm:$0xff]
          %v3135 = vld [vmem:[#allocation2 + $0x970] sm:$0xff]
          %v3136 = vld [vmem:[#allocation2 + $0x978] sm:$0xff]
          %v3137 = vld [vmem:[#allocation2 + $0x980] sm:$0xff]
          %v3138 = vld [vmem:[#allocation2 + $0x988] sm:$0xff]
          %v3139 = vld [vmem:[#allocation2 + $0x990] sm:$0xff]
          %v3140 = vld [vmem:[#allocation2 + $0x998] sm:$0xff]
          %v3141 = vld [vmem:[#allocation2 + $0x9a0] sm:$0xff]
          %v3142 = vld [vmem:[#allocation2 + $0x9a8] sm:$0xff]
          %v3143 = vld [vmem:[#allocation2 + $0x9b0] sm:$0xff]
          %v3144 = vld [vmem:[#allocation2 + $0x9b8] sm:$0xff]
          %v3145 = vld [vmem:[#allocation2 + $0x9c0] sm:$0xff]
          %v3146 = vld [vmem:[#allocation2 + $0x9c8] sm:$0xff]
          %v3147 = vld [vmem:[#allocation2 + $0x9d0] sm:$0xff]
          %v3148 = vld [vmem:[#allocation2 + $0x9d8] sm:$0xff]
          %v3149 = vld [vmem:[#allocation2 + $0x9e0] sm:$0xff]
          %v3150 = vld [vmem:[#allocation2 + $0x9e8] sm:$0xff]
          %v3151 = vld [vmem:[#allocation2 + $0x9f0] sm:$0xff]
          %v3152 = vld [vmem:[#allocation2 + $0x9f8] sm:$0xff]
          %v3153 = vld [vmem:[#allocation2 + $0xa00] sm:$0xff]
          %v3154 = vld [vmem:[#allocation2 + $0xa08] sm:$0xff]
          %v3155 = vld [vmem:[#allocation2 + $0xa10] sm:$0xff]
          %v3156 = vld [vmem:[#allocation2 + $0xa18] sm:$0xff]
          %v3157 = vld [vmem:[#allocation2 + $0xa20] sm:$0xff]
          %v3158 = vld [vmem:[#allocation2 + $0xa28] sm:$0xff]
          %v3159 = vld [vmem:[#allocation2 + $0xa30] sm:$0xff]
          %v3160 = vld [vmem:[#allocation2 + $0xa38] sm:$0xff]
          %v3161 = vld [vmem:[#allocation2 + $0xa40] sm:$0xff]
          %v3162 = vld [vmem:[#allocation2 + $0xa48] sm:$0xff]
          %v3163 = vld [vmem:[#allocation2 + $0xa50] sm:$0xff]
          %v3164 = vld [vmem:[#allocation2 + $0xa58] sm:$0xff]
          %v3165 = vld [vmem:[#allocation2 + $0xa60] sm:$0xff]
          %v3166 = vld [vmem:[#allocation2 + $0xa68] sm:$0xff]
          %v3167 = vld [vmem:[#allocation2 + $0xa70] sm:$0xff]
          %v3168 = vld [vmem:[#allocation2 + $0xa78] sm:$0xff]
          %v3169 = vld [vmem:[#allocation2 + $0xa80] sm:$0xff]
          %v3170 = vld [vmem:[#allocation2 + $0xa88] sm:$0xff]
          %v3171 = vld [vmem:[#allocation2 + $0xa90] sm:$0xff]
          %v3172 = vld [vmem:[#allocation2 + $0xa98] sm:$0xff]
          %v3173 = vld [vmem:[#allocation2 + $0xaa0] sm:$0xff]
          %v3174 = vld [vmem:[#allocation2 + $0xaa8] sm:$0xff]
          %v3175 = vld [vmem:[#allocation2 + $0xab0] sm:$0xff]
          %v3176 = vld [vmem:[#allocation2 + $0xab8] sm:$0xff]
          %v3177 = vld [vmem:[#allocation2 + $0xac0] sm:$0xff]
          %v3178 = vld [vmem:[#allocation2 + $0xac8] sm:$0xff]
          %v3179 = vld [vmem:[#allocation2 + $0xad0] sm:$0xff]
          %v3180 = vld [vmem:[#allocation2 + $0xad8] sm:$0xff]
          %v3181 = vld [vmem:[#allocation2 + $0xae0] sm:$0xff]
          %v3182 = vld [vmem:[#allocation2 + $0xae8] sm:$0xff]
          %v3183 = vld [vmem:[#allocation2 + $0xaf0] sm:$0xff]
          %v3184 = vld [vmem:[#allocation2 + $0xaf8] sm:$0xff]
          %v3185 = vld [vmem:[#allocation2 + $0xb00] sm:$0xff]
          %v3186 = vld [vmem:[#allocation2 + $0xb08] sm:$0xff]
          %v3187 = vld [vmem:[#allocation2 + $0xb10] sm:$0xff]
          %v3188 = vld [vmem:[#allocation2 + $0xb18] sm:$0xff]
          %v3189 = vld [vmem:[#allocation2 + $0xb20] sm:$0xff]
          %v3190 = vld [vmem:[#allocation2 + $0xb28] sm:$0xff]
          %v3191 = vld [vmem:[#allocation2 + $0xb30] sm:$0xff]
          %v3192 = vld [vmem:[#allocation2 + $0xb38] sm:$0xff]
          %v3193 = vld [vmem:[#allocation2 + $0xb40] sm:$0xff]
          %v3194 = vld [vmem:[#allocation2 + $0xb48] sm:$0xff]
          %v3195 = vld [vmem:[#allocation2 + $0xb50] sm:$0xff]
          %v3196 = vld [vmem:[#allocation2 + $0xb58] sm:$0xff]
          %v3197 = vld [vmem:[#allocation2 + $0xb60] sm:$0xff]
          %v3198 = vld [vmem:[#allocation2 + $0xb68] sm:$0xff]
          %v3199 = vld [vmem:[#allocation2 + $0xb70] sm:$0xff]
          %v3200 = vld [vmem:[#allocation2 + $0xb78] sm:$0xff]
          %v3201 = vld [vmem:[#allocation2 + $0xb80] sm:$0xff]
          %v3202 = vld [vmem:[#allocation2 + $0xb88] sm:$0xff]
          %v3203 = vld [vmem:[#allocation2 + $0xb90] sm:$0xff]
          %v3204 = vld [vmem:[#allocation2 + $0xb98] sm:$0xff]
          %v3205 = vld [vmem:[#allocation2 + $0xba0] sm:$0xff]
          %v3206 = vld [vmem:[#allocation2 + $0xba8] sm:$0xff]
          %v3207 = vld [vmem:[#allocation2 + $0xbb0] sm:$0xff]
          %v3208 = vld [vmem:[#allocation2 + $0xbb8] sm:$0xff]
          %v3209 = vld [vmem:[#allocation2 + $0xbc0] sm:$0xff]
          %v3210 = vld [vmem:[#allocation2 + $0xbc8] sm:$0xff]
          %v3211 = vld [vmem:[#allocation2 + $0xbd0] sm:$0xff]
          %v3212 = vld [vmem:[#allocation2 + $0xbd8] sm:$0xff]
          %v3213 = vld [vmem:[#allocation2 + $0xbe0] sm:$0xff]
          %v3214 = vld [vmem:[#allocation2 + $0xbe8] sm:$0xff]
          %v3215 = vld [vmem:[#allocation2 + $0xbf0] sm:$0xff]
          %v3216 = vld [vmem:[#allocation2 + $0xbf8] sm:$0xff]
          %v3217 = vld [vmem:[#allocation2 + $0xc00] sm:$0xff]
          %v3218 = vld [vmem:[#allocation2 + $0xc08] sm:$0xff]
          %v3219 = vld [vmem:[#allocation2 + $0xc10] sm:$0xff]
          %v3220 = vld [vmem:[#allocation2 + $0xc18] sm:$0xff]
          %v3221 = vld [vmem:[#allocation2 + $0xc20] sm:$0xff]
          %v3222 = vld [vmem:[#allocation2 + $0xc28] sm:$0xff]
          %v3223 = vld [vmem:[#allocation2 + $0xc30] sm:$0xff]
          %v3224 = vld [vmem:[#allocation2 + $0xc38] sm:$0xff]
          %v3225 = vld [vmem:[#allocation2 + $0xc40] sm:$0xff]
          %v3226 = vld [vmem:[#allocation2 + $0xc48] sm:$0xff]
          %v3227 = vld [vmem:[#allocation2 + $0xc50] sm:$0xff]
          %v3228 = vld [vmem:[#allocation2 + $0xc58] sm:$0xff]
          %v3229 = vld [vmem:[#allocation2 + $0xc60] sm:$0xff]
          %v3230 = vld [vmem:[#allocation2 + $0xc68] sm:$0xff]
          %v3231 = vld [vmem:[#allocation2 + $0xc70] sm:$0xff]
          %v3232 = vld [vmem:[#allocation2 + $0xc78] sm:$0xff]
          %v3233 = vld [vmem:[#allocation2 + $0xc80] sm:$0xff]
          %v3234 = vld [vmem:[#allocation2 + $0xc88] sm:$0xff]
          %v3235 = vld [vmem:[#allocation2 + $0xc90] sm:$0xff]
          %v3236 = vld [vmem:[#allocation2 + $0xc98] sm:$0xff]
          %v3237 = vld [vmem:[#allocation2 + $0xca0] sm:$0xff]
          %v3238 = vld [vmem:[#allocation2 + $0xca8] sm:$0xff]
          %v3239 = vld [vmem:[#allocation2 + $0xcb0] sm:$0xff]
          %v3240 = vld [vmem:[#allocation2 + $0xcb8] sm:$0xff]
          %v3241 = vld [vmem:[#allocation2 + $0xcc0] sm:$0xff]
          %v3242 = vld [vmem:[#allocation2 + $0xcc8] sm:$0xff]
          %v3243 = vld [vmem:[#allocation2 + $0xcd0] sm:$0xff]
          %v3244 = vld [vmem:[#allocation2 + $0xcd8] sm:$0xff]
          %v3245 = vld [vmem:[#allocation2 + $0xce0] sm:$0xff]
          %v3246 = vld [vmem:[#allocation2 + $0xce8] sm:$0xff]
          %v3247 = vld [vmem:[#allocation2 + $0xcf0] sm:$0xff]
          %v3248 = vld [vmem:[#allocation2 + $0xcf8] sm:$0xff]
          %v3249 = vld [vmem:[#allocation2 + $0xd00] sm:$0xff]
          %v3250 = vld [vmem:[#allocation2 + $0xd08] sm:$0xff]
          %v3251 = vld [vmem:[#allocation2 + $0xd10] sm:$0xff]
          %v3252 = vld [vmem:[#allocation2 + $0xd18] sm:$0xff]
          %v3253 = vld [vmem:[#allocation2 + $0xd20] sm:$0xff]
          %v3254 = vld [vmem:[#allocation2 + $0xd28] sm:$0xff]
          %v3255 = vld [vmem:[#allocation2 + $0xd30] sm:$0xff]
          %v3256 = vld [vmem:[#allocation2 + $0xd38] sm:$0xff]
          %v3257 = vld [vmem:[#allocation2 + $0xd40] sm:$0xff]
          %v3258 = vld [vmem:[#allocation2 + $0xd48] sm:$0xff]
          %v3259 = vld [vmem:[#allocation2 + $0xd50] sm:$0xff]
          %v3260 = vld [vmem:[#allocation2 + $0xd58] sm:$0xff]
          %v3261 = vld [vmem:[#allocation2 + $0xd60] sm:$0xff]
          %v3262 = vld [vmem:[#allocation2 + $0xd68] sm:$0xff]
          %v3263 = vld [vmem:[#allocation2 + $0xd70] sm:$0xff]
          %v3264 = vld [vmem:[#allocation2 + $0xd78] sm:$0xff]
          %v3265 = vld [vmem:[#allocation2 + $0xd80] sm:$0xff]
          %v3266 = vld [vmem:[#allocation2 + $0xd88] sm:$0xff]
          %v3267 = vld [vmem:[#allocation2 + $0xd90] sm:$0xff]
          %v3268 = vld [vmem:[#allocation2 + $0xd98] sm:$0xff]
          %v3269 = vld [vmem:[#allocation2 + $0xda0] sm:$0xff]
          %v3270 = vld [vmem:[#allocation2 + $0xda8] sm:$0xff]
          %v3271 = vld [vmem:[#allocation2 + $0xdb0] sm:$0xff]
          %v3272 = vld [vmem:[#allocation2 + $0xdb8] sm:$0xff]
          %v3273 = vld [vmem:[#allocation2 + $0xdc0] sm:$0xff]
          %v3274 = vld [vmem:[#allocation2 + $0xdc8] sm:$0xff]
          %v3275 = vld [vmem:[#allocation2 + $0xdd0] sm:$0xff]
          %v3276 = vld [vmem:[#allocation2 + $0xdd8] sm:$0xff]
          %v3277 = vld [vmem:[#allocation2 + $0xde0] sm:$0xff]
          %v3278 = vld [vmem:[#allocation2 + $0xde8] sm:$0xff]
          %v3279 = vld [vmem:[#allocation2 + $0xdf0] sm:$0xff]
          %v3280 = vld [vmem:[#allocation2 + $0xdf8] sm:$0xff]
          %v3281 = vld [vmem:[#allocation2 + $0xe00] sm:$0xff]
          %v3282 = vld [vmem:[#allocation2 + $0xe08] sm:$0xff]
          %v3283 = vld [vmem:[#allocation2 + $0xe10] sm:$0xff]
          %v3284 = vld [vmem:[#allocation2 + $0xe18] sm:$0xff]
          %v3285 = vld [vmem:[#allocation2 + $0xe20] sm:$0xff]
          %v3286 = vld [vmem:[#allocation2 + $0xe28] sm:$0xff]
          %v3287 = vld [vmem:[#allocation2 + $0xe30] sm:$0xff]
          %v3288 = vld [vmem:[#allocation2 + $0xe38] sm:$0xff]
          %v3289 = vld [vmem:[#allocation2 + $0xe40] sm:$0xff]
          %v3290 = vld [vmem:[#allocation2 + $0xe48] sm:$0xff]
          %v3291 = vld [vmem:[#allocation2 + $0xe50] sm:$0xff]
          %v3292 = vld [vmem:[#allocation2 + $0xe58] sm:$0xff]
          %v3293 = vld [vmem:[#allocation2 + $0xe60] sm:$0xff]
          %v3294 = vld [vmem:[#allocation2 + $0xe68] sm:$0xff]
          %v3295 = vld [vmem:[#allocation2 + $0xe70] sm:$0xff]
          %v3296 = vld [vmem:[#allocation2 + $0xe78] sm:$0xff]
          %v3297 = vld [vmem:[#allocation2 + $0xe80] sm:$0xff]
          %v3298 = vld [vmem:[#allocation2 + $0xe88] sm:$0xff]
          %v3299 = vld [vmem:[#allocation2 + $0xe90] sm:$0xff]
          %v3300 = vld [vmem:[#allocation2 + $0xe98] sm:$0xff]
          %v3301 = vld [vmem:[#allocation2 + $0xea0] sm:$0xff]
          %v3302 = vld [vmem:[#allocation2 + $0xea8] sm:$0xff]
          %v3303 = vld [vmem:[#allocation2 + $0xeb0] sm:$0xff]
          %v3304 = vld [vmem:[#allocation2 + $0xeb8] sm:$0xff]
          %v3305 = vld [vmem:[#allocation2 + $0xec0] sm:$0xff]
          %v3306 = vld [vmem:[#allocation2 + $0xec8] sm:$0xff]
          %v3307 = vld [vmem:[#allocation2 + $0xed0] sm:$0xff]
          %v3308 = vld [vmem:[#allocation2 + $0xed8] sm:$0xff]
          %v3309 = vld [vmem:[#allocation2 + $0xee0] sm:$0xff]
          %v3310 = vld [vmem:[#allocation2 + $0xee8] sm:$0xff]
          %v3311 = vld [vmem:[#allocation2 + $0xef0] sm:$0xff]
          %v3312 = vld [vmem:[#allocation2 + $0xef8] sm:$0xff]
          %v3313 = vld [vmem:[#allocation2 + $0xf00] sm:$0xff]
          %v3314 = vld [vmem:[#allocation2 + $0xf08] sm:$0xff]
          %v3315 = vld [vmem:[#allocation2 + $0xf10] sm:$0xff]
          %v3316 = vld [vmem:[#allocation2 + $0xf18] sm:$0xff]
          %v3317 = vld [vmem:[#allocation2 + $0xf20] sm:$0xff]
          %v3318 = vld [vmem:[#allocation2 + $0xf28] sm:$0xff]
          %v3319 = vld [vmem:[#allocation2 + $0xf30] sm:$0xff]
          %v3320 = vld [vmem:[#allocation2 + $0xf38] sm:$0xff]
          %v3321 = vld [vmem:[#allocation2 + $0xf40] sm:$0xff]
          %v3322 = vld [vmem:[#allocation2 + $0xf48] sm:$0xff]
          %v3323 = vld [vmem:[#allocation2 + $0xf50] sm:$0xff]
          %v3324 = vld [vmem:[#allocation2 + $0xf58] sm:$0xff]
          %v3325 = vld [vmem:[#allocation2 + $0xf60] sm:$0xff]
          %v3326 = vld [vmem:[#allocation2 + $0xf68] sm:$0xff]
          %v3327 = vld [vmem:[#allocation2 + $0xf70] sm:$0xff]
          %v3328 = vld [vmem:[#allocation2 + $0xf78] sm:$0xff]
          %v3329 = vld [vmem:[#allocation2 + $0xf80] sm:$0xff]
          %v3330 = vld [vmem:[#allocation2 + $0xf88] sm:$0xff]
          %v3331 = vld [vmem:[#allocation2 + $0xf90] sm:$0xff]
          %v3332 = vld [vmem:[#allocation2 + $0xf98] sm:$0xff]
          %v3333 = vld [vmem:[#allocation2 + $0xfa0] sm:$0xff]
          %v3334 = vld [vmem:[#allocation2 + $0xfa8] sm:$0xff]
          %v3335 = vld [vmem:[#allocation2 + $0xfb0] sm:$0xff]
          %v3336 = vld [vmem:[#allocation2 + $0xfb8] sm:$0xff]
          %v3337 = vld [vmem:[#allocation2 + $0xfc0] sm:$0xff]
          %v3338 = vld [vmem:[#allocation2 + $0xfc8] sm:$0xff]
          %v3339 = vld [vmem:[#allocation2 + $0xfd0] sm:$0xff]
          %v3340 = vld [vmem:[#allocation2 + $0xfd8] sm:$0xff]
          %v3341 = vld [vmem:[#allocation2 + $0xfe0] sm:$0xff]
          %v3342 = vld [vmem:[#allocation2 + $0xfe8] sm:$0xff]
          %v3343 = vld [vmem:[#allocation2 + $0xff0] sm:$0xff]
          %v3344 = vld [vmem:[#allocation2 + $0xff8] sm:$0xff]
          %v3345 = vadd.f32 %v2833, %v2313
          %v3346 = vadd.f32 %v2834, %v2314
          %v3347 = vadd.f32 %v2835, %v2315
          %v3348 = vadd.f32 %v2836, %v2316
          %v3349 = vadd.f32 %v2837, %v2317
          %v3350 = vadd.f32 %v2838, %v2318
          %v3351 = vadd.f32 %v2839, %v2319
          %v3352 = vadd.f32 %v2840, %v2320
          %v3353 = vadd.f32 %v2841, %v2321
          %v3354 = vadd.f32 %v2842, %v2322
          %v3355 = vadd.f32 %v2843, %v2323
          %v3356 = vadd.f32 %v2844, %v2324
          %v3357 = vadd.f32 %v2845, %v2325
          %v3358 = vadd.f32 %v2846, %v2326
          %v3359 = vadd.f32 %v2847, %v2327
          %v3360 = vadd.f32 %v2848, %v2328
          %v3361 = vadd.f32 %v2849, %v2329
          %v3362 = vadd.f32 %v2850, %v2330
          %v3363 = vadd.f32 %v2851, %v2331
          %v3364 = vadd.f32 %v2852, %v2332
          %v3365 = vadd.f32 %v2853, %v2333
          %v3366 = vadd.f32 %v2854, %v2334
          %v3367 = vadd.f32 %v2855, %v2335
          %v3368 = vadd.f32 %v2856, %v2336
          %v3369 = vadd.f32 %v2857, %v2337
          %v3370 = vadd.f32 %v2858, %v2338
          %v3371 = vadd.f32 %v2859, %v2339
          %v3372 = vadd.f32 %v2860, %v2340
          %v3373 = vadd.f32 %v2861, %v2341
          %v3374 = vadd.f32 %v2862, %v2342
          %v3375 = vadd.f32 %v2863, %v2343
          %v3376 = vadd.f32 %v2864, %v2344
          %v3377 = vadd.f32 %v2865, %v2345
          %v3378 = vadd.f32 %v2866, %v2346
          %v3379 = vadd.f32 %v2867, %v2347
          %v3380 = vadd.f32 %v2868, %v2348
          %v3381 = vadd.f32 %v2869, %v2349
          %v3382 = vadd.f32 %v2870, %v2350
          %v3383 = vadd.f32 %v2871, %v2351
          %v3384 = vadd.f32 %v2872, %v2352
          %v3385 = vadd.f32 %v2873, %v2353
          %v3386 = vadd.f32 %v2874, %v2354
          %v3387 = vadd.f32 %v2875, %v2355
          %v3388 = vadd.f32 %v2876, %v2356
          %v3389 = vadd.f32 %v2877, %v2357
          %v3390 = vadd.f32 %v2878, %v2358
          %v3391 = vadd.f32 %v2879, %v2359
          %v3392 = vadd.f32 %v2880, %v2360
          %v3393 = vadd.f32 %v2881, %v2361
          %v3394 = vadd.f32 %v2882, %v2362
          %v3395 = vadd.f32 %v2883, %v2363
          %v3396 = vadd.f32 %v2884, %v2364
          %v3397 = vadd.f32 %v2885, %v2365
          %v3398 = vadd.f32 %v2886, %v2366
          %v3399 = vadd.f32 %v2887, %v2367
          %v3400 = vadd.f32 %v2888, %v2368
          %v3401 = vadd.f32 %v2889, %v2369
          %v3402 = vadd.f32 %v2890, %v2370
          %v3403 = vadd.f32 %v2891, %v2371
          %v3404 = vadd.f32 %v2892, %v2372
          %v3405 = vadd.f32 %v2893, %v2373
          %v3406 = vadd.f32 %v2894, %v2374
          %v3407 = vadd.f32 %v2895, %v2375
          %v3408 = vadd.f32 %v2896, %v2376
          %v3409 = vadd.f32 %v2897, %v2377
          %v3410 = vadd.f32 %v2898, %v2378
          %v3411 = vadd.f32 %v2899, %v2379
          %v3412 = vadd.f32 %v2900, %v2380
          %v3413 = vadd.f32 %v2901, %v2381
          %v3414 = vadd.f32 %v2902, %v2382
          %v3415 = vadd.f32 %v2903, %v2383
          %v3416 = vadd.f32 %v2904, %v2384
          %v3417 = vadd.f32 %v2905, %v2385
          %v3418 = vadd.f32 %v2906, %v2386
          %v3419 = vadd.f32 %v2907, %v2387
          %v3420 = vadd.f32 %v2908, %v2388
          %v3421 = vadd.f32 %v2909, %v2389
          %v3422 = vadd.f32 %v2910, %v2390
          %v3423 = vadd.f32 %v2911, %v2391
          %v3424 = vadd.f32 %v2912, %v2392
          %v3425 = vadd.f32 %v2913, %v2393
          %v3426 = vadd.f32 %v2914, %v2394
          %v3427 = vadd.f32 %v2915, %v2395
          %v3428 = vadd.f32 %v2916, %v2396
          %v3429 = vadd.f32 %v2917, %v2397
          %v3430 = vadd.f32 %v2918, %v2398
          %v3431 = vadd.f32 %v2919, %v2399
          %v3432 = vadd.f32 %v2920, %v2400
          %v3433 = vadd.f32 %v2921, %v2401
          %v3434 = vadd.f32 %v2922, %v2402
          %v3435 = vadd.f32 %v2923, %v2403
          %v3436 = vadd.f32 %v2924, %v2404
          %v3437 = vadd.f32 %v2925, %v2405
          %v3438 = vadd.f32 %v2926, %v2406
          %v3439 = vadd.f32 %v2927, %v2407
          %v3440 = vadd.f32 %v2928, %v2408
          %v3441 = vadd.f32 %v2929, %v2409
          %v3442 = vadd.f32 %v2930, %v2410
          %v3443 = vadd.f32 %v2931, %v2411
          %v3444 = vadd.f32 %v2932, %v2412
          %v3445 = vadd.f32 %v2933, %v2413
          %v3446 = vadd.f32 %v2934, %v2414
          %v3447 = vadd.f32 %v2935, %v2415
          %v3448 = vadd.f32 %v2936, %v2416
          %v3449 = vadd.f32 %v2937, %v2417
          %v3450 = vadd.f32 %v2938, %v2418
          %v3451 = vadd.f32 %v2939, %v2419
          %v3452 = vadd.f32 %v2940, %v2420
          %v3453 = vadd.f32 %v2941, %v2421
          %v3454 = vadd.f32 %v2942, %v2422
          %v3455 = vadd.f32 %v2943, %v2423
          %v3456 = vadd.f32 %v2944, %v2424
          %v3457 = vadd.f32 %v2945, %v2425
          %v3458 = vadd.f32 %v2946, %v2426
          %v3459 = vadd.f32 %v2947, %v2427
          %v3460 = vadd.f32 %v2948, %v2428
          %v3461 = vadd.f32 %v2949, %v2429
          %v3462 = vadd.f32 %v2950, %v2430
          %v3463 = vadd.f32 %v2951, %v2431
          %v3464 = vadd.f32 %v2952, %v2432
          %v3465 = vadd.f32 %v2953, %v2433
          %v3466 = vadd.f32 %v2954, %v2434
          %v3467 = vadd.f32 %v2955, %v2435
          %v3468 = vadd.f32 %v2956, %v2436
          %v3469 = vadd.f32 %v2957, %v2437
          %v3470 = vadd.f32 %v2958, %v2438
          %v3471 = vadd.f32 %v2959, %v2439
          %v3472 = vadd.f32 %v2960, %v2440
          %v3473 = vadd.f32 %v2961, %v2441
          %v3474 = vadd.f32 %v2962, %v2442
          %v3475 = vadd.f32 %v2963, %v2443
          %v3476 = vadd.f32 %v2964, %v2444
          %v3477 = vadd.f32 %v2965, %v2445
          %v3478 = vadd.f32 %v2966, %v2446
          %v3479 = vadd.f32 %v2967, %v2447
          %v3480 = vadd.f32 %v2968, %v2448
          %v3481 = vadd.f32 %v2969, %v2449
          %v3482 = vadd.f32 %v2970, %v2450
          %v3483 = vadd.f32 %v2971, %v2451
          %v3484 = vadd.f32 %v2972, %v2452
          %v3485 = vadd.f32 %v2973, %v2453
          %v3486 = vadd.f32 %v2974, %v2454
          %v3487 = vadd.f32 %v2975, %v2455
          %v3488 = vadd.f32 %v2976, %v2456
          %v3489 = vadd.f32 %v2977, %v2457
          %v3490 = vadd.f32 %v2978, %v2458
          %v3491 = vadd.f32 %v2979, %v2459
          %v3492 = vadd.f32 %v2980, %v2460
          %v3493 = vadd.f32 %v2981, %v2461
          %v3494 = vadd.f32 %v2982, %v2462
          %v3495 = vadd.f32 %v2983, %v2463
          %v3496 = vadd.f32 %v2984, %v2464
          %v3497 = vadd.f32 %v2985, %v2465
          %v3498 = vadd.f32 %v2986, %v2466
          %v3499 = vadd.f32 %v2987, %v2467
          %v3500 = vadd.f32 %v2988, %v2468
          %v3501 = vadd.f32 %v2989, %v2469
          %v3502 = vadd.f32 %v2990, %v2470
          %v3503 = vadd.f32 %v2991, %v2471
          %v3504 = vadd.f32 %v2992, %v2472
          %v3505 = vadd.f32 %v2993, %v2473
          %v3506 = vadd.f32 %v2994, %v2474
          %v3507 = vadd.f32 %v2995, %v2475
          %v3508 = vadd.f32 %v2996, %v2476
          %v3509 = vadd.f32 %v2997, %v2477
          %v3510 = vadd.f32 %v2998, %v2478
          %v3511 = vadd.f32 %v2999, %v2479
          %v3512 = vadd.f32 %v3000, %v2480
          %v3513 = vadd.f32 %v3001, %v2481
          %v3514 = vadd.f32 %v3002, %v2482
          %v3515 = vadd.f32 %v3003, %v2483
          %v3516 = vadd.f32 %v3004, %v2484
          %v3517 = vadd.f32 %v3005, %v2485
          %v3518 = vadd.f32 %v3006, %v2486
          %v3519 = vadd.f32 %v3007, %v2487
          %v3520 = vadd.f32 %v3008, %v2488
          %v3521 = vadd.f32 %v3009, %v2489
          %v3522 = vadd.f32 %v3010, %v2490
          %v3523 = vadd.f32 %v3011, %v2491
          %v3524 = vadd.f32 %v3012, %v2492
          %v3525 = vadd.f32 %v3013, %v2493
          %v3526 = vadd.f32 %v3014, %v2494
          %v3527 = vadd.f32 %v3015, %v2495
          %v3528 = vadd.f32 %v3016, %v2496
          %v3529 = vadd.f32 %v3017, %v2497
          %v3530 = vadd.f32 %v3018, %v2498
          %v3531 = vadd.f32 %v3019, %v2499
          %v3532 = vadd.f32 %v3020, %v2500
          %v3533 = vadd.f32 %v3021, %v2501
          %v3534 = vadd.f32 %v3022, %v2502
          %v3535 = vadd.f32 %v3023, %v2503
          %v3536 = vadd.f32 %v3024, %v2504
          %v3537 = vadd.f32 %v3025, %v2505
          %v3538 = vadd.f32 %v3026, %v2506
          %v3539 = vadd.f32 %v3027, %v2507
          %v3540 = vadd.f32 %v3028, %v2508
          %v3541 = vadd.f32 %v3029, %v2509
          %v3542 = vadd.f32 %v3030, %v2510
          %v3543 = vadd.f32 %v3031, %v2511
          %v3544 = vadd.f32 %v3032, %v2512
          %v3545 = vadd.f32 %v3033, %v2513
          %v3546 = vadd.f32 %v3034, %v2514
          %v3547 = vadd.f32 %v3035, %v2515
          %v3548 = vadd.f32 %v3036, %v2516
          %v3549 = vadd.f32 %v3037, %v2517
          %v3550 = vadd.f32 %v3038, %v2518
          %v3551 = vadd.f32 %v3039, %v2519
          %v3552 = vadd.f32 %v3040, %v2520
          %v3553 = vadd.f32 %v3041, %v2521
          %v3554 = vadd.f32 %v3042, %v2522
          %v3555 = vadd.f32 %v3043, %v2523
          %v3556 = vadd.f32 %v3044, %v2524
          %v3557 = vadd.f32 %v3045, %v2525
          %v3558 = vadd.f32 %v3046, %v2526
          %v3559 = vadd.f32 %v3047, %v2527
          %v3560 = vadd.f32 %v3048, %v2528
          %v3561 = vadd.f32 %v3049, %v2529
          %v3562 = vadd.f32 %v3050, %v2530
          %v3563 = vadd.f32 %v3051, %v2531
          %v3564 = vadd.f32 %v3052, %v2532
          %v3565 = vadd.f32 %v3053, %v2533
          %v3566 = vadd.f32 %v3054, %v2534
          %v3567 = vadd.f32 %v3055, %v2535
          %v3568 = vadd.f32 %v3056, %v2536
          %v3569 = vadd.f32 %v3057, %v2537
          %v3570 = vadd.f32 %v3058, %v2538
          %v3571 = vadd.f32 %v3059, %v2539
          %v3572 = vadd.f32 %v3060, %v2540
          %v3573 = vadd.f32 %v3061, %v2541
          %v3574 = vadd.f32 %v3062, %v2542
          %v3575 = vadd.f32 %v3063, %v2543
          %v3576 = vadd.f32 %v3064, %v2544
          %v3577 = vadd.f32 %v3065, %v2545
          %v3578 = vadd.f32 %v3066, %v2546
          %v3579 = vadd.f32 %v3067, %v2547
          %v3580 = vadd.f32 %v3068, %v2548
          %v3581 = vadd.f32 %v3069, %v2549
          %v3582 = vadd.f32 %v3070, %v2550
          %v3583 = vadd.f32 %v3071, %v2551
          %v3584 = vadd.f32 %v3072, %v2552
          %v3585 = vadd.f32 %v3073, %v2553
          %v3586 = vadd.f32 %v3074, %v2554
          %v3587 = vadd.f32 %v3075, %v2555
          %v3588 = vadd.f32 %v3076, %v2556
          %v3589 = vadd.f32 %v3077, %v2557
          %v3590 = vadd.f32 %v3078, %v2558
          %v3591 = vadd.f32 %v3079, %v2559
          %v3592 = vadd.f32 %v3080, %v2560
          %v3593 = vadd.f32 %v3081, %v2561
          %v3594 = vadd.f32 %v3082, %v2562
          %v3595 = vadd.f32 %v3083, %v2563
          %v3596 = vadd.f32 %v3084, %v2564
          %v3597 = vadd.f32 %v3085, %v2565
          %v3598 = vadd.f32 %v3086, %v2566
          %v3599 = vadd.f32 %v3087, %v2567
          %v3600 = vadd.f32 %v3088, %v2568
          %v3601 = vadd.f32 %v3089, %v2569
          %v3602 = vadd.f32 %v3090, %v2570
          %v3603 = vadd.f32 %v3091, %v2571
          %v3604 = vadd.f32 %v3092, %v2572
          %v3605 = vadd.f32 %v3093, %v2573
          %v3606 = vadd.f32 %v3094, %v2574
          %v3607 = vadd.f32 %v3095, %v2575
          %v3608 = vadd.f32 %v3096, %v2576
          %v3609 = vadd.f32 %v3097, %v2577
          %v3610 = vadd.f32 %v3098, %v2578
          %v3611 = vadd.f32 %v3099, %v2579
          %v3612 = vadd.f32 %v3100, %v2580
          %v3613 = vadd.f32 %v3101, %v2581
          %v3614 = vadd.f32 %v3102, %v2582
          %v3615 = vadd.f32 %v3103, %v2583
          %v3616 = vadd.f32 %v3104, %v2584
          %v3617 = vadd.f32 %v3105, %v2585
          %v3618 = vadd.f32 %v3106, %v2586
          %v3619 = vadd.f32 %v3107, %v2587
          %v3620 = vadd.f32 %v3108, %v2588
          %v3621 = vadd.f32 %v3109, %v2589
          %v3622 = vadd.f32 %v3110, %v2590
          %v3623 = vadd.f32 %v3111, %v2591
          %v3624 = vadd.f32 %v3112, %v2592
          %v3625 = vadd.f32 %v3113, %v2593
          %v3626 = vadd.f32 %v3114, %v2594
          %v3627 = vadd.f32 %v3115, %v2595
          %v3628 = vadd.f32 %v3116, %v2596
          %v3629 = vadd.f32 %v3117, %v2597
          %v3630 = vadd.f32 %v3118, %v2598
          %v3631 = vadd.f32 %v3119, %v2599
          %v3632 = vadd.f32 %v3120, %v2600
          %v3633 = vadd.f32 %v3121, %v2601
          %v3634 = vadd.f32 %v3122, %v2602
          %v3635 = vadd.f32 %v3123, %v2603
          %v3636 = vadd.f32 %v3124, %v2604
          %v3637 = vadd.f32 %v3125, %v2605
          %v3638 = vadd.f32 %v3126, %v2606
          %v3639 = vadd.f32 %v3127, %v2607
          %v3640 = vadd.f32 %v3128, %v2608
          %v3641 = vadd.f32 %v3129, %v2609
          %v3642 = vadd.f32 %v3130, %v2610
          %v3643 = vadd.f32 %v3131, %v2611
          %v3644 = vadd.f32 %v3132, %v2612
          %v3645 = vadd.f32 %v3133, %v2613
          %v3646 = vadd.f32 %v3134, %v2614
          %v3647 = vadd.f32 %v3135, %v2615
          %v3648 = vadd.f32 %v3136, %v2616
          %v3649 = vadd.f32 %v3137, %v2617
          %v3650 = vadd.f32 %v3138, %v2618
          %v3651 = vadd.f32 %v3139, %v2619
          %v3652 = vadd.f32 %v3140, %v2620
          %v3653 = vadd.f32 %v3141, %v2621
          %v3654 = vadd.f32 %v3142, %v2622
          %v3655 = vadd.f32 %v3143, %v2623
          %v3656 = vadd.f32 %v3144, %v2624
          %v3657 = vadd.f32 %v3145, %v2625
          %v3658 = vadd.f32 %v3146, %v2626
          %v3659 = vadd.f32 %v3147, %v2627
          %v3660 = vadd.f32 %v3148, %v2628
          %v3661 = vadd.f32 %v3149, %v2629
          %v3662 = vadd.f32 %v3150, %v2630
          %v3663 = vadd.f32 %v3151, %v2631
          %v3664 = vadd.f32 %v3152, %v2632
          %v3665 = vadd.f32 %v3153, %v2633
          %v3666 = vadd.f32 %v3154, %v2634
          %v3667 = vadd.f32 %v3155, %v2635
          %v3668 = vadd.f32 %v3156, %v2636
          %v3669 = vadd.f32 %v3157, %v2637
          %v3670 = vadd.f32 %v3158, %v2638
          %v3671 = vadd.f32 %v3159, %v2639
          %v3672 = vadd.f32 %v3160, %v2640
          %v3673 = vadd.f32 %v3161, %v2641
          %v3674 = vadd.f32 %v3162, %v2642
          %v3675 = vadd.f32 %v3163, %v2643
          %v3676 = vadd.f32 %v3164, %v2644
          %v3677 = vadd.f32 %v3165, %v2645
          %v3678 = vadd.f32 %v3166, %v2646
          %v3679 = vadd.f32 %v3167, %v2647
          %v3680 = vadd.f32 %v3168, %v2648
          %v3681 = vadd.f32 %v3169, %v2649
          %v3682 = vadd.f32 %v3170, %v2650
          %v3683 = vadd.f32 %v3171, %v2651
          %v3684 = vadd.f32 %v3172, %v2652
          %v3685 = vadd.f32 %v3173, %v2653
          %v3686 = vadd.f32 %v3174, %v2654
          %v3687 = vadd.f32 %v3175, %v2655
          %v3688 = vadd.f32 %v3176, %v2656
          %v3689 = vadd.f32 %v3177, %v2657
          %v3690 = vadd.f32 %v3178, %v2658
          %v3691 = vadd.f32 %v3179, %v2659
          %v3692 = vadd.f32 %v3180, %v2660
          %v3693 = vadd.f32 %v3181, %v2661
          %v3694 = vadd.f32 %v3182, %v2662
          %v3695 = vadd.f32 %v3183, %v2663
          %v3696 = vadd.f32 %v3184, %v2664
          %v3697 = vadd.f32 %v3185, %v2665
          %v3698 = vadd.f32 %v3186, %v2666
          %v3699 = vadd.f32 %v3187, %v2667
          %v3700 = vadd.f32 %v3188, %v2668
          %v3701 = vadd.f32 %v3189, %v2669
          %v3702 = vadd.f32 %v3190, %v2670
          %v3703 = vadd.f32 %v3191, %v2671
          %v3704 = vadd.f32 %v3192, %v2672
          %v3705 = vadd.f32 %v3193, %v2673
          %v3706 = vadd.f32 %v3194, %v2674
          %v3707 = vadd.f32 %v3195, %v2675
          %v3708 = vadd.f32 %v3196, %v2676
          %v3709 = vadd.f32 %v3197, %v2677
          %v3710 = vadd.f32 %v3198, %v2678
          %v3711 = vadd.f32 %v3199, %v2679
          %v3712 = vadd.f32 %v3200, %v2680
          %v3713 = vadd.f32 %v3201, %v2681
          %v3714 = vadd.f32 %v3202, %v2682
          %v3715 = vadd.f32 %v3203, %v2683
          %v3716 = vadd.f32 %v3204, %v2684
          %v3717 = vadd.f32 %v3205, %v2685
          %v3718 = vadd.f32 %v3206, %v2686
          %v3719 = vadd.f32 %v3207, %v2687
          %v3720 = vadd.f32 %v3208, %v2688
          %v3721 = vadd.f32 %v3209, %v2689
          %v3722 = vadd.f32 %v3210, %v2690
          %v3723 = vadd.f32 %v3211, %v2691
          %v3724 = vadd.f32 %v3212, %v2692
          %v3725 = vadd.f32 %v3213, %v2693
          %v3726 = vadd.f32 %v3214, %v2694
          %v3727 = vadd.f32 %v3215, %v2695
          %v3728 = vadd.f32 %v3216, %v2696
          %v3729 = vadd.f32 %v3217, %v2697
          %v3730 = vadd.f32 %v3218, %v2698
          %v3731 = vadd.f32 %v3219, %v2699
          %v3732 = vadd.f32 %v3220, %v2700
          %v3733 = vadd.f32 %v3221, %v2701
          %v3734 = vadd.f32 %v3222, %v2702
          %v3735 = vadd.f32 %v3223, %v2703
          %v3736 = vadd.f32 %v3224, %v2704
          %v3737 = vadd.f32 %v3225, %v2705
          %v3738 = vadd.f32 %v3226, %v2706
          %v3739 = vadd.f32 %v3227, %v2707
          %v3740 = vadd.f32 %v3228, %v2708
          %v3741 = vadd.f32 %v3229, %v2709
          %v3742 = vadd.f32 %v3230, %v2710
          %v3743 = vadd.f32 %v3231, %v2711
          %v3744 = vadd.f32 %v3232, %v2712
          %v3745 = vadd.f32 %v3233, %v2713
          %v3746 = vadd.f32 %v3234, %v2714
          %v3747 = vadd.f32 %v3235, %v2715
          %v3748 = vadd.f32 %v3236, %v2716
          %v3749 = vadd.f32 %v3237, %v2717
          %v3750 = vadd.f32 %v3238, %v2718
          %v3751 = vadd.f32 %v3239, %v2719
          %v3752 = vadd.f32 %v3240, %v2720
          %v3753 = vadd.f32 %v3241, %v2721
          %v3754 = vadd.f32 %v3242, %v2722
          %v3755 = vadd.f32 %v3243, %v2723
          %v3756 = vadd.f32 %v3244, %v2724
          %v3757 = vadd.f32 %v3245, %v2725
          %v3758 = vadd.f32 %v3246, %v2726
          %v3759 = vadd.f32 %v3247, %v2727
          %v3760 = vadd.f32 %v3248, %v2728
          %v3761 = vadd.f32 %v3249, %v2729
          %v3762 = vadd.f32 %v3250, %v2730
          %v3763 = vadd.f32 %v3251, %v2731
          %v3764 = vadd.f32 %v3252, %v2732
          %v3765 = vadd.f32 %v3253, %v2733
          %v3766 = vadd.f32 %v3254, %v2734
          %v3767 = vadd.f32 %v3255, %v2735
          %v3768 = vadd.f32 %v3256, %v2736
          %v3769 = vadd.f32 %v3257, %v2737
          %v3770 = vadd.f32 %v3258, %v2738
          %v3771 = vadd.f32 %v3259, %v2739
          %v3772 = vadd.f32 %v3260, %v2740
          %v3773 = vadd.f32 %v3261, %v2741
          %v3774 = vadd.f32 %v3262, %v2742
          %v3775 = vadd.f32 %v3263, %v2743
          %v3776 = vadd.f32 %v3264, %v2744
          %v3777 = vadd.f32 %v3265, %v2745
          %v3778 = vadd.f32 %v3266, %v2746
          %v3779 = vadd.f32 %v3267, %v2747
          %v3780 = vadd.f32 %v3268, %v2748
          %v3781 = vadd.f32 %v3269, %v2749
          %v3782 = vadd.f32 %v3270, %v2750
          %v3783 = vadd.f32 %v3271, %v2751
          %v3784 = vadd.f32 %v3272, %v2752
          %v3785 = vadd.f32 %v3273, %v2753
          %v3786 = vadd.f32 %v3274, %v2754
          %v3787 = vadd.f32 %v3275, %v2755
          %v3788 = vadd.f32 %v3276, %v2756
          %v3789 = vadd.f32 %v3277, %v2757
          %v3790 = vadd.f32 %v3278, %v2758
          %v3791 = vadd.f32 %v3279, %v2759
          %v3792 = vadd.f32 %v3280, %v2760
          %v3793 = vadd.f32 %v3281, %v2761
          %v3794 = vadd.f32 %v3282, %v2762
          %v3795 = vadd.f32 %v3283, %v2763
          %v3796 = vadd.f32 %v3284, %v2764
          %v3797 = vadd.f32 %v3285, %v2765
          %v3798 = vadd.f32 %v3286, %v2766
          %v3799 = vadd.f32 %v3287, %v2767
          %v3800 = vadd.f32 %v3288, %v2768
          %v3801 = vadd.f32 %v3289, %v2769
          %v3802 = vadd.f32 %v3290, %v2770
          %v3803 = vadd.f32 %v3291, %v2771
          %v3804 = vadd.f32 %v3292, %v2772
          %v3805 = vadd.f32 %v3293, %v2773
          %v3806 = vadd.f32 %v3294, %v2774
          %v3807 = vadd.f32 %v3295, %v2775
          %v3808 = vadd.f32 %v3296, %v2776
          %v3809 = vadd.f32 %v3297, %v2777
          %v3810 = vadd.f32 %v3298, %v2778
          %v3811 = vadd.f32 %v3299, %v2779
          %v3812 = vadd.f32 %v3300, %v2780
          %v3813 = vadd.f32 %v3301, %v2781
          %v3814 = vadd.f32 %v3302, %v2782
          %v3815 = vadd.f32 %v3303, %v2783
          %v3816 = vadd.f32 %v3304, %v2784
          %v3817 = vadd.f32 %v3305, %v2785
          %v3818 = vadd.f32 %v3306, %v2786
          %v3819 = vadd.f32 %v3307, %v2787
          %v3820 = vadd.f32 %v3308, %v2788
          %v3821 = vadd.f32 %v3309, %v2789
          %v3822 = vadd.f32 %v3310, %v2790
          %v3823 = vadd.f32 %v3311, %v2791
          %v3824 = vadd.f32 %v3312, %v2792
          %v3825 = vadd.f32 %v3313, %v2793
          %v3826 = vadd.f32 %v3314, %v2794
          %v3827 = vadd.f32 %v3315, %v2795
          %v3828 = vadd.f32 %v3316, %v2796
          %v3829 = vadd.f32 %v3317, %v2797
          %v3830 = vadd.f32 %v3318, %v2798
          %v3831 = vadd.f32 %v3319, %v2799
          %v3832 = vadd.f32 %v3320, %v2800
          %v3833 = vadd.f32 %v3321, %v2801
          %v3834 = vadd.f32 %v3322, %v2802
          %v3835 = vadd.f32 %v3323, %v2803
          %v3836 = vadd.f32 %v3324, %v2804
          %v3837 = vadd.f32 %v3325, %v2805
          %v3838 = vadd.f32 %v3326, %v2806
          %v3839 = vadd.f32 %v3327, %v2807
          %v3840 = vadd.f32 %v3328, %v2808
          %v3841 = vadd.f32 %v3329, %v2809
          %v3842 = vadd.f32 %v3330, %v2810
          %v3843 = vadd.f32 %v3331, %v2811
          %v3844 = vadd.f32 %v3332, %v2812
          %v3845 = vadd.f32 %v3333, %v2813
          %v3846 = vadd.f32 %v3334, %v2814
          %v3847 = vadd.f32 %v3335, %v2815
          %v3848 = vadd.f32 %v3336, %v2816
          %v3849 = vadd.f32 %v3337, %v2817
          %v3850 = vadd.f32 %v3338, %v2818
          %v3851 = vadd.f32 %v3339, %v2819
          %v3852 = vadd.f32 %v3340, %v2820
          %v3853 = vadd.f32 %v3341, %v2821
          %v3854 = vadd.f32 %v3342, %v2822
          %v3855 = vadd.f32 %v3343, %v2823
          %v3856 = vadd.f32 %v3344, %v2824
          %3857 = vst [vmem:[#allocation2] sm:$0xff] %v3345
          %3858 = vst [vmem:[#allocation2 + $0x8] sm:$0xff] %v3346
          %3859 = vst [vmem:[#allocation2 + $0x10] sm:$0xff] %v3347
          %3860 = vst [vmem:[#allocation2 + $0x18] sm:$0xff] %v3348
          %3861 = vst [vmem:[#allocation2 + $0x20] sm:$0xff] %v3349
          %3862 = vst [vmem:[#allocation2 + $0x28] sm:$0xff] %v3350
          %3863 = vst [vmem:[#allocation2 + $0x30] sm:$0xff] %v3351
          %3864 = vst [vmem:[#allocation2 + $0x38] sm:$0xff] %v3352
          %3865 = vst [vmem:[#allocation2 + $0x40] sm:$0xff] %v3353
          %3866 = vst [vmem:[#allocation2 + $0x48] sm:$0xff] %v3354
          %3867 = vst [vmem:[#allocation2 + $0x50] sm:$0xff] %v3355
          %3868 = vst [vmem:[#allocation2 + $0x58] sm:$0xff] %v3356
          %3869 = vst [vmem:[#allocation2 + $0x60] sm:$0xff] %v3357
          %3870 = vst [vmem:[#allocation2 + $0x68] sm:$0xff] %v3358
          %3871 = vst [vmem:[#allocation2 + $0x70] sm:$0xff] %v3359
          %3872 = vst [vmem:[#allocation2 + $0x78] sm:$0xff] %v3360
          %3873 = vst [vmem:[#allocation2 + $0x80] sm:$0xff] %v3361
          %3874 = vst [vmem:[#allocation2 + $0x88] sm:$0xff] %v3362
          %3875 = vst [vmem:[#allocation2 + $0x90] sm:$0xff] %v3363
          %3876 = vst [vmem:[#allocation2 + $0x98] sm:$0xff] %v3364
          %3877 = vst [vmem:[#allocation2 + $0xa0] sm:$0xff] %v3365
          %3878 = vst [vmem:[#allocation2 + $0xa8] sm:$0xff] %v3366
          %3879 = vst [vmem:[#allocation2 + $0xb0] sm:$0xff] %v3367
          %3880 = vst [vmem:[#allocation2 + $0xb8] sm:$0xff] %v3368
          %3881 = vst [vmem:[#allocation2 + $0xc0] sm:$0xff] %v3369
          %3882 = vst [vmem:[#allocation2 + $0xc8] sm:$0xff] %v3370
          %3883 = vst [vmem:[#allocation2 + $0xd0] sm:$0xff] %v3371
          %3884 = vst [vmem:[#allocation2 + $0xd8] sm:$0xff] %v3372
          %3885 = vst [vmem:[#allocation2 + $0xe0] sm:$0xff] %v3373
          %3886 = vst [vmem:[#allocation2 + $0xe8] sm:$0xff] %v3374
          %3887 = vst [vmem:[#allocation2 + $0xf0] sm:$0xff] %v3375
          %3888 = vst [vmem:[#allocation2 + $0xf8] sm:$0xff] %v3376
          %3889 = vst [vmem:[#allocation2 + $0x100] sm:$0xff] %v3377
          %3890 = vst [vmem:[#allocation2 + $0x108] sm:$0xff] %v3378
          %3891 = vst [vmem:[#allocation2 + $0x110] sm:$0xff] %v3379
          %3892 = vst [vmem:[#allocation2 + $0x118] sm:$0xff] %v3380
          %3893 = vst [vmem:[#allocation2 + $0x120] sm:$0xff] %v3381
          %3894 = vst [vmem:[#allocation2 + $0x128] sm:$0xff] %v3382
          %3895 = vst [vmem:[#allocation2 + $0x130] sm:$0xff] %v3383
          %3896 = vst [vmem:[#allocation2 + $0x138] sm:$0xff] %v3384
          %3897 = vst [vmem:[#allocation2 + $0x140] sm:$0xff] %v3385
          %3898 = vst [vmem:[#allocation2 + $0x148] sm:$0xff] %v3386
          %3899 = vst [vmem:[#allocation2 + $0x150] sm:$0xff] %v3387
          %3900 = vst [vmem:[#allocation2 + $0x158] sm:$0xff] %v3388
          %3901 = vst [vmem:[#allocation2 + $0x160] sm:$0xff] %v3389
          %3902 = vst [vmem:[#allocation2 + $0x168] sm:$0xff] %v3390
          %3903 = vst [vmem:[#allocation2 + $0x170] sm:$0xff] %v3391
          %3904 = vst [vmem:[#allocation2 + $0x178] sm:$0xff] %v3392
          %3905 = vst [vmem:[#allocation2 + $0x180] sm:$0xff] %v3393
          %3906 = vst [vmem:[#allocation2 + $0x188] sm:$0xff] %v3394
          %3907 = vst [vmem:[#allocation2 + $0x190] sm:$0xff] %v3395
          %3908 = vst [vmem:[#allocation2 + $0x198] sm:$0xff] %v3396
          %3909 = vst [vmem:[#allocation2 + $0x1a0] sm:$0xff] %v3397
          %3910 = vst [vmem:[#allocation2 + $0x1a8] sm:$0xff] %v3398
          %3911 = vst [vmem:[#allocation2 + $0x1b0] sm:$0xff] %v3399
          %3912 = vst [vmem:[#allocation2 + $0x1b8] sm:$0xff] %v3400
          %3913 = vst [vmem:[#allocation2 + $0x1c0] sm:$0xff] %v3401
          %3914 = vst [vmem:[#allocation2 + $0x1c8] sm:$0xff] %v3402
          %3915 = vst [vmem:[#allocation2 + $0x1d0] sm:$0xff] %v3403
          %3916 = vst [vmem:[#allocation2 + $0x1d8] sm:$0xff] %v3404
          %3917 = vst [vmem:[#allocation2 + $0x1e0] sm:$0xff] %v3405
          %3918 = vst [vmem:[#allocation2 + $0x1e8] sm:$0xff] %v3406
          %3919 = vst [vmem:[#allocation2 + $0x1f0] sm:$0xff] %v3407
          %3920 = vst [vmem:[#allocation2 + $0x1f8] sm:$0xff] %v3408
          %3921 = vst [vmem:[#allocation2 + $0x200] sm:$0xff] %v3409
          %3922 = vst [vmem:[#allocation2 + $0x208] sm:$0xff] %v3410
          %3923 = vst [vmem:[#allocation2 + $0x210] sm:$0xff] %v3411
          %3924 = vst [vmem:[#allocation2 + $0x218] sm:$0xff] %v3412
          %3925 = vst [vmem:[#allocation2 + $0x220] sm:$0xff] %v3413
          %3926 = vst [vmem:[#allocation2 + $0x228] sm:$0xff] %v3414
          %3927 = vst [vmem:[#allocation2 + $0x230] sm:$0xff] %v3415
          %3928 = vst [vmem:[#allocation2 + $0x238] sm:$0xff] %v3416
          %3929 = vst [vmem:[#allocation2 + $0x240] sm:$0xff] %v3417
          %3930 = vst [vmem:[#allocation2 + $0x248] sm:$0xff] %v3418
          %3931 = vst [vmem:[#allocation2 + $0x250] sm:$0xff] %v3419
          %3932 = vst [vmem:[#allocation2 + $0x258] sm:$0xff] %v3420
          %3933 = vst [vmem:[#allocation2 + $0x260] sm:$0xff] %v3421
          %3934 = vst [vmem:[#allocation2 + $0x268] sm:$0xff] %v3422
          %3935 = vst [vmem:[#allocation2 + $0x270] sm:$0xff] %v3423
          %3936 = vst [vmem:[#allocation2 + $0x278] sm:$0xff] %v3424
          %3937 = vst [vmem:[#allocation2 + $0x280] sm:$0xff] %v3425
          %3938 = vst [vmem:[#allocation2 + $0x288] sm:$0xff] %v3426
          %3939 = vst [vmem:[#allocation2 + $0x290] sm:$0xff] %v3427
          %3940 = vst [vmem:[#allocation2 + $0x298] sm:$0xff] %v3428
          %3941 = vst [vmem:[#allocation2 + $0x2a0] sm:$0xff] %v3429
          %3942 = vst [vmem:[#allocation2 + $0x2a8] sm:$0xff] %v3430
          %3943 = vst [vmem:[#allocation2 + $0x2b0] sm:$0xff] %v3431
          %3944 = vst [vmem:[#allocation2 + $0x2b8] sm:$0xff] %v3432
          %3945 = vst [vmem:[#allocation2 + $0x2c0] sm:$0xff] %v3433
          %3946 = vst [vmem:[#allocation2 + $0x2c8] sm:$0xff] %v3434
          %3947 = vst [vmem:[#allocation2 + $0x2d0] sm:$0xff] %v3435
          %3948 = vst [vmem:[#allocation2 + $0x2d8] sm:$0xff] %v3436
          %3949 = vst [vmem:[#allocation2 + $0x2e0] sm:$0xff] %v3437
          %3950 = vst [vmem:[#allocation2 + $0x2e8] sm:$0xff] %v3438
          %3951 = vst [vmem:[#allocation2 + $0x2f0] sm:$0xff] %v3439
          %3952 = vst [vmem:[#allocation2 + $0x2f8] sm:$0xff] %v3440
          %3953 = vst [vmem:[#allocation2 + $0x300] sm:$0xff] %v3441
          %3954 = vst [vmem:[#allocation2 + $0x308] sm:$0xff] %v3442
          %3955 = vst [vmem:[#allocation2 + $0x310] sm:$0xff] %v3443
          %3956 = vst [vmem:[#allocation2 + $0x318] sm:$0xff] %v3444
          %3957 = vst [vmem:[#allocation2 + $0x320] sm:$0xff] %v3445
          %3958 = vst [vmem:[#allocation2 + $0x328] sm:$0xff] %v3446
          %3959 = vst [vmem:[#allocation2 + $0x330] sm:$0xff] %v3447
          %3960 = vst [vmem:[#allocation2 + $0x338] sm:$0xff] %v3448
          %3961 = vst [vmem:[#allocation2 + $0x340] sm:$0xff] %v3449
          %3962 = vst [vmem:[#allocation2 + $0x348] sm:$0xff] %v3450
          %3963 = vst [vmem:[#allocation2 + $0x350] sm:$0xff] %v3451
          %3964 = vst [vmem:[#allocation2 + $0x358] sm:$0xff] %v3452
          %3965 = vst [vmem:[#allocation2 + $0x360] sm:$0xff] %v3453
          %3966 = vst [vmem:[#allocation2 + $0x368] sm:$0xff] %v3454
          %3967 = vst [vmem:[#allocation2 + $0x370] sm:$0xff] %v3455
          %3968 = vst [vmem:[#allocation2 + $0x378] sm:$0xff] %v3456
          %3969 = vst [vmem:[#allocation2 + $0x380] sm:$0xff] %v3457
          %3970 = vst [vmem:[#allocation2 + $0x388] sm:$0xff] %v3458
          %3971 = vst [vmem:[#allocation2 + $0x390] sm:$0xff] %v3459
          %3972 = vst [vmem:[#allocation2 + $0x398] sm:$0xff] %v3460
          %3973 = vst [vmem:[#allocation2 + $0x3a0] sm:$0xff] %v3461
          %3974 = vst [vmem:[#allocation2 + $0x3a8] sm:$0xff] %v3462
          %3975 = vst [vmem:[#allocation2 + $0x3b0] sm:$0xff] %v3463
          %3976 = vst [vmem:[#allocation2 + $0x3b8] sm:$0xff] %v3464
          %3977 = vst [vmem:[#allocation2 + $0x3c0] sm:$0xff] %v3465
          %3978 = vst [vmem:[#allocation2 + $0x3c8] sm:$0xff] %v3466
          %3979 = vst [vmem:[#allocation2 + $0x3d0] sm:$0xff] %v3467
          %3980 = vst [vmem:[#allocation2 + $0x3d8] sm:$0xff] %v3468
          %3981 = vst [vmem:[#allocation2 + $0x3e0] sm:$0xff] %v3469
          %3982 = vst [vmem:[#allocation2 + $0x3e8] sm:$0xff] %v3470
          %3983 = vst [vmem:[#allocation2 + $0x3f0] sm:$0xff] %v3471
          %3984 = vst [vmem:[#allocation2 + $0x3f8] sm:$0xff] %v3472
          %3985 = vst [vmem:[#allocation2 + $0x400] sm:$0xff] %v3473
          %3986 = vst [vmem:[#allocation2 + $0x408] sm:$0xff] %v3474
          %3987 = vst [vmem:[#allocation2 + $0x410] sm:$0xff] %v3475
          %3988 = vst [vmem:[#allocation2 + $0x418] sm:$0xff] %v3476
          %3989 = vst [vmem:[#allocation2 + $0x420] sm:$0xff] %v3477
          %3990 = vst [vmem:[#allocation2 + $0x428] sm:$0xff] %v3478
          %3991 = vst [vmem:[#allocation2 + $0x430] sm:$0xff] %v3479
          %3992 = vst [vmem:[#allocation2 + $0x438] sm:$0xff] %v3480
          %3993 = vst [vmem:[#allocation2 + $0x440] sm:$0xff] %v3481
          %3994 = vst [vmem:[#allocation2 + $0x448] sm:$0xff] %v3482
          %3995 = vst [vmem:[#allocation2 + $0x450] sm:$0xff] %v3483
          %3996 = vst [vmem:[#allocation2 + $0x458] sm:$0xff] %v3484
          %3997 = vst [vmem:[#allocation2 + $0x460] sm:$0xff] %v3485
          %3998 = vst [vmem:[#allocation2 + $0x468] sm:$0xff] %v3486
          %3999 = vst [vmem:[#allocation2 + $0x470] sm:$0xff] %v3487
          %4000 = vst [vmem:[#allocation2 + $0x478] sm:$0xff] %v3488
          %4001 = vst [vmem:[#allocation2 + $0x480] sm:$0xff] %v3489
          %4002 = vst [vmem:[#allocation2 + $0x488] sm:$0xff] %v3490
          %4003 = vst [vmem:[#allocation2 + $0x490] sm:$0xff] %v3491
          %4004 = vst [vmem:[#allocation2 + $0x498] sm:$0xff] %v3492
          %4005 = vst [vmem:[#allocation2 + $0x4a0] sm:$0xff] %v3493
          %4006 = vst [vmem:[#allocation2 + $0x4a8] sm:$0xff] %v3494
          %4007 = vst [vmem:[#allocation2 + $0x4b0] sm:$0xff] %v3495
          %4008 = vst [vmem:[#allocation2 + $0x4b8] sm:$0xff] %v3496
          %4009 = vst [vmem:[#allocation2 + $0x4c0] sm:$0xff] %v3497
          %4010 = vst [vmem:[#allocation2 + $0x4c8] sm:$0xff] %v3498
          %4011 = vst [vmem:[#allocation2 + $0x4d0] sm:$0xff] %v3499
          %4012 = vst [vmem:[#allocation2 + $0x4d8] sm:$0xff] %v3500
          %4013 = vst [vmem:[#allocation2 + $0x4e0] sm:$0xff] %v3501
          %4014 = vst [vmem:[#allocation2 + $0x4e8] sm:$0xff] %v3502
          %4015 = vst [vmem:[#allocation2 + $0x4f0] sm:$0xff] %v3503
          %4016 = vst [vmem:[#allocation2 + $0x4f8] sm:$0xff] %v3504
          %4017 = vst [vmem:[#allocation2 + $0x500] sm:$0xff] %v3505
          %4018 = vst [vmem:[#allocation2 + $0x508] sm:$0xff] %v3506
          %4019 = vst [vmem:[#allocation2 + $0x510] sm:$0xff] %v3507
          %4020 = vst [vmem:[#allocation2 + $0x518] sm:$0xff] %v3508
          %4021 = vst [vmem:[#allocation2 + $0x520] sm:$0xff] %v3509
          %4022 = vst [vmem:[#allocation2 + $0x528] sm:$0xff] %v3510
          %4023 = vst [vmem:[#allocation2 + $0x530] sm:$0xff] %v3511
          %4024 = vst [vmem:[#allocation2 + $0x538] sm:$0xff] %v3512
          %4025 = vst [vmem:[#allocation2 + $0x540] sm:$0xff] %v3513
          %4026 = vst [vmem:[#allocation2 + $0x548] sm:$0xff] %v3514
          %4027 = vst [vmem:[#allocation2 + $0x550] sm:$0xff] %v3515
          %4028 = vst [vmem:[#allocation2 + $0x558] sm:$0xff] %v3516
          %4029 = vst [vmem:[#allocation2 + $0x560] sm:$0xff] %v3517
          %4030 = vst [vmem:[#allocation2 + $0x568] sm:$0xff] %v3518
          %4031 = vst [vmem:[#allocation2 + $0x570] sm:$0xff] %v3519
          %4032 = vst [vmem:[#allocation2 + $0x578] sm:$0xff] %v3520
          %4033 = vst [vmem:[#allocation2 + $0x580] sm:$0xff] %v3521
          %4034 = vst [vmem:[#allocation2 + $0x588] sm:$0xff] %v3522
          %4035 = vst [vmem:[#allocation2 + $0x590] sm:$0xff] %v3523
          %4036 = vst [vmem:[#allocation2 + $0x598] sm:$0xff] %v3524
          %4037 = vst [vmem:[#allocation2 + $0x5a0] sm:$0xff] %v3525
          %4038 = vst [vmem:[#allocation2 + $0x5a8] sm:$0xff] %v3526
          %4039 = vst [vmem:[#allocation2 + $0x5b0] sm:$0xff] %v3527
          %4040 = vst [vmem:[#allocation2 + $0x5b8] sm:$0xff] %v3528
          %4041 = vst [vmem:[#allocation2 + $0x5c0] sm:$0xff] %v3529
          %4042 = vst [vmem:[#allocation2 + $0x5c8] sm:$0xff] %v3530
          %4043 = vst [vmem:[#allocation2 + $0x5d0] sm:$0xff] %v3531
          %4044 = vst [vmem:[#allocation2 + $0x5d8] sm:$0xff] %v3532
          %4045 = vst [vmem:[#allocation2 + $0x5e0] sm:$0xff] %v3533
          %4046 = vst [vmem:[#allocation2 + $0x5e8] sm:$0xff] %v3534
          %4047 = vst [vmem:[#allocation2 + $0x5f0] sm:$0xff] %v3535
          %4048 = vst [vmem:[#allocation2 + $0x5f8] sm:$0xff] %v3536
          %4049 = vst [vmem:[#allocation2 + $0x600] sm:$0xff] %v3537
          %4050 = vst [vmem:[#allocation2 + $0x608] sm:$0xff] %v3538
          %4051 = vst [vmem:[#allocation2 + $0x610] sm:$0xff] %v3539
          %4052 = vst [vmem:[#allocation2 + $0x618] sm:$0xff] %v3540
          %4053 = vst [vmem:[#allocation2 + $0x620] sm:$0xff] %v3541
          %4054 = vst [vmem:[#allocation2 + $0x628] sm:$0xff] %v3542
          %4055 = vst [vmem:[#allocation2 + $0x630] sm:$0xff] %v3543
          %4056 = vst [vmem:[#allocation2 + $0x638] sm:$0xff] %v3544
          %4057 = vst [vmem:[#allocation2 + $0x640] sm:$0xff] %v3545
          %4058 = vst [vmem:[#allocation2 + $0x648] sm:$0xff] %v3546
          %4059 = vst [vmem:[#allocation2 + $0x650] sm:$0xff] %v3547
          %4060 = vst [vmem:[#allocation2 + $0x658] sm:$0xff] %v3548
          %4061 = vst [vmem:[#allocation2 + $0x660] sm:$0xff] %v3549
          %4062 = vst [vmem:[#allocation2 + $0x668] sm:$0xff] %v3550
          %4063 = vst [vmem:[#allocation2 + $0x670] sm:$0xff] %v3551
          %4064 = vst [vmem:[#allocation2 + $0x678] sm:$0xff] %v3552
          %4065 = vst [vmem:[#allocation2 + $0x680] sm:$0xff] %v3553
          %4066 = vst [vmem:[#allocation2 + $0x688] sm:$0xff] %v3554
          %4067 = vst [vmem:[#allocation2 + $0x690] sm:$0xff] %v3555
          %4068 = vst [vmem:[#allocation2 + $0x698] sm:$0xff] %v3556
          %4069 = vst [vmem:[#allocation2 + $0x6a0] sm:$0xff] %v3557
          %4070 = vst [vmem:[#allocation2 + $0x6a8] sm:$0xff] %v3558
          %4071 = vst [vmem:[#allocation2 + $0x6b0] sm:$0xff] %v3559
          %4072 = vst [vmem:[#allocation2 + $0x6b8] sm:$0xff] %v3560
          %4073 = vst [vmem:[#allocation2 + $0x6c0] sm:$0xff] %v3561
          %4074 = vst [vmem:[#allocation2 + $0x6c8] sm:$0xff] %v3562
          %4075 = vst [vmem:[#allocation2 + $0x6d0] sm:$0xff] %v3563
          %4076 = vst [vmem:[#allocation2 + $0x6d8] sm:$0xff] %v3564
          %4077 = vst [vmem:[#allocation2 + $0x6e0] sm:$0xff] %v3565
          %4078 = vst [vmem:[#allocation2 + $0x6e8] sm:$0xff] %v3566
          %4079 = vst [vmem:[#allocation2 + $0x6f0] sm:$0xff] %v3567
          %4080 = vst [vmem:[#allocation2 + $0x6f8] sm:$0xff] %v3568
          %4081 = vst [vmem:[#allocation2 + $0x700] sm:$0xff] %v3569
          %4082 = vst [vmem:[#allocation2 + $0x708] sm:$0xff] %v3570
          %4083 = vst [vmem:[#allocation2 + $0x710] sm:$0xff] %v3571
          %4084 = vst [vmem:[#allocation2 + $0x718] sm:$0xff] %v3572
          %4085 = vst [vmem:[#allocation2 + $0x720] sm:$0xff] %v3573
          %4086 = vst [vmem:[#allocation2 + $0x728] sm:$0xff] %v3574
          %4087 = vst [vmem:[#allocation2 + $0x730] sm:$0xff] %v3575
          %4088 = vst [vmem:[#allocation2 + $0x738] sm:$0xff] %v3576
          %4089 = vst [vmem:[#allocation2 + $0x740] sm:$0xff] %v3577
          %4090 = vst [vmem:[#allocation2 + $0x748] sm:$0xff] %v3578
          %4091 = vst [vmem:[#allocation2 + $0x750] sm:$0xff] %v3579
          %4092 = vst [vmem:[#allocation2 + $0x758] sm:$0xff] %v3580
          %4093 = vst [vmem:[#allocation2 + $0x760] sm:$0xff] %v3581
          %4094 = vst [vmem:[#allocation2 + $0x768] sm:$0xff] %v3582
          %4095 = vst [vmem:[#allocation2 + $0x770] sm:$0xff] %v3583
          %4096 = vst [vmem:[#allocation2 + $0x778] sm:$0xff] %v3584
          %4097 = vst [vmem:[#allocation2 + $0x780] sm:$0xff] %v3585
          %4098 = vst [vmem:[#allocation2 + $0x788] sm:$0xff] %v3586
          %4099 = vst [vmem:[#allocation2 + $0x790] sm:$0xff] %v3587
          %4100 = vst [vmem:[#allocation2 + $0x798] sm:$0xff] %v3588
          %4101 = vst [vmem:[#allocation2 + $0x7a0] sm:$0xff] %v3589
          %4102 = vst [vmem:[#allocation2 + $0x7a8] sm:$0xff] %v3590
          %4103 = vst [vmem:[#allocation2 + $0x7b0] sm:$0xff] %v3591
          %4104 = vst [vmem:[#allocation2 + $0x7b8] sm:$0xff] %v3592
          %4105 = vst [vmem:[#allocation2 + $0x7c0] sm:$0xff] %v3593
          %4106 = vst [vmem:[#allocation2 + $0x7c8] sm:$0xff] %v3594
          %4107 = vst [vmem:[#allocation2 + $0x7d0] sm:$0xff] %v3595
          %4108 = vst [vmem:[#allocation2 + $0x7d8] sm:$0xff] %v3596
          %4109 = vst [vmem:[#allocation2 + $0x7e0] sm:$0xff] %v3597
          %4110 = vst [vmem:[#allocation2 + $0x7e8] sm:$0xff] %v3598
          %4111 = vst [vmem:[#allocation2 + $0x7f0] sm:$0xff] %v3599
          %4112 = vst [vmem:[#allocation2 + $0x7f8] sm:$0xff] %v3600
          %4113 = vst [vmem:[#allocation2 + $0x800] sm:$0xff] %v3601
          %4114 = vst [vmem:[#allocation2 + $0x808] sm:$0xff] %v3602
          %4115 = vst [vmem:[#allocation2 + $0x810] sm:$0xff] %v3603
          %4116 = vst [vmem:[#allocation2 + $0x818] sm:$0xff] %v3604
          %4117 = vst [vmem:[#allocation2 + $0x820] sm:$0xff] %v3605
          %4118 = vst [vmem:[#allocation2 + $0x828] sm:$0xff] %v3606
          %4119 = vst [vmem:[#allocation2 + $0x830] sm:$0xff] %v3607
          %4120 = vst [vmem:[#allocation2 + $0x838] sm:$0xff] %v3608
          %4121 = vst [vmem:[#allocation2 + $0x840] sm:$0xff] %v3609
          %4122 = vst [vmem:[#allocation2 + $0x848] sm:$0xff] %v3610
          %4123 = vst [vmem:[#allocation2 + $0x850] sm:$0xff] %v3611
          %4124 = vst [vmem:[#allocation2 + $0x858] sm:$0xff] %v3612
          %4125 = vst [vmem:[#allocation2 + $0x860] sm:$0xff] %v3613
          %4126 = vst [vmem:[#allocation2 + $0x868] sm:$0xff] %v3614
          %4127 = vst [vmem:[#allocation2 + $0x870] sm:$0xff] %v3615
          %4128 = vst [vmem:[#allocation2 + $0x878] sm:$0xff] %v3616
          %4129 = vst [vmem:[#allocation2 + $0x880] sm:$0xff] %v3617
          %4130 = vst [vmem:[#allocation2 + $0x888] sm:$0xff] %v3618
          %4131 = vst [vmem:[#allocation2 + $0x890] sm:$0xff] %v3619
          %4132 = vst [vmem:[#allocation2 + $0x898] sm:$0xff] %v3620
          %4133 = vst [vmem:[#allocation2 + $0x8a0] sm:$0xff] %v3621
          %4134 = vst [vmem:[#allocation2 + $0x8a8] sm:$0xff] %v3622
          %4135 = vst [vmem:[#allocation2 + $0x8b0] sm:$0xff] %v3623
          %4136 = vst [vmem:[#allocation2 + $0x8b8] sm:$0xff] %v3624
          %4137 = vst [vmem:[#allocation2 + $0x8c0] sm:$0xff] %v3625
          %4138 = vst [vmem:[#allocation2 + $0x8c8] sm:$0xff] %v3626
          %4139 = vst [vmem:[#allocation2 + $0x8d0] sm:$0xff] %v3627
          %4140 = vst [vmem:[#allocation2 + $0x8d8] sm:$0xff] %v3628
          %4141 = vst [vmem:[#allocation2 + $0x8e0] sm:$0xff] %v3629
          %4142 = vst [vmem:[#allocation2 + $0x8e8] sm:$0xff] %v3630
          %4143 = vst [vmem:[#allocation2 + $0x8f0] sm:$0xff] %v3631
          %4144 = vst [vmem:[#allocation2 + $0x8f8] sm:$0xff] %v3632
          %4145 = vst [vmem:[#allocation2 + $0x900] sm:$0xff] %v3633
          %4146 = vst [vmem:[#allocation2 + $0x908] sm:$0xff] %v3634
          %4147 = vst [vmem:[#allocation2 + $0x910] sm:$0xff] %v3635
          %4148 = vst [vmem:[#allocation2 + $0x918] sm:$0xff] %v3636
          %4149 = vst [vmem:[#allocation2 + $0x920] sm:$0xff] %v3637
          %4150 = vst [vmem:[#allocation2 + $0x928] sm:$0xff] %v3638
          %4151 = vst [vmem:[#allocation2 + $0x930] sm:$0xff] %v3639
          %4152 = vst [vmem:[#allocation2 + $0x938] sm:$0xff] %v3640
          %4153 = vst [vmem:[#allocation2 + $0x940] sm:$0xff] %v3641
          %4154 = vst [vmem:[#allocation2 + $0x948] sm:$0xff] %v3642
          %4155 = vst [vmem:[#allocation2 + $0x950] sm:$0xff] %v3643
          %4156 = vst [vmem:[#allocation2 + $0x958] sm:$0xff] %v3644
          %4157 = vst [vmem:[#allocation2 + $0x960] sm:$0xff] %v3645
          %4158 = vst [vmem:[#allocation2 + $0x968] sm:$0xff] %v3646
          %4159 = vst [vmem:[#allocation2 + $0x970] sm:$0xff] %v3647
          %4160 = vst [vmem:[#allocation2 + $0x978] sm:$0xff] %v3648
          %4161 = vst [vmem:[#allocation2 + $0x980] sm:$0xff] %v3649
          %4162 = vst [vmem:[#allocation2 + $0x988] sm:$0xff] %v3650
          %4163 = vst [vmem:[#allocation2 + $0x990] sm:$0xff] %v3651
          %4164 = vst [vmem:[#allocation2 + $0x998] sm:$0xff] %v3652
          %4165 = vst [vmem:[#allocation2 + $0x9a0] sm:$0xff] %v3653
          %4166 = vst [vmem:[#allocation2 + $0x9a8] sm:$0xff] %v3654
          %4167 = vst [vmem:[#allocation2 + $0x9b0] sm:$0xff] %v3655
          %4168 = vst [vmem:[#allocation2 + $0x9b8] sm:$0xff] %v3656
          %4169 = vst [vmem:[#allocation2 + $0x9c0] sm:$0xff] %v3657
          %4170 = vst [vmem:[#allocation2 + $0x9c8] sm:$0xff] %v3658
          %4171 = vst [vmem:[#allocation2 + $0x9d0] sm:$0xff] %v3659
          %4172 = vst [vmem:[#allocation2 + $0x9d8] sm:$0xff] %v3660
          %4173 = vst [vmem:[#allocation2 + $0x9e0] sm:$0xff] %v3661
          %4174 = vst [vmem:[#allocation2 + $0x9e8] sm:$0xff] %v3662
          %4175 = vst [vmem:[#allocation2 + $0x9f0] sm:$0xff] %v3663
          %4176 = vst [vmem:[#allocation2 + $0x9f8] sm:$0xff] %v3664
          %4177 = vst [vmem:[#allocation2 + $0xa00] sm:$0xff] %v3665
          %4178 = vst [vmem:[#allocation2 + $0xa08] sm:$0xff] %v3666
          %4179 = vst [vmem:[#allocation2 + $0xa10] sm:$0xff] %v3667
          %4180 = vst [vmem:[#allocation2 + $0xa18] sm:$0xff] %v3668
          %4181 = vst [vmem:[#allocation2 + $0xa20] sm:$0xff] %v3669
          %4182 = vst [vmem:[#allocation2 + $0xa28] sm:$0xff] %v3670
          %4183 = vst [vmem:[#allocation2 + $0xa30] sm:$0xff] %v3671
          %4184 = vst [vmem:[#allocation2 + $0xa38] sm:$0xff] %v3672
          %4185 = vst [vmem:[#allocation2 + $0xa40] sm:$0xff] %v3673
          %4186 = vst [vmem:[#allocation2 + $0xa48] sm:$0xff] %v3674
          %4187 = vst [vmem:[#allocation2 + $0xa50] sm:$0xff] %v3675
          %4188 = vst [vmem:[#allocation2 + $0xa58] sm:$0xff] %v3676
          %4189 = vst [vmem:[#allocation2 + $0xa60] sm:$0xff] %v3677
          %4190 = vst [vmem:[#allocation2 + $0xa68] sm:$0xff] %v3678
          %4191 = vst [vmem:[#allocation2 + $0xa70] sm:$0xff] %v3679
          %4192 = vst [vmem:[#allocation2 + $0xa78] sm:$0xff] %v3680
          %4193 = vst [vmem:[#allocation2 + $0xa80] sm:$0xff] %v3681
          %4194 = vst [vmem:[#allocation2 + $0xa88] sm:$0xff] %v3682
          %4195 = vst [vmem:[#allocation2 + $0xa90] sm:$0xff] %v3683
          %4196 = vst [vmem:[#allocation2 + $0xa98] sm:$0xff] %v3684
          %4197 = vst [vmem:[#allocation2 + $0xaa0] sm:$0xff] %v3685
          %4198 = vst [vmem:[#allocation2 + $0xaa8] sm:$0xff] %v3686
          %4199 = vst [vmem:[#allocation2 + $0xab0] sm:$0xff] %v3687
          %4200 = vst [vmem:[#allocation2 + $0xab8] sm:$0xff] %v3688
          %4201 = vst [vmem:[#allocation2 + $0xac0] sm:$0xff] %v3689
          %4202 = vst [vmem:[#allocation2 + $0xac8] sm:$0xff] %v3690
          %4203 = vst [vmem:[#allocation2 + $0xad0] sm:$0xff] %v3691
          %4204 = vst [vmem:[#allocation2 + $0xad8] sm:$0xff] %v3692
          %4205 = vst [vmem:[#allocation2 + $0xae0] sm:$0xff] %v3693
          %4206 = vst [vmem:[#allocation2 + $0xae8] sm:$0xff] %v3694
          %4207 = vst [vmem:[#allocation2 + $0xaf0] sm:$0xff] %v3695
          %4208 = vst [vmem:[#allocation2 + $0xaf8] sm:$0xff] %v3696
          %4209 = vst [vmem:[#allocation2 + $0xb00] sm:$0xff] %v3697
          %4210 = vst [vmem:[#allocation2 + $0xb08] sm:$0xff] %v3698
          %4211 = vst [vmem:[#allocation2 + $0xb10] sm:$0xff] %v3699
          %4212 = vst [vmem:[#allocation2 + $0xb18] sm:$0xff] %v3700
          %4213 = vst [vmem:[#allocation2 + $0xb20] sm:$0xff] %v3701
          %4214 = vst [vmem:[#allocation2 + $0xb28] sm:$0xff] %v3702
          %4215 = vst [vmem:[#allocation2 + $0xb30] sm:$0xff] %v3703
          %4216 = vst [vmem:[#allocation2 + $0xb38] sm:$0xff] %v3704
          %4217 = vst [vmem:[#allocation2 + $0xb40] sm:$0xff] %v3705
          %4218 = vst [vmem:[#allocation2 + $0xb48] sm:$0xff] %v3706
          %4219 = vst [vmem:[#allocation2 + $0xb50] sm:$0xff] %v3707
          %4220 = vst [vmem:[#allocation2 + $0xb58] sm:$0xff] %v3708
          %4221 = vst [vmem:[#allocation2 + $0xb60] sm:$0xff] %v3709
          %4222 = vst [vmem:[#allocation2 + $0xb68] sm:$0xff] %v3710
          %4223 = vst [vmem:[#allocation2 + $0xb70] sm:$0xff] %v3711
          %4224 = vst [vmem:[#allocation2 + $0xb78] sm:$0xff] %v3712
          %4225 = vst [vmem:[#allocation2 + $0xb80] sm:$0xff] %v3713
          %4226 = vst [vmem:[#allocation2 + $0xb88] sm:$0xff] %v3714
          %4227 = vst [vmem:[#allocation2 + $0xb90] sm:$0xff] %v3715
          %4228 = vst [vmem:[#allocation2 + $0xb98] sm:$0xff] %v3716
          %4229 = vst [vmem:[#allocation2 + $0xba0] sm:$0xff] %v3717
          %4230 = vst [vmem:[#allocation2 + $0xba8] sm:$0xff] %v3718
          %4231 = vst [vmem:[#allocation2 + $0xbb0] sm:$0xff] %v3719
          %4232 = vst [vmem:[#allocation2 + $0xbb8] sm:$0xff] %v3720
          %4233 = vst [vmem:[#allocation2 + $0xbc0] sm:$0xff] %v3721
          %4234 = vst [vmem:[#allocation2 + $0xbc8] sm:$0xff] %v3722
          %4235 = vst [vmem:[#allocation2 + $0xbd0] sm:$0xff] %v3723
          %4236 = vst [vmem:[#allocation2 + $0xbd8] sm:$0xff] %v3724
          %4237 = vst [vmem:[#allocation2 + $0xbe0] sm:$0xff] %v3725
          %4238 = vst [vmem:[#allocation2 + $0xbe8] sm:$0xff] %v3726
          %4239 = vst [vmem:[#allocation2 + $0xbf0] sm:$0xff] %v3727
          %4240 = vst [vmem:[#allocation2 + $0xbf8] sm:$0xff] %v3728
          %4241 = vst [vmem:[#allocation2 + $0xc00] sm:$0xff] %v3729
          %4242 = vst [vmem:[#allocation2 + $0xc08] sm:$0xff] %v3730
          %4243 = vst [vmem:[#allocation2 + $0xc10] sm:$0xff] %v3731
          %4244 = vst [vmem:[#allocation2 + $0xc18] sm:$0xff] %v3732
          %4245 = vst [vmem:[#allocation2 + $0xc20] sm:$0xff] %v3733
          %4246 = vst [vmem:[#allocation2 + $0xc28] sm:$0xff] %v3734
          %4247 = vst [vmem:[#allocation2 + $0xc30] sm:$0xff] %v3735
          %4248 = vst [vmem:[#allocation2 + $0xc38] sm:$0xff] %v3736
          %4249 = vst [vmem:[#allocation2 + $0xc40] sm:$0xff] %v3737
          %4250 = vst [vmem:[#allocation2 + $0xc48] sm:$0xff] %v3738
          %4251 = vst [vmem:[#allocation2 + $0xc50] sm:$0xff] %v3739
          %4252 = vst [vmem:[#allocation2 + $0xc58] sm:$0xff] %v3740
          %4253 = vst [vmem:[#allocation2 + $0xc60] sm:$0xff] %v3741
          %4254 = vst [vmem:[#allocation2 + $0xc68] sm:$0xff] %v3742
          %4255 = vst [vmem:[#allocation2 + $0xc70] sm:$0xff] %v3743
          %4256 = vst [vmem:[#allocation2 + $0xc78] sm:$0xff] %v3744
          %4257 = vst [vmem:[#allocation2 + $0xc80] sm:$0xff] %v3745
          %4258 = vst [vmem:[#allocation2 + $0xc88] sm:$0xff] %v3746
          %4259 = vst [vmem:[#allocation2 + $0xc90] sm:$0xff] %v3747
          %4260 = vst [vmem:[#allocation2 + $0xc98] sm:$0xff] %v3748
          %4261 = vst [vmem:[#allocation2 + $0xca0] sm:$0xff] %v3749
          %4262 = vst [vmem:[#allocation2 + $0xca8] sm:$0xff] %v3750
          %4263 = vst [vmem:[#allocation2 + $0xcb0] sm:$0xff] %v3751
          %4264 = vst [vmem:[#allocation2 + $0xcb8] sm:$0xff] %v3752
          %4265 = vst [vmem:[#allocation2 + $0xcc0] sm:$0xff] %v3753
          %4266 = vst [vmem:[#allocation2 + $0xcc8] sm:$0xff] %v3754
          %4267 = vst [vmem:[#allocation2 + $0xcd0] sm:$0xff] %v3755
          %4268 = vst [vmem:[#allocation2 + $0xcd8] sm:$0xff] %v3756
          %4269 = vst [vmem:[#allocation2 + $0xce0] sm:$0xff] %v3757
          %4270 = vst [vmem:[#allocation2 + $0xce8] sm:$0xff] %v3758
          %4271 = vst [vmem:[#allocation2 + $0xcf0] sm:$0xff] %v3759
          %4272 = vst [vmem:[#allocation2 + $0xcf8] sm:$0xff] %v3760
          %4273 = vst [vmem:[#allocation2 + $0xd00] sm:$0xff] %v3761
          %4274 = vst [vmem:[#allocation2 + $0xd08] sm:$0xff] %v3762
          %4275 = vst [vmem:[#allocation2 + $0xd10] sm:$0xff] %v3763
          %4276 = vst [vmem:[#allocation2 + $0xd18] sm:$0xff] %v3764
          %4277 = vst [vmem:[#allocation2 + $0xd20] sm:$0xff] %v3765
          %4278 = vst [vmem:[#allocation2 + $0xd28] sm:$0xff] %v3766
          %4279 = vst [vmem:[#allocation2 + $0xd30] sm:$0xff] %v3767
          %4280 = vst [vmem:[#allocation2 + $0xd38] sm:$0xff] %v3768
          %4281 = vst [vmem:[#allocation2 + $0xd40] sm:$0xff] %v3769
          %4282 = vst [vmem:[#allocation2 + $0xd48] sm:$0xff] %v3770
          %4283 = vst [vmem:[#allocation2 + $0xd50] sm:$0xff] %v3771
          %4284 = vst [vmem:[#allocation2 + $0xd58] sm:$0xff] %v3772
          %4285 = vst [vmem:[#allocation2 + $0xd60] sm:$0xff] %v3773
          %4286 = vst [vmem:[#allocation2 + $0xd68] sm:$0xff] %v3774
          %4287 = vst [vmem:[#allocation2 + $0xd70] sm:$0xff] %v3775
          %4288 = vst [vmem:[#allocation2 + $0xd78] sm:$0xff] %v3776
          %4289 = vst [vmem:[#allocation2 + $0xd80] sm:$0xff] %v3777
          %4290 = vst [vmem:[#allocation2 + $0xd88] sm:$0xff] %v3778
          %4291 = vst [vmem:[#allocation2 + $0xd90] sm:$0xff] %v3779
          %4292 = vst [vmem:[#allocation2 + $0xd98] sm:$0xff] %v3780
          %4293 = vst [vmem:[#allocation2 + $0xda0] sm:$0xff] %v3781
          %4294 = vst [vmem:[#allocation2 + $0xda8] sm:$0xff] %v3782
          %4295 = vst [vmem:[#allocation2 + $0xdb0] sm:$0xff] %v3783
          %4296 = vst [vmem:[#allocation2 + $0xdb8] sm:$0xff] %v3784
          %4297 = vst [vmem:[#allocation2 + $0xdc0] sm:$0xff] %v3785
          %4298 = vst [vmem:[#allocation2 + $0xdc8] sm:$0xff] %v3786
          %4299 = vst [vmem:[#allocation2 + $0xdd0] sm:$0xff] %v3787
          %4300 = vst [vmem:[#allocation2 + $0xdd8] sm:$0xff] %v3788
          %4301 = vst [vmem:[#allocation2 + $0xde0] sm:$0xff] %v3789
          %4302 = vst [vmem:[#allocation2 + $0xde8] sm:$0xff] %v3790
          %4303 = vst [vmem:[#allocation2 + $0xdf0] sm:$0xff] %v3791
          %4304 = vst [vmem:[#allocation2 + $0xdf8] sm:$0xff] %v3792
          %4305 = vst [vmem:[#allocation2 + $0xe00] sm:$0xff] %v3793
          %4306 = vst [vmem:[#allocation2 + $0xe08] sm:$0xff] %v3794
          %4307 = vst [vmem:[#allocation2 + $0xe10] sm:$0xff] %v3795
          %4308 = vst [vmem:[#allocation2 + $0xe18] sm:$0xff] %v3796
          %4309 = vst [vmem:[#allocation2 + $0xe20] sm:$0xff] %v3797
          %4310 = vst [vmem:[#allocation2 + $0xe28] sm:$0xff] %v3798
          %4311 = vst [vmem:[#allocation2 + $0xe30] sm:$0xff] %v3799
          %4312 = vst [vmem:[#allocation2 + $0xe38] sm:$0xff] %v3800
          %4313 = vst [vmem:[#allocation2 + $0xe40] sm:$0xff] %v3801
          %4314 = vst [vmem:[#allocation2 + $0xe48] sm:$0xff] %v3802
          %4315 = vst [vmem:[#allocation2 + $0xe50] sm:$0xff] %v3803
          %4316 = vst [vmem:[#allocation2 + $0xe58] sm:$0xff] %v3804
          %4317 = vst [vmem:[#allocation2 + $0xe60] sm:$0xff] %v3805
          %4318 = vst [vmem:[#allocation2 + $0xe68] sm:$0xff] %v3806
          %4319 = vst [vmem:[#allocation2 + $0xe70] sm:$0xff] %v3807
          %4320 = vst [vmem:[#allocation2 + $0xe78] sm:$0xff] %v3808
          %4321 = vst [vmem:[#allocation2 + $0xe80] sm:$0xff] %v3809
          %4322 = vst [vmem:[#allocation2 + $0xe88] sm:$0xff] %v3810
          %4323 = vst [vmem:[#allocation2 + $0xe90] sm:$0xff] %v3811
          %4324 = vst [vmem:[#allocation2 + $0xe98] sm:$0xff] %v3812
          %4325 = vst [vmem:[#allocation2 + $0xea0] sm:$0xff] %v3813
          %4326 = vst [vmem:[#allocation2 + $0xea8] sm:$0xff] %v3814
          %4327 = vst [vmem:[#allocation2 + $0xeb0] sm:$0xff] %v3815
          %4328 = vst [vmem:[#allocation2 + $0xeb8] sm:$0xff] %v3816
          %4329 = vst [vmem:[#allocation2 + $0xec0] sm:$0xff] %v3817
          %4330 = vst [vmem:[#allocation2 + $0xec8] sm:$0xff] %v3818
          %4331 = vst [vmem:[#allocation2 + $0xed0] sm:$0xff] %v3819
          %4332 = vst [vmem:[#allocation2 + $0xed8] sm:$0xff] %v3820
          %4333 = vst [vmem:[#allocation2 + $0xee0] sm:$0xff] %v3821
          %4334 = vst [vmem:[#allocation2 + $0xee8] sm:$0xff] %v3822
          %4335 = vst [vmem:[#allocation2 + $0xef0] sm:$0xff] %v3823
          %4336 = vst [vmem:[#allocation2 + $0xef8] sm:$0xff] %v3824
          %4337 = vst [vmem:[#allocation2 + $0xf00] sm:$0xff] %v3825
          %4338 = vst [vmem:[#allocation2 + $0xf08] sm:$0xff] %v3826
          %4339 = vst [vmem:[#allocation2 + $0xf10] sm:$0xff] %v3827
          %4340 = vst [vmem:[#allocation2 + $0xf18] sm:$0xff] %v3828
          %4341 = vst [vmem:[#allocation2 + $0xf20] sm:$0xff] %v3829
          %4342 = vst [vmem:[#allocation2 + $0xf28] sm:$0xff] %v3830
          %4343 = vst [vmem:[#allocation2 + $0xf30] sm:$0xff] %v3831
          %4344 = vst [vmem:[#allocation2 + $0xf38] sm:$0xff] %v3832
          %4345 = vst [vmem:[#allocation2 + $0xf40] sm:$0xff] %v3833
          %4346 = vst [vmem:[#allocation2 + $0xf48] sm:$0xff] %v3834
          %4347 = vst [vmem:[#allocation2 + $0xf50] sm:$0xff] %v3835
          %4348 = vst [vmem:[#allocation2 + $0xf58] sm:$0xff] %v3836
          %4349 = vst [vmem:[#allocation2 + $0xf60] sm:$0xff] %v3837
          %4350 = vst [vmem:[#allocation2 + $0xf68] sm:$0xff] %v3838
          %4351 = vst [vmem:[#allocation2 + $0xf70] sm:$0xff] %v3839
          %4352 = vst [vmem:[#allocation2 + $0xf78] sm:$0xff] %v3840
          %4353 = vst [vmem:[#allocation2 + $0xf80] sm:$0xff] %v3841
          %4354 = vst [vmem:[#allocation2 + $0xf88] sm:$0xff] %v3842
          %4355 = vst [vmem:[#allocation2 + $0xf90] sm:$0xff] %v3843
          %4356 = vst [vmem:[#allocation2 + $0xf98] sm:$0xff] %v3844
          %4357 = vst [vmem:[#allocation2 + $0xfa0] sm:$0xff] %v3845
          %4358 = vst [vmem:[#allocation2 + $0xfa8] sm:$0xff] %v3846
          %4359 = vst [vmem:[#allocation2 + $0xfb0] sm:$0xff] %v3847
          %4360 = vst [vmem:[#allocation2 + $0xfb8] sm:$0xff] %v3848
          %4361 = vst [vmem:[#allocation2 + $0xfc0] sm:$0xff] %v3849
          %4362 = vst [vmem:[#allocation2 + $0xfc8] sm:$0xff] %v3850
          %4363 = vst [vmem:[#allocation2 + $0xfd0] sm:$0xff] %v3851
          %4364 = vst [vmem:[#allocation2 + $0xfd8] sm:$0xff] %v3852
          %4365 = vst [vmem:[#allocation2 + $0xfe0] sm:$0xff] %v3853
          %4366 = vst [vmem:[#allocation2 + $0xfe8] sm:$0xff] %v3854
          %4367 = vst [vmem:[#allocation2 + $0xff0] sm:$0xff] %v3855
          %4368 = vst [vmem:[#allocation2 + $0xff8] sm:$0xff] %v3856
        $region44: #{tpu_custom_call.1} parent=27 // pred_fallthru
          _
        %p4369 = scmp.gt.s32.totalorder %s2828, 4101
        // Predicated region
        $region45: #{tpu_custom_call.1} parent=27 // pred_check
          %p4370 = pneg %p4369
        $region46: #{tpu_custom_call.1} parent=27 // pred_check_branch
          %4372 = sbr.rel (%p4370) target = $region48
        $region47: #{tpu_custom_call.1} parent=27 // pred_region
          %v4373 = vlaneseq
          %v4374 = vshrl.u32 %v4373, 7
          %v4375 = vadd.s32 %v4374, 8
          %v4376 = vadd.s32 %v4374, 16
          %v4377 = vadd.s32 %v4374, 24
          %v4378 = vadd.s32 %v4374, 32
          %v4379 = vadd.s32 %v4374, 40
          %v4380 = vadd.s32 %v4374, 48
          %v4381 = vadd.s32 %v4374, 56
          %v4382 = vadd.s32 %v4374, 64
          %v4383 = vadd.s32 %v4374, 72
          %v4384 = vadd.s32 %v4374, 80
          %v4385 = vadd.s32 %v4374, 88
          %v4386 = vadd.s32 %v4374, 96
          %v4387 = vadd.s32 %v4374, 104
          %v4388 = vadd.s32 %v4374, 112
          %v4389 = vadd.s32 %v4374, 120
          %v4390 = vadd.s32 %v4374, 128
          %v4391 = vadd.s32 %v4374, 136
          %v4392 = vadd.s32 %v4374, 144
          %v4393 = vadd.s32 %v4374, 152
          %v4394 = vadd.s32 %v4374, 160
          %v4395 = vadd.s32 %v4374, 168
          %v4396 = vadd.s32 %v4374, 176
          %v4397 = vadd.s32 %v4374, 184
          %v4398 = vadd.s32 %v4374, 192
          %v4399 = vadd.s32 %v4374, 200
          %v4400 = vadd.s32 %v4374, 208
          %v4401 = vadd.s32 %v4374, 216
          %v4402 = vadd.s32 %v4374, 224
          %v4403 = vadd.s32 %v4374, 232
          %v4404 = vadd.s32 %v4374, 240
          %v4405 = vadd.s32 %v4374, 248
          %v4406 = vadd.s32 %v4374, 256
          %v4407 = vadd.s32 %v4374, 264
          %v4408 = vadd.s32 %v4374, 272
          %v4409 = vadd.s32 %v4374, 280
          %v4410 = vadd.s32 %v4374, 288
          %v4411 = vadd.s32 %v4374, 296
          %v4412 = vadd.s32 %v4374, 304
          %v4413 = vadd.s32 %v4374, 312
          %v4414 = vadd.s32 %v4374, 320
          %v4415 = vadd.s32 %v4374, 328
          %v4416 = vadd.s32 %v4374, 336
          %v4417 = vadd.s32 %v4374, 344
          %v4418 = vadd.s32 %v4374, 352
          %v4419 = vadd.s32 %v4374, 360
          %v4420 = vadd.s32 %v4374, 368
          %v4421 = vadd.s32 %v4374, 376
          %v4422 = vadd.s32 %v4374, 384
          %v4423 = vadd.s32 %v4374, 392
          %v4424 = vadd.s32 %v4374, 400
          %v4425 = vadd.s32 %v4374, 408
          %v4426 = vadd.s32 %v4374, 416
          %v4427 = vadd.s32 %v4374, 424
          %v4428 = vadd.s32 %v4374, 432
          %v4429 = vadd.s32 %v4374, 440
          %v4430 = vadd.s32 %v4374, 448
          %v4431 = vadd.s32 %v4374, 456
          %v4432 = vadd.s32 %v4374, 464
          %v4433 = vadd.s32 %v4374, 472
          %v4434 = vadd.s32 %v4374, 480
          %v4435 = vadd.s32 %v4374, 488
          %v4436 = vadd.s32 %v4374, 496
          %v4437 = vadd.s32 %v4374, 504
          %v4438 = vadd.s32 %v4374, 512
          %v4439 = vadd.s32 %v4374, 520
          %v4440 = vadd.s32 %v4374, 528
          %v4441 = vadd.s32 %v4374, 536
          %v4442 = vadd.s32 %v4374, 544
          %v4443 = vadd.s32 %v4374, 552
          %v4444 = vadd.s32 %v4374, 560
          %v4445 = vadd.s32 %v4374, 568
          %v4446 = vadd.s32 %v4374, 576
          %v4447 = vadd.s32 %v4374, 584
          %v4448 = vadd.s32 %v4374, 592
          %v4449 = vadd.s32 %v4374, 600
          %v4450 = vadd.s32 %v4374, 608
          %v4451 = vadd.s32 %v4374, 616
          %v4452 = vadd.s32 %v4374, 624
          %v4453 = vadd.s32 %v4374, 632
          %v4454 = vadd.s32 %v4374, 640
          %v4455 = vadd.s32 %v4374, 648
          %v4456 = vadd.s32 %v4374, 656
          %v4457 = vadd.s32 %v4374, 664
          %v4458 = vadd.s32 %v4374, 672
          %v4459 = vadd.s32 %v4374, 680
          %v4460 = vadd.s32 %v4374, 688
          %v4461 = vadd.s32 %v4374, 696
          %v4462 = vadd.s32 %v4374, 704
          %v4463 = vadd.s32 %v4374, 712
          %v4464 = vadd.s32 %v4374, 720
          %v4465 = vadd.s32 %v4374, 728
          %v4466 = vadd.s32 %v4374, 736
          %v4467 = vadd.s32 %v4374, 744
          %v4468 = vadd.s32 %v4374, 752
          %v4469 = vadd.s32 %v4374, 760
          %v4470 = vadd.s32 %v4374, 768
          %v4471 = vadd.s32 %v4374, 776
          %v4472 = vadd.s32 %v4374, 784
          %v4473 = vadd.s32 %v4374, 792
          %v4474 = vadd.s32 %v4374, 800
          %v4475 = vadd.s32 %v4374, 808
          %v4476 = vadd.s32 %v4374, 816
          %v4477 = vadd.s32 %v4374, 824
          %v4478 = vadd.s32 %v4374, 832
          %v4479 = vadd.s32 %v4374, 840
          %v4480 = vadd.s32 %v4374, 848
          %v4481 = vadd.s32 %v4374, 856
          %v4482 = vadd.s32 %v4374, 864
          %v4483 = vadd.s32 %v4374, 872
          %v4484 = vadd.s32 %v4374, 880
          %v4485 = vadd.s32 %v4374, 888
          %v4486 = vadd.s32 %v4374, 896
          %v4487 = vadd.s32 %v4374, 904
          %v4488 = vadd.s32 %v4374, 912
          %v4489 = vadd.s32 %v4374, 920
          %v4490 = vadd.s32 %v4374, 928
          %v4491 = vadd.s32 %v4374, 936
          %v4492 = vadd.s32 %v4374, 944
          %v4493 = vadd.s32 %v4374, 952
          %v4494 = vadd.s32 %v4374, 960
          %v4495 = vadd.s32 %v4374, 968
          %v4496 = vadd.s32 %v4374, 976
          %v4497 = vadd.s32 %v4374, 984
          %v4498 = vadd.s32 %v4374, 992
          %v4499 = vadd.s32 %v4374, 1000
          %v4500 = vadd.s32 %v4374, 1008
          %v4501 = vadd.s32 %v4374, 1016
          %v4502 = vadd.s32 %v4374, 1024
          %v4503 = vadd.s32 %v4374, 1032
          %v4504 = vadd.s32 %v4374, 1040
          %v4505 = vadd.s32 %v4374, 1048
          %v4506 = vadd.s32 %v4374, 1056
          %v4507 = vadd.s32 %v4374, 1064
          %v4508 = vadd.s32 %v4374, 1072
          %v4509 = vadd.s32 %v4374, 1080
          %v4510 = vadd.s32 %v4374, 1088
          %v4511 = vadd.s32 %v4374, 1096
          %v4512 = vadd.s32 %v4374, 1104
          %v4513 = vadd.s32 %v4374, 1112
          %v4514 = vadd.s32 %v4374, 1120
          %v4515 = vadd.s32 %v4374, 1128
          %v4516 = vadd.s32 %v4374, 1136
          %v4517 = vadd.s32 %v4374, 1144
          %v4518 = vadd.s32 %v4374, 1152
          %v4519 = vadd.s32 %v4374, 1160
          %v4520 = vadd.s32 %v4374, 1168
          %v4521 = vadd.s32 %v4374, 1176
          %v4522 = vadd.s32 %v4374, 1184
          %v4523 = vadd.s32 %v4374, 1192
          %v4524 = vadd.s32 %v4374, 1200
          %v4525 = vadd.s32 %v4374, 1208
          %v4526 = vadd.s32 %v4374, 1216
          %v4527 = vadd.s32 %v4374, 1224
          %v4528 = vadd.s32 %v4374, 1232
          %v4529 = vadd.s32 %v4374, 1240
          %v4530 = vadd.s32 %v4374, 1248
          %v4531 = vadd.s32 %v4374, 1256
          %v4532 = vadd.s32 %v4374, 1264
          %v4533 = vadd.s32 %v4374, 1272
          %v4534 = vadd.s32 %v4374, 1280
          %v4535 = vadd.s32 %v4374, 1288
          %v4536 = vadd.s32 %v4374, 1296
          %v4537 = vadd.s32 %v4374, 1304
          %v4538 = vadd.s32 %v4374, 1312
          %v4539 = vadd.s32 %v4374, 1320
          %v4540 = vadd.s32 %v4374, 1328
          %v4541 = vadd.s32 %v4374, 1336
          %v4542 = vadd.s32 %v4374, 1344
          %v4543 = vadd.s32 %v4374, 1352
          %v4544 = vadd.s32 %v4374, 1360
          %v4545 = vadd.s32 %v4374, 1368
          %v4546 = vadd.s32 %v4374, 1376
          %v4547 = vadd.s32 %v4374, 1384
          %v4548 = vadd.s32 %v4374, 1392
          %v4549 = vadd.s32 %v4374, 1400
          %v4550 = vadd.s32 %v4374, 1408
          %v4551 = vadd.s32 %v4374, 1416
          %v4552 = vadd.s32 %v4374, 1424
          %v4553 = vadd.s32 %v4374, 1432
          %v4554 = vadd.s32 %v4374, 1440
          %v4555 = vadd.s32 %v4374, 1448
          %v4556 = vadd.s32 %v4374, 1456
          %v4557 = vadd.s32 %v4374, 1464
          %v4558 = vadd.s32 %v4374, 1472
          %v4559 = vadd.s32 %v4374, 1480
          %v4560 = vadd.s32 %v4374, 1488
          %v4561 = vadd.s32 %v4374, 1496
          %v4562 = vadd.s32 %v4374, 1504
          %v4563 = vadd.s32 %v4374, 1512
          %v4564 = vadd.s32 %v4374, 1520
          %v4565 = vadd.s32 %v4374, 1528
          %v4566 = vadd.s32 %v4374, 1536
          %v4567 = vadd.s32 %v4374, 1544
          %v4568 = vadd.s32 %v4374, 1552
          %v4569 = vadd.s32 %v4374, 1560
          %v4570 = vadd.s32 %v4374, 1568
          %v4571 = vadd.s32 %v4374, 1576
          %v4572 = vadd.s32 %v4374, 1584
          %v4573 = vadd.s32 %v4374, 1592
          %v4574 = vadd.s32 %v4374, 1600
          %v4575 = vadd.s32 %v4374, 1608
          %v4576 = vadd.s32 %v4374, 1616
          %v4577 = vadd.s32 %v4374, 1624
          %v4578 = vadd.s32 %v4374, 1632
          %v4579 = vadd.s32 %v4374, 1640
          %v4580 = vadd.s32 %v4374, 1648
          %v4581 = vadd.s32 %v4374, 1656
          %v4582 = vadd.s32 %v4374, 1664
          %v4583 = vadd.s32 %v4374, 1672
          %v4584 = vadd.s32 %v4374, 1680
          %v4585 = vadd.s32 %v4374, 1688
          %v4586 = vadd.s32 %v4374, 1696
          %v4587 = vadd.s32 %v4374, 1704
          %v4588 = vadd.s32 %v4374, 1712
          %v4589 = vadd.s32 %v4374, 1720
          %v4590 = vadd.s32 %v4374, 1728
          %v4591 = vadd.s32 %v4374, 1736
          %v4592 = vadd.s32 %v4374, 1744
          %v4593 = vadd.s32 %v4374, 1752
          %v4594 = vadd.s32 %v4374, 1760
          %v4595 = vadd.s32 %v4374, 1768
          %v4596 = vadd.s32 %v4374, 1776
          %v4597 = vadd.s32 %v4374, 1784
          %v4598 = vadd.s32 %v4374, 1792
          %v4599 = vadd.s32 %v4374, 1800
          %v4600 = vadd.s32 %v4374, 1808
          %v4601 = vadd.s32 %v4374, 1816
          %v4602 = vadd.s32 %v4374, 1824
          %v4603 = vadd.s32 %v4374, 1832
          %v4604 = vadd.s32 %v4374, 1840
          %v4605 = vadd.s32 %v4374, 1848
          %v4606 = vadd.s32 %v4374, 1856
          %v4607 = vadd.s32 %v4374, 1864
          %v4608 = vadd.s32 %v4374, 1872
          %v4609 = vadd.s32 %v4374, 1880
          %v4610 = vadd.s32 %v4374, 1888
          %v4611 = vadd.s32 %v4374, 1896
          %v4612 = vadd.s32 %v4374, 1904
          %v4613 = vadd.s32 %v4374, 1912
          %v4614 = vadd.s32 %v4374, 1920
          %v4615 = vadd.s32 %v4374, 1928
          %v4616 = vadd.s32 %v4374, 1936
          %v4617 = vadd.s32 %v4374, 1944
          %v4618 = vadd.s32 %v4374, 1952
          %v4619 = vadd.s32 %v4374, 1960
          %v4620 = vadd.s32 %v4374, 1968
          %v4621 = vadd.s32 %v4374, 1976
          %v4622 = vadd.s32 %v4374, 1984
          %v4623 = vadd.s32 %v4374, 1992
          %v4624 = vadd.s32 %v4374, 2000
          %v4625 = vadd.s32 %v4374, 2008
          %v4626 = vadd.s32 %v4374, 2016
          %v4627 = vadd.s32 %v4374, 2024
          %v4628 = vadd.s32 %v4374, 2032
          %v4629 = vadd.s32 %v4374, 2040
          %v4630 = vadd.s32 %v4374, 2048
          %v4631 = vadd.s32 %v4374, 2056
          %v4632 = vadd.s32 %v4374, 2064
          %v4633 = vadd.s32 %v4374, 2072
          %v4634 = vadd.s32 %v4374, 2080
          %v4635 = vadd.s32 %v4374, 2088
          %v4636 = vadd.s32 %v4374, 2096
          %v4637 = vadd.s32 %v4374, 2104
          %v4638 = vadd.s32 %v4374, 2112
          %v4639 = vadd.s32 %v4374, 2120
          %v4640 = vadd.s32 %v4374, 2128
          %v4641 = vadd.s32 %v4374, 2136
          %v4642 = vadd.s32 %v4374, 2144
          %v4643 = vadd.s32 %v4374, 2152
          %v4644 = vadd.s32 %v4374, 2160
          %v4645 = vadd.s32 %v4374, 2168
          %v4646 = vadd.s32 %v4374, 2176
          %v4647 = vadd.s32 %v4374, 2184
          %v4648 = vadd.s32 %v4374, 2192
          %v4649 = vadd.s32 %v4374, 2200
          %v4650 = vadd.s32 %v4374, 2208
          %v4651 = vadd.s32 %v4374, 2216
          %v4652 = vadd.s32 %v4374, 2224
          %v4653 = vadd.s32 %v4374, 2232
          %v4654 = vadd.s32 %v4374, 2240
          %v4655 = vadd.s32 %v4374, 2248
          %v4656 = vadd.s32 %v4374, 2256
          %v4657 = vadd.s32 %v4374, 2264
          %v4658 = vadd.s32 %v4374, 2272
          %v4659 = vadd.s32 %v4374, 2280
          %v4660 = vadd.s32 %v4374, 2288
          %v4661 = vadd.s32 %v4374, 2296
          %v4662 = vadd.s32 %v4374, 2304
          %v4663 = vadd.s32 %v4374, 2312
          %v4664 = vadd.s32 %v4374, 2320
          %v4665 = vadd.s32 %v4374, 2328
          %v4666 = vadd.s32 %v4374, 2336
          %v4667 = vadd.s32 %v4374, 2344
          %v4668 = vadd.s32 %v4374, 2352
          %v4669 = vadd.s32 %v4374, 2360
          %v4670 = vadd.s32 %v4374, 2368
          %v4671 = vadd.s32 %v4374, 2376
          %v4672 = vadd.s32 %v4374, 2384
          %v4673 = vadd.s32 %v4374, 2392
          %v4674 = vadd.s32 %v4374, 2400
          %v4675 = vadd.s32 %v4374, 2408
          %v4676 = vadd.s32 %v4374, 2416
          %v4677 = vadd.s32 %v4374, 2424
          %v4678 = vadd.s32 %v4374, 2432
          %v4679 = vadd.s32 %v4374, 2440
          %v4680 = vadd.s32 %v4374, 2448
          %v4681 = vadd.s32 %v4374, 2456
          %v4682 = vadd.s32 %v4374, 2464
          %v4683 = vadd.s32 %v4374, 2472
          %v4684 = vadd.s32 %v4374, 2480
          %v4685 = vadd.s32 %v4374, 2488
          %v4686 = vadd.s32 %v4374, 2496
          %v4687 = vadd.s32 %v4374, 2504
          %v4688 = vadd.s32 %v4374, 2512
          %v4689 = vadd.s32 %v4374, 2520
          %v4690 = vadd.s32 %v4374, 2528
          %v4691 = vadd.s32 %v4374, 2536
          %v4692 = vadd.s32 %v4374, 2544
          %v4693 = vadd.s32 %v4374, 2552
          %v4694 = vadd.s32 %v4374, 2560
          %v4695 = vadd.s32 %v4374, 2568
          %v4696 = vadd.s32 %v4374, 2576
          %v4697 = vadd.s32 %v4374, 2584
          %v4698 = vadd.s32 %v4374, 2592
          %v4699 = vadd.s32 %v4374, 2600
          %v4700 = vadd.s32 %v4374, 2608
          %v4701 = vadd.s32 %v4374, 2616
          %v4702 = vadd.s32 %v4374, 2624
          %v4703 = vadd.s32 %v4374, 2632
          %v4704 = vadd.s32 %v4374, 2640
          %v4705 = vadd.s32 %v4374, 2648
          %v4706 = vadd.s32 %v4374, 2656
          %v4707 = vadd.s32 %v4374, 2664
          %v4708 = vadd.s32 %v4374, 2672
          %v4709 = vadd.s32 %v4374, 2680
          %v4710 = vadd.s32 %v4374, 2688
          %v4711 = vadd.s32 %v4374, 2696
          %v4712 = vadd.s32 %v4374, 2704
          %v4713 = vadd.s32 %v4374, 2712
          %v4714 = vadd.s32 %v4374, 2720
          %v4715 = vadd.s32 %v4374, 2728
          %v4716 = vadd.s32 %v4374, 2736
          %v4717 = vadd.s32 %v4374, 2744
          %v4718 = vadd.s32 %v4374, 2752
          %v4719 = vadd.s32 %v4374, 2760
          %v4720 = vadd.s32 %v4374, 2768
          %v4721 = vadd.s32 %v4374, 2776
          %v4722 = vadd.s32 %v4374, 2784
          %v4723 = vadd.s32 %v4374, 2792
          %v4724 = vadd.s32 %v4374, 2800
          %v4725 = vadd.s32 %v4374, 2808
          %v4726 = vadd.s32 %v4374, 2816
          %v4727 = vadd.s32 %v4374, 2824
          %v4728 = vadd.s32 %v4374, 2832
          %v4729 = vadd.s32 %v4374, 2840
          %v4730 = vadd.s32 %v4374, 2848
          %v4731 = vadd.s32 %v4374, 2856
          %v4732 = vadd.s32 %v4374, 2864
          %v4733 = vadd.s32 %v4374, 2872
          %v4734 = vadd.s32 %v4374, 2880
          %v4735 = vadd.s32 %v4374, 2888
          %v4736 = vadd.s32 %v4374, 2896
          %v4737 = vadd.s32 %v4374, 2904
          %v4738 = vadd.s32 %v4374, 2912
          %v4739 = vadd.s32 %v4374, 2920
          %v4740 = vadd.s32 %v4374, 2928
          %v4741 = vadd.s32 %v4374, 2936
          %v4742 = vadd.s32 %v4374, 2944
          %v4743 = vadd.s32 %v4374, 2952
          %v4744 = vadd.s32 %v4374, 2960
          %v4745 = vadd.s32 %v4374, 2968
          %v4746 = vadd.s32 %v4374, 2976
          %v4747 = vadd.s32 %v4374, 2984
          %v4748 = vadd.s32 %v4374, 2992
          %v4749 = vadd.s32 %v4374, 3000
          %v4750 = vadd.s32 %v4374, 3008
          %v4751 = vadd.s32 %v4374, 3016
          %v4752 = vadd.s32 %v4374, 3024
          %v4753 = vadd.s32 %v4374, 3032
          %v4754 = vadd.s32 %v4374, 3040
          %v4755 = vadd.s32 %v4374, 3048
          %v4756 = vadd.s32 %v4374, 3056
          %v4757 = vadd.s32 %v4374, 3064
          %v4758 = vadd.s32 %v4374, 3072
          %v4759 = vadd.s32 %v4374, 3080
          %v4760 = vadd.s32 %v4374, 3088
          %v4761 = vadd.s32 %v4374, 3096
          %v4762 = vadd.s32 %v4374, 3104
          %v4763 = vadd.s32 %v4374, 3112
          %v4764 = vadd.s32 %v4374, 3120
          %v4765 = vadd.s32 %v4374, 3128
          %v4766 = vadd.s32 %v4374, 3136
          %v4767 = vadd.s32 %v4374, 3144
          %v4768 = vadd.s32 %v4374, 3152
          %v4769 = vadd.s32 %v4374, 3160
          %v4770 = vadd.s32 %v4374, 3168
          %v4771 = vadd.s32 %v4374, 3176
          %v4772 = vadd.s32 %v4374, 3184
          %v4773 = vadd.s32 %v4374, 3192
          %v4774 = vadd.s32 %v4374, 3200
          %v4775 = vadd.s32 %v4374, 3208
          %v4776 = vadd.s32 %v4374, 3216
          %v4777 = vadd.s32 %v4374, 3224
          %v4778 = vadd.s32 %v4374, 3232
          %v4779 = vadd.s32 %v4374, 3240
          %v4780 = vadd.s32 %v4374, 3248
          %v4781 = vadd.s32 %v4374, 3256
          %v4782 = vadd.s32 %v4374, 3264
          %v4783 = vadd.s32 %v4374, 3272
          %v4784 = vadd.s32 %v4374, 3280
          %v4785 = vadd.s32 %v4374, 3288
          %v4786 = vadd.s32 %v4374, 3296
          %v4787 = vadd.s32 %v4374, 3304
          %v4788 = vadd.s32 %v4374, 3312
          %v4789 = vadd.s32 %v4374, 3320
          %v4790 = vadd.s32 %v4374, 3328
          %v4791 = vadd.s32 %v4374, 3336
          %v4792 = vadd.s32 %v4374, 3344
          %v4793 = vadd.s32 %v4374, 3352
          %v4794 = vadd.s32 %v4374, 3360
          %v4795 = vadd.s32 %v4374, 3368
          %v4796 = vadd.s32 %v4374, 3376
          %v4797 = vadd.s32 %v4374, 3384
          %v4798 = vadd.s32 %v4374, 3392
          %v4799 = vadd.s32 %v4374, 3400
          %v4800 = vadd.s32 %v4374, 3408
          %v4801 = vadd.s32 %v4374, 3416
          %v4802 = vadd.s32 %v4374, 3424
          %v4803 = vadd.s32 %v4374, 3432
          %v4804 = vadd.s32 %v4374, 3440
          %v4805 = vadd.s32 %v4374, 3448
          %v4806 = vadd.s32 %v4374, 3456
          %v4807 = vadd.s32 %v4374, 3464
          %v4808 = vadd.s32 %v4374, 3472
          %v4809 = vadd.s32 %v4374, 3480
          %v4810 = vadd.s32 %v4374, 3488
          %v4811 = vadd.s32 %v4374, 3496
          %v4812 = vadd.s32 %v4374, 3504
          %v4813 = vadd.s32 %v4374, 3512
          %v4814 = vadd.s32 %v4374, 3520
          %v4815 = vadd.s32 %v4374, 3528
          %v4816 = vadd.s32 %v4374, 3536
          %v4817 = vadd.s32 %v4374, 3544
          %v4818 = vadd.s32 %v4374, 3552
          %v4819 = vadd.s32 %v4374, 3560
          %v4820 = vadd.s32 %v4374, 3568
          %v4821 = vadd.s32 %v4374, 3576
          %v4822 = vadd.s32 %v4374, 3584
          %v4823 = vadd.s32 %v4374, 3592
          %v4824 = vadd.s32 %v4374, 3600
          %v4825 = vadd.s32 %v4374, 3608
          %v4826 = vadd.s32 %v4374, 3616
          %v4827 = vadd.s32 %v4374, 3624
          %v4828 = vadd.s32 %v4374, 3632
          %v4829 = vadd.s32 %v4374, 3640
          %v4830 = vadd.s32 %v4374, 3648
          %v4831 = vadd.s32 %v4374, 3656
          %v4832 = vadd.s32 %v4374, 3664
          %v4833 = vadd.s32 %v4374, 3672
          %v4834 = vadd.s32 %v4374, 3680
          %v4835 = vadd.s32 %v4374, 3688
          %v4836 = vadd.s32 %v4374, 3696
          %v4837 = vadd.s32 %v4374, 3704
          %v4838 = vadd.s32 %v4374, 3712
          %v4839 = vadd.s32 %v4374, 3720
          %v4840 = vadd.s32 %v4374, 3728
          %v4841 = vadd.s32 %v4374, 3736
          %v4842 = vadd.s32 %v4374, 3744
          %v4843 = vadd.s32 %v4374, 3752
          %v4844 = vadd.s32 %v4374, 3760
          %v4845 = vadd.s32 %v4374, 3768
          %v4846 = vadd.s32 %v4374, 3776
          %v4847 = vadd.s32 %v4374, 3784
          %v4848 = vadd.s32 %v4374, 3792
          %v4849 = vadd.s32 %v4374, 3800
          %v4850 = vadd.s32 %v4374, 3808
          %v4851 = vadd.s32 %v4374, 3816
          %v4852 = vadd.s32 %v4374, 3824
          %v4853 = vadd.s32 %v4374, 3832
          %v4854 = vadd.s32 %v4374, 3840
          %v4855 = vadd.s32 %v4374, 3848
          %v4856 = vadd.s32 %v4374, 3856
          %v4857 = vadd.s32 %v4374, 3864
          %v4858 = vadd.s32 %v4374, 3872
          %v4859 = vadd.s32 %v4374, 3880
          %v4860 = vadd.s32 %v4374, 3888
          %v4861 = vadd.s32 %v4374, 3896
          %v4862 = vadd.s32 %v4374, 3904
          %v4863 = vadd.s32 %v4374, 3912
          %v4864 = vadd.s32 %v4374, 3920
          %v4865 = vadd.s32 %v4374, 3928
          %v4866 = vadd.s32 %v4374, 3936
          %v4867 = vadd.s32 %v4374, 3944
          %v4868 = vadd.s32 %v4374, 3952
          %v4869 = vadd.s32 %v4374, 3960
          %v4870 = vadd.s32 %v4374, 3968
          %v4871 = vadd.s32 %v4374, 3976
          %v4872 = vadd.s32 %v4374, 3984
          %v4873 = vadd.s32 %v4374, 3992
          %v4874 = vadd.s32 %v4374, 4000
          %v4875 = vadd.s32 %v4374, 4008
          %v4876 = vadd.s32 %v4374, 4016
          %v4877 = vadd.s32 %v4374, 4024
          %v4878 = vadd.s32 %v4374, 4032
          %v4879 = vadd.s32 %v4374, 4040
          %v4880 = vadd.s32 %v4374, 4048
          %v4881 = vadd.s32 %v4374, 4056
          %v4882 = vadd.s32 %v4374, 4064
          %v4883 = vadd.s32 %v4374, 4072
          %v4884 = vadd.s32 %v4374, 4080
          %v4885 = vadd.s32 %v4374, 4088
          %v4886 = vld [vmem:[#allocation2] sm:$0xff]
          %v4887 = vld [vmem:[#allocation2 + $0x8] sm:$0xff]
          %v4888 = vld [vmem:[#allocation2 + $0x10] sm:$0xff]
          %v4889 = vld [vmem:[#allocation2 + $0x18] sm:$0xff]
          %v4890 = vld [vmem:[#allocation2 + $0x20] sm:$0xff]
          %v4891 = vld [vmem:[#allocation2 + $0x28] sm:$0xff]
          %v4892 = vld [vmem:[#allocation2 + $0x30] sm:$0xff]
          %v4893 = vld [vmem:[#allocation2 + $0x38] sm:$0xff]
          %v4894 = vld [vmem:[#allocation2 + $0x40] sm:$0xff]
          %v4895 = vld [vmem:[#allocation2 + $0x48] sm:$0xff]
          %v4896 = vld [vmem:[#allocation2 + $0x50] sm:$0xff]
          %v4897 = vld [vmem:[#allocation2 + $0x58] sm:$0xff]
          %v4898 = vld [vmem:[#allocation2 + $0x60] sm:$0xff]
          %v4899 = vld [vmem:[#allocation2 + $0x68] sm:$0xff]
          %v4900 = vld [vmem:[#allocation2 + $0x70] sm:$0xff]
          %v4901 = vld [vmem:[#allocation2 + $0x78] sm:$0xff]
          %v4902 = vld [vmem:[#allocation2 + $0x80] sm:$0xff]
          %v4903 = vld [vmem:[#allocation2 + $0x88] sm:$0xff]
          %v4904 = vld [vmem:[#allocation2 + $0x90] sm:$0xff]
          %v4905 = vld [vmem:[#allocation2 + $0x98] sm:$0xff]
          %v4906 = vld [vmem:[#allocation2 + $0xa0] sm:$0xff]
          %v4907 = vld [vmem:[#allocation2 + $0xa8] sm:$0xff]
          %v4908 = vld [vmem:[#allocation2 + $0xb0] sm:$0xff]
          %v4909 = vld [vmem:[#allocation2 + $0xb8] sm:$0xff]
          %v4910 = vld [vmem:[#allocation2 + $0xc0] sm:$0xff]
          %v4911 = vld [vmem:[#allocation2 + $0xc8] sm:$0xff]
          %v4912 = vld [vmem:[#allocation2 + $0xd0] sm:$0xff]
          %v4913 = vld [vmem:[#allocation2 + $0xd8] sm:$0xff]
          %v4914 = vld [vmem:[#allocation2 + $0xe0] sm:$0xff]
          %v4915 = vld [vmem:[#allocation2 + $0xe8] sm:$0xff]
          %v4916 = vld [vmem:[#allocation2 + $0xf0] sm:$0xff]
          %v4917 = vld [vmem:[#allocation2 + $0xf8] sm:$0xff]
          %v4918 = vld [vmem:[#allocation2 + $0x100] sm:$0xff]
          %v4919 = vld [vmem:[#allocation2 + $0x108] sm:$0xff]
          %v4920 = vld [vmem:[#allocation2 + $0x110] sm:$0xff]
          %v4921 = vld [vmem:[#allocation2 + $0x118] sm:$0xff]
          %v4922 = vld [vmem:[#allocation2 + $0x120] sm:$0xff]
          %v4923 = vld [vmem:[#allocation2 + $0x128] sm:$0xff]
          %v4924 = vld [vmem:[#allocation2 + $0x130] sm:$0xff]
          %v4925 = vld [vmem:[#allocation2 + $0x138] sm:$0xff]
          %v4926 = vld [vmem:[#allocation2 + $0x140] sm:$0xff]
          %v4927 = vld [vmem:[#allocation2 + $0x148] sm:$0xff]
          %v4928 = vld [vmem:[#allocation2 + $0x150] sm:$0xff]
          %v4929 = vld [vmem:[#allocation2 + $0x158] sm:$0xff]
          %v4930 = vld [vmem:[#allocation2 + $0x160] sm:$0xff]
          %v4931 = vld [vmem:[#allocation2 + $0x168] sm:$0xff]
          %v4932 = vld [vmem:[#allocation2 + $0x170] sm:$0xff]
          %v4933 = vld [vmem:[#allocation2 + $0x178] sm:$0xff]
          %v4934 = vld [vmem:[#allocation2 + $0x180] sm:$0xff]
          %v4935 = vld [vmem:[#allocation2 + $0x188] sm:$0xff]
          %v4936 = vld [vmem:[#allocation2 + $0x190] sm:$0xff]
          %v4937 = vld [vmem:[#allocation2 + $0x198] sm:$0xff]
          %v4938 = vld [vmem:[#allocation2 + $0x1a0] sm:$0xff]
          %v4939 = vld [vmem:[#allocation2 + $0x1a8] sm:$0xff]
          %v4940 = vld [vmem:[#allocation2 + $0x1b0] sm:$0xff]
          %v4941 = vld [vmem:[#allocation2 + $0x1b8] sm:$0xff]
          %v4942 = vld [vmem:[#allocation2 + $0x1c0] sm:$0xff]
          %v4943 = vld [vmem:[#allocation2 + $0x1c8] sm:$0xff]
          %v4944 = vld [vmem:[#allocation2 + $0x1d0] sm:$0xff]
          %v4945 = vld [vmem:[#allocation2 + $0x1d8] sm:$0xff]
          %v4946 = vld [vmem:[#allocation2 + $0x1e0] sm:$0xff]
          %v4947 = vld [vmem:[#allocation2 + $0x1e8] sm:$0xff]
          %v4948 = vld [vmem:[#allocation2 + $0x1f0] sm:$0xff]
          %v4949 = vld [vmem:[#allocation2 + $0x1f8] sm:$0xff]
          %v4950 = vld [vmem:[#allocation2 + $0x200] sm:$0xff]
          %v4951 = vld [vmem:[#allocation2 + $0x208] sm:$0xff]
          %v4952 = vld [vmem:[#allocation2 + $0x210] sm:$0xff]
          %v4953 = vld [vmem:[#allocation2 + $0x218] sm:$0xff]
          %v4954 = vld [vmem:[#allocation2 + $0x220] sm:$0xff]
          %v4955 = vld [vmem:[#allocation2 + $0x228] sm:$0xff]
          %v4956 = vld [vmem:[#allocation2 + $0x230] sm:$0xff]
          %v4957 = vld [vmem:[#allocation2 + $0x238] sm:$0xff]
          %v4958 = vld [vmem:[#allocation2 + $0x240] sm:$0xff]
          %v4959 = vld [vmem:[#allocation2 + $0x248] sm:$0xff]
          %v4960 = vld [vmem:[#allocation2 + $0x250] sm:$0xff]
          %v4961 = vld [vmem:[#allocation2 + $0x258] sm:$0xff]
          %v4962 = vld [vmem:[#allocation2 + $0x260] sm:$0xff]
          %v4963 = vld [vmem:[#allocation2 + $0x268] sm:$0xff]
          %v4964 = vld [vmem:[#allocation2 + $0x270] sm:$0xff]
          %v4965 = vld [vmem:[#allocation2 + $0x278] sm:$0xff]
          %v4966 = vld [vmem:[#allocation2 + $0x280] sm:$0xff]
          %v4967 = vld [vmem:[#allocation2 + $0x288] sm:$0xff]
          %v4968 = vld [vmem:[#allocation2 + $0x290] sm:$0xff]
          %v4969 = vld [vmem:[#allocation2 + $0x298] sm:$0xff]
          %v4970 = vld [vmem:[#allocation2 + $0x2a0] sm:$0xff]
          %v4971 = vld [vmem:[#allocation2 + $0x2a8] sm:$0xff]
          %v4972 = vld [vmem:[#allocation2 + $0x2b0] sm:$0xff]
          %v4973 = vld [vmem:[#allocation2 + $0x2b8] sm:$0xff]
          %v4974 = vld [vmem:[#allocation2 + $0x2c0] sm:$0xff]
          %v4975 = vld [vmem:[#allocation2 + $0x2c8] sm:$0xff]
          %v4976 = vld [vmem:[#allocation2 + $0x2d0] sm:$0xff]
          %v4977 = vld [vmem:[#allocation2 + $0x2d8] sm:$0xff]
          %v4978 = vld [vmem:[#allocation2 + $0x2e0] sm:$0xff]
          %v4979 = vld [vmem:[#allocation2 + $0x2e8] sm:$0xff]
          %v4980 = vld [vmem:[#allocation2 + $0x2f0] sm:$0xff]
          %v4981 = vld [vmem:[#allocation2 + $0x2f8] sm:$0xff]
          %v4982 = vld [vmem:[#allocation2 + $0x300] sm:$0xff]
          %v4983 = vld [vmem:[#allocation2 + $0x308] sm:$0xff]
          %v4984 = vld [vmem:[#allocation2 + $0x310] sm:$0xff]
          %v4985 = vld [vmem:[#allocation2 + $0x318] sm:$0xff]
          %v4986 = vld [vmem:[#allocation2 + $0x320] sm:$0xff]
          %v4987 = vld [vmem:[#allocation2 + $0x328] sm:$0xff]
          %v4988 = vld [vmem:[#allocation2 + $0x330] sm:$0xff]
          %v4989 = vld [vmem:[#allocation2 + $0x338] sm:$0xff]
          %v4990 = vld [vmem:[#allocation2 + $0x340] sm:$0xff]
          %v4991 = vld [vmem:[#allocation2 + $0x348] sm:$0xff]
          %v4992 = vld [vmem:[#allocation2 + $0x350] sm:$0xff]
          %v4993 = vld [vmem:[#allocation2 + $0x358] sm:$0xff]
          %v4994 = vld [vmem:[#allocation2 + $0x360] sm:$0xff]
          %v4995 = vld [vmem:[#allocation2 + $0x368] sm:$0xff]
          %v4996 = vld [vmem:[#allocation2 + $0x370] sm:$0xff]
          %v4997 = vld [vmem:[#allocation2 + $0x378] sm:$0xff]
          %v4998 = vld [vmem:[#allocation2 + $0x380] sm:$0xff]
          %v4999 = vld [vmem:[#allocation2 + $0x388] sm:$0xff]
          %v5000 = vld [vmem:[#allocation2 + $0x390] sm:$0xff]
          %v5001 = vld [vmem:[#allocation2 + $0x398] sm:$0xff]
          %v5002 = vld [vmem:[#allocation2 + $0x3a0] sm:$0xff]
          %v5003 = vld [vmem:[#allocation2 + $0x3a8] sm:$0xff]
          %v5004 = vld [vmem:[#allocation2 + $0x3b0] sm:$0xff]
          %v5005 = vld [vmem:[#allocation2 + $0x3b8] sm:$0xff]
          %v5006 = vld [vmem:[#allocation2 + $0x3c0] sm:$0xff]
          %v5007 = vld [vmem:[#allocation2 + $0x3c8] sm:$0xff]
          %v5008 = vld [vmem:[#allocation2 + $0x3d0] sm:$0xff]
          %v5009 = vld [vmem:[#allocation2 + $0x3d8] sm:$0xff]
          %v5010 = vld [vmem:[#allocation2 + $0x3e0] sm:$0xff]
          %v5011 = vld [vmem:[#allocation2 + $0x3e8] sm:$0xff]
          %v5012 = vld [vmem:[#allocation2 + $0x3f0] sm:$0xff]
          %v5013 = vld [vmem:[#allocation2 + $0x3f8] sm:$0xff]
          %v5014 = vld [vmem:[#allocation2 + $0x400] sm:$0xff]
          %v5015 = vld [vmem:[#allocation2 + $0x408] sm:$0xff]
          %v5016 = vld [vmem:[#allocation2 + $0x410] sm:$0xff]
          %v5017 = vld [vmem:[#allocation2 + $0x418] sm:$0xff]
          %v5018 = vld [vmem:[#allocation2 + $0x420] sm:$0xff]
          %v5019 = vld [vmem:[#allocation2 + $0x428] sm:$0xff]
          %v5020 = vld [vmem:[#allocation2 + $0x430] sm:$0xff]
          %v5021 = vld [vmem:[#allocation2 + $0x438] sm:$0xff]
          %v5022 = vld [vmem:[#allocation2 + $0x440] sm:$0xff]
          %v5023 = vld [vmem:[#allocation2 + $0x448] sm:$0xff]
          %v5024 = vld [vmem:[#allocation2 + $0x450] sm:$0xff]
          %v5025 = vld [vmem:[#allocation2 + $0x458] sm:$0xff]
          %v5026 = vld [vmem:[#allocation2 + $0x460] sm:$0xff]
          %v5027 = vld [vmem:[#allocation2 + $0x468] sm:$0xff]
          %v5028 = vld [vmem:[#allocation2 + $0x470] sm:$0xff]
          %v5029 = vld [vmem:[#allocation2 + $0x478] sm:$0xff]
          %v5030 = vld [vmem:[#allocation2 + $0x480] sm:$0xff]
          %v5031 = vld [vmem:[#allocation2 + $0x488] sm:$0xff]
          %v5032 = vld [vmem:[#allocation2 + $0x490] sm:$0xff]
          %v5033 = vld [vmem:[#allocation2 + $0x498] sm:$0xff]
          %v5034 = vld [vmem:[#allocation2 + $0x4a0] sm:$0xff]
          %v5035 = vld [vmem:[#allocation2 + $0x4a8] sm:$0xff]
          %v5036 = vld [vmem:[#allocation2 + $0x4b0] sm:$0xff]
          %v5037 = vld [vmem:[#allocation2 + $0x4b8] sm:$0xff]
          %v5038 = vld [vmem:[#allocation2 + $0x4c0] sm:$0xff]
          %v5039 = vld [vmem:[#allocation2 + $0x4c8] sm:$0xff]
          %v5040 = vld [vmem:[#allocation2 + $0x4d0] sm:$0xff]
          %v5041 = vld [vmem:[#allocation2 + $0x4d8] sm:$0xff]
          %v5042 = vld [vmem:[#allocation2 + $0x4e0] sm:$0xff]
          %v5043 = vld [vmem:[#allocation2 + $0x4e8] sm:$0xff]
          %v5044 = vld [vmem:[#allocation2 + $0x4f0] sm:$0xff]
          %v5045 = vld [vmem:[#allocation2 + $0x4f8] sm:$0xff]
          %v5046 = vld [vmem:[#allocation2 + $0x500] sm:$0xff]
          %v5047 = vld [vmem:[#allocation2 + $0x508] sm:$0xff]
          %v5048 = vld [vmem:[#allocation2 + $0x510] sm:$0xff]
          %v5049 = vld [vmem:[#allocation2 + $0x518] sm:$0xff]
          %v5050 = vld [vmem:[#allocation2 + $0x520] sm:$0xff]
          %v5051 = vld [vmem:[#allocation2 + $0x528] sm:$0xff]
          %v5052 = vld [vmem:[#allocation2 + $0x530] sm:$0xff]
          %v5053 = vld [vmem:[#allocation2 + $0x538] sm:$0xff]
          %v5054 = vld [vmem:[#allocation2 + $0x540] sm:$0xff]
          %v5055 = vld [vmem:[#allocation2 + $0x548] sm:$0xff]
          %v5056 = vld [vmem:[#allocation2 + $0x550] sm:$0xff]
          %v5057 = vld [vmem:[#allocation2 + $0x558] sm:$0xff]
          %v5058 = vld [vmem:[#allocation2 + $0x560] sm:$0xff]
          %v5059 = vld [vmem:[#allocation2 + $0x568] sm:$0xff]
          %v5060 = vld [vmem:[#allocation2 + $0x570] sm:$0xff]
          %v5061 = vld [vmem:[#allocation2 + $0x578] sm:$0xff]
          %v5062 = vld [vmem:[#allocation2 + $0x580] sm:$0xff]
          %v5063 = vld [vmem:[#allocation2 + $0x588] sm:$0xff]
          %v5064 = vld [vmem:[#allocation2 + $0x590] sm:$0xff]
          %v5065 = vld [vmem:[#allocation2 + $0x598] sm:$0xff]
          %v5066 = vld [vmem:[#allocation2 + $0x5a0] sm:$0xff]
          %v5067 = vld [vmem:[#allocation2 + $0x5a8] sm:$0xff]
          %v5068 = vld [vmem:[#allocation2 + $0x5b0] sm:$0xff]
          %v5069 = vld [vmem:[#allocation2 + $0x5b8] sm:$0xff]
          %v5070 = vld [vmem:[#allocation2 + $0x5c0] sm:$0xff]
          %v5071 = vld [vmem:[#allocation2 + $0x5c8] sm:$0xff]
          %v5072 = vld [vmem:[#allocation2 + $0x5d0] sm:$0xff]
          %v5073 = vld [vmem:[#allocation2 + $0x5d8] sm:$0xff]
          %v5074 = vld [vmem:[#allocation2 + $0x5e0] sm:$0xff]
          %v5075 = vld [vmem:[#allocation2 + $0x5e8] sm:$0xff]
          %v5076 = vld [vmem:[#allocation2 + $0x5f0] sm:$0xff]
          %v5077 = vld [vmem:[#allocation2 + $0x5f8] sm:$0xff]
          %v5078 = vld [vmem:[#allocation2 + $0x600] sm:$0xff]
          %v5079 = vld [vmem:[#allocation2 + $0x608] sm:$0xff]
          %v5080 = vld [vmem:[#allocation2 + $0x610] sm:$0xff]
          %v5081 = vld [vmem:[#allocation2 + $0x618] sm:$0xff]
          %v5082 = vld [vmem:[#allocation2 + $0x620] sm:$0xff]
          %v5083 = vld [vmem:[#allocation2 + $0x628] sm:$0xff]
          %v5084 = vld [vmem:[#allocation2 + $0x630] sm:$0xff]
          %v5085 = vld [vmem:[#allocation2 + $0x638] sm:$0xff]
          %v5086 = vld [vmem:[#allocation2 + $0x640] sm:$0xff]
          %v5087 = vld [vmem:[#allocation2 + $0x648] sm:$0xff]
          %v5088 = vld [vmem:[#allocation2 + $0x650] sm:$0xff]
          %v5089 = vld [vmem:[#allocation2 + $0x658] sm:$0xff]
          %v5090 = vld [vmem:[#allocation2 + $0x660] sm:$0xff]
          %v5091 = vld [vmem:[#allocation2 + $0x668] sm:$0xff]
          %v5092 = vld [vmem:[#allocation2 + $0x670] sm:$0xff]
          %v5093 = vld [vmem:[#allocation2 + $0x678] sm:$0xff]
          %v5094 = vld [vmem:[#allocation2 + $0x680] sm:$0xff]
          %v5095 = vld [vmem:[#allocation2 + $0x688] sm:$0xff]
          %v5096 = vld [vmem:[#allocation2 + $0x690] sm:$0xff]
          %v5097 = vld [vmem:[#allocation2 + $0x698] sm:$0xff]
          %v5098 = vld [vmem:[#allocation2 + $0x6a0] sm:$0xff]
          %v5099 = vld [vmem:[#allocation2 + $0x6a8] sm:$0xff]
          %v5100 = vld [vmem:[#allocation2 + $0x6b0] sm:$0xff]
          %v5101 = vld [vmem:[#allocation2 + $0x6b8] sm:$0xff]
          %v5102 = vld [vmem:[#allocation2 + $0x6c0] sm:$0xff]
          %v5103 = vld [vmem:[#allocation2 + $0x6c8] sm:$0xff]
          %v5104 = vld [vmem:[#allocation2 + $0x6d0] sm:$0xff]
          %v5105 = vld [vmem:[#allocation2 + $0x6d8] sm:$0xff]
          %v5106 = vld [vmem:[#allocation2 + $0x6e0] sm:$0xff]
          %v5107 = vld [vmem:[#allocation2 + $0x6e8] sm:$0xff]
          %v5108 = vld [vmem:[#allocation2 + $0x6f0] sm:$0xff]
          %v5109 = vld [vmem:[#allocation2 + $0x6f8] sm:$0xff]
          %v5110 = vld [vmem:[#allocation2 + $0x700] sm:$0xff]
          %v5111 = vld [vmem:[#allocation2 + $0x708] sm:$0xff]
          %v5112 = vld [vmem:[#allocation2 + $0x710] sm:$0xff]
          %v5113 = vld [vmem:[#allocation2 + $0x718] sm:$0xff]
          %v5114 = vld [vmem:[#allocation2 + $0x720] sm:$0xff]
          %v5115 = vld [vmem:[#allocation2 + $0x728] sm:$0xff]
          %v5116 = vld [vmem:[#allocation2 + $0x730] sm:$0xff]
          %v5117 = vld [vmem:[#allocation2 + $0x738] sm:$0xff]
          %v5118 = vld [vmem:[#allocation2 + $0x740] sm:$0xff]
          %v5119 = vld [vmem:[#allocation2 + $0x748] sm:$0xff]
          %v5120 = vld [vmem:[#allocation2 + $0x750] sm:$0xff]
          %v5121 = vld [vmem:[#allocation2 + $0x758] sm:$0xff]
          %v5122 = vld [vmem:[#allocation2 + $0x760] sm:$0xff]
          %v5123 = vld [vmem:[#allocation2 + $0x768] sm:$0xff]
          %v5124 = vld [vmem:[#allocation2 + $0x770] sm:$0xff]
          %v5125 = vld [vmem:[#allocation2 + $0x778] sm:$0xff]
          %v5126 = vld [vmem:[#allocation2 + $0x780] sm:$0xff]
          %v5127 = vld [vmem:[#allocation2 + $0x788] sm:$0xff]
          %v5128 = vld [vmem:[#allocation2 + $0x790] sm:$0xff]
          %v5129 = vld [vmem:[#allocation2 + $0x798] sm:$0xff]
          %v5130 = vld [vmem:[#allocation2 + $0x7a0] sm:$0xff]
          %v5131 = vld [vmem:[#allocation2 + $0x7a8] sm:$0xff]
          %v5132 = vld [vmem:[#allocation2 + $0x7b0] sm:$0xff]
          %v5133 = vld [vmem:[#allocation2 + $0x7b8] sm:$0xff]
          %v5134 = vld [vmem:[#allocation2 + $0x7c0] sm:$0xff]
          %v5135 = vld [vmem:[#allocation2 + $0x7c8] sm:$0xff]
          %v5136 = vld [vmem:[#allocation2 + $0x7d0] sm:$0xff]
          %v5137 = vld [vmem:[#allocation2 + $0x7d8] sm:$0xff]
          %v5138 = vld [vmem:[#allocation2 + $0x7e0] sm:$0xff]
          %v5139 = vld [vmem:[#allocation2 + $0x7e8] sm:$0xff]
          %v5140 = vld [vmem:[#allocation2 + $0x7f0] sm:$0xff]
          %v5141 = vld [vmem:[#allocation2 + $0x7f8] sm:$0xff]
          %v5142 = vld [vmem:[#allocation2 + $0x800] sm:$0xff]
          %v5143 = vld [vmem:[#allocation2 + $0x808] sm:$0xff]
          %v5144 = vld [vmem:[#allocation2 + $0x810] sm:$0xff]
          %v5145 = vld [vmem:[#allocation2 + $0x818] sm:$0xff]
          %v5146 = vld [vmem:[#allocation2 + $0x820] sm:$0xff]
          %v5147 = vld [vmem:[#allocation2 + $0x828] sm:$0xff]
          %v5148 = vld [vmem:[#allocation2 + $0x830] sm:$0xff]
          %v5149 = vld [vmem:[#allocation2 + $0x838] sm:$0xff]
          %v5150 = vld [vmem:[#allocation2 + $0x840] sm:$0xff]
          %v5151 = vld [vmem:[#allocation2 + $0x848] sm:$0xff]
          %v5152 = vld [vmem:[#allocation2 + $0x850] sm:$0xff]
          %v5153 = vld [vmem:[#allocation2 + $0x858] sm:$0xff]
          %v5154 = vld [vmem:[#allocation2 + $0x860] sm:$0xff]
          %v5155 = vld [vmem:[#allocation2 + $0x868] sm:$0xff]
          %v5156 = vld [vmem:[#allocation2 + $0x870] sm:$0xff]
          %v5157 = vld [vmem:[#allocation2 + $0x878] sm:$0xff]
          %v5158 = vld [vmem:[#allocation2 + $0x880] sm:$0xff]
          %v5159 = vld [vmem:[#allocation2 + $0x888] sm:$0xff]
          %v5160 = vld [vmem:[#allocation2 + $0x890] sm:$0xff]
          %v5161 = vld [vmem:[#allocation2 + $0x898] sm:$0xff]
          %v5162 = vld [vmem:[#allocation2 + $0x8a0] sm:$0xff]
          %v5163 = vld [vmem:[#allocation2 + $0x8a8] sm:$0xff]
          %v5164 = vld [vmem:[#allocation2 + $0x8b0] sm:$0xff]
          %v5165 = vld [vmem:[#allocation2 + $0x8b8] sm:$0xff]
          %v5166 = vld [vmem:[#allocation2 + $0x8c0] sm:$0xff]
          %v5167 = vld [vmem:[#allocation2 + $0x8c8] sm:$0xff]
          %v5168 = vld [vmem:[#allocation2 + $0x8d0] sm:$0xff]
          %v5169 = vld [vmem:[#allocation2 + $0x8d8] sm:$0xff]
          %v5170 = vld [vmem:[#allocation2 + $0x8e0] sm:$0xff]
          %v5171 = vld [vmem:[#allocation2 + $0x8e8] sm:$0xff]
          %v5172 = vld [vmem:[#allocation2 + $0x8f0] sm:$0xff]
          %v5173 = vld [vmem:[#allocation2 + $0x8f8] sm:$0xff]
          %v5174 = vld [vmem:[#allocation2 + $0x900] sm:$0xff]
          %v5175 = vld [vmem:[#allocation2 + $0x908] sm:$0xff]
          %v5176 = vld [vmem:[#allocation2 + $0x910] sm:$0xff]
          %v5177 = vld [vmem:[#allocation2 + $0x918] sm:$0xff]
          %v5178 = vld [vmem:[#allocation2 + $0x920] sm:$0xff]
          %v5179 = vld [vmem:[#allocation2 + $0x928] sm:$0xff]
          %v5180 = vld [vmem:[#allocation2 + $0x930] sm:$0xff]
          %v5181 = vld [vmem:[#allocation2 + $0x938] sm:$0xff]
          %v5182 = vld [vmem:[#allocation2 + $0x940] sm:$0xff]
          %v5183 = vld [vmem:[#allocation2 + $0x948] sm:$0xff]
          %v5184 = vld [vmem:[#allocation2 + $0x950] sm:$0xff]
          %v5185 = vld [vmem:[#allocation2 + $0x958] sm:$0xff]
          %v5186 = vld [vmem:[#allocation2 + $0x960] sm:$0xff]
          %v5187 = vld [vmem:[#allocation2 + $0x968] sm:$0xff]
          %v5188 = vld [vmem:[#allocation2 + $0x970] sm:$0xff]
          %v5189 = vld [vmem:[#allocation2 + $0x978] sm:$0xff]
          %v5190 = vld [vmem:[#allocation2 + $0x980] sm:$0xff]
          %v5191 = vld [vmem:[#allocation2 + $0x988] sm:$0xff]
          %v5192 = vld [vmem:[#allocation2 + $0x990] sm:$0xff]
          %v5193 = vld [vmem:[#allocation2 + $0x998] sm:$0xff]
          %v5194 = vld [vmem:[#allocation2 + $0x9a0] sm:$0xff]
          %v5195 = vld [vmem:[#allocation2 + $0x9a8] sm:$0xff]
          %v5196 = vld [vmem:[#allocation2 + $0x9b0] sm:$0xff]
          %v5197 = vld [vmem:[#allocation2 + $0x9b8] sm:$0xff]
          %v5198 = vld [vmem:[#allocation2 + $0x9c0] sm:$0xff]
          %v5199 = vld [vmem:[#allocation2 + $0x9c8] sm:$0xff]
          %v5200 = vld [vmem:[#allocation2 + $0x9d0] sm:$0xff]
          %v5201 = vld [vmem:[#allocation2 + $0x9d8] sm:$0xff]
          %v5202 = vld [vmem:[#allocation2 + $0x9e0] sm:$0xff]
          %v5203 = vld [vmem:[#allocation2 + $0x9e8] sm:$0xff]
          %v5204 = vld [vmem:[#allocation2 + $0x9f0] sm:$0xff]
          %v5205 = vld [vmem:[#allocation2 + $0x9f8] sm:$0xff]
          %v5206 = vld [vmem:[#allocation2 + $0xa00] sm:$0xff]
          %v5207 = vld [vmem:[#allocation2 + $0xa08] sm:$0xff]
          %v5208 = vld [vmem:[#allocation2 + $0xa10] sm:$0xff]
          %v5209 = vld [vmem:[#allocation2 + $0xa18] sm:$0xff]
          %v5210 = vld [vmem:[#allocation2 + $0xa20] sm:$0xff]
          %v5211 = vld [vmem:[#allocation2 + $0xa28] sm:$0xff]
          %v5212 = vld [vmem:[#allocation2 + $0xa30] sm:$0xff]
          %v5213 = vld [vmem:[#allocation2 + $0xa38] sm:$0xff]
          %v5214 = vld [vmem:[#allocation2 + $0xa40] sm:$0xff]
          %v5215 = vld [vmem:[#allocation2 + $0xa48] sm:$0xff]
          %v5216 = vld [vmem:[#allocation2 + $0xa50] sm:$0xff]
          %v5217 = vld [vmem:[#allocation2 + $0xa58] sm:$0xff]
          %v5218 = vld [vmem:[#allocation2 + $0xa60] sm:$0xff]
          %v5219 = vld [vmem:[#allocation2 + $0xa68] sm:$0xff]
          %v5220 = vld [vmem:[#allocation2 + $0xa70] sm:$0xff]
          %v5221 = vld [vmem:[#allocation2 + $0xa78] sm:$0xff]
          %v5222 = vld [vmem:[#allocation2 + $0xa80] sm:$0xff]
          %v5223 = vld [vmem:[#allocation2 + $0xa88] sm:$0xff]
          %v5224 = vld [vmem:[#allocation2 + $0xa90] sm:$0xff]
          %v5225 = vld [vmem:[#allocation2 + $0xa98] sm:$0xff]
          %v5226 = vld [vmem:[#allocation2 + $0xaa0] sm:$0xff]
          %v5227 = vld [vmem:[#allocation2 + $0xaa8] sm:$0xff]
          %v5228 = vld [vmem:[#allocation2 + $0xab0] sm:$0xff]
          %v5229 = vld [vmem:[#allocation2 + $0xab8] sm:$0xff]
          %v5230 = vld [vmem:[#allocation2 + $0xac0] sm:$0xff]
          %v5231 = vld [vmem:[#allocation2 + $0xac8] sm:$0xff]
          %v5232 = vld [vmem:[#allocation2 + $0xad0] sm:$0xff]
          %v5233 = vld [vmem:[#allocation2 + $0xad8] sm:$0xff]
          %v5234 = vld [vmem:[#allocation2 + $0xae0] sm:$0xff]
          %v5235 = vld [vmem:[#allocation2 + $0xae8] sm:$0xff]
          %v5236 = vld [vmem:[#allocation2 + $0xaf0] sm:$0xff]
          %v5237 = vld [vmem:[#allocation2 + $0xaf8] sm:$0xff]
          %v5238 = vld [vmem:[#allocation2 + $0xb00] sm:$0xff]
          %v5239 = vld [vmem:[#allocation2 + $0xb08] sm:$0xff]
          %v5240 = vld [vmem:[#allocation2 + $0xb10] sm:$0xff]
          %v5241 = vld [vmem:[#allocation2 + $0xb18] sm:$0xff]
          %v5242 = vld [vmem:[#allocation2 + $0xb20] sm:$0xff]
          %v5243 = vld [vmem:[#allocation2 + $0xb28] sm:$0xff]
          %v5244 = vld [vmem:[#allocation2 + $0xb30] sm:$0xff]
          %v5245 = vld [vmem:[#allocation2 + $0xb38] sm:$0xff]
          %v5246 = vld [vmem:[#allocation2 + $0xb40] sm:$0xff]
          %v5247 = vld [vmem:[#allocation2 + $0xb48] sm:$0xff]
          %v5248 = vld [vmem:[#allocation2 + $0xb50] sm:$0xff]
          %v5249 = vld [vmem:[#allocation2 + $0xb58] sm:$0xff]
          %v5250 = vld [vmem:[#allocation2 + $0xb60] sm:$0xff]
          %v5251 = vld [vmem:[#allocation2 + $0xb68] sm:$0xff]
          %v5252 = vld [vmem:[#allocation2 + $0xb70] sm:$0xff]
          %v5253 = vld [vmem:[#allocation2 + $0xb78] sm:$0xff]
          %v5254 = vld [vmem:[#allocation2 + $0xb80] sm:$0xff]
          %v5255 = vld [vmem:[#allocation2 + $0xb88] sm:$0xff]
          %v5256 = vld [vmem:[#allocation2 + $0xb90] sm:$0xff]
          %v5257 = vld [vmem:[#allocation2 + $0xb98] sm:$0xff]
          %v5258 = vld [vmem:[#allocation2 + $0xba0] sm:$0xff]
          %v5259 = vld [vmem:[#allocation2 + $0xba8] sm:$0xff]
          %v5260 = vld [vmem:[#allocation2 + $0xbb0] sm:$0xff]
          %v5261 = vld [vmem:[#allocation2 + $0xbb8] sm:$0xff]
          %v5262 = vld [vmem:[#allocation2 + $0xbc0] sm:$0xff]
          %v5263 = vld [vmem:[#allocation2 + $0xbc8] sm:$0xff]
          %v5264 = vld [vmem:[#allocation2 + $0xbd0] sm:$0xff]
          %v5265 = vld [vmem:[#allocation2 + $0xbd8] sm:$0xff]
          %v5266 = vld [vmem:[#allocation2 + $0xbe0] sm:$0xff]
          %v5267 = vld [vmem:[#allocation2 + $0xbe8] sm:$0xff]
          %v5268 = vld [vmem:[#allocation2 + $0xbf0] sm:$0xff]
          %v5269 = vld [vmem:[#allocation2 + $0xbf8] sm:$0xff]
          %v5270 = vld [vmem:[#allocation2 + $0xc00] sm:$0xff]
          %v5271 = vld [vmem:[#allocation2 + $0xc08] sm:$0xff]
          %v5272 = vld [vmem:[#allocation2 + $0xc10] sm:$0xff]
          %v5273 = vld [vmem:[#allocation2 + $0xc18] sm:$0xff]
          %v5274 = vld [vmem:[#allocation2 + $0xc20] sm:$0xff]
          %v5275 = vld [vmem:[#allocation2 + $0xc28] sm:$0xff]
          %v5276 = vld [vmem:[#allocation2 + $0xc30] sm:$0xff]
          %v5277 = vld [vmem:[#allocation2 + $0xc38] sm:$0xff]
          %v5278 = vld [vmem:[#allocation2 + $0xc40] sm:$0xff]
          %v5279 = vld [vmem:[#allocation2 + $0xc48] sm:$0xff]
          %v5280 = vld [vmem:[#allocation2 + $0xc50] sm:$0xff]
          %v5281 = vld [vmem:[#allocation2 + $0xc58] sm:$0xff]
          %v5282 = vld [vmem:[#allocation2 + $0xc60] sm:$0xff]
          %v5283 = vld [vmem:[#allocation2 + $0xc68] sm:$0xff]
          %v5284 = vld [vmem:[#allocation2 + $0xc70] sm:$0xff]
          %v5285 = vld [vmem:[#allocation2 + $0xc78] sm:$0xff]
          %v5286 = vld [vmem:[#allocation2 + $0xc80] sm:$0xff]
          %v5287 = vld [vmem:[#allocation2 + $0xc88] sm:$0xff]
          %v5288 = vld [vmem:[#allocation2 + $0xc90] sm:$0xff]
          %v5289 = vld [vmem:[#allocation2 + $0xc98] sm:$0xff]
          %v5290 = vld [vmem:[#allocation2 + $0xca0] sm:$0xff]
          %v5291 = vld [vmem:[#allocation2 + $0xca8] sm:$0xff]
          %v5292 = vld [vmem:[#allocation2 + $0xcb0] sm:$0xff]
          %v5293 = vld [vmem:[#allocation2 + $0xcb8] sm:$0xff]
          %v5294 = vld [vmem:[#allocation2 + $0xcc0] sm:$0xff]
          %v5295 = vld [vmem:[#allocation2 + $0xcc8] sm:$0xff]
          %v5296 = vld [vmem:[#allocation2 + $0xcd0] sm:$0xff]
          %v5297 = vld [vmem:[#allocation2 + $0xcd8] sm:$0xff]
          %v5298 = vld [vmem:[#allocation2 + $0xce0] sm:$0xff]
          %v5299 = vld [vmem:[#allocation2 + $0xce8] sm:$0xff]
          %v5300 = vld [vmem:[#allocation2 + $0xcf0] sm:$0xff]
          %v5301 = vld [vmem:[#allocation2 + $0xcf8] sm:$0xff]
          %v5302 = vld [vmem:[#allocation2 + $0xd00] sm:$0xff]
          %v5303 = vld [vmem:[#allocation2 + $0xd08] sm:$0xff]
          %v5304 = vld [vmem:[#allocation2 + $0xd10] sm:$0xff]
          %v5305 = vld [vmem:[#allocation2 + $0xd18] sm:$0xff]
          %v5306 = vld [vmem:[#allocation2 + $0xd20] sm:$0xff]
          %v5307 = vld [vmem:[#allocation2 + $0xd28] sm:$0xff]
          %v5308 = vld [vmem:[#allocation2 + $0xd30] sm:$0xff]
          %v5309 = vld [vmem:[#allocation2 + $0xd38] sm:$0xff]
          %v5310 = vld [vmem:[#allocation2 + $0xd40] sm:$0xff]
          %v5311 = vld [vmem:[#allocation2 + $0xd48] sm:$0xff]
          %v5312 = vld [vmem:[#allocation2 + $0xd50] sm:$0xff]
          %v5313 = vld [vmem:[#allocation2 + $0xd58] sm:$0xff]
          %v5314 = vld [vmem:[#allocation2 + $0xd60] sm:$0xff]
          %v5315 = vld [vmem:[#allocation2 + $0xd68] sm:$0xff]
          %v5316 = vld [vmem:[#allocation2 + $0xd70] sm:$0xff]
          %v5317 = vld [vmem:[#allocation2 + $0xd78] sm:$0xff]
          %v5318 = vld [vmem:[#allocation2 + $0xd80] sm:$0xff]
          %v5319 = vld [vmem:[#allocation2 + $0xd88] sm:$0xff]
          %v5320 = vld [vmem:[#allocation2 + $0xd90] sm:$0xff]
          %v5321 = vld [vmem:[#allocation2 + $0xd98] sm:$0xff]
          %v5322 = vld [vmem:[#allocation2 + $0xda0] sm:$0xff]
          %v5323 = vld [vmem:[#allocation2 + $0xda8] sm:$0xff]
          %v5324 = vld [vmem:[#allocation2 + $0xdb0] sm:$0xff]
          %v5325 = vld [vmem:[#allocation2 + $0xdb8] sm:$0xff]
          %v5326 = vld [vmem:[#allocation2 + $0xdc0] sm:$0xff]
          %v5327 = vld [vmem:[#allocation2 + $0xdc8] sm:$0xff]
          %v5328 = vld [vmem:[#allocation2 + $0xdd0] sm:$0xff]
          %v5329 = vld [vmem:[#allocation2 + $0xdd8] sm:$0xff]
          %v5330 = vld [vmem:[#allocation2 + $0xde0] sm:$0xff]
          %v5331 = vld [vmem:[#allocation2 + $0xde8] sm:$0xff]
          %v5332 = vld [vmem:[#allocation2 + $0xdf0] sm:$0xff]
          %v5333 = vld [vmem:[#allocation2 + $0xdf8] sm:$0xff]
          %v5334 = vld [vmem:[#allocation2 + $0xe00] sm:$0xff]
          %v5335 = vld [vmem:[#allocation2 + $0xe08] sm:$0xff]
          %v5336 = vld [vmem:[#allocation2 + $0xe10] sm:$0xff]
          %v5337 = vld [vmem:[#allocation2 + $0xe18] sm:$0xff]
          %v5338 = vld [vmem:[#allocation2 + $0xe20] sm:$0xff]
          %v5339 = vld [vmem:[#allocation2 + $0xe28] sm:$0xff]
          %v5340 = vld [vmem:[#allocation2 + $0xe30] sm:$0xff]
          %v5341 = vld [vmem:[#allocation2 + $0xe38] sm:$0xff]
          %v5342 = vld [vmem:[#allocation2 + $0xe40] sm:$0xff]
          %v5343 = vld [vmem:[#allocation2 + $0xe48] sm:$0xff]
          %v5344 = vld [vmem:[#allocation2 + $0xe50] sm:$0xff]
          %v5345 = vld [vmem:[#allocation2 + $0xe58] sm:$0xff]
          %v5346 = vld [vmem:[#allocation2 + $0xe60] sm:$0xff]
          %v5347 = vld [vmem:[#allocation2 + $0xe68] sm:$0xff]
          %v5348 = vld [vmem:[#allocation2 + $0xe70] sm:$0xff]
          %v5349 = vld [vmem:[#allocation2 + $0xe78] sm:$0xff]
          %v5350 = vld [vmem:[#allocation2 + $0xe80] sm:$0xff]
          %v5351 = vld [vmem:[#allocation2 + $0xe88] sm:$0xff]
          %v5352 = vld [vmem:[#allocation2 + $0xe90] sm:$0xff]
          %v5353 = vld [vmem:[#allocation2 + $0xe98] sm:$0xff]
          %v5354 = vld [vmem:[#allocation2 + $0xea0] sm:$0xff]
          %v5355 = vld [vmem:[#allocation2 + $0xea8] sm:$0xff]
          %v5356 = vld [vmem:[#allocation2 + $0xeb0] sm:$0xff]
          %v5357 = vld [vmem:[#allocation2 + $0xeb8] sm:$0xff]
          %v5358 = vld [vmem:[#allocation2 + $0xec0] sm:$0xff]
          %v5359 = vld [vmem:[#allocation2 + $0xec8] sm:$0xff]
          %v5360 = vld [vmem:[#allocation2 + $0xed0] sm:$0xff]
          %v5361 = vld [vmem:[#allocation2 + $0xed8] sm:$0xff]
          %v5362 = vld [vmem:[#allocation2 + $0xee0] sm:$0xff]
          %v5363 = vld [vmem:[#allocation2 + $0xee8] sm:$0xff]
          %v5364 = vld [vmem:[#allocation2 + $0xef0] sm:$0xff]
          %v5365 = vld [vmem:[#allocation2 + $0xef8] sm:$0xff]
          %v5366 = vld [vmem:[#allocation2 + $0xf00] sm:$0xff]
          %v5367 = vld [vmem:[#allocation2 + $0xf08] sm:$0xff]
          %v5368 = vld [vmem:[#allocation2 + $0xf10] sm:$0xff]
          %v5369 = vld [vmem:[#allocation2 + $0xf18] sm:$0xff]
          %v5370 = vld [vmem:[#allocation2 + $0xf20] sm:$0xff]
          %v5371 = vld [vmem:[#allocation2 + $0xf28] sm:$0xff]
          %v5372 = vld [vmem:[#allocation2 + $0xf30] sm:$0xff]
          %v5373 = vld [vmem:[#allocation2 + $0xf38] sm:$0xff]
          %v5374 = vld [vmem:[#allocation2 + $0xf40] sm:$0xff]
          %v5375 = vld [vmem:[#allocation2 + $0xf48] sm:$0xff]
          %v5376 = vld [vmem:[#allocation2 + $0xf50] sm:$0xff]
          %v5377 = vld [vmem:[#allocation2 + $0xf58] sm:$0xff]
          %v5378 = vld [vmem:[#allocation2 + $0xf60] sm:$0xff]
          %v5379 = vld [vmem:[#allocation2 + $0xf68] sm:$0xff]
          %v5380 = vld [vmem:[#allocation2 + $0xf70] sm:$0xff]
          %v5381 = vld [vmem:[#allocation2 + $0xf78] sm:$0xff]
          %v5382 = vld [vmem:[#allocation2 + $0xf80] sm:$0xff]
          %v5383 = vld [vmem:[#allocation2 + $0xf88] sm:$0xff]
          %v5384 = vld [vmem:[#allocation2 + $0xf90] sm:$0xff]
          %v5385 = vld [vmem:[#allocation2 + $0xf98] sm:$0xff]
          %v5386 = vld [vmem:[#allocation2 + $0xfa0] sm:$0xff]
          %v5387 = vld [vmem:[#allocation2 + $0xfa8] sm:$0xff]
          %v5388 = vld [vmem:[#allocation2 + $0xfb0] sm:$0xff]
          %v5389 = vld [vmem:[#allocation2 + $0xfb8] sm:$0xff]
          %v5390 = vld [vmem:[#allocation2 + $0xfc0] sm:$0xff]
          %v5391 = vld [vmem:[#allocation2 + $0xfc8] sm:$0xff]
          %v5392 = vld [vmem:[#allocation2 + $0xfd0] sm:$0xff]
          %v5393 = vld [vmem:[#allocation2 + $0xfd8] sm:$0xff]
          %v5394 = vld [vmem:[#allocation2 + $0xfe0] sm:$0xff]
          %v5395 = vld [vmem:[#allocation2 + $0xfe8] sm:$0xff]
          %v5396 = vld [vmem:[#allocation2 + $0xff0] sm:$0xff]
          %v5397 = vld [vmem:[#allocation2 + $0xff8] sm:$0xff]
          %v5398 = vstv %s2827
          %v5399 = vadd.s32 %v5398, %v4374
          %v5400 = vadd.s32 %v5398, %v4375
          %v5401 = vadd.s32 %v5398, %v4376
          %v5402 = vadd.s32 %v5398, %v4377
          %v5403 = vadd.s32 %v5398, %v4378
          %v5404 = vadd.s32 %v5398, %v4379
          %v5405 = vadd.s32 %v5398, %v4380
          %v5406 = vadd.s32 %v5398, %v4381
          %v5407 = vadd.s32 %v5398, %v4382
          %v5408 = vadd.s32 %v5398, %v4383
          %v5409 = vadd.s32 %v5398, %v4384
          %v5410 = vadd.s32 %v5398, %v4385
          %v5411 = vadd.s32 %v5398, %v4386
          %v5412 = vadd.s32 %v5398, %v4387
          %v5413 = vadd.s32 %v5398, %v4388
          %v5414 = vadd.s32 %v5398, %v4389
          %v5415 = vadd.s32 %v5398, %v4390
          %v5416 = vadd.s32 %v5398, %v4391
          %v5417 = vadd.s32 %v5398, %v4392
          %v5418 = vadd.s32 %v5398, %v4393
          %v5419 = vadd.s32 %v5398, %v4394
          %v5420 = vadd.s32 %v5398, %v4395
          %v5421 = vadd.s32 %v5398, %v4396
          %v5422 = vadd.s32 %v5398, %v4397
          %v5423 = vadd.s32 %v5398, %v4398
          %v5424 = vadd.s32 %v5398, %v4399
          %v5425 = vadd.s32 %v5398, %v4400
          %v5426 = vadd.s32 %v5398, %v4401
          %v5427 = vadd.s32 %v5398, %v4402
          %v5428 = vadd.s32 %v5398, %v4403
          %v5429 = vadd.s32 %v5398, %v4404
          %v5430 = vadd.s32 %v5398, %v4405
          %v5431 = vadd.s32 %v5398, %v4406
          %v5432 = vadd.s32 %v5398, %v4407
          %v5433 = vadd.s32 %v5398, %v4408
          %v5434 = vadd.s32 %v5398, %v4409
          %v5435 = vadd.s32 %v5398, %v4410
          %v5436 = vadd.s32 %v5398, %v4411
          %v5437 = vadd.s32 %v5398, %v4412
          %v5438 = vadd.s32 %v5398, %v4413
          %v5439 = vadd.s32 %v5398, %v4414
          %v5440 = vadd.s32 %v5398, %v4415
          %v5441 = vadd.s32 %v5398, %v4416
          %v5442 = vadd.s32 %v5398, %v4417
          %v5443 = vadd.s32 %v5398, %v4418
          %v5444 = vadd.s32 %v5398, %v4419
          %v5445 = vadd.s32 %v5398, %v4420
          %v5446 = vadd.s32 %v5398, %v4421
          %v5447 = vadd.s32 %v5398, %v4422
          %v5448 = vadd.s32 %v5398, %v4423
          %v5449 = vadd.s32 %v5398, %v4424
          %v5450 = vadd.s32 %v5398, %v4425
          %v5451 = vadd.s32 %v5398, %v4426
          %v5452 = vadd.s32 %v5398, %v4427
          %v5453 = vadd.s32 %v5398, %v4428
          %v5454 = vadd.s32 %v5398, %v4429
          %v5455 = vadd.s32 %v5398, %v4430
          %v5456 = vadd.s32 %v5398, %v4431
          %v5457 = vadd.s32 %v5398, %v4432
          %v5458 = vadd.s32 %v5398, %v4433
          %v5459 = vadd.s32 %v5398, %v4434
          %v5460 = vadd.s32 %v5398, %v4435
          %v5461 = vadd.s32 %v5398, %v4436
          %v5462 = vadd.s32 %v5398, %v4437
          %v5463 = vadd.s32 %v5398, %v4438
          %v5464 = vadd.s32 %v5398, %v4439
          %v5465 = vadd.s32 %v5398, %v4440
          %v5466 = vadd.s32 %v5398, %v4441
          %v5467 = vadd.s32 %v5398, %v4442
          %v5468 = vadd.s32 %v5398, %v4443
          %v5469 = vadd.s32 %v5398, %v4444
          %v5470 = vadd.s32 %v5398, %v4445
          %v5471 = vadd.s32 %v5398, %v4446
          %v5472 = vadd.s32 %v5398, %v4447
          %v5473 = vadd.s32 %v5398, %v4448
          %v5474 = vadd.s32 %v5398, %v4449
          %v5475 = vadd.s32 %v5398, %v4450
          %v5476 = vadd.s32 %v5398, %v4451
          %v5477 = vadd.s32 %v5398, %v4452
          %v5478 = vadd.s32 %v5398, %v4453
          %v5479 = vadd.s32 %v5398, %v4454
          %v5480 = vadd.s32 %v5398, %v4455
          %v5481 = vadd.s32 %v5398, %v4456
          %v5482 = vadd.s32 %v5398, %v4457
          %v5483 = vadd.s32 %v5398, %v4458
          %v5484 = vadd.s32 %v5398, %v4459
          %v5485 = vadd.s32 %v5398, %v4460
          %v5486 = vadd.s32 %v5398, %v4461
          %v5487 = vadd.s32 %v5398, %v4462
          %v5488 = vadd.s32 %v5398, %v4463
          %v5489 = vadd.s32 %v5398, %v4464
          %v5490 = vadd.s32 %v5398, %v4465
          %v5491 = vadd.s32 %v5398, %v4466
          %v5492 = vadd.s32 %v5398, %v4467
          %v5493 = vadd.s32 %v5398, %v4468
          %v5494 = vadd.s32 %v5398, %v4469
          %v5495 = vadd.s32 %v5398, %v4470
          %v5496 = vadd.s32 %v5398, %v4471
          %v5497 = vadd.s32 %v5398, %v4472
          %v5498 = vadd.s32 %v5398, %v4473
          %v5499 = vadd.s32 %v5398, %v4474
          %v5500 = vadd.s32 %v5398, %v4475
          %v5501 = vadd.s32 %v5398, %v4476
          %v5502 = vadd.s32 %v5398, %v4477
          %v5503 = vadd.s32 %v5398, %v4478
          %v5504 = vadd.s32 %v5398, %v4479
          %v5505 = vadd.s32 %v5398, %v4480
          %v5506 = vadd.s32 %v5398, %v4481
          %v5507 = vadd.s32 %v5398, %v4482
          %v5508 = vadd.s32 %v5398, %v4483
          %v5509 = vadd.s32 %v5398, %v4484
          %v5510 = vadd.s32 %v5398, %v4485
          %v5511 = vadd.s32 %v5398, %v4486
          %v5512 = vadd.s32 %v5398, %v4487
          %v5513 = vadd.s32 %v5398, %v4488
          %v5514 = vadd.s32 %v5398, %v4489
          %v5515 = vadd.s32 %v5398, %v4490
          %v5516 = vadd.s32 %v5398, %v4491
          %v5517 = vadd.s32 %v5398, %v4492
          %v5518 = vadd.s32 %v5398, %v4493
          %v5519 = vadd.s32 %v5398, %v4494
          %v5520 = vadd.s32 %v5398, %v4495
          %v5521 = vadd.s32 %v5398, %v4496
          %v5522 = vadd.s32 %v5398, %v4497
          %v5523 = vadd.s32 %v5398, %v4498
          %v5524 = vadd.s32 %v5398, %v4499
          %v5525 = vadd.s32 %v5398, %v4500
          %v5526 = vadd.s32 %v5398, %v4501
          %v5527 = vadd.s32 %v5398, %v4502
          %v5528 = vadd.s32 %v5398, %v4503
          %v5529 = vadd.s32 %v5398, %v4504
          %v5530 = vadd.s32 %v5398, %v4505
          %v5531 = vadd.s32 %v5398, %v4506
          %v5532 = vadd.s32 %v5398, %v4507
          %v5533 = vadd.s32 %v5398, %v4508
          %v5534 = vadd.s32 %v5398, %v4509
          %v5535 = vadd.s32 %v5398, %v4510
          %v5536 = vadd.s32 %v5398, %v4511
          %v5537 = vadd.s32 %v5398, %v4512
          %v5538 = vadd.s32 %v5398, %v4513
          %v5539 = vadd.s32 %v5398, %v4514
          %v5540 = vadd.s32 %v5398, %v4515
          %v5541 = vadd.s32 %v5398, %v4516
          %v5542 = vadd.s32 %v5398, %v4517
          %v5543 = vadd.s32 %v5398, %v4518
          %v5544 = vadd.s32 %v5398, %v4519
          %v5545 = vadd.s32 %v5398, %v4520
          %v5546 = vadd.s32 %v5398, %v4521
          %v5547 = vadd.s32 %v5398, %v4522
          %v5548 = vadd.s32 %v5398, %v4523
          %v5549 = vadd.s32 %v5398, %v4524
          %v5550 = vadd.s32 %v5398, %v4525
          %v5551 = vadd.s32 %v5398, %v4526
          %v5552 = vadd.s32 %v5398, %v4527
          %v5553 = vadd.s32 %v5398, %v4528
          %v5554 = vadd.s32 %v5398, %v4529
          %v5555 = vadd.s32 %v5398, %v4530
          %v5556 = vadd.s32 %v5398, %v4531
          %v5557 = vadd.s32 %v5398, %v4532
          %v5558 = vadd.s32 %v5398, %v4533
          %v5559 = vadd.s32 %v5398, %v4534
          %v5560 = vadd.s32 %v5398, %v4535
          %v5561 = vadd.s32 %v5398, %v4536
          %v5562 = vadd.s32 %v5398, %v4537
          %v5563 = vadd.s32 %v5398, %v4538
          %v5564 = vadd.s32 %v5398, %v4539
          %v5565 = vadd.s32 %v5398, %v4540
          %v5566 = vadd.s32 %v5398, %v4541
          %v5567 = vadd.s32 %v5398, %v4542
          %v5568 = vadd.s32 %v5398, %v4543
          %v5569 = vadd.s32 %v5398, %v4544
          %v5570 = vadd.s32 %v5398, %v4545
          %v5571 = vadd.s32 %v5398, %v4546
          %v5572 = vadd.s32 %v5398, %v4547
          %v5573 = vadd.s32 %v5398, %v4548
          %v5574 = vadd.s32 %v5398, %v4549
          %v5575 = vadd.s32 %v5398, %v4550
          %v5576 = vadd.s32 %v5398, %v4551
          %v5577 = vadd.s32 %v5398, %v4552
          %v5578 = vadd.s32 %v5398, %v4553
          %v5579 = vadd.s32 %v5398, %v4554
          %v5580 = vadd.s32 %v5398, %v4555
          %v5581 = vadd.s32 %v5398, %v4556
          %v5582 = vadd.s32 %v5398, %v4557
          %v5583 = vadd.s32 %v5398, %v4558
          %v5584 = vadd.s32 %v5398, %v4559
          %v5585 = vadd.s32 %v5398, %v4560
          %v5586 = vadd.s32 %v5398, %v4561
          %v5587 = vadd.s32 %v5398, %v4562
          %v5588 = vadd.s32 %v5398, %v4563
          %v5589 = vadd.s32 %v5398, %v4564
          %v5590 = vadd.s32 %v5398, %v4565
          %v5591 = vadd.s32 %v5398, %v4566
          %v5592 = vadd.s32 %v5398, %v4567
          %v5593 = vadd.s32 %v5398, %v4568
          %v5594 = vadd.s32 %v5398, %v4569
          %v5595 = vadd.s32 %v5398, %v4570
          %v5596 = vadd.s32 %v5398, %v4571
          %v5597 = vadd.s32 %v5398, %v4572
          %v5598 = vadd.s32 %v5398, %v4573
          %v5599 = vadd.s32 %v5398, %v4574
          %v5600 = vadd.s32 %v5398, %v4575
          %v5601 = vadd.s32 %v5398, %v4576
          %v5602 = vadd.s32 %v5398, %v4577
          %v5603 = vadd.s32 %v5398, %v4578
          %v5604 = vadd.s32 %v5398, %v4579
          %v5605 = vadd.s32 %v5398, %v4580
          %v5606 = vadd.s32 %v5398, %v4581
          %v5607 = vadd.s32 %v5398, %v4582
          %v5608 = vadd.s32 %v5398, %v4583
          %v5609 = vadd.s32 %v5398, %v4584
          %v5610 = vadd.s32 %v5398, %v4585
          %v5611 = vadd.s32 %v5398, %v4586
          %v5612 = vadd.s32 %v5398, %v4587
          %v5613 = vadd.s32 %v5398, %v4588
          %v5614 = vadd.s32 %v5398, %v4589
          %v5615 = vadd.s32 %v5398, %v4590
          %v5616 = vadd.s32 %v5398, %v4591
          %v5617 = vadd.s32 %v5398, %v4592
          %v5618 = vadd.s32 %v5398, %v4593
          %v5619 = vadd.s32 %v5398, %v4594
          %v5620 = vadd.s32 %v5398, %v4595
          %v5621 = vadd.s32 %v5398, %v4596
          %v5622 = vadd.s32 %v5398, %v4597
          %v5623 = vadd.s32 %v5398, %v4598
          %v5624 = vadd.s32 %v5398, %v4599
          %v5625 = vadd.s32 %v5398, %v4600
          %v5626 = vadd.s32 %v5398, %v4601
          %v5627 = vadd.s32 %v5398, %v4602
          %v5628 = vadd.s32 %v5398, %v4603
          %v5629 = vadd.s32 %v5398, %v4604
          %v5630 = vadd.s32 %v5398, %v4605
          %v5631 = vadd.s32 %v5398, %v4606
          %v5632 = vadd.s32 %v5398, %v4607
          %v5633 = vadd.s32 %v5398, %v4608
          %v5634 = vadd.s32 %v5398, %v4609
          %v5635 = vadd.s32 %v5398, %v4610
          %v5636 = vadd.s32 %v5398, %v4611
          %v5637 = vadd.s32 %v5398, %v4612
          %v5638 = vadd.s32 %v5398, %v4613
          %v5639 = vadd.s32 %v5398, %v4614
          %v5640 = vadd.s32 %v5398, %v4615
          %v5641 = vadd.s32 %v5398, %v4616
          %v5642 = vadd.s32 %v5398, %v4617
          %v5643 = vadd.s32 %v5398, %v4618
          %v5644 = vadd.s32 %v5398, %v4619
          %v5645 = vadd.s32 %v5398, %v4620
          %v5646 = vadd.s32 %v5398, %v4621
          %v5647 = vadd.s32 %v5398, %v4622
          %v5648 = vadd.s32 %v5398, %v4623
          %v5649 = vadd.s32 %v5398, %v4624
          %v5650 = vadd.s32 %v5398, %v4625
          %v5651 = vadd.s32 %v5398, %v4626
          %v5652 = vadd.s32 %v5398, %v4627
          %v5653 = vadd.s32 %v5398, %v4628
          %v5654 = vadd.s32 %v5398, %v4629
          %v5655 = vadd.s32 %v5398, %v4630
          %v5656 = vadd.s32 %v5398, %v4631
          %v5657 = vadd.s32 %v5398, %v4632
          %v5658 = vadd.s32 %v5398, %v4633
          %v5659 = vadd.s32 %v5398, %v4634
          %v5660 = vadd.s32 %v5398, %v4635
          %v5661 = vadd.s32 %v5398, %v4636
          %v5662 = vadd.s32 %v5398, %v4637
          %v5663 = vadd.s32 %v5398, %v4638
          %v5664 = vadd.s32 %v5398, %v4639
          %v5665 = vadd.s32 %v5398, %v4640
          %v5666 = vadd.s32 %v5398, %v4641
          %v5667 = vadd.s32 %v5398, %v4642
          %v5668 = vadd.s32 %v5398, %v4643
          %v5669 = vadd.s32 %v5398, %v4644
          %v5670 = vadd.s32 %v5398, %v4645
          %v5671 = vadd.s32 %v5398, %v4646
          %v5672 = vadd.s32 %v5398, %v4647
          %v5673 = vadd.s32 %v5398, %v4648
          %v5674 = vadd.s32 %v5398, %v4649
          %v5675 = vadd.s32 %v5398, %v4650
          %v5676 = vadd.s32 %v5398, %v4651
          %v5677 = vadd.s32 %v5398, %v4652
          %v5678 = vadd.s32 %v5398, %v4653
          %v5679 = vadd.s32 %v5398, %v4654
          %v5680 = vadd.s32 %v5398, %v4655
          %v5681 = vadd.s32 %v5398, %v4656
          %v5682 = vadd.s32 %v5398, %v4657
          %v5683 = vadd.s32 %v5398, %v4658
          %v5684 = vadd.s32 %v5398, %v4659
          %v5685 = vadd.s32 %v5398, %v4660
          %v5686 = vadd.s32 %v5398, %v4661
          %v5687 = vadd.s32 %v5398, %v4662
          %v5688 = vadd.s32 %v5398, %v4663
          %v5689 = vadd.s32 %v5398, %v4664
          %v5690 = vadd.s32 %v5398, %v4665
          %v5691 = vadd.s32 %v5398, %v4666
          %v5692 = vadd.s32 %v5398, %v4667
          %v5693 = vadd.s32 %v5398, %v4668
          %v5694 = vadd.s32 %v5398, %v4669
          %v5695 = vadd.s32 %v5398, %v4670
          %v5696 = vadd.s32 %v5398, %v4671
          %v5697 = vadd.s32 %v5398, %v4672
          %v5698 = vadd.s32 %v5398, %v4673
          %v5699 = vadd.s32 %v5398, %v4674
          %v5700 = vadd.s32 %v5398, %v4675
          %v5701 = vadd.s32 %v5398, %v4676
          %v5702 = vadd.s32 %v5398, %v4677
          %v5703 = vadd.s32 %v5398, %v4678
          %v5704 = vadd.s32 %v5398, %v4679
          %v5705 = vadd.s32 %v5398, %v4680
          %v5706 = vadd.s32 %v5398, %v4681
          %v5707 = vadd.s32 %v5398, %v4682
          %v5708 = vadd.s32 %v5398, %v4683
          %v5709 = vadd.s32 %v5398, %v4684
          %v5710 = vadd.s32 %v5398, %v4685
          %v5711 = vadd.s32 %v5398, %v4686
          %v5712 = vadd.s32 %v5398, %v4687
          %v5713 = vadd.s32 %v5398, %v4688
          %v5714 = vadd.s32 %v5398, %v4689
          %v5715 = vadd.s32 %v5398, %v4690
          %v5716 = vadd.s32 %v5398, %v4691
          %v5717 = vadd.s32 %v5398, %v4692
          %v5718 = vadd.s32 %v5398, %v4693
          %v5719 = vadd.s32 %v5398, %v4694
          %v5720 = vadd.s32 %v5398, %v4695
          %v5721 = vadd.s32 %v5398, %v4696
          %v5722 = vadd.s32 %v5398, %v4697
          %v5723 = vadd.s32 %v5398, %v4698
          %v5724 = vadd.s32 %v5398, %v4699
          %v5725 = vadd.s32 %v5398, %v4700
          %v5726 = vadd.s32 %v5398, %v4701
          %v5727 = vadd.s32 %v5398, %v4702
          %v5728 = vadd.s32 %v5398, %v4703
          %v5729 = vadd.s32 %v5398, %v4704
          %v5730 = vadd.s32 %v5398, %v4705
          %v5731 = vadd.s32 %v5398, %v4706
          %v5732 = vadd.s32 %v5398, %v4707
          %v5733 = vadd.s32 %v5398, %v4708
          %v5734 = vadd.s32 %v5398, %v4709
          %v5735 = vadd.s32 %v5398, %v4710
          %v5736 = vadd.s32 %v5398, %v4711
          %v5737 = vadd.s32 %v5398, %v4712
          %v5738 = vadd.s32 %v5398, %v4713
          %v5739 = vadd.s32 %v5398, %v4714
          %v5740 = vadd.s32 %v5398, %v4715
          %v5741 = vadd.s32 %v5398, %v4716
          %v5742 = vadd.s32 %v5398, %v4717
          %v5743 = vadd.s32 %v5398, %v4718
          %v5744 = vadd.s32 %v5398, %v4719
          %v5745 = vadd.s32 %v5398, %v4720
          %v5746 = vadd.s32 %v5398, %v4721
          %v5747 = vadd.s32 %v5398, %v4722
          %v5748 = vadd.s32 %v5398, %v4723
          %v5749 = vadd.s32 %v5398, %v4724
          %v5750 = vadd.s32 %v5398, %v4725
          %v5751 = vadd.s32 %v5398, %v4726
          %v5752 = vadd.s32 %v5398, %v4727
          %v5753 = vadd.s32 %v5398, %v4728
          %v5754 = vadd.s32 %v5398, %v4729
          %v5755 = vadd.s32 %v5398, %v4730
          %v5756 = vadd.s32 %v5398, %v4731
          %v5757 = vadd.s32 %v5398, %v4732
          %v5758 = vadd.s32 %v5398, %v4733
          %v5759 = vadd.s32 %v5398, %v4734
          %v5760 = vadd.s32 %v5398, %v4735
          %v5761 = vadd.s32 %v5398, %v4736
          %v5762 = vadd.s32 %v5398, %v4737
          %v5763 = vadd.s32 %v5398, %v4738
          %v5764 = vadd.s32 %v5398, %v4739
          %v5765 = vadd.s32 %v5398, %v4740
          %v5766 = vadd.s32 %v5398, %v4741
          %v5767 = vadd.s32 %v5398, %v4742
          %v5768 = vadd.s32 %v5398, %v4743
          %v5769 = vadd.s32 %v5398, %v4744
          %v5770 = vadd.s32 %v5398, %v4745
          %v5771 = vadd.s32 %v5398, %v4746
          %v5772 = vadd.s32 %v5398, %v4747
          %v5773 = vadd.s32 %v5398, %v4748
          %v5774 = vadd.s32 %v5398, %v4749
          %v5775 = vadd.s32 %v5398, %v4750
          %v5776 = vadd.s32 %v5398, %v4751
          %v5777 = vadd.s32 %v5398, %v4752
          %v5778 = vadd.s32 %v5398, %v4753
          %v5779 = vadd.s32 %v5398, %v4754
          %v5780 = vadd.s32 %v5398, %v4755
          %v5781 = vadd.s32 %v5398, %v4756
          %v5782 = vadd.s32 %v5398, %v4757
          %v5783 = vadd.s32 %v5398, %v4758
          %v5784 = vadd.s32 %v5398, %v4759
          %v5785 = vadd.s32 %v5398, %v4760
          %v5786 = vadd.s32 %v5398, %v4761
          %v5787 = vadd.s32 %v5398, %v4762
          %v5788 = vadd.s32 %v5398, %v4763
          %v5789 = vadd.s32 %v5398, %v4764
          %v5790 = vadd.s32 %v5398, %v4765
          %v5791 = vadd.s32 %v5398, %v4766
          %v5792 = vadd.s32 %v5398, %v4767
          %v5793 = vadd.s32 %v5398, %v4768
          %v5794 = vadd.s32 %v5398, %v4769
          %v5795 = vadd.s32 %v5398, %v4770
          %v5796 = vadd.s32 %v5398, %v4771
          %v5797 = vadd.s32 %v5398, %v4772
          %v5798 = vadd.s32 %v5398, %v4773
          %v5799 = vadd.s32 %v5398, %v4774
          %v5800 = vadd.s32 %v5398, %v4775
          %v5801 = vadd.s32 %v5398, %v4776
          %v5802 = vadd.s32 %v5398, %v4777
          %v5803 = vadd.s32 %v5398, %v4778
          %v5804 = vadd.s32 %v5398, %v4779
          %v5805 = vadd.s32 %v5398, %v4780
          %v5806 = vadd.s32 %v5398, %v4781
          %v5807 = vadd.s32 %v5398, %v4782
          %v5808 = vadd.s32 %v5398, %v4783
          %v5809 = vadd.s32 %v5398, %v4784
          %v5810 = vadd.s32 %v5398, %v4785
          %v5811 = vadd.s32 %v5398, %v4786
          %v5812 = vadd.s32 %v5398, %v4787
          %v5813 = vadd.s32 %v5398, %v4788
          %v5814 = vadd.s32 %v5398, %v4789
          %v5815 = vadd.s32 %v5398, %v4790
          %v5816 = vadd.s32 %v5398, %v4791
          %v5817 = vadd.s32 %v5398, %v4792
          %v5818 = vadd.s32 %v5398, %v4793
          %v5819 = vadd.s32 %v5398, %v4794
          %v5820 = vadd.s32 %v5398, %v4795
          %v5821 = vadd.s32 %v5398, %v4796
          %v5822 = vadd.s32 %v5398, %v4797
          %v5823 = vadd.s32 %v5398, %v4798
          %v5824 = vadd.s32 %v5398, %v4799
          %v5825 = vadd.s32 %v5398, %v4800
          %v5826 = vadd.s32 %v5398, %v4801
          %v5827 = vadd.s32 %v5398, %v4802
          %v5828 = vadd.s32 %v5398, %v4803
          %v5829 = vadd.s32 %v5398, %v4804
          %v5830 = vadd.s32 %v5398, %v4805
          %v5831 = vadd.s32 %v5398, %v4806
          %v5832 = vadd.s32 %v5398, %v4807
          %v5833 = vadd.s32 %v5398, %v4808
          %v5834 = vadd.s32 %v5398, %v4809
          %v5835 = vadd.s32 %v5398, %v4810
          %v5836 = vadd.s32 %v5398, %v4811
          %v5837 = vadd.s32 %v5398, %v4812
          %v5838 = vadd.s32 %v5398, %v4813
          %v5839 = vadd.s32 %v5398, %v4814
          %v5840 = vadd.s32 %v5398, %v4815
          %v5841 = vadd.s32 %v5398, %v4816
          %v5842 = vadd.s32 %v5398, %v4817
          %v5843 = vadd.s32 %v5398, %v4818
          %v5844 = vadd.s32 %v5398, %v4819
          %v5845 = vadd.s32 %v5398, %v4820
          %v5846 = vadd.s32 %v5398, %v4821
          %v5847 = vadd.s32 %v5398, %v4822
          %v5848 = vadd.s32 %v5398, %v4823
          %v5849 = vadd.s32 %v5398, %v4824
          %v5850 = vadd.s32 %v5398, %v4825
          %v5851 = vadd.s32 %v5398, %v4826
          %v5852 = vadd.s32 %v5398, %v4827
          %v5853 = vadd.s32 %v5398, %v4828
          %v5854 = vadd.s32 %v5398, %v4829
          %v5855 = vadd.s32 %v5398, %v4830
          %v5856 = vadd.s32 %v5398, %v4831
          %v5857 = vadd.s32 %v5398, %v4832
          %v5858 = vadd.s32 %v5398, %v4833
          %v5859 = vadd.s32 %v5398, %v4834
          %v5860 = vadd.s32 %v5398, %v4835
          %v5861 = vadd.s32 %v5398, %v4836
          %v5862 = vadd.s32 %v5398, %v4837
          %v5863 = vadd.s32 %v5398, %v4838
          %v5864 = vadd.s32 %v5398, %v4839
          %v5865 = vadd.s32 %v5398, %v4840
          %v5866 = vadd.s32 %v5398, %v4841
          %v5867 = vadd.s32 %v5398, %v4842
          %v5868 = vadd.s32 %v5398, %v4843
          %v5869 = vadd.s32 %v5398, %v4844
          %v5870 = vadd.s32 %v5398, %v4845
          %v5871 = vadd.s32 %v5398, %v4846
          %v5872 = vadd.s32 %v5398, %v4847
          %v5873 = vadd.s32 %v5398, %v4848
          %v5874 = vadd.s32 %v5398, %v4849
          %v5875 = vadd.s32 %v5398, %v4850
          %v5876 = vadd.s32 %v5398, %v4851
          %v5877 = vadd.s32 %v5398, %v4852
          %v5878 = vadd.s32 %v5398, %v4853
          %v5879 = vadd.s32 %v5398, %v4854
          %v5880 = vadd.s32 %v5398, %v4855
          %v5881 = vadd.s32 %v5398, %v4856
          %v5882 = vadd.s32 %v5398, %v4857
          %v5883 = vadd.s32 %v5398, %v4858
          %v5884 = vadd.s32 %v5398, %v4859
          %v5885 = vadd.s32 %v5398, %v4860
          %v5886 = vadd.s32 %v5398, %v4861
          %v5887 = vadd.s32 %v5398, %v4862
          %v5888 = vadd.s32 %v5398, %v4863
          %v5889 = vadd.s32 %v5398, %v4864
          %v5890 = vadd.s32 %v5398, %v4865
          %v5891 = vadd.s32 %v5398, %v4866
          %v5892 = vadd.s32 %v5398, %v4867
          %v5893 = vadd.s32 %v5398, %v4868
          %v5894 = vadd.s32 %v5398, %v4869
          %v5895 = vadd.s32 %v5398, %v4870
          %v5896 = vadd.s32 %v5398, %v4871
          %v5897 = vadd.s32 %v5398, %v4872
          %v5898 = vadd.s32 %v5398, %v4873
          %v5899 = vadd.s32 %v5398, %v4874
          %v5900 = vadd.s32 %v5398, %v4875
          %v5901 = vadd.s32 %v5398, %v4876
          %v5902 = vadd.s32 %v5398, %v4877
          %v5903 = vadd.s32 %v5398, %v4878
          %v5904 = vadd.s32 %v5398, %v4879
          %v5905 = vadd.s32 %v5398, %v4880
          %v5906 = vadd.s32 %v5398, %v4881
          %v5907 = vadd.s32 %v5398, %v4882
          %v5908 = vadd.s32 %v5398, %v4883
          %v5909 = vadd.s32 %v5398, %v4884
          %v5910 = vadd.s32 %v5398, %v4885
          %vm5911 = vcmp.lt.s32.totalorder %v5399, 4101
          %vm5912 = vcmp.lt.s32.totalorder %v5400, 4101
          %vm5913 = vcmp.lt.s32.totalorder %v5401, 4101
          %vm5914 = vcmp.lt.s32.totalorder %v5402, 4101
          %vm5915 = vcmp.lt.s32.totalorder %v5403, 4101
          %vm5916 = vcmp.lt.s32.totalorder %v5404, 4101
          %vm5917 = vcmp.lt.s32.totalorder %v5405, 4101
          %vm5918 = vcmp.lt.s32.totalorder %v5406, 4101
          %vm5919 = vcmp.lt.s32.totalorder %v5407, 4101
          %vm5920 = vcmp.lt.s32.totalorder %v5408, 4101
          %vm5921 = vcmp.lt.s32.totalorder %v5409, 4101
          %vm5922 = vcmp.lt.s32.totalorder %v5410, 4101
          %vm5923 = vcmp.lt.s32.totalorder %v5411, 4101
          %vm5924 = vcmp.lt.s32.totalorder %v5412, 4101
          %vm5925 = vcmp.lt.s32.totalorder %v5413, 4101
          %vm5926 = vcmp.lt.s32.totalorder %v5414, 4101
          %vm5927 = vcmp.lt.s32.totalorder %v5415, 4101
          %vm5928 = vcmp.lt.s32.totalorder %v5416, 4101
          %vm5929 = vcmp.lt.s32.totalorder %v5417, 4101
          %vm5930 = vcmp.lt.s32.totalorder %v5418, 4101
          %vm5931 = vcmp.lt.s32.totalorder %v5419, 4101
          %vm5932 = vcmp.lt.s32.totalorder %v5420, 4101
          %vm5933 = vcmp.lt.s32.totalorder %v5421, 4101
          %vm5934 = vcmp.lt.s32.totalorder %v5422, 4101
          %vm5935 = vcmp.lt.s32.totalorder %v5423, 4101
          %vm5936 = vcmp.lt.s32.totalorder %v5424, 4101
          %vm5937 = vcmp.lt.s32.totalorder %v5425, 4101
          %vm5938 = vcmp.lt.s32.totalorder %v5426, 4101
          %vm5939 = vcmp.lt.s32.totalorder %v5427, 4101
          %vm5940 = vcmp.lt.s32.totalorder %v5428, 4101
          %vm5941 = vcmp.lt.s32.totalorder %v5429, 4101
          %vm5942 = vcmp.lt.s32.totalorder %v5430, 4101
          %vm5943 = vcmp.lt.s32.totalorder %v5431, 4101
          %vm5944 = vcmp.lt.s32.totalorder %v5432, 4101
          %vm5945 = vcmp.lt.s32.totalorder %v5433, 4101
          %vm5946 = vcmp.lt.s32.totalorder %v5434, 4101
          %vm5947 = vcmp.lt.s32.totalorder %v5435, 4101
          %vm5948 = vcmp.lt.s32.totalorder %v5436, 4101
          %vm5949 = vcmp.lt.s32.totalorder %v5437, 4101
          %vm5950 = vcmp.lt.s32.totalorder %v5438, 4101
          %vm5951 = vcmp.lt.s32.totalorder %v5439, 4101
          %vm5952 = vcmp.lt.s32.totalorder %v5440, 4101
          %vm5953 = vcmp.lt.s32.totalorder %v5441, 4101
          %vm5954 = vcmp.lt.s32.totalorder %v5442, 4101
          %vm5955 = vcmp.lt.s32.totalorder %v5443, 4101
          %vm5956 = vcmp.lt.s32.totalorder %v5444, 4101
          %vm5957 = vcmp.lt.s32.totalorder %v5445, 4101
          %vm5958 = vcmp.lt.s32.totalorder %v5446, 4101
          %vm5959 = vcmp.lt.s32.totalorder %v5447, 4101
          %vm5960 = vcmp.lt.s32.totalorder %v5448, 4101
          %vm5961 = vcmp.lt.s32.totalorder %v5449, 4101
          %vm5962 = vcmp.lt.s32.totalorder %v5450, 4101
          %vm5963 = vcmp.lt.s32.totalorder %v5451, 4101
          %vm5964 = vcmp.lt.s32.totalorder %v5452, 4101
          %vm5965 = vcmp.lt.s32.totalorder %v5453, 4101
          %vm5966 = vcmp.lt.s32.totalorder %v5454, 4101
          %vm5967 = vcmp.lt.s32.totalorder %v5455, 4101
          %vm5968 = vcmp.lt.s32.totalorder %v5456, 4101
          %vm5969 = vcmp.lt.s32.totalorder %v5457, 4101
          %vm5970 = vcmp.lt.s32.totalorder %v5458, 4101
          %vm5971 = vcmp.lt.s32.totalorder %v5459, 4101
          %vm5972 = vcmp.lt.s32.totalorder %v5460, 4101
          %vm5973 = vcmp.lt.s32.totalorder %v5461, 4101
          %vm5974 = vcmp.lt.s32.totalorder %v5462, 4101
          %vm5975 = vcmp.lt.s32.totalorder %v5463, 4101
          %vm5976 = vcmp.lt.s32.totalorder %v5464, 4101
          %vm5977 = vcmp.lt.s32.totalorder %v5465, 4101
          %vm5978 = vcmp.lt.s32.totalorder %v5466, 4101
          %vm5979 = vcmp.lt.s32.totalorder %v5467, 4101
          %vm5980 = vcmp.lt.s32.totalorder %v5468, 4101
          %vm5981 = vcmp.lt.s32.totalorder %v5469, 4101
          %vm5982 = vcmp.lt.s32.totalorder %v5470, 4101
          %vm5983 = vcmp.lt.s32.totalorder %v5471, 4101
          %vm5984 = vcmp.lt.s32.totalorder %v5472, 4101
          %vm5985 = vcmp.lt.s32.totalorder %v5473, 4101
          %vm5986 = vcmp.lt.s32.totalorder %v5474, 4101
          %vm5987 = vcmp.lt.s32.totalorder %v5475, 4101
          %vm5988 = vcmp.lt.s32.totalorder %v5476, 4101
          %vm5989 = vcmp.lt.s32.totalorder %v5477, 4101
          %vm5990 = vcmp.lt.s32.totalorder %v5478, 4101
          %vm5991 = vcmp.lt.s32.totalorder %v5479, 4101
          %vm5992 = vcmp.lt.s32.totalorder %v5480, 4101
          %vm5993 = vcmp.lt.s32.totalorder %v5481, 4101
          %vm5994 = vcmp.lt.s32.totalorder %v5482, 4101
          %vm5995 = vcmp.lt.s32.totalorder %v5483, 4101
          %vm5996 = vcmp.lt.s32.totalorder %v5484, 4101
          %vm5997 = vcmp.lt.s32.totalorder %v5485, 4101
          %vm5998 = vcmp.lt.s32.totalorder %v5486, 4101
          %vm5999 = vcmp.lt.s32.totalorder %v5487, 4101
          %vm6000 = vcmp.lt.s32.totalorder %v5488, 4101
          %vm6001 = vcmp.lt.s32.totalorder %v5489, 4101
          %vm6002 = vcmp.lt.s32.totalorder %v5490, 4101
          %vm6003 = vcmp.lt.s32.totalorder %v5491, 4101
          %vm6004 = vcmp.lt.s32.totalorder %v5492, 4101
          %vm6005 = vcmp.lt.s32.totalorder %v5493, 4101
          %vm6006 = vcmp.lt.s32.totalorder %v5494, 4101
          %vm6007 = vcmp.lt.s32.totalorder %v5495, 4101
          %vm6008 = vcmp.lt.s32.totalorder %v5496, 4101
          %vm6009 = vcmp.lt.s32.totalorder %v5497, 4101
          %vm6010 = vcmp.lt.s32.totalorder %v5498, 4101
          %vm6011 = vcmp.lt.s32.totalorder %v5499, 4101
          %vm6012 = vcmp.lt.s32.totalorder %v5500, 4101
          %vm6013 = vcmp.lt.s32.totalorder %v5501, 4101
          %vm6014 = vcmp.lt.s32.totalorder %v5502, 4101
          %vm6015 = vcmp.lt.s32.totalorder %v5503, 4101
          %vm6016 = vcmp.lt.s32.totalorder %v5504, 4101
          %vm6017 = vcmp.lt.s32.totalorder %v5505, 4101
          %vm6018 = vcmp.lt.s32.totalorder %v5506, 4101
          %vm6019 = vcmp.lt.s32.totalorder %v5507, 4101
          %vm6020 = vcmp.lt.s32.totalorder %v5508, 4101
          %vm6021 = vcmp.lt.s32.totalorder %v5509, 4101
          %vm6022 = vcmp.lt.s32.totalorder %v5510, 4101
          %vm6023 = vcmp.lt.s32.totalorder %v5511, 4101
          %vm6024 = vcmp.lt.s32.totalorder %v5512, 4101
          %vm6025 = vcmp.lt.s32.totalorder %v5513, 4101
          %vm6026 = vcmp.lt.s32.totalorder %v5514, 4101
          %vm6027 = vcmp.lt.s32.totalorder %v5515, 4101
          %vm6028 = vcmp.lt.s32.totalorder %v5516, 4101
          %vm6029 = vcmp.lt.s32.totalorder %v5517, 4101
          %vm6030 = vcmp.lt.s32.totalorder %v5518, 4101
          %vm6031 = vcmp.lt.s32.totalorder %v5519, 4101
          %vm6032 = vcmp.lt.s32.totalorder %v5520, 4101
          %vm6033 = vcmp.lt.s32.totalorder %v5521, 4101
          %vm6034 = vcmp.lt.s32.totalorder %v5522, 4101
          %vm6035 = vcmp.lt.s32.totalorder %v5523, 4101
          %vm6036 = vcmp.lt.s32.totalorder %v5524, 4101
          %vm6037 = vcmp.lt.s32.totalorder %v5525, 4101
          %vm6038 = vcmp.lt.s32.totalorder %v5526, 4101
          %vm6039 = vcmp.lt.s32.totalorder %v5527, 4101
          %vm6040 = vcmp.lt.s32.totalorder %v5528, 4101
          %vm6041 = vcmp.lt.s32.totalorder %v5529, 4101
          %vm6042 = vcmp.lt.s32.totalorder %v5530, 4101
          %vm6043 = vcmp.lt.s32.totalorder %v5531, 4101
          %vm6044 = vcmp.lt.s32.totalorder %v5532, 4101
          %vm6045 = vcmp.lt.s32.totalorder %v5533, 4101
          %vm6046 = vcmp.lt.s32.totalorder %v5534, 4101
          %vm6047 = vcmp.lt.s32.totalorder %v5535, 4101
          %vm6048 = vcmp.lt.s32.totalorder %v5536, 4101
          %vm6049 = vcmp.lt.s32.totalorder %v5537, 4101
          %vm6050 = vcmp.lt.s32.totalorder %v5538, 4101
          %vm6051 = vcmp.lt.s32.totalorder %v5539, 4101
          %vm6052 = vcmp.lt.s32.totalorder %v5540, 4101
          %vm6053 = vcmp.lt.s32.totalorder %v5541, 4101
          %vm6054 = vcmp.lt.s32.totalorder %v5542, 4101
          %vm6055 = vcmp.lt.s32.totalorder %v5543, 4101
          %vm6056 = vcmp.lt.s32.totalorder %v5544, 4101
          %vm6057 = vcmp.lt.s32.totalorder %v5545, 4101
          %vm6058 = vcmp.lt.s32.totalorder %v5546, 4101
          %vm6059 = vcmp.lt.s32.totalorder %v5547, 4101
          %vm6060 = vcmp.lt.s32.totalorder %v5548, 4101
          %vm6061 = vcmp.lt.s32.totalorder %v5549, 4101
          %vm6062 = vcmp.lt.s32.totalorder %v5550, 4101
          %vm6063 = vcmp.lt.s32.totalorder %v5551, 4101
          %vm6064 = vcmp.lt.s32.totalorder %v5552, 4101
          %vm6065 = vcmp.lt.s32.totalorder %v5553, 4101
          %vm6066 = vcmp.lt.s32.totalorder %v5554, 4101
          %vm6067 = vcmp.lt.s32.totalorder %v5555, 4101
          %vm6068 = vcmp.lt.s32.totalorder %v5556, 4101
          %vm6069 = vcmp.lt.s32.totalorder %v5557, 4101
          %vm6070 = vcmp.lt.s32.totalorder %v5558, 4101
          %vm6071 = vcmp.lt.s32.totalorder %v5559, 4101
          %vm6072 = vcmp.lt.s32.totalorder %v5560, 4101
          %vm6073 = vcmp.lt.s32.totalorder %v5561, 4101
          %vm6074 = vcmp.lt.s32.totalorder %v5562, 4101
          %vm6075 = vcmp.lt.s32.totalorder %v5563, 4101
          %vm6076 = vcmp.lt.s32.totalorder %v5564, 4101
          %vm6077 = vcmp.lt.s32.totalorder %v5565, 4101
          %vm6078 = vcmp.lt.s32.totalorder %v5566, 4101
          %vm6079 = vcmp.lt.s32.totalorder %v5567, 4101
          %vm6080 = vcmp.lt.s32.totalorder %v5568, 4101
          %vm6081 = vcmp.lt.s32.totalorder %v5569, 4101
          %vm6082 = vcmp.lt.s32.totalorder %v5570, 4101
          %vm6083 = vcmp.lt.s32.totalorder %v5571, 4101
          %vm6084 = vcmp.lt.s32.totalorder %v5572, 4101
          %vm6085 = vcmp.lt.s32.totalorder %v5573, 4101
          %vm6086 = vcmp.lt.s32.totalorder %v5574, 4101
          %vm6087 = vcmp.lt.s32.totalorder %v5575, 4101
          %vm6088 = vcmp.lt.s32.totalorder %v5576, 4101
          %vm6089 = vcmp.lt.s32.totalorder %v5577, 4101
          %vm6090 = vcmp.lt.s32.totalorder %v5578, 4101
          %vm6091 = vcmp.lt.s32.totalorder %v5579, 4101
          %vm6092 = vcmp.lt.s32.totalorder %v5580, 4101
          %vm6093 = vcmp.lt.s32.totalorder %v5581, 4101
          %vm6094 = vcmp.lt.s32.totalorder %v5582, 4101
          %vm6095 = vcmp.lt.s32.totalorder %v5583, 4101
          %vm6096 = vcmp.lt.s32.totalorder %v5584, 4101
          %vm6097 = vcmp.lt.s32.totalorder %v5585, 4101
          %vm6098 = vcmp.lt.s32.totalorder %v5586, 4101
          %vm6099 = vcmp.lt.s32.totalorder %v5587, 4101
          %vm6100 = vcmp.lt.s32.totalorder %v5588, 4101
          %vm6101 = vcmp.lt.s32.totalorder %v5589, 4101
          %vm6102 = vcmp.lt.s32.totalorder %v5590, 4101
          %vm6103 = vcmp.lt.s32.totalorder %v5591, 4101
          %vm6104 = vcmp.lt.s32.totalorder %v5592, 4101
          %vm6105 = vcmp.lt.s32.totalorder %v5593, 4101
          %vm6106 = vcmp.lt.s32.totalorder %v5594, 4101
          %vm6107 = vcmp.lt.s32.totalorder %v5595, 4101
          %vm6108 = vcmp.lt.s32.totalorder %v5596, 4101
          %vm6109 = vcmp.lt.s32.totalorder %v5597, 4101
          %vm6110 = vcmp.lt.s32.totalorder %v5598, 4101
          %vm6111 = vcmp.lt.s32.totalorder %v5599, 4101
          %vm6112 = vcmp.lt.s32.totalorder %v5600, 4101
          %vm6113 = vcmp.lt.s32.totalorder %v5601, 4101
          %vm6114 = vcmp.lt.s32.totalorder %v5602, 4101
          %vm6115 = vcmp.lt.s32.totalorder %v5603, 4101
          %vm6116 = vcmp.lt.s32.totalorder %v5604, 4101
          %vm6117 = vcmp.lt.s32.totalorder %v5605, 4101
          %vm6118 = vcmp.lt.s32.totalorder %v5606, 4101
          %vm6119 = vcmp.lt.s32.totalorder %v5607, 4101
          %vm6120 = vcmp.lt.s32.totalorder %v5608, 4101
          %vm6121 = vcmp.lt.s32.totalorder %v5609, 4101
          %vm6122 = vcmp.lt.s32.totalorder %v5610, 4101
          %vm6123 = vcmp.lt.s32.totalorder %v5611, 4101
          %vm6124 = vcmp.lt.s32.totalorder %v5612, 4101
          %vm6125 = vcmp.lt.s32.totalorder %v5613, 4101
          %vm6126 = vcmp.lt.s32.totalorder %v5614, 4101
          %vm6127 = vcmp.lt.s32.totalorder %v5615, 4101
          %vm6128 = vcmp.lt.s32.totalorder %v5616, 4101
          %vm6129 = vcmp.lt.s32.totalorder %v5617, 4101
          %vm6130 = vcmp.lt.s32.totalorder %v5618, 4101
          %vm6131 = vcmp.lt.s32.totalorder %v5619, 4101
          %vm6132 = vcmp.lt.s32.totalorder %v5620, 4101
          %vm6133 = vcmp.lt.s32.totalorder %v5621, 4101
          %vm6134 = vcmp.lt.s32.totalorder %v5622, 4101
          %vm6135 = vcmp.lt.s32.totalorder %v5623, 4101
          %vm6136 = vcmp.lt.s32.totalorder %v5624, 4101
          %vm6137 = vcmp.lt.s32.totalorder %v5625, 4101
          %vm6138 = vcmp.lt.s32.totalorder %v5626, 4101
          %vm6139 = vcmp.lt.s32.totalorder %v5627, 4101
          %vm6140 = vcmp.lt.s32.totalorder %v5628, 4101
          %vm6141 = vcmp.lt.s32.totalorder %v5629, 4101
          %vm6142 = vcmp.lt.s32.totalorder %v5630, 4101
          %vm6143 = vcmp.lt.s32.totalorder %v5631, 4101
          %vm6144 = vcmp.lt.s32.totalorder %v5632, 4101
          %vm6145 = vcmp.lt.s32.totalorder %v5633, 4101
          %vm6146 = vcmp.lt.s32.totalorder %v5634, 4101
          %vm6147 = vcmp.lt.s32.totalorder %v5635, 4101
          %vm6148 = vcmp.lt.s32.totalorder %v5636, 4101
          %vm6149 = vcmp.lt.s32.totalorder %v5637, 4101
          %vm6150 = vcmp.lt.s32.totalorder %v5638, 4101
          %vm6151 = vcmp.lt.s32.totalorder %v5639, 4101
          %vm6152 = vcmp.lt.s32.totalorder %v5640, 4101
          %vm6153 = vcmp.lt.s32.totalorder %v5641, 4101
          %vm6154 = vcmp.lt.s32.totalorder %v5642, 4101
          %vm6155 = vcmp.lt.s32.totalorder %v5643, 4101
          %vm6156 = vcmp.lt.s32.totalorder %v5644, 4101
          %vm6157 = vcmp.lt.s32.totalorder %v5645, 4101
          %vm6158 = vcmp.lt.s32.totalorder %v5646, 4101
          %vm6159 = vcmp.lt.s32.totalorder %v5647, 4101
          %vm6160 = vcmp.lt.s32.totalorder %v5648, 4101
          %vm6161 = vcmp.lt.s32.totalorder %v5649, 4101
          %vm6162 = vcmp.lt.s32.totalorder %v5650, 4101
          %vm6163 = vcmp.lt.s32.totalorder %v5651, 4101
          %vm6164 = vcmp.lt.s32.totalorder %v5652, 4101
          %vm6165 = vcmp.lt.s32.totalorder %v5653, 4101
          %vm6166 = vcmp.lt.s32.totalorder %v5654, 4101
          %vm6167 = vcmp.lt.s32.totalorder %v5655, 4101
          %vm6168 = vcmp.lt.s32.totalorder %v5656, 4101
          %vm6169 = vcmp.lt.s32.totalorder %v5657, 4101
          %vm6170 = vcmp.lt.s32.totalorder %v5658, 4101
          %vm6171 = vcmp.lt.s32.totalorder %v5659, 4101
          %vm6172 = vcmp.lt.s32.totalorder %v5660, 4101
          %vm6173 = vcmp.lt.s32.totalorder %v5661, 4101
          %vm6174 = vcmp.lt.s32.totalorder %v5662, 4101
          %vm6175 = vcmp.lt.s32.totalorder %v5663, 4101
          %vm6176 = vcmp.lt.s32.totalorder %v5664, 4101
          %vm6177 = vcmp.lt.s32.totalorder %v5665, 4101
          %vm6178 = vcmp.lt.s32.totalorder %v5666, 4101
          %vm6179 = vcmp.lt.s32.totalorder %v5667, 4101
          %vm6180 = vcmp.lt.s32.totalorder %v5668, 4101
          %vm6181 = vcmp.lt.s32.totalorder %v5669, 4101
          %vm6182 = vcmp.lt.s32.totalorder %v5670, 4101
          %vm6183 = vcmp.lt.s32.totalorder %v5671, 4101
          %vm6184 = vcmp.lt.s32.totalorder %v5672, 4101
          %vm6185 = vcmp.lt.s32.totalorder %v5673, 4101
          %vm6186 = vcmp.lt.s32.totalorder %v5674, 4101
          %vm6187 = vcmp.lt.s32.totalorder %v5675, 4101
          %vm6188 = vcmp.lt.s32.totalorder %v5676, 4101
          %vm6189 = vcmp.lt.s32.totalorder %v5677, 4101
          %vm6190 = vcmp.lt.s32.totalorder %v5678, 4101
          %vm6191 = vcmp.lt.s32.totalorder %v5679, 4101
          %vm6192 = vcmp.lt.s32.totalorder %v5680, 4101
          %vm6193 = vcmp.lt.s32.totalorder %v5681, 4101
          %vm6194 = vcmp.lt.s32.totalorder %v5682, 4101
          %vm6195 = vcmp.lt.s32.totalorder %v5683, 4101
          %vm6196 = vcmp.lt.s32.totalorder %v5684, 4101
          %vm6197 = vcmp.lt.s32.totalorder %v5685, 4101
          %vm6198 = vcmp.lt.s32.totalorder %v5686, 4101
          %vm6199 = vcmp.lt.s32.totalorder %v5687, 4101
          %vm6200 = vcmp.lt.s32.totalorder %v5688, 4101
          %vm6201 = vcmp.lt.s32.totalorder %v5689, 4101
          %vm6202 = vcmp.lt.s32.totalorder %v5690, 4101
          %vm6203 = vcmp.lt.s32.totalorder %v5691, 4101
          %vm6204 = vcmp.lt.s32.totalorder %v5692, 4101
          %vm6205 = vcmp.lt.s32.totalorder %v5693, 4101
          %vm6206 = vcmp.lt.s32.totalorder %v5694, 4101
          %vm6207 = vcmp.lt.s32.totalorder %v5695, 4101
          %vm6208 = vcmp.lt.s32.totalorder %v5696, 4101
          %vm6209 = vcmp.lt.s32.totalorder %v5697, 4101
          %vm6210 = vcmp.lt.s32.totalorder %v5698, 4101
          %vm6211 = vcmp.lt.s32.totalorder %v5699, 4101
          %vm6212 = vcmp.lt.s32.totalorder %v5700, 4101
          %vm6213 = vcmp.lt.s32.totalorder %v5701, 4101
          %vm6214 = vcmp.lt.s32.totalorder %v5702, 4101
          %vm6215 = vcmp.lt.s32.totalorder %v5703, 4101
          %vm6216 = vcmp.lt.s32.totalorder %v5704, 4101
          %vm6217 = vcmp.lt.s32.totalorder %v5705, 4101
          %vm6218 = vcmp.lt.s32.totalorder %v5706, 4101
          %vm6219 = vcmp.lt.s32.totalorder %v5707, 4101
          %vm6220 = vcmp.lt.s32.totalorder %v5708, 4101
          %vm6221 = vcmp.lt.s32.totalorder %v5709, 4101
          %vm6222 = vcmp.lt.s32.totalorder %v5710, 4101
          %vm6223 = vcmp.lt.s32.totalorder %v5711, 4101
          %vm6224 = vcmp.lt.s32.totalorder %v5712, 4101
          %vm6225 = vcmp.lt.s32.totalorder %v5713, 4101
          %vm6226 = vcmp.lt.s32.totalorder %v5714, 4101
          %vm6227 = vcmp.lt.s32.totalorder %v5715, 4101
          %vm6228 = vcmp.lt.s32.totalorder %v5716, 4101
          %vm6229 = vcmp.lt.s32.totalorder %v5717, 4101
          %vm6230 = vcmp.lt.s32.totalorder %v5718, 4101
          %vm6231 = vcmp.lt.s32.totalorder %v5719, 4101
          %vm6232 = vcmp.lt.s32.totalorder %v5720, 4101
          %vm6233 = vcmp.lt.s32.totalorder %v5721, 4101
          %vm6234 = vcmp.lt.s32.totalorder %v5722, 4101
          %vm6235 = vcmp.lt.s32.totalorder %v5723, 4101
          %vm6236 = vcmp.lt.s32.totalorder %v5724, 4101
          %vm6237 = vcmp.lt.s32.totalorder %v5725, 4101
          %vm6238 = vcmp.lt.s32.totalorder %v5726, 4101
          %vm6239 = vcmp.lt.s32.totalorder %v5727, 4101
          %vm6240 = vcmp.lt.s32.totalorder %v5728, 4101
          %vm6241 = vcmp.lt.s32.totalorder %v5729, 4101
          %vm6242 = vcmp.lt.s32.totalorder %v5730, 4101
          %vm6243 = vcmp.lt.s32.totalorder %v5731, 4101
          %vm6244 = vcmp.lt.s32.totalorder %v5732, 4101
          %vm6245 = vcmp.lt.s32.totalorder %v5733, 4101
          %vm6246 = vcmp.lt.s32.totalorder %v5734, 4101
          %vm6247 = vcmp.lt.s32.totalorder %v5735, 4101
          %vm6248 = vcmp.lt.s32.totalorder %v5736, 4101
          %vm6249 = vcmp.lt.s32.totalorder %v5737, 4101
          %vm6250 = vcmp.lt.s32.totalorder %v5738, 4101
          %vm6251 = vcmp.lt.s32.totalorder %v5739, 4101
          %vm6252 = vcmp.lt.s32.totalorder %v5740, 4101
          %vm6253 = vcmp.lt.s32.totalorder %v5741, 4101
          %vm6254 = vcmp.lt.s32.totalorder %v5742, 4101
          %vm6255 = vcmp.lt.s32.totalorder %v5743, 4101
          %vm6256 = vcmp.lt.s32.totalorder %v5744, 4101
          %vm6257 = vcmp.lt.s32.totalorder %v5745, 4101
          %vm6258 = vcmp.lt.s32.totalorder %v5746, 4101
          %vm6259 = vcmp.lt.s32.totalorder %v5747, 4101
          %vm6260 = vcmp.lt.s32.totalorder %v5748, 4101
          %vm6261 = vcmp.lt.s32.totalorder %v5749, 4101
          %vm6262 = vcmp.lt.s32.totalorder %v5750, 4101
          %vm6263 = vcmp.lt.s32.totalorder %v5751, 4101
          %vm6264 = vcmp.lt.s32.totalorder %v5752, 4101
          %vm6265 = vcmp.lt.s32.totalorder %v5753, 4101
          %vm6266 = vcmp.lt.s32.totalorder %v5754, 4101
          %vm6267 = vcmp.lt.s32.totalorder %v5755, 4101
          %vm6268 = vcmp.lt.s32.totalorder %v5756, 4101
          %vm6269 = vcmp.lt.s32.totalorder %v5757, 4101
          %vm6270 = vcmp.lt.s32.totalorder %v5758, 4101
          %vm6271 = vcmp.lt.s32.totalorder %v5759, 4101
          %vm6272 = vcmp.lt.s32.totalorder %v5760, 4101
          %vm6273 = vcmp.lt.s32.totalorder %v5761, 4101
          %vm6274 = vcmp.lt.s32.totalorder %v5762, 4101
          %vm6275 = vcmp.lt.s32.totalorder %v5763, 4101
          %vm6276 = vcmp.lt.s32.totalorder %v5764, 4101
          %vm6277 = vcmp.lt.s32.totalorder %v5765, 4101
          %vm6278 = vcmp.lt.s32.totalorder %v5766, 4101
          %vm6279 = vcmp.lt.s32.totalorder %v5767, 4101
          %vm6280 = vcmp.lt.s32.totalorder %v5768, 4101
          %vm6281 = vcmp.lt.s32.totalorder %v5769, 4101
          %vm6282 = vcmp.lt.s32.totalorder %v5770, 4101
          %vm6283 = vcmp.lt.s32.totalorder %v5771, 4101
          %vm6284 = vcmp.lt.s32.totalorder %v5772, 4101
          %vm6285 = vcmp.lt.s32.totalorder %v5773, 4101
          %vm6286 = vcmp.lt.s32.totalorder %v5774, 4101
          %vm6287 = vcmp.lt.s32.totalorder %v5775, 4101
          %vm6288 = vcmp.lt.s32.totalorder %v5776, 4101
          %vm6289 = vcmp.lt.s32.totalorder %v5777, 4101
          %vm6290 = vcmp.lt.s32.totalorder %v5778, 4101
          %vm6291 = vcmp.lt.s32.totalorder %v5779, 4101
          %vm6292 = vcmp.lt.s32.totalorder %v5780, 4101
          %vm6293 = vcmp.lt.s32.totalorder %v5781, 4101
          %vm6294 = vcmp.lt.s32.totalorder %v5782, 4101
          %vm6295 = vcmp.lt.s32.totalorder %v5783, 4101
          %vm6296 = vcmp.lt.s32.totalorder %v5784, 4101
          %vm6297 = vcmp.lt.s32.totalorder %v5785, 4101
          %vm6298 = vcmp.lt.s32.totalorder %v5786, 4101
          %vm6299 = vcmp.lt.s32.totalorder %v5787, 4101
          %vm6300 = vcmp.lt.s32.totalorder %v5788, 4101
          %vm6301 = vcmp.lt.s32.totalorder %v5789, 4101
          %vm6302 = vcmp.lt.s32.totalorder %v5790, 4101
          %vm6303 = vcmp.lt.s32.totalorder %v5791, 4101
          %vm6304 = vcmp.lt.s32.totalorder %v5792, 4101
          %vm6305 = vcmp.lt.s32.totalorder %v5793, 4101
          %vm6306 = vcmp.lt.s32.totalorder %v5794, 4101
          %vm6307 = vcmp.lt.s32.totalorder %v5795, 4101
          %vm6308 = vcmp.lt.s32.totalorder %v5796, 4101
          %vm6309 = vcmp.lt.s32.totalorder %v5797, 4101
          %vm6310 = vcmp.lt.s32.totalorder %v5798, 4101
          %vm6311 = vcmp.lt.s32.totalorder %v5799, 4101
          %vm6312 = vcmp.lt.s32.totalorder %v5800, 4101
          %vm6313 = vcmp.lt.s32.totalorder %v5801, 4101
          %vm6314 = vcmp.lt.s32.totalorder %v5802, 4101
          %vm6315 = vcmp.lt.s32.totalorder %v5803, 4101
          %vm6316 = vcmp.lt.s32.totalorder %v5804, 4101
          %vm6317 = vcmp.lt.s32.totalorder %v5805, 4101
          %vm6318 = vcmp.lt.s32.totalorder %v5806, 4101
          %vm6319 = vcmp.lt.s32.totalorder %v5807, 4101
          %vm6320 = vcmp.lt.s32.totalorder %v5808, 4101
          %vm6321 = vcmp.lt.s32.totalorder %v5809, 4101
          %vm6322 = vcmp.lt.s32.totalorder %v5810, 4101
          %vm6323 = vcmp.lt.s32.totalorder %v5811, 4101
          %vm6324 = vcmp.lt.s32.totalorder %v5812, 4101
          %vm6325 = vcmp.lt.s32.totalorder %v5813, 4101
          %vm6326 = vcmp.lt.s32.totalorder %v5814, 4101
          %vm6327 = vcmp.lt.s32.totalorder %v5815, 4101
          %vm6328 = vcmp.lt.s32.totalorder %v5816, 4101
          %vm6329 = vcmp.lt.s32.totalorder %v5817, 4101
          %vm6330 = vcmp.lt.s32.totalorder %v5818, 4101
          %vm6331 = vcmp.lt.s32.totalorder %v5819, 4101
          %vm6332 = vcmp.lt.s32.totalorder %v5820, 4101
          %vm6333 = vcmp.lt.s32.totalorder %v5821, 4101
          %vm6334 = vcmp.lt.s32.totalorder %v5822, 4101
          %vm6335 = vcmp.lt.s32.totalorder %v5823, 4101
          %vm6336 = vcmp.lt.s32.totalorder %v5824, 4101
          %vm6337 = vcmp.lt.s32.totalorder %v5825, 4101
          %vm6338 = vcmp.lt.s32.totalorder %v5826, 4101
          %vm6339 = vcmp.lt.s32.totalorder %v5827, 4101
          %vm6340 = vcmp.lt.s32.totalorder %v5828, 4101
          %vm6341 = vcmp.lt.s32.totalorder %v5829, 4101
          %vm6342 = vcmp.lt.s32.totalorder %v5830, 4101
          %vm6343 = vcmp.lt.s32.totalorder %v5831, 4101
          %vm6344 = vcmp.lt.s32.totalorder %v5832, 4101
          %vm6345 = vcmp.lt.s32.totalorder %v5833, 4101
          %vm6346 = vcmp.lt.s32.totalorder %v5834, 4101
          %vm6347 = vcmp.lt.s32.totalorder %v5835, 4101
          %vm6348 = vcmp.lt.s32.totalorder %v5836, 4101
          %vm6349 = vcmp.lt.s32.totalorder %v5837, 4101
          %vm6350 = vcmp.lt.s32.totalorder %v5838, 4101
          %vm6351 = vcmp.lt.s32.totalorder %v5839, 4101
          %vm6352 = vcmp.lt.s32.totalorder %v5840, 4101
          %vm6353 = vcmp.lt.s32.totalorder %v5841, 4101
          %vm6354 = vcmp.lt.s32.totalorder %v5842, 4101
          %vm6355 = vcmp.lt.s32.totalorder %v5843, 4101
          %vm6356 = vcmp.lt.s32.totalorder %v5844, 4101
          %vm6357 = vcmp.lt.s32.totalorder %v5845, 4101
          %vm6358 = vcmp.lt.s32.totalorder %v5846, 4101
          %vm6359 = vcmp.lt.s32.totalorder %v5847, 4101
          %vm6360 = vcmp.lt.s32.totalorder %v5848, 4101
          %vm6361 = vcmp.lt.s32.totalorder %v5849, 4101
          %vm6362 = vcmp.lt.s32.totalorder %v5850, 4101
          %vm6363 = vcmp.lt.s32.totalorder %v5851, 4101
          %vm6364 = vcmp.lt.s32.totalorder %v5852, 4101
          %vm6365 = vcmp.lt.s32.totalorder %v5853, 4101
          %vm6366 = vcmp.lt.s32.totalorder %v5854, 4101
          %vm6367 = vcmp.lt.s32.totalorder %v5855, 4101
          %vm6368 = vcmp.lt.s32.totalorder %v5856, 4101
          %vm6369 = vcmp.lt.s32.totalorder %v5857, 4101
          %vm6370 = vcmp.lt.s32.totalorder %v5858, 4101
          %vm6371 = vcmp.lt.s32.totalorder %v5859, 4101
          %vm6372 = vcmp.lt.s32.totalorder %v5860, 4101
          %vm6373 = vcmp.lt.s32.totalorder %v5861, 4101
          %vm6374 = vcmp.lt.s32.totalorder %v5862, 4101
          %vm6375 = vcmp.lt.s32.totalorder %v5863, 4101
          %vm6376 = vcmp.lt.s32.totalorder %v5864, 4101
          %vm6377 = vcmp.lt.s32.totalorder %v5865, 4101
          %vm6378 = vcmp.lt.s32.totalorder %v5866, 4101
          %vm6379 = vcmp.lt.s32.totalorder %v5867, 4101
          %vm6380 = vcmp.lt.s32.totalorder %v5868, 4101
          %vm6381 = vcmp.lt.s32.totalorder %v5869, 4101
          %vm6382 = vcmp.lt.s32.totalorder %v5870, 4101
          %vm6383 = vcmp.lt.s32.totalorder %v5871, 4101
          %vm6384 = vcmp.lt.s32.totalorder %v5872, 4101
          %vm6385 = vcmp.lt.s32.totalorder %v5873, 4101
          %vm6386 = vcmp.lt.s32.totalorder %v5874, 4101
          %vm6387 = vcmp.lt.s32.totalorder %v5875, 4101
          %vm6388 = vcmp.lt.s32.totalorder %v5876, 4101
          %vm6389 = vcmp.lt.s32.totalorder %v5877, 4101
          %vm6390 = vcmp.lt.s32.totalorder %v5878, 4101
          %vm6391 = vcmp.lt.s32.totalorder %v5879, 4101
          %vm6392 = vcmp.lt.s32.totalorder %v5880, 4101
          %vm6393 = vcmp.lt.s32.totalorder %v5881, 4101
          %vm6394 = vcmp.lt.s32.totalorder %v5882, 4101
          %vm6395 = vcmp.lt.s32.totalorder %v5883, 4101
          %vm6396 = vcmp.lt.s32.totalorder %v5884, 4101
          %vm6397 = vcmp.lt.s32.totalorder %v5885, 4101
          %vm6398 = vcmp.lt.s32.totalorder %v5886, 4101
          %vm6399 = vcmp.lt.s32.totalorder %v5887, 4101
          %vm6400 = vcmp.lt.s32.totalorder %v5888, 4101
          %vm6401 = vcmp.lt.s32.totalorder %v5889, 4101
          %vm6402 = vcmp.lt.s32.totalorder %v5890, 4101
          %vm6403 = vcmp.lt.s32.totalorder %v5891, 4101
          %vm6404 = vcmp.lt.s32.totalorder %v5892, 4101
          %vm6405 = vcmp.lt.s32.totalorder %v5893, 4101
          %vm6406 = vcmp.lt.s32.totalorder %v5894, 4101
          %vm6407 = vcmp.lt.s32.totalorder %v5895, 4101
          %vm6408 = vcmp.lt.s32.totalorder %v5896, 4101
          %vm6409 = vcmp.lt.s32.totalorder %v5897, 4101
          %vm6410 = vcmp.lt.s32.totalorder %v5898, 4101
          %vm6411 = vcmp.lt.s32.totalorder %v5899, 4101
          %vm6412 = vcmp.lt.s32.totalorder %v5900, 4101
          %vm6413 = vcmp.lt.s32.totalorder %v5901, 4101
          %vm6414 = vcmp.lt.s32.totalorder %v5902, 4101
          %vm6415 = vcmp.lt.s32.totalorder %v5903, 4101
          %vm6416 = vcmp.lt.s32.totalorder %v5904, 4101
          %vm6417 = vcmp.lt.s32.totalorder %v5905, 4101
          %vm6418 = vcmp.lt.s32.totalorder %v5906, 4101
          %vm6419 = vcmp.lt.s32.totalorder %v5907, 4101
          %vm6420 = vcmp.lt.s32.totalorder %v5908, 4101
          %vm6421 = vcmp.lt.s32.totalorder %v5909, 4101
          %vm6422 = vcmp.lt.s32.totalorder %v5910, 4101
          %v6423 = vsel %vm5911, %v2313, 0.0
          %v6424 = vsel %vm5912, %v2314, 0.0
          %v6425 = vsel %vm5913, %v2315, 0.0
          %v6426 = vsel %vm5914, %v2316, 0.0
          %v6427 = vsel %vm5915, %v2317, 0.0
          %v6428 = vsel %vm5916, %v2318, 0.0
          %v6429 = vsel %vm5917, %v2319, 0.0
          %v6430 = vsel %vm5918, %v2320, 0.0
          %v6431 = vsel %vm5919, %v2321, 0.0
          %v6432 = vsel %vm5920, %v2322, 0.0
          %v6433 = vsel %vm5921, %v2323, 0.0
          %v6434 = vsel %vm5922, %v2324, 0.0
          %v6435 = vsel %vm5923, %v2325, 0.0
          %v6436 = vsel %vm5924, %v2326, 0.0
          %v6437 = vsel %vm5925, %v2327, 0.0
          %v6438 = vsel %vm5926, %v2328, 0.0
          %v6439 = vsel %vm5927, %v2329, 0.0
          %v6440 = vsel %vm5928, %v2330, 0.0
          %v6441 = vsel %vm5929, %v2331, 0.0
          %v6442 = vsel %vm5930, %v2332, 0.0
          %v6443 = vsel %vm5931, %v2333, 0.0
          %v6444 = vsel %vm5932, %v2334, 0.0
          %v6445 = vsel %vm5933, %v2335, 0.0
          %v6446 = vsel %vm5934, %v2336, 0.0
          %v6447 = vsel %vm5935, %v2337, 0.0
          %v6448 = vsel %vm5936, %v2338, 0.0
          %v6449 = vsel %vm5937, %v2339, 0.0
          %v6450 = vsel %vm5938, %v2340, 0.0
          %v6451 = vsel %vm5939, %v2341, 0.0
          %v6452 = vsel %vm5940, %v2342, 0.0
          %v6453 = vsel %vm5941, %v2343, 0.0
          %v6454 = vsel %vm5942, %v2344, 0.0
          %v6455 = vsel %vm5943, %v2345, 0.0
          %v6456 = vsel %vm5944, %v2346, 0.0
          %v6457 = vsel %vm5945, %v2347, 0.0
          %v6458 = vsel %vm5946, %v2348, 0.0
          %v6459 = vsel %vm5947, %v2349, 0.0
          %v6460 = vsel %vm5948, %v2350, 0.0
          %v6461 = vsel %vm5949, %v2351, 0.0
          %v6462 = vsel %vm5950, %v2352, 0.0
          %v6463 = vsel %vm5951, %v2353, 0.0
          %v6464 = vsel %vm5952, %v2354, 0.0
          %v6465 = vsel %vm5953, %v2355, 0.0
          %v6466 = vsel %vm5954, %v2356, 0.0
          %v6467 = vsel %vm5955, %v2357, 0.0
          %v6468 = vsel %vm5956, %v2358, 0.0
          %v6469 = vsel %vm5957, %v2359, 0.0
          %v6470 = vsel %vm5958, %v2360, 0.0
          %v6471 = vsel %vm5959, %v2361, 0.0
          %v6472 = vsel %vm5960, %v2362, 0.0
          %v6473 = vsel %vm5961, %v2363, 0.0
          %v6474 = vsel %vm5962, %v2364, 0.0
          %v6475 = vsel %vm5963, %v2365, 0.0
          %v6476 = vsel %vm5964, %v2366, 0.0
          %v6477 = vsel %vm5965, %v2367, 0.0
          %v6478 = vsel %vm5966, %v2368, 0.0
          %v6479 = vsel %vm5967, %v2369, 0.0
          %v6480 = vsel %vm5968, %v2370, 0.0
          %v6481 = vsel %vm5969, %v2371, 0.0
          %v6482 = vsel %vm5970, %v2372, 0.0
          %v6483 = vsel %vm5971, %v2373, 0.0
          %v6484 = vsel %vm5972, %v2374, 0.0
          %v6485 = vsel %vm5973, %v2375, 0.0
          %v6486 = vsel %vm5974, %v2376, 0.0
          %v6487 = vsel %vm5975, %v2377, 0.0
          %v6488 = vsel %vm5976, %v2378, 0.0
          %v6489 = vsel %vm5977, %v2379, 0.0
          %v6490 = vsel %vm5978, %v2380, 0.0
          %v6491 = vsel %vm5979, %v2381, 0.0
          %v6492 = vsel %vm5980, %v2382, 0.0
          %v6493 = vsel %vm5981, %v2383, 0.0
          %v6494 = vsel %vm5982, %v2384, 0.0
          %v6495 = vsel %vm5983, %v2385, 0.0
          %v6496 = vsel %vm5984, %v2386, 0.0
          %v6497 = vsel %vm5985, %v2387, 0.0
          %v6498 = vsel %vm5986, %v2388, 0.0
          %v6499 = vsel %vm5987, %v2389, 0.0
          %v6500 = vsel %vm5988, %v2390, 0.0
          %v6501 = vsel %vm5989, %v2391, 0.0
          %v6502 = vsel %vm5990, %v2392, 0.0
          %v6503 = vsel %vm5991, %v2393, 0.0
          %v6504 = vsel %vm5992, %v2394, 0.0
          %v6505 = vsel %vm5993, %v2395, 0.0
          %v6506 = vsel %vm5994, %v2396, 0.0
          %v6507 = vsel %vm5995, %v2397, 0.0
          %v6508 = vsel %vm5996, %v2398, 0.0
          %v6509 = vsel %vm5997, %v2399, 0.0
          %v6510 = vsel %vm5998, %v2400, 0.0
          %v6511 = vsel %vm5999, %v2401, 0.0
          %v6512 = vsel %vm6000, %v2402, 0.0
          %v6513 = vsel %vm6001, %v2403, 0.0
          %v6514 = vsel %vm6002, %v2404, 0.0
          %v6515 = vsel %vm6003, %v2405, 0.0
          %v6516 = vsel %vm6004, %v2406, 0.0
          %v6517 = vsel %vm6005, %v2407, 0.0
          %v6518 = vsel %vm6006, %v2408, 0.0
          %v6519 = vsel %vm6007, %v2409, 0.0
          %v6520 = vsel %vm6008, %v2410, 0.0
          %v6521 = vsel %vm6009, %v2411, 0.0
          %v6522 = vsel %vm6010, %v2412, 0.0
          %v6523 = vsel %vm6011, %v2413, 0.0
          %v6524 = vsel %vm6012, %v2414, 0.0
          %v6525 = vsel %vm6013, %v2415, 0.0
          %v6526 = vsel %vm6014, %v2416, 0.0
          %v6527 = vsel %vm6015, %v2417, 0.0
          %v6528 = vsel %vm6016, %v2418, 0.0
          %v6529 = vsel %vm6017, %v2419, 0.0
          %v6530 = vsel %vm6018, %v2420, 0.0
          %v6531 = vsel %vm6019, %v2421, 0.0
          %v6532 = vsel %vm6020, %v2422, 0.0
          %v6533 = vsel %vm6021, %v2423, 0.0
          %v6534 = vsel %vm6022, %v2424, 0.0
          %v6535 = vsel %vm6023, %v2425, 0.0
          %v6536 = vsel %vm6024, %v2426, 0.0
          %v6537 = vsel %vm6025, %v2427, 0.0
          %v6538 = vsel %vm6026, %v2428, 0.0
          %v6539 = vsel %vm6027, %v2429, 0.0
          %v6540 = vsel %vm6028, %v2430, 0.0
          %v6541 = vsel %vm6029, %v2431, 0.0
          %v6542 = vsel %vm6030, %v2432, 0.0
          %v6543 = vsel %vm6031, %v2433, 0.0
          %v6544 = vsel %vm6032, %v2434, 0.0
          %v6545 = vsel %vm6033, %v2435, 0.0
          %v6546 = vsel %vm6034, %v2436, 0.0
          %v6547 = vsel %vm6035, %v2437, 0.0
          %v6548 = vsel %vm6036, %v2438, 0.0
          %v6549 = vsel %vm6037, %v2439, 0.0
          %v6550 = vsel %vm6038, %v2440, 0.0
          %v6551 = vsel %vm6039, %v2441, 0.0
          %v6552 = vsel %vm6040, %v2442, 0.0
          %v6553 = vsel %vm6041, %v2443, 0.0
          %v6554 = vsel %vm6042, %v2444, 0.0
          %v6555 = vsel %vm6043, %v2445, 0.0
          %v6556 = vsel %vm6044, %v2446, 0.0
          %v6557 = vsel %vm6045, %v2447, 0.0
          %v6558 = vsel %vm6046, %v2448, 0.0
          %v6559 = vsel %vm6047, %v2449, 0.0
          %v6560 = vsel %vm6048, %v2450, 0.0
          %v6561 = vsel %vm6049, %v2451, 0.0
          %v6562 = vsel %vm6050, %v2452, 0.0
          %v6563 = vsel %vm6051, %v2453, 0.0
          %v6564 = vsel %vm6052, %v2454, 0.0
          %v6565 = vsel %vm6053, %v2455, 0.0
          %v6566 = vsel %vm6054, %v2456, 0.0
          %v6567 = vsel %vm6055, %v2457, 0.0
          %v6568 = vsel %vm6056, %v2458, 0.0
          %v6569 = vsel %vm6057, %v2459, 0.0
          %v6570 = vsel %vm6058, %v2460, 0.0
          %v6571 = vsel %vm6059, %v2461, 0.0
          %v6572 = vsel %vm6060, %v2462, 0.0
          %v6573 = vsel %vm6061, %v2463, 0.0
          %v6574 = vsel %vm6062, %v2464, 0.0
          %v6575 = vsel %vm6063, %v2465, 0.0
          %v6576 = vsel %vm6064, %v2466, 0.0
          %v6577 = vsel %vm6065, %v2467, 0.0
          %v6578 = vsel %vm6066, %v2468, 0.0
          %v6579 = vsel %vm6067, %v2469, 0.0
          %v6580 = vsel %vm6068, %v2470, 0.0
          %v6581 = vsel %vm6069, %v2471, 0.0
          %v6582 = vsel %vm6070, %v2472, 0.0
          %v6583 = vsel %vm6071, %v2473, 0.0
          %v6584 = vsel %vm6072, %v2474, 0.0
          %v6585 = vsel %vm6073, %v2475, 0.0
          %v6586 = vsel %vm6074, %v2476, 0.0
          %v6587 = vsel %vm6075, %v2477, 0.0
          %v6588 = vsel %vm6076, %v2478, 0.0
          %v6589 = vsel %vm6077, %v2479, 0.0
          %v6590 = vsel %vm6078, %v2480, 0.0
          %v6591 = vsel %vm6079, %v2481, 0.0
          %v6592 = vsel %vm6080, %v2482, 0.0
          %v6593 = vsel %vm6081, %v2483, 0.0
          %v6594 = vsel %vm6082, %v2484, 0.0
          %v6595 = vsel %vm6083, %v2485, 0.0
          %v6596 = vsel %vm6084, %v2486, 0.0
          %v6597 = vsel %vm6085, %v2487, 0.0
          %v6598 = vsel %vm6086, %v2488, 0.0
          %v6599 = vsel %vm6087, %v2489, 0.0
          %v6600 = vsel %vm6088, %v2490, 0.0
          %v6601 = vsel %vm6089, %v2491, 0.0
          %v6602 = vsel %vm6090, %v2492, 0.0
          %v6603 = vsel %vm6091, %v2493, 0.0
          %v6604 = vsel %vm6092, %v2494, 0.0
          %v6605 = vsel %vm6093, %v2495, 0.0
          %v6606 = vsel %vm6094, %v2496, 0.0
          %v6607 = vsel %vm6095, %v2497, 0.0
          %v6608 = vsel %vm6096, %v2498, 0.0
          %v6609 = vsel %vm6097, %v2499, 0.0
          %v6610 = vsel %vm6098, %v2500, 0.0
          %v6611 = vsel %vm6099, %v2501, 0.0
          %v6612 = vsel %vm6100, %v2502, 0.0
          %v6613 = vsel %vm6101, %v2503, 0.0
          %v6614 = vsel %vm6102, %v2504, 0.0
          %v6615 = vsel %vm6103, %v2505, 0.0
          %v6616 = vsel %vm6104, %v2506, 0.0
          %v6617 = vsel %vm6105, %v2507, 0.0
          %v6618 = vsel %vm6106, %v2508, 0.0
          %v6619 = vsel %vm6107, %v2509, 0.0
          %v6620 = vsel %vm6108, %v2510, 0.0
          %v6621 = vsel %vm6109, %v2511, 0.0
          %v6622 = vsel %vm6110, %v2512, 0.0
          %v6623 = vsel %vm6111, %v2513, 0.0
          %v6624 = vsel %vm6112, %v2514, 0.0
          %v6625 = vsel %vm6113, %v2515, 0.0
          %v6626 = vsel %vm6114, %v2516, 0.0
          %v6627 = vsel %vm6115, %v2517, 0.0
          %v6628 = vsel %vm6116, %v2518, 0.0
          %v6629 = vsel %vm6117, %v2519, 0.0
          %v6630 = vsel %vm6118, %v2520, 0.0
          %v6631 = vsel %vm6119, %v2521, 0.0
          %v6632 = vsel %vm6120, %v2522, 0.0
          %v6633 = vsel %vm6121, %v2523, 0.0
          %v6634 = vsel %vm6122, %v2524, 0.0
          %v6635 = vsel %vm6123, %v2525, 0.0
          %v6636 = vsel %vm6124, %v2526, 0.0
          %v6637 = vsel %vm6125, %v2527, 0.0
          %v6638 = vsel %vm6126, %v2528, 0.0
          %v6639 = vsel %vm6127, %v2529, 0.0
          %v6640 = vsel %vm6128, %v2530, 0.0
          %v6641 = vsel %vm6129, %v2531, 0.0
          %v6642 = vsel %vm6130, %v2532, 0.0
          %v6643 = vsel %vm6131, %v2533, 0.0
          %v6644 = vsel %vm6132, %v2534, 0.0
          %v6645 = vsel %vm6133, %v2535, 0.0
          %v6646 = vsel %vm6134, %v2536, 0.0
          %v6647 = vsel %vm6135, %v2537, 0.0
          %v6648 = vsel %vm6136, %v2538, 0.0
          %v6649 = vsel %vm6137, %v2539, 0.0
          %v6650 = vsel %vm6138, %v2540, 0.0
          %v6651 = vsel %vm6139, %v2541, 0.0
          %v6652 = vsel %vm6140, %v2542, 0.0
          %v6653 = vsel %vm6141, %v2543, 0.0
          %v6654 = vsel %vm6142, %v2544, 0.0
          %v6655 = vsel %vm6143, %v2545, 0.0
          %v6656 = vsel %vm6144, %v2546, 0.0
          %v6657 = vsel %vm6145, %v2547, 0.0
          %v6658 = vsel %vm6146, %v2548, 0.0
          %v6659 = vsel %vm6147, %v2549, 0.0
          %v6660 = vsel %vm6148, %v2550, 0.0
          %v6661 = vsel %vm6149, %v2551, 0.0
          %v6662 = vsel %vm6150, %v2552, 0.0
          %v6663 = vsel %vm6151, %v2553, 0.0
          %v6664 = vsel %vm6152, %v2554, 0.0
          %v6665 = vsel %vm6153, %v2555, 0.0
          %v6666 = vsel %vm6154, %v2556, 0.0
          %v6667 = vsel %vm6155, %v2557, 0.0
          %v6668 = vsel %vm6156, %v2558, 0.0
          %v6669 = vsel %vm6157, %v2559, 0.0
          %v6670 = vsel %vm6158, %v2560, 0.0
          %v6671 = vsel %vm6159, %v2561, 0.0
          %v6672 = vsel %vm6160, %v2562, 0.0
          %v6673 = vsel %vm6161, %v2563, 0.0
          %v6674 = vsel %vm6162, %v2564, 0.0
          %v6675 = vsel %vm6163, %v2565, 0.0
          %v6676 = vsel %vm6164, %v2566, 0.0
          %v6677 = vsel %vm6165, %v2567, 0.0
          %v6678 = vsel %vm6166, %v2568, 0.0
          %v6679 = vsel %vm6167, %v2569, 0.0
          %v6680 = vsel %vm6168, %v2570, 0.0
          %v6681 = vsel %vm6169, %v2571, 0.0
          %v6682 = vsel %vm6170, %v2572, 0.0
          %v6683 = vsel %vm6171, %v2573, 0.0
          %v6684 = vsel %vm6172, %v2574, 0.0
          %v6685 = vsel %vm6173, %v2575, 0.0
          %v6686 = vsel %vm6174, %v2576, 0.0
          %v6687 = vsel %vm6175, %v2577, 0.0
          %v6688 = vsel %vm6176, %v2578, 0.0
          %v6689 = vsel %vm6177, %v2579, 0.0
          %v6690 = vsel %vm6178, %v2580, 0.0
          %v6691 = vsel %vm6179, %v2581, 0.0
          %v6692 = vsel %vm6180, %v2582, 0.0
          %v6693 = vsel %vm6181, %v2583, 0.0
          %v6694 = vsel %vm6182, %v2584, 0.0
          %v6695 = vsel %vm6183, %v2585, 0.0
          %v6696 = vsel %vm6184, %v2586, 0.0
          %v6697 = vsel %vm6185, %v2587, 0.0
          %v6698 = vsel %vm6186, %v2588, 0.0
          %v6699 = vsel %vm6187, %v2589, 0.0
          %v6700 = vsel %vm6188, %v2590, 0.0
          %v6701 = vsel %vm6189, %v2591, 0.0
          %v6702 = vsel %vm6190, %v2592, 0.0
          %v6703 = vsel %vm6191, %v2593, 0.0
          %v6704 = vsel %vm6192, %v2594, 0.0
          %v6705 = vsel %vm6193, %v2595, 0.0
          %v6706 = vsel %vm6194, %v2596, 0.0
          %v6707 = vsel %vm6195, %v2597, 0.0
          %v6708 = vsel %vm6196, %v2598, 0.0
          %v6709 = vsel %vm6197, %v2599, 0.0
          %v6710 = vsel %vm6198, %v2600, 0.0
          %v6711 = vsel %vm6199, %v2601, 0.0
          %v6712 = vsel %vm6200, %v2602, 0.0
          %v6713 = vsel %vm6201, %v2603, 0.0
          %v6714 = vsel %vm6202, %v2604, 0.0
          %v6715 = vsel %vm6203, %v2605, 0.0
          %v6716 = vsel %vm6204, %v2606, 0.0
          %v6717 = vsel %vm6205, %v2607, 0.0
          %v6718 = vsel %vm6206, %v2608, 0.0
          %v6719 = vsel %vm6207, %v2609, 0.0
          %v6720 = vsel %vm6208, %v2610, 0.0
          %v6721 = vsel %vm6209, %v2611, 0.0
          %v6722 = vsel %vm6210, %v2612, 0.0
          %v6723 = vsel %vm6211, %v2613, 0.0
          %v6724 = vsel %vm6212, %v2614, 0.0
          %v6725 = vsel %vm6213, %v2615, 0.0
          %v6726 = vsel %vm6214, %v2616, 0.0
          %v6727 = vsel %vm6215, %v2617, 0.0
          %v6728 = vsel %vm6216, %v2618, 0.0
          %v6729 = vsel %vm6217, %v2619, 0.0
          %v6730 = vsel %vm6218, %v2620, 0.0
          %v6731 = vsel %vm6219, %v2621, 0.0
          %v6732 = vsel %vm6220, %v2622, 0.0
          %v6733 = vsel %vm6221, %v2623, 0.0
          %v6734 = vsel %vm6222, %v2624, 0.0
          %v6735 = vsel %vm6223, %v2625, 0.0
          %v6736 = vsel %vm6224, %v2626, 0.0
          %v6737 = vsel %vm6225, %v2627, 0.0
          %v6738 = vsel %vm6226, %v2628, 0.0
          %v6739 = vsel %vm6227, %v2629, 0.0
          %v6740 = vsel %vm6228, %v2630, 0.0
          %v6741 = vsel %vm6229, %v2631, 0.0
          %v6742 = vsel %vm6230, %v2632, 0.0
          %v6743 = vsel %vm6231, %v2633, 0.0
          %v6744 = vsel %vm6232, %v2634, 0.0
          %v6745 = vsel %vm6233, %v2635, 0.0
          %v6746 = vsel %vm6234, %v2636, 0.0
          %v6747 = vsel %vm6235, %v2637, 0.0
          %v6748 = vsel %vm6236, %v2638, 0.0
          %v6749 = vsel %vm6237, %v2639, 0.0
          %v6750 = vsel %vm6238, %v2640, 0.0
          %v6751 = vsel %vm6239, %v2641, 0.0
          %v6752 = vsel %vm6240, %v2642, 0.0
          %v6753 = vsel %vm6241, %v2643, 0.0
          %v6754 = vsel %vm6242, %v2644, 0.0
          %v6755 = vsel %vm6243, %v2645, 0.0
          %v6756 = vsel %vm6244, %v2646, 0.0
          %v6757 = vsel %vm6245, %v2647, 0.0
          %v6758 = vsel %vm6246, %v2648, 0.0
          %v6759 = vsel %vm6247, %v2649, 0.0
          %v6760 = vsel %vm6248, %v2650, 0.0
          %v6761 = vsel %vm6249, %v2651, 0.0
          %v6762 = vsel %vm6250, %v2652, 0.0
          %v6763 = vsel %vm6251, %v2653, 0.0
          %v6764 = vsel %vm6252, %v2654, 0.0
          %v6765 = vsel %vm6253, %v2655, 0.0
          %v6766 = vsel %vm6254, %v2656, 0.0
          %v6767 = vsel %vm6255, %v2657, 0.0
          %v6768 = vsel %vm6256, %v2658, 0.0
          %v6769 = vsel %vm6257, %v2659, 0.0
          %v6770 = vsel %vm6258, %v2660, 0.0
          %v6771 = vsel %vm6259, %v2661, 0.0
          %v6772 = vsel %vm6260, %v2662, 0.0
          %v6773 = vsel %vm6261, %v2663, 0.0
          %v6774 = vsel %vm6262, %v2664, 0.0
          %v6775 = vsel %vm6263, %v2665, 0.0
          %v6776 = vsel %vm6264, %v2666, 0.0
          %v6777 = vsel %vm6265, %v2667, 0.0
          %v6778 = vsel %vm6266, %v2668, 0.0
          %v6779 = vsel %vm6267, %v2669, 0.0
          %v6780 = vsel %vm6268, %v2670, 0.0
          %v6781 = vsel %vm6269, %v2671, 0.0
          %v6782 = vsel %vm6270, %v2672, 0.0
          %v6783 = vsel %vm6271, %v2673, 0.0
          %v6784 = vsel %vm6272, %v2674, 0.0
          %v6785 = vsel %vm6273, %v2675, 0.0
          %v6786 = vsel %vm6274, %v2676, 0.0
          %v6787 = vsel %vm6275, %v2677, 0.0
          %v6788 = vsel %vm6276, %v2678, 0.0
          %v6789 = vsel %vm6277, %v2679, 0.0
          %v6790 = vsel %vm6278, %v2680, 0.0
          %v6791 = vsel %vm6279, %v2681, 0.0
          %v6792 = vsel %vm6280, %v2682, 0.0
          %v6793 = vsel %vm6281, %v2683, 0.0
          %v6794 = vsel %vm6282, %v2684, 0.0
          %v6795 = vsel %vm6283, %v2685, 0.0
          %v6796 = vsel %vm6284, %v2686, 0.0
          %v6797 = vsel %vm6285, %v2687, 0.0
          %v6798 = vsel %vm6286, %v2688, 0.0
          %v6799 = vsel %vm6287, %v2689, 0.0
          %v6800 = vsel %vm6288, %v2690, 0.0
          %v6801 = vsel %vm6289, %v2691, 0.0
          %v6802 = vsel %vm6290, %v2692, 0.0
          %v6803 = vsel %vm6291, %v2693, 0.0
          %v6804 = vsel %vm6292, %v2694, 0.0
          %v6805 = vsel %vm6293, %v2695, 0.0
          %v6806 = vsel %vm6294, %v2696, 0.0
          %v6807 = vsel %vm6295, %v2697, 0.0
          %v6808 = vsel %vm6296, %v2698, 0.0
          %v6809 = vsel %vm6297, %v2699, 0.0
          %v6810 = vsel %vm6298, %v2700, 0.0
          %v6811 = vsel %vm6299, %v2701, 0.0
          %v6812 = vsel %vm6300, %v2702, 0.0
          %v6813 = vsel %vm6301, %v2703, 0.0
          %v6814 = vsel %vm6302, %v2704, 0.0
          %v6815 = vsel %vm6303, %v2705, 0.0
          %v6816 = vsel %vm6304, %v2706, 0.0
          %v6817 = vsel %vm6305, %v2707, 0.0
          %v6818 = vsel %vm6306, %v2708, 0.0
          %v6819 = vsel %vm6307, %v2709, 0.0
          %v6820 = vsel %vm6308, %v2710, 0.0
          %v6821 = vsel %vm6309, %v2711, 0.0
          %v6822 = vsel %vm6310, %v2712, 0.0
          %v6823 = vsel %vm6311, %v2713, 0.0
          %v6824 = vsel %vm6312, %v2714, 0.0
          %v6825 = vsel %vm6313, %v2715, 0.0
          %v6826 = vsel %vm6314, %v2716, 0.0
          %v6827 = vsel %vm6315, %v2717, 0.0
          %v6828 = vsel %vm6316, %v2718, 0.0
          %v6829 = vsel %vm6317, %v2719, 0.0
          %v6830 = vsel %vm6318, %v2720, 0.0
          %v6831 = vsel %vm6319, %v2721, 0.0
          %v6832 = vsel %vm6320, %v2722, 0.0
          %v6833 = vsel %vm6321, %v2723, 0.0
          %v6834 = vsel %vm6322, %v2724, 0.0
          %v6835 = vsel %vm6323, %v2725, 0.0
          %v6836 = vsel %vm6324, %v2726, 0.0
          %v6837 = vsel %vm6325, %v2727, 0.0
          %v6838 = vsel %vm6326, %v2728, 0.0
          %v6839 = vsel %vm6327, %v2729, 0.0
          %v6840 = vsel %vm6328, %v2730, 0.0
          %v6841 = vsel %vm6329, %v2731, 0.0
          %v6842 = vsel %vm6330, %v2732, 0.0
          %v6843 = vsel %vm6331, %v2733, 0.0
          %v6844 = vsel %vm6332, %v2734, 0.0
          %v6845 = vsel %vm6333, %v2735, 0.0
          %v6846 = vsel %vm6334, %v2736, 0.0
          %v6847 = vsel %vm6335, %v2737, 0.0
          %v6848 = vsel %vm6336, %v2738, 0.0
          %v6849 = vsel %vm6337, %v2739, 0.0
          %v6850 = vsel %vm6338, %v2740, 0.0
          %v6851 = vsel %vm6339, %v2741, 0.0
          %v6852 = vsel %vm6340, %v2742, 0.0
          %v6853 = vsel %vm6341, %v2743, 0.0
          %v6854 = vsel %vm6342, %v2744, 0.0
          %v6855 = vsel %vm6343, %v2745, 0.0
          %v6856 = vsel %vm6344, %v2746, 0.0
          %v6857 = vsel %vm6345, %v2747, 0.0
          %v6858 = vsel %vm6346, %v2748, 0.0
          %v6859 = vsel %vm6347, %v2749, 0.0
          %v6860 = vsel %vm6348, %v2750, 0.0
          %v6861 = vsel %vm6349, %v2751, 0.0
          %v6862 = vsel %vm6350, %v2752, 0.0
          %v6863 = vsel %vm6351, %v2753, 0.0
          %v6864 = vsel %vm6352, %v2754, 0.0
          %v6865 = vsel %vm6353, %v2755, 0.0
          %v6866 = vsel %vm6354, %v2756, 0.0
          %v6867 = vsel %vm6355, %v2757, 0.0
          %v6868 = vsel %vm6356, %v2758, 0.0
          %v6869 = vsel %vm6357, %v2759, 0.0
          %v6870 = vsel %vm6358, %v2760, 0.0
          %v6871 = vsel %vm6359, %v2761, 0.0
          %v6872 = vsel %vm6360, %v2762, 0.0
          %v6873 = vsel %vm6361, %v2763, 0.0
          %v6874 = vsel %vm6362, %v2764, 0.0
          %v6875 = vsel %vm6363, %v2765, 0.0
          %v6876 = vsel %vm6364, %v2766, 0.0
          %v6877 = vsel %vm6365, %v2767, 0.0
          %v6878 = vsel %vm6366, %v2768, 0.0
          %v6879 = vsel %vm6367, %v2769, 0.0
          %v6880 = vsel %vm6368, %v2770, 0.0
          %v6881 = vsel %vm6369, %v2771, 0.0
          %v6882 = vsel %vm6370, %v2772, 0.0
          %v6883 = vsel %vm6371, %v2773, 0.0
          %v6884 = vsel %vm6372, %v2774, 0.0
          %v6885 = vsel %vm6373, %v2775, 0.0
          %v6886 = vsel %vm6374, %v2776, 0.0
          %v6887 = vsel %vm6375, %v2777, 0.0
          %v6888 = vsel %vm6376, %v2778, 0.0
          %v6889 = vsel %vm6377, %v2779, 0.0
          %v6890 = vsel %vm6378, %v2780, 0.0
          %v6891 = vsel %vm6379, %v2781, 0.0
          %v6892 = vsel %vm6380, %v2782, 0.0
          %v6893 = vsel %vm6381, %v2783, 0.0
          %v6894 = vsel %vm6382, %v2784, 0.0
          %v6895 = vsel %vm6383, %v2785, 0.0
          %v6896 = vsel %vm6384, %v2786, 0.0
          %v6897 = vsel %vm6385, %v2787, 0.0
          %v6898 = vsel %vm6386, %v2788, 0.0
          %v6899 = vsel %vm6387, %v2789, 0.0
          %v6900 = vsel %vm6388, %v2790, 0.0
          %v6901 = vsel %vm6389, %v2791, 0.0
          %v6902 = vsel %vm6390, %v2792, 0.0
          %v6903 = vsel %vm6391, %v2793, 0.0
          %v6904 = vsel %vm6392, %v2794, 0.0
          %v6905 = vsel %vm6393, %v2795, 0.0
          %v6906 = vsel %vm6394, %v2796, 0.0
          %v6907 = vsel %vm6395, %v2797, 0.0
          %v6908 = vsel %vm6396, %v2798, 0.0
          %v6909 = vsel %vm6397, %v2799, 0.0
          %v6910 = vsel %vm6398, %v2800, 0.0
          %v6911 = vsel %vm6399, %v2801, 0.0
          %v6912 = vsel %vm6400, %v2802, 0.0
          %v6913 = vsel %vm6401, %v2803, 0.0
          %v6914 = vsel %vm6402, %v2804, 0.0
          %v6915 = vsel %vm6403, %v2805, 0.0
          %v6916 = vsel %vm6404, %v2806, 0.0
          %v6917 = vsel %vm6405, %v2807, 0.0
          %v6918 = vsel %vm6406, %v2808, 0.0
          %v6919 = vsel %vm6407, %v2809, 0.0
          %v6920 = vsel %vm6408, %v2810, 0.0
          %v6921 = vsel %vm6409, %v2811, 0.0
          %v6922 = vsel %vm6410, %v2812, 0.0
          %v6923 = vsel %vm6411, %v2813, 0.0
          %v6924 = vsel %vm6412, %v2814, 0.0
          %v6925 = vsel %vm6413, %v2815, 0.0
          %v6926 = vsel %vm6414, %v2816, 0.0
          %v6927 = vsel %vm6415, %v2817, 0.0
          %v6928 = vsel %vm6416, %v2818, 0.0
          %v6929 = vsel %vm6417, %v2819, 0.0
          %v6930 = vsel %vm6418, %v2820, 0.0
          %v6931 = vsel %vm6419, %v2821, 0.0
          %v6932 = vsel %vm6420, %v2822, 0.0
          %v6933 = vsel %vm6421, %v2823, 0.0
          %v6934 = vsel %vm6422, %v2824, 0.0
          %v6935 = vadd.f32 %v4886, %v6423
          %v6936 = vadd.f32 %v4887, %v6424
          %v6937 = vadd.f32 %v4888, %v6425
          %v6938 = vadd.f32 %v4889, %v6426
          %v6939 = vadd.f32 %v4890, %v6427
          %v6940 = vadd.f32 %v4891, %v6428
          %v6941 = vadd.f32 %v4892, %v6429
          %v6942 = vadd.f32 %v4893, %v6430
          %v6943 = vadd.f32 %v4894, %v6431
          %v6944 = vadd.f32 %v4895, %v6432
          %v6945 = vadd.f32 %v4896, %v6433
          %v6946 = vadd.f32 %v4897, %v6434
          %v6947 = vadd.f32 %v4898, %v6435
          %v6948 = vadd.f32 %v4899, %v6436
          %v6949 = vadd.f32 %v4900, %v6437
          %v6950 = vadd.f32 %v4901, %v6438
          %v6951 = vadd.f32 %v4902, %v6439
          %v6952 = vadd.f32 %v4903, %v6440
          %v6953 = vadd.f32 %v4904, %v6441
          %v6954 = vadd.f32 %v4905, %v6442
          %v6955 = vadd.f32 %v4906, %v6443
          %v6956 = vadd.f32 %v4907, %v6444
          %v6957 = vadd.f32 %v4908, %v6445
          %v6958 = vadd.f32 %v4909, %v6446
          %v6959 = vadd.f32 %v4910, %v6447
          %v6960 = vadd.f32 %v4911, %v6448
          %v6961 = vadd.f32 %v4912, %v6449
          %v6962 = vadd.f32 %v4913, %v6450
          %v6963 = vadd.f32 %v4914, %v6451
          %v6964 = vadd.f32 %v4915, %v6452
          %v6965 = vadd.f32 %v4916, %v6453
          %v6966 = vadd.f32 %v4917, %v6454
          %v6967 = vadd.f32 %v4918, %v6455
          %v6968 = vadd.f32 %v4919, %v6456
          %v6969 = vadd.f32 %v4920, %v6457
          %v6970 = vadd.f32 %v4921, %v6458
          %v6971 = vadd.f32 %v4922, %v6459
          %v6972 = vadd.f32 %v4923, %v6460
          %v6973 = vadd.f32 %v4924, %v6461
          %v6974 = vadd.f32 %v4925, %v6462
          %v6975 = vadd.f32 %v4926, %v6463
          %v6976 = vadd.f32 %v4927, %v6464
          %v6977 = vadd.f32 %v4928, %v6465
          %v6978 = vadd.f32 %v4929, %v6466
          %v6979 = vadd.f32 %v4930, %v6467
          %v6980 = vadd.f32 %v4931, %v6468
          %v6981 = vadd.f32 %v4932, %v6469
          %v6982 = vadd.f32 %v4933, %v6470
          %v6983 = vadd.f32 %v4934, %v6471
          %v6984 = vadd.f32 %v4935, %v6472
          %v6985 = vadd.f32 %v4936, %v6473
          %v6986 = vadd.f32 %v4937, %v6474
          %v6987 = vadd.f32 %v4938, %v6475
          %v6988 = vadd.f32 %v4939, %v6476
          %v6989 = vadd.f32 %v4940, %v6477
          %v6990 = vadd.f32 %v4941, %v6478
          %v6991 = vadd.f32 %v4942, %v6479
          %v6992 = vadd.f32 %v4943, %v6480
          %v6993 = vadd.f32 %v4944, %v6481
          %v6994 = vadd.f32 %v4945, %v6482
          %v6995 = vadd.f32 %v4946, %v6483
          %v6996 = vadd.f32 %v4947, %v6484
          %v6997 = vadd.f32 %v4948, %v6485
          %v6998 = vadd.f32 %v4949, %v6486
          %v6999 = vadd.f32 %v4950, %v6487
          %v7000 = vadd.f32 %v4951, %v6488
          %v7001 = vadd.f32 %v4952, %v6489
          %v7002 = vadd.f32 %v4953, %v6490
          %v7003 = vadd.f32 %v4954, %v6491
          %v7004 = vadd.f32 %v4955, %v6492
          %v7005 = vadd.f32 %v4956, %v6493
          %v7006 = vadd.f32 %v4957, %v6494
          %v7007 = vadd.f32 %v4958, %v6495
          %v7008 = vadd.f32 %v4959, %v6496
          %v7009 = vadd.f32 %v4960, %v6497
          %v7010 = vadd.f32 %v4961, %v6498
          %v7011 = vadd.f32 %v4962, %v6499
          %v7012 = vadd.f32 %v4963, %v6500
          %v7013 = vadd.f32 %v4964, %v6501
          %v7014 = vadd.f32 %v4965, %v6502
          %v7015 = vadd.f32 %v4966, %v6503
          %v7016 = vadd.f32 %v4967, %v6504
          %v7017 = vadd.f32 %v4968, %v6505
          %v7018 = vadd.f32 %v4969, %v6506
          %v7019 = vadd.f32 %v4970, %v6507
          %v7020 = vadd.f32 %v4971, %v6508
          %v7021 = vadd.f32 %v4972, %v6509
          %v7022 = vadd.f32 %v4973, %v6510
          %v7023 = vadd.f32 %v4974, %v6511
          %v7024 = vadd.f32 %v4975, %v6512
          %v7025 = vadd.f32 %v4976, %v6513
          %v7026 = vadd.f32 %v4977, %v6514
          %v7027 = vadd.f32 %v4978, %v6515
          %v7028 = vadd.f32 %v4979, %v6516
          %v7029 = vadd.f32 %v4980, %v6517
          %v7030 = vadd.f32 %v4981, %v6518
          %v7031 = vadd.f32 %v4982, %v6519
          %v7032 = vadd.f32 %v4983, %v6520
          %v7033 = vadd.f32 %v4984, %v6521
          %v7034 = vadd.f32 %v4985, %v6522
          %v7035 = vadd.f32 %v4986, %v6523
          %v7036 = vadd.f32 %v4987, %v6524
          %v7037 = vadd.f32 %v4988, %v6525
          %v7038 = vadd.f32 %v4989, %v6526
          %v7039 = vadd.f32 %v4990, %v6527
          %v7040 = vadd.f32 %v4991, %v6528
          %v7041 = vadd.f32 %v4992, %v6529
          %v7042 = vadd.f32 %v4993, %v6530
          %v7043 = vadd.f32 %v4994, %v6531
          %v7044 = vadd.f32 %v4995, %v6532
          %v7045 = vadd.f32 %v4996, %v6533
          %v7046 = vadd.f32 %v4997, %v6534
          %v7047 = vadd.f32 %v4998, %v6535
          %v7048 = vadd.f32 %v4999, %v6536
          %v7049 = vadd.f32 %v5000, %v6537
          %v7050 = vadd.f32 %v5001, %v6538
          %v7051 = vadd.f32 %v5002, %v6539
          %v7052 = vadd.f32 %v5003, %v6540
          %v7053 = vadd.f32 %v5004, %v6541
          %v7054 = vadd.f32 %v5005, %v6542
          %v7055 = vadd.f32 %v5006, %v6543
          %v7056 = vadd.f32 %v5007, %v6544
          %v7057 = vadd.f32 %v5008, %v6545
          %v7058 = vadd.f32 %v5009, %v6546
          %v7059 = vadd.f32 %v5010, %v6547
          %v7060 = vadd.f32 %v5011, %v6548
          %v7061 = vadd.f32 %v5012, %v6549
          %v7062 = vadd.f32 %v5013, %v6550
          %v7063 = vadd.f32 %v5014, %v6551
          %v7064 = vadd.f32 %v5015, %v6552
          %v7065 = vadd.f32 %v5016, %v6553
          %v7066 = vadd.f32 %v5017, %v6554
          %v7067 = vadd.f32 %v5018, %v6555
          %v7068 = vadd.f32 %v5019, %v6556
          %v7069 = vadd.f32 %v5020, %v6557
          %v7070 = vadd.f32 %v5021, %v6558
          %v7071 = vadd.f32 %v5022, %v6559
          %v7072 = vadd.f32 %v5023, %v6560
          %v7073 = vadd.f32 %v5024, %v6561
          %v7074 = vadd.f32 %v5025, %v6562
          %v7075 = vadd.f32 %v5026, %v6563
          %v7076 = vadd.f32 %v5027, %v6564
          %v7077 = vadd.f32 %v5028, %v6565
          %v7078 = vadd.f32 %v5029, %v6566
          %v7079 = vadd.f32 %v5030, %v6567
          %v7080 = vadd.f32 %v5031, %v6568
          %v7081 = vadd.f32 %v5032, %v6569
          %v7082 = vadd.f32 %v5033, %v6570
          %v7083 = vadd.f32 %v5034, %v6571
          %v7084 = vadd.f32 %v5035, %v6572
          %v7085 = vadd.f32 %v5036, %v6573
          %v7086 = vadd.f32 %v5037, %v6574
          %v7087 = vadd.f32 %v5038, %v6575
          %v7088 = vadd.f32 %v5039, %v6576
          %v7089 = vadd.f32 %v5040, %v6577
          %v7090 = vadd.f32 %v5041, %v6578
          %v7091 = vadd.f32 %v5042, %v6579
          %v7092 = vadd.f32 %v5043, %v6580
          %v7093 = vadd.f32 %v5044, %v6581
          %v7094 = vadd.f32 %v5045, %v6582
          %v7095 = vadd.f32 %v5046, %v6583
          %v7096 = vadd.f32 %v5047, %v6584
          %v7097 = vadd.f32 %v5048, %v6585
          %v7098 = vadd.f32 %v5049, %v6586
          %v7099 = vadd.f32 %v5050, %v6587
          %v7100 = vadd.f32 %v5051, %v6588
          %v7101 = vadd.f32 %v5052, %v6589
          %v7102 = vadd.f32 %v5053, %v6590
          %v7103 = vadd.f32 %v5054, %v6591
          %v7104 = vadd.f32 %v5055, %v6592
          %v7105 = vadd.f32 %v5056, %v6593
          %v7106 = vadd.f32 %v5057, %v6594
          %v7107 = vadd.f32 %v5058, %v6595
          %v7108 = vadd.f32 %v5059, %v6596
          %v7109 = vadd.f32 %v5060, %v6597
          %v7110 = vadd.f32 %v5061, %v6598
          %v7111 = vadd.f32 %v5062, %v6599
          %v7112 = vadd.f32 %v5063, %v6600
          %v7113 = vadd.f32 %v5064, %v6601
          %v7114 = vadd.f32 %v5065, %v6602
          %v7115 = vadd.f32 %v5066, %v6603
          %v7116 = vadd.f32 %v5067, %v6604
          %v7117 = vadd.f32 %v5068, %v6605
          %v7118 = vadd.f32 %v5069, %v6606
          %v7119 = vadd.f32 %v5070, %v6607
          %v7120 = vadd.f32 %v5071, %v6608
          %v7121 = vadd.f32 %v5072, %v6609
          %v7122 = vadd.f32 %v5073, %v6610
          %v7123 = vadd.f32 %v5074, %v6611
          %v7124 = vadd.f32 %v5075, %v6612
          %v7125 = vadd.f32 %v5076, %v6613
          %v7126 = vadd.f32 %v5077, %v6614
          %v7127 = vadd.f32 %v5078, %v6615
          %v7128 = vadd.f32 %v5079, %v6616
          %v7129 = vadd.f32 %v5080, %v6617
          %v7130 = vadd.f32 %v5081, %v6618
          %v7131 = vadd.f32 %v5082, %v6619
          %v7132 = vadd.f32 %v5083, %v6620
          %v7133 = vadd.f32 %v5084, %v6621
          %v7134 = vadd.f32 %v5085, %v6622
          %v7135 = vadd.f32 %v5086, %v6623
          %v7136 = vadd.f32 %v5087, %v6624
          %v7137 = vadd.f32 %v5088, %v6625
          %v7138 = vadd.f32 %v5089, %v6626
          %v7139 = vadd.f32 %v5090, %v6627
          %v7140 = vadd.f32 %v5091, %v6628
          %v7141 = vadd.f32 %v5092, %v6629
          %v7142 = vadd.f32 %v5093, %v6630
          %v7143 = vadd.f32 %v5094, %v6631
          %v7144 = vadd.f32 %v5095, %v6632
          %v7145 = vadd.f32 %v5096, %v6633
          %v7146 = vadd.f32 %v5097, %v6634
          %v7147 = vadd.f32 %v5098, %v6635
          %v7148 = vadd.f32 %v5099, %v6636
          %v7149 = vadd.f32 %v5100, %v6637
          %v7150 = vadd.f32 %v5101, %v6638
          %v7151 = vadd.f32 %v5102, %v6639
          %v7152 = vadd.f32 %v5103, %v6640
          %v7153 = vadd.f32 %v5104, %v6641
          %v7154 = vadd.f32 %v5105, %v6642
          %v7155 = vadd.f32 %v5106, %v6643
          %v7156 = vadd.f32 %v5107, %v6644
          %v7157 = vadd.f32 %v5108, %v6645
          %v7158 = vadd.f32 %v5109, %v6646
          %v7159 = vadd.f32 %v5110, %v6647
          %v7160 = vadd.f32 %v5111, %v6648
          %v7161 = vadd.f32 %v5112, %v6649
          %v7162 = vadd.f32 %v5113, %v6650
          %v7163 = vadd.f32 %v5114, %v6651
          %v7164 = vadd.f32 %v5115, %v6652
          %v7165 = vadd.f32 %v5116, %v6653
          %v7166 = vadd.f32 %v5117, %v6654
          %v7167 = vadd.f32 %v5118, %v6655
          %v7168 = vadd.f32 %v5119, %v6656
          %v7169 = vadd.f32 %v5120, %v6657
          %v7170 = vadd.f32 %v5121, %v6658
          %v7171 = vadd.f32 %v5122, %v6659
          %v7172 = vadd.f32 %v5123, %v6660
          %v7173 = vadd.f32 %v5124, %v6661
          %v7174 = vadd.f32 %v5125, %v6662
          %v7175 = vadd.f32 %v5126, %v6663
          %v7176 = vadd.f32 %v5127, %v6664
          %v7177 = vadd.f32 %v5128, %v6665
          %v7178 = vadd.f32 %v5129, %v6666
          %v7179 = vadd.f32 %v5130, %v6667
          %v7180 = vadd.f32 %v5131, %v6668
          %v7181 = vadd.f32 %v5132, %v6669
          %v7182 = vadd.f32 %v5133, %v6670
          %v7183 = vadd.f32 %v5134, %v6671
          %v7184 = vadd.f32 %v5135, %v6672
          %v7185 = vadd.f32 %v5136, %v6673
          %v7186 = vadd.f32 %v5137, %v6674
          %v7187 = vadd.f32 %v5138, %v6675
          %v7188 = vadd.f32 %v5139, %v6676
          %v7189 = vadd.f32 %v5140, %v6677
          %v7190 = vadd.f32 %v5141, %v6678
          %v7191 = vadd.f32 %v5142, %v6679
          %v7192 = vadd.f32 %v5143, %v6680
          %v7193 = vadd.f32 %v5144, %v6681
          %v7194 = vadd.f32 %v5145, %v6682
          %v7195 = vadd.f32 %v5146, %v6683
          %v7196 = vadd.f32 %v5147, %v6684
          %v7197 = vadd.f32 %v5148, %v6685
          %v7198 = vadd.f32 %v5149, %v6686
          %v7199 = vadd.f32 %v5150, %v6687
          %v7200 = vadd.f32 %v5151, %v6688
          %v7201 = vadd.f32 %v5152, %v6689
          %v7202 = vadd.f32 %v5153, %v6690
          %v7203 = vadd.f32 %v5154, %v6691
          %v7204 = vadd.f32 %v5155, %v6692
          %v7205 = vadd.f32 %v5156, %v6693
          %v7206 = vadd.f32 %v5157, %v6694
          %v7207 = vadd.f32 %v5158, %v6695
          %v7208 = vadd.f32 %v5159, %v6696
          %v7209 = vadd.f32 %v5160, %v6697
          %v7210 = vadd.f32 %v5161, %v6698
          %v7211 = vadd.f32 %v5162, %v6699
          %v7212 = vadd.f32 %v5163, %v6700
          %v7213 = vadd.f32 %v5164, %v6701
          %v7214 = vadd.f32 %v5165, %v6702
          %v7215 = vadd.f32 %v5166, %v6703
          %v7216 = vadd.f32 %v5167, %v6704
          %v7217 = vadd.f32 %v5168, %v6705
          %v7218 = vadd.f32 %v5169, %v6706
          %v7219 = vadd.f32 %v5170, %v6707
          %v7220 = vadd.f32 %v5171, %v6708
          %v7221 = vadd.f32 %v5172, %v6709
          %v7222 = vadd.f32 %v5173, %v6710
          %v7223 = vadd.f32 %v5174, %v6711
          %v7224 = vadd.f32 %v5175, %v6712
          %v7225 = vadd.f32 %v5176, %v6713
          %v7226 = vadd.f32 %v5177, %v6714
          %v7227 = vadd.f32 %v5178, %v6715
          %v7228 = vadd.f32 %v5179, %v6716
          %v7229 = vadd.f32 %v5180, %v6717
          %v7230 = vadd.f32 %v5181, %v6718
          %v7231 = vadd.f32 %v5182, %v6719
          %v7232 = vadd.f32 %v5183, %v6720
          %v7233 = vadd.f32 %v5184, %v6721
          %v7234 = vadd.f32 %v5185, %v6722
          %v7235 = vadd.f32 %v5186, %v6723
          %v7236 = vadd.f32 %v5187, %v6724
          %v7237 = vadd.f32 %v5188, %v6725
          %v7238 = vadd.f32 %v5189, %v6726
          %v7239 = vadd.f32 %v5190, %v6727
          %v7240 = vadd.f32 %v5191, %v6728
          %v7241 = vadd.f32 %v5192, %v6729
          %v7242 = vadd.f32 %v5193, %v6730
          %v7243 = vadd.f32 %v5194, %v6731
          %v7244 = vadd.f32 %v5195, %v6732
          %v7245 = vadd.f32 %v5196, %v6733
          %v7246 = vadd.f32 %v5197, %v6734
          %v7247 = vadd.f32 %v5198, %v6735
          %v7248 = vadd.f32 %v5199, %v6736
          %v7249 = vadd.f32 %v5200, %v6737
          %v7250 = vadd.f32 %v5201, %v6738
          %v7251 = vadd.f32 %v5202, %v6739
          %v7252 = vadd.f32 %v5203, %v6740
          %v7253 = vadd.f32 %v5204, %v6741
          %v7254 = vadd.f32 %v5205, %v6742
          %v7255 = vadd.f32 %v5206, %v6743
          %v7256 = vadd.f32 %v5207, %v6744
          %v7257 = vadd.f32 %v5208, %v6745
          %v7258 = vadd.f32 %v5209, %v6746
          %v7259 = vadd.f32 %v5210, %v6747
          %v7260 = vadd.f32 %v5211, %v6748
          %v7261 = vadd.f32 %v5212, %v6749
          %v7262 = vadd.f32 %v5213, %v6750
          %v7263 = vadd.f32 %v5214, %v6751
          %v7264 = vadd.f32 %v5215, %v6752
          %v7265 = vadd.f32 %v5216, %v6753
          %v7266 = vadd.f32 %v5217, %v6754
          %v7267 = vadd.f32 %v5218, %v6755
          %v7268 = vadd.f32 %v5219, %v6756
          %v7269 = vadd.f32 %v5220, %v6757
          %v7270 = vadd.f32 %v5221, %v6758
          %v7271 = vadd.f32 %v5222, %v6759
          %v7272 = vadd.f32 %v5223, %v6760
          %v7273 = vadd.f32 %v5224, %v6761
          %v7274 = vadd.f32 %v5225, %v6762
          %v7275 = vadd.f32 %v5226, %v6763
          %v7276 = vadd.f32 %v5227, %v6764
          %v7277 = vadd.f32 %v5228, %v6765
          %v7278 = vadd.f32 %v5229, %v6766
          %v7279 = vadd.f32 %v5230, %v6767
          %v7280 = vadd.f32 %v5231, %v6768
          %v7281 = vadd.f32 %v5232, %v6769
          %v7282 = vadd.f32 %v5233, %v6770
          %v7283 = vadd.f32 %v5234, %v6771
          %v7284 = vadd.f32 %v5235, %v6772
          %v7285 = vadd.f32 %v5236, %v6773
          %v7286 = vadd.f32 %v5237, %v6774
          %v7287 = vadd.f32 %v5238, %v6775
          %v7288 = vadd.f32 %v5239, %v6776
          %v7289 = vadd.f32 %v5240, %v6777
          %v7290 = vadd.f32 %v5241, %v6778
          %v7291 = vadd.f32 %v5242, %v6779
          %v7292 = vadd.f32 %v5243, %v6780
          %v7293 = vadd.f32 %v5244, %v6781
          %v7294 = vadd.f32 %v5245, %v6782
          %v7295 = vadd.f32 %v5246, %v6783
          %v7296 = vadd.f32 %v5247, %v6784
          %v7297 = vadd.f32 %v5248, %v6785
          %v7298 = vadd.f32 %v5249, %v6786
          %v7299 = vadd.f32 %v5250, %v6787
          %v7300 = vadd.f32 %v5251, %v6788
          %v7301 = vadd.f32 %v5252, %v6789
          %v7302 = vadd.f32 %v5253, %v6790
          %v7303 = vadd.f32 %v5254, %v6791
          %v7304 = vadd.f32 %v5255, %v6792
          %v7305 = vadd.f32 %v5256, %v6793
          %v7306 = vadd.f32 %v5257, %v6794
          %v7307 = vadd.f32 %v5258, %v6795
          %v7308 = vadd.f32 %v5259, %v6796
          %v7309 = vadd.f32 %v5260, %v6797
          %v7310 = vadd.f32 %v5261, %v6798
          %v7311 = vadd.f32 %v5262, %v6799
          %v7312 = vadd.f32 %v5263, %v6800
          %v7313 = vadd.f32 %v5264, %v6801
          %v7314 = vadd.f32 %v5265, %v6802
          %v7315 = vadd.f32 %v5266, %v6803
          %v7316 = vadd.f32 %v5267, %v6804
          %v7317 = vadd.f32 %v5268, %v6805
          %v7318 = vadd.f32 %v5269, %v6806
          %v7319 = vadd.f32 %v5270, %v6807
          %v7320 = vadd.f32 %v5271, %v6808
          %v7321 = vadd.f32 %v5272, %v6809
          %v7322 = vadd.f32 %v5273, %v6810
          %v7323 = vadd.f32 %v5274, %v6811
          %v7324 = vadd.f32 %v5275, %v6812
          %v7325 = vadd.f32 %v5276, %v6813
          %v7326 = vadd.f32 %v5277, %v6814
          %v7327 = vadd.f32 %v5278, %v6815
          %v7328 = vadd.f32 %v5279, %v6816
          %v7329 = vadd.f32 %v5280, %v6817
          %v7330 = vadd.f32 %v5281, %v6818
          %v7331 = vadd.f32 %v5282, %v6819
          %v7332 = vadd.f32 %v5283, %v6820
          %v7333 = vadd.f32 %v5284, %v6821
          %v7334 = vadd.f32 %v5285, %v6822
          %v7335 = vadd.f32 %v5286, %v6823
          %v7336 = vadd.f32 %v5287, %v6824
          %v7337 = vadd.f32 %v5288, %v6825
          %v7338 = vadd.f32 %v5289, %v6826
          %v7339 = vadd.f32 %v5290, %v6827
          %v7340 = vadd.f32 %v5291, %v6828
          %v7341 = vadd.f32 %v5292, %v6829
          %v7342 = vadd.f32 %v5293, %v6830
          %v7343 = vadd.f32 %v5294, %v6831
          %v7344 = vadd.f32 %v5295, %v6832
          %v7345 = vadd.f32 %v5296, %v6833
          %v7346 = vadd.f32 %v5297, %v6834
          %v7347 = vadd.f32 %v5298, %v6835
          %v7348 = vadd.f32 %v5299, %v6836
          %v7349 = vadd.f32 %v5300, %v6837
          %v7350 = vadd.f32 %v5301, %v6838
          %v7351 = vadd.f32 %v5302, %v6839
          %v7352 = vadd.f32 %v5303, %v6840
          %v7353 = vadd.f32 %v5304, %v6841
          %v7354 = vadd.f32 %v5305, %v6842
          %v7355 = vadd.f32 %v5306, %v6843
          %v7356 = vadd.f32 %v5307, %v6844
          %v7357 = vadd.f32 %v5308, %v6845
          %v7358 = vadd.f32 %v5309, %v6846
          %v7359 = vadd.f32 %v5310, %v6847
          %v7360 = vadd.f32 %v5311, %v6848
          %v7361 = vadd.f32 %v5312, %v6849
          %v7362 = vadd.f32 %v5313, %v6850
          %v7363 = vadd.f32 %v5314, %v6851
          %v7364 = vadd.f32 %v5315, %v6852
          %v7365 = vadd.f32 %v5316, %v6853
          %v7366 = vadd.f32 %v5317, %v6854
          %v7367 = vadd.f32 %v5318, %v6855
          %v7368 = vadd.f32 %v5319, %v6856
          %v7369 = vadd.f32 %v5320, %v6857
          %v7370 = vadd.f32 %v5321, %v6858
          %v7371 = vadd.f32 %v5322, %v6859
          %v7372 = vadd.f32 %v5323, %v6860
          %v7373 = vadd.f32 %v5324, %v6861
          %v7374 = vadd.f32 %v5325, %v6862
          %v7375 = vadd.f32 %v5326, %v6863
          %v7376 = vadd.f32 %v5327, %v6864
          %v7377 = vadd.f32 %v5328, %v6865
          %v7378 = vadd.f32 %v5329, %v6866
          %v7379 = vadd.f32 %v5330, %v6867
          %v7380 = vadd.f32 %v5331, %v6868
          %v7381 = vadd.f32 %v5332, %v6869
          %v7382 = vadd.f32 %v5333, %v6870
          %v7383 = vadd.f32 %v5334, %v6871
          %v7384 = vadd.f32 %v5335, %v6872
          %v7385 = vadd.f32 %v5336, %v6873
          %v7386 = vadd.f32 %v5337, %v6874
          %v7387 = vadd.f32 %v5338, %v6875
          %v7388 = vadd.f32 %v5339, %v6876
          %v7389 = vadd.f32 %v5340, %v6877
          %v7390 = vadd.f32 %v5341, %v6878
          %v7391 = vadd.f32 %v5342, %v6879
          %v7392 = vadd.f32 %v5343, %v6880
          %v7393 = vadd.f32 %v5344, %v6881
          %v7394 = vadd.f32 %v5345, %v6882
          %v7395 = vadd.f32 %v5346, %v6883
          %v7396 = vadd.f32 %v5347, %v6884
          %v7397 = vadd.f32 %v5348, %v6885
          %v7398 = vadd.f32 %v5349, %v6886
          %v7399 = vadd.f32 %v5350, %v6887
          %v7400 = vadd.f32 %v5351, %v6888
          %v7401 = vadd.f32 %v5352, %v6889
          %v7402 = vadd.f32 %v5353, %v6890
          %v7403 = vadd.f32 %v5354, %v6891
          %v7404 = vadd.f32 %v5355, %v6892
          %v7405 = vadd.f32 %v5356, %v6893
          %v7406 = vadd.f32 %v5357, %v6894
          %v7407 = vadd.f32 %v5358, %v6895
          %v7408 = vadd.f32 %v5359, %v6896
          %v7409 = vadd.f32 %v5360, %v6897
          %v7410 = vadd.f32 %v5361, %v6898
          %v7411 = vadd.f32 %v5362, %v6899
          %v7412 = vadd.f32 %v5363, %v6900
          %v7413 = vadd.f32 %v5364, %v6901
          %v7414 = vadd.f32 %v5365, %v6902
          %v7415 = vadd.f32 %v5366, %v6903
          %v7416 = vadd.f32 %v5367, %v6904
          %v7417 = vadd.f32 %v5368, %v6905
          %v7418 = vadd.f32 %v5369, %v6906
          %v7419 = vadd.f32 %v5370, %v6907
          %v7420 = vadd.f32 %v5371, %v6908
          %v7421 = vadd.f32 %v5372, %v6909
          %v7422 = vadd.f32 %v5373, %v6910
          %v7423 = vadd.f32 %v5374, %v6911
          %v7424 = vadd.f32 %v5375, %v6912
          %v7425 = vadd.f32 %v5376, %v6913
          %v7426 = vadd.f32 %v5377, %v6914
          %v7427 = vadd.f32 %v5378, %v6915
          %v7428 = vadd.f32 %v5379, %v6916
          %v7429 = vadd.f32 %v5380, %v6917
          %v7430 = vadd.f32 %v5381, %v6918
          %v7431 = vadd.f32 %v5382, %v6919
          %v7432 = vadd.f32 %v5383, %v6920
          %v7433 = vadd.f32 %v5384, %v6921
          %v7434 = vadd.f32 %v5385, %v6922
          %v7435 = vadd.f32 %v5386, %v6923
          %v7436 = vadd.f32 %v5387, %v6924
          %v7437 = vadd.f32 %v5388, %v6925
          %v7438 = vadd.f32 %v5389, %v6926
          %v7439 = vadd.f32 %v5390, %v6927
          %v7440 = vadd.f32 %v5391, %v6928
          %v7441 = vadd.f32 %v5392, %v6929
          %v7442 = vadd.f32 %v5393, %v6930
          %v7443 = vadd.f32 %v5394, %v6931
          %v7444 = vadd.f32 %v5395, %v6932
          %v7445 = vadd.f32 %v5396, %v6933
          %v7446 = vadd.f32 %v5397, %v6934
          %7447 = vst [vmem:[#allocation2] sm:$0xff] %v6935
          %7448 = vst [vmem:[#allocation2 + $0x8] sm:$0xff] %v6936
          %7449 = vst [vmem:[#allocation2 + $0x10] sm:$0xff] %v6937
          %7450 = vst [vmem:[#allocation2 + $0x18] sm:$0xff] %v6938
          %7451 = vst [vmem:[#allocation2 + $0x20] sm:$0xff] %v6939
          %7452 = vst [vmem:[#allocation2 + $0x28] sm:$0xff] %v6940
          %7453 = vst [vmem:[#allocation2 + $0x30] sm:$0xff] %v6941
          %7454 = vst [vmem:[#allocation2 + $0x38] sm:$0xff] %v6942
          %7455 = vst [vmem:[#allocation2 + $0x40] sm:$0xff] %v6943
          %7456 = vst [vmem:[#allocation2 + $0x48] sm:$0xff] %v6944
          %7457 = vst [vmem:[#allocation2 + $0x50] sm:$0xff] %v6945
          %7458 = vst [vmem:[#allocation2 + $0x58] sm:$0xff] %v6946
          %7459 = vst [vmem:[#allocation2 + $0x60] sm:$0xff] %v6947
          %7460 = vst [vmem:[#allocation2 + $0x68] sm:$0xff] %v6948
          %7461 = vst [vmem:[#allocation2 + $0x70] sm:$0xff] %v6949
          %7462 = vst [vmem:[#allocation2 + $0x78] sm:$0xff] %v6950
          %7463 = vst [vmem:[#allocation2 + $0x80] sm:$0xff] %v6951
          %7464 = vst [vmem:[#allocation2 + $0x88] sm:$0xff] %v6952
          %7465 = vst [vmem:[#allocation2 + $0x90] sm:$0xff] %v6953
          %7466 = vst [vmem:[#allocation2 + $0x98] sm:$0xff] %v6954
          %7467 = vst [vmem:[#allocation2 + $0xa0] sm:$0xff] %v6955
          %7468 = vst [vmem:[#allocation2 + $0xa8] sm:$0xff] %v6956
          %7469 = vst [vmem:[#allocation2 + $0xb0] sm:$0xff] %v6957
          %7470 = vst [vmem:[#allocation2 + $0xb8] sm:$0xff] %v6958
          %7471 = vst [vmem:[#allocation2 + $0xc0] sm:$0xff] %v6959
          %7472 = vst [vmem:[#allocation2 + $0xc8] sm:$0xff] %v6960
          %7473 = vst [vmem:[#allocation2 + $0xd0] sm:$0xff] %v6961
          %7474 = vst [vmem:[#allocation2 + $0xd8] sm:$0xff] %v6962
          %7475 = vst [vmem:[#allocation2 + $0xe0] sm:$0xff] %v6963
          %7476 = vst [vmem:[#allocation2 + $0xe8] sm:$0xff] %v6964
          %7477 = vst [vmem:[#allocation2 + $0xf0] sm:$0xff] %v6965
          %7478 = vst [vmem:[#allocation2 + $0xf8] sm:$0xff] %v6966
          %7479 = vst [vmem:[#allocation2 + $0x100] sm:$0xff] %v6967
          %7480 = vst [vmem:[#allocation2 + $0x108] sm:$0xff] %v6968
          %7481 = vst [vmem:[#allocation2 + $0x110] sm:$0xff] %v6969
          %7482 = vst [vmem:[#allocation2 + $0x118] sm:$0xff] %v6970
          %7483 = vst [vmem:[#allocation2 + $0x120] sm:$0xff] %v6971
          %7484 = vst [vmem:[#allocation2 + $0x128] sm:$0xff] %v6972
          %7485 = vst [vmem:[#allocation2 + $0x130] sm:$0xff] %v6973
          %7486 = vst [vmem:[#allocation2 + $0x138] sm:$0xff] %v6974
          %7487 = vst [vmem:[#allocation2 + $0x140] sm:$0xff] %v6975
          %7488 = vst [vmem:[#allocation2 + $0x148] sm:$0xff] %v6976
          %7489 = vst [vmem:[#allocation2 + $0x150] sm:$0xff] %v6977
          %7490 = vst [vmem:[#allocation2 + $0x158] sm:$0xff] %v6978
          %7491 = vst [vmem:[#allocation2 + $0x160] sm:$0xff] %v6979
          %7492 = vst [vmem:[#allocation2 + $0x168] sm:$0xff] %v6980
          %7493 = vst [vmem:[#allocation2 + $0x170] sm:$0xff] %v6981
          %7494 = vst [vmem:[#allocation2 + $0x178] sm:$0xff] %v6982
          %7495 = vst [vmem:[#allocation2 + $0x180] sm:$0xff] %v6983
          %7496 = vst [vmem:[#allocation2 + $0x188] sm:$0xff] %v6984
          %7497 = vst [vmem:[#allocation2 + $0x190] sm:$0xff] %v6985
          %7498 = vst [vmem:[#allocation2 + $0x198] sm:$0xff] %v6986
          %7499 = vst [vmem:[#allocation2 + $0x1a0] sm:$0xff] %v6987
          %7500 = vst [vmem:[#allocation2 + $0x1a8] sm:$0xff] %v6988
          %7501 = vst [vmem:[#allocation2 + $0x1b0] sm:$0xff] %v6989
          %7502 = vst [vmem:[#allocation2 + $0x1b8] sm:$0xff] %v6990
          %7503 = vst [vmem:[#allocation2 + $0x1c0] sm:$0xff] %v6991
          %7504 = vst [vmem:[#allocation2 + $0x1c8] sm:$0xff] %v6992
          %7505 = vst [vmem:[#allocation2 + $0x1d0] sm:$0xff] %v6993
          %7506 = vst [vmem:[#allocation2 + $0x1d8] sm:$0xff] %v6994
          %7507 = vst [vmem:[#allocation2 + $0x1e0] sm:$0xff] %v6995
          %7508 = vst [vmem:[#allocation2 + $0x1e8] sm:$0xff] %v6996
          %7509 = vst [vmem:[#allocation2 + $0x1f0] sm:$0xff] %v6997
          %7510 = vst [vmem:[#allocation2 + $0x1f8] sm:$0xff] %v6998
          %7511 = vst [vmem:[#allocation2 + $0x200] sm:$0xff] %v6999
          %7512 = vst [vmem:[#allocation2 + $0x208] sm:$0xff] %v7000
          %7513 = vst [vmem:[#allocation2 + $0x210] sm:$0xff] %v7001
          %7514 = vst [vmem:[#allocation2 + $0x218] sm:$0xff] %v7002
          %7515 = vst [vmem:[#allocation2 + $0x220] sm:$0xff] %v7003
          %7516 = vst [vmem:[#allocation2 + $0x228] sm:$0xff] %v7004
          %7517 = vst [vmem:[#allocation2 + $0x230] sm:$0xff] %v7005
          %7518 = vst [vmem:[#allocation2 + $0x238] sm:$0xff] %v7006
          %7519 = vst [vmem:[#allocation2 + $0x240] sm:$0xff] %v7007
          %7520 = vst [vmem:[#allocation2 + $0x248] sm:$0xff] %v7008
          %7521 = vst [vmem:[#allocation2 + $0x250] sm:$0xff] %v7009
          %7522 = vst [vmem:[#allocation2 + $0x258] sm:$0xff] %v7010
          %7523 = vst [vmem:[#allocation2 + $0x260] sm:$0xff] %v7011
          %7524 = vst [vmem:[#allocation2 + $0x268] sm:$0xff] %v7012
          %7525 = vst [vmem:[#allocation2 + $0x270] sm:$0xff] %v7013
          %7526 = vst [vmem:[#allocation2 + $0x278] sm:$0xff] %v7014
          %7527 = vst [vmem:[#allocation2 + $0x280] sm:$0xff] %v7015
          %7528 = vst [vmem:[#allocation2 + $0x288] sm:$0xff] %v7016
          %7529 = vst [vmem:[#allocation2 + $0x290] sm:$0xff] %v7017
          %7530 = vst [vmem:[#allocation2 + $0x298] sm:$0xff] %v7018
          %7531 = vst [vmem:[#allocation2 + $0x2a0] sm:$0xff] %v7019
          %7532 = vst [vmem:[#allocation2 + $0x2a8] sm:$0xff] %v7020
          %7533 = vst [vmem:[#allocation2 + $0x2b0] sm:$0xff] %v7021
          %7534 = vst [vmem:[#allocation2 + $0x2b8] sm:$0xff] %v7022
          %7535 = vst [vmem:[#allocation2 + $0x2c0] sm:$0xff] %v7023
          %7536 = vst [vmem:[#allocation2 + $0x2c8] sm:$0xff] %v7024
          %7537 = vst [vmem:[#allocation2 + $0x2d0] sm:$0xff] %v7025
          %7538 = vst [vmem:[#allocation2 + $0x2d8] sm:$0xff] %v7026
          %7539 = vst [vmem:[#allocation2 + $0x2e0] sm:$0xff] %v7027
          %7540 = vst [vmem:[#allocation2 + $0x2e8] sm:$0xff] %v7028
          %7541 = vst [vmem:[#allocation2 + $0x2f0] sm:$0xff] %v7029
          %7542 = vst [vmem:[#allocation2 + $0x2f8] sm:$0xff] %v7030
          %7543 = vst [vmem:[#allocation2 + $0x300] sm:$0xff] %v7031
          %7544 = vst [vmem:[#allocation2 + $0x308] sm:$0xff] %v7032
          %7545 = vst [vmem:[#allocation2 + $0x310] sm:$0xff] %v7033
          %7546 = vst [vmem:[#allocation2 + $0x318] sm:$0xff] %v7034
          %7547 = vst [vmem:[#allocation2 + $0x320] sm:$0xff] %v7035
          %7548 = vst [vmem:[#allocation2 + $0x328] sm:$0xff] %v7036
          %7549 = vst [vmem:[#allocation2 + $0x330] sm:$0xff] %v7037
          %7550 = vst [vmem:[#allocation2 + $0x338] sm:$0xff] %v7038
          %7551 = vst [vmem:[#allocation2 + $0x340] sm:$0xff] %v7039
          %7552 = vst [vmem:[#allocation2 + $0x348] sm:$0xff] %v7040
          %7553 = vst [vmem:[#allocation2 + $0x350] sm:$0xff] %v7041
          %7554 = vst [vmem:[#allocation2 + $0x358] sm:$0xff] %v7042
          %7555 = vst [vmem:[#allocation2 + $0x360] sm:$0xff] %v7043
          %7556 = vst [vmem:[#allocation2 + $0x368] sm:$0xff] %v7044
          %7557 = vst [vmem:[#allocation2 + $0x370] sm:$0xff] %v7045
          %7558 = vst [vmem:[#allocation2 + $0x378] sm:$0xff] %v7046
          %7559 = vst [vmem:[#allocation2 + $0x380] sm:$0xff] %v7047
          %7560 = vst [vmem:[#allocation2 + $0x388] sm:$0xff] %v7048
          %7561 = vst [vmem:[#allocation2 + $0x390] sm:$0xff] %v7049
          %7562 = vst [vmem:[#allocation2 + $0x398] sm:$0xff] %v7050
          %7563 = vst [vmem:[#allocation2 + $0x3a0] sm:$0xff] %v7051
          %7564 = vst [vmem:[#allocation2 + $0x3a8] sm:$0xff] %v7052
          %7565 = vst [vmem:[#allocation2 + $0x3b0] sm:$0xff] %v7053
          %7566 = vst [vmem:[#allocation2 + $0x3b8] sm:$0xff] %v7054
          %7567 = vst [vmem:[#allocation2 + $0x3c0] sm:$0xff] %v7055
          %7568 = vst [vmem:[#allocation2 + $0x3c8] sm:$0xff] %v7056
          %7569 = vst [vmem:[#allocation2 + $0x3d0] sm:$0xff] %v7057
          %7570 = vst [vmem:[#allocation2 + $0x3d8] sm:$0xff] %v7058
          %7571 = vst [vmem:[#allocation2 + $0x3e0] sm:$0xff] %v7059
          %7572 = vst [vmem:[#allocation2 + $0x3e8] sm:$0xff] %v7060
          %7573 = vst [vmem:[#allocation2 + $0x3f0] sm:$0xff] %v7061
          %7574 = vst [vmem:[#allocation2 + $0x3f8] sm:$0xff] %v7062
          %7575 = vst [vmem:[#allocation2 + $0x400] sm:$0xff] %v7063
          %7576 = vst [vmem:[#allocation2 + $0x408] sm:$0xff] %v7064
          %7577 = vst [vmem:[#allocation2 + $0x410] sm:$0xff] %v7065
          %7578 = vst [vmem:[#allocation2 + $0x418] sm:$0xff] %v7066
          %7579 = vst [vmem:[#allocation2 + $0x420] sm:$0xff] %v7067
          %7580 = vst [vmem:[#allocation2 + $0x428] sm:$0xff] %v7068
          %7581 = vst [vmem:[#allocation2 + $0x430] sm:$0xff] %v7069
          %7582 = vst [vmem:[#allocation2 + $0x438] sm:$0xff] %v7070
          %7583 = vst [vmem:[#allocation2 + $0x440] sm:$0xff] %v7071
          %7584 = vst [vmem:[#allocation2 + $0x448] sm:$0xff] %v7072
          %7585 = vst [vmem:[#allocation2 + $0x450] sm:$0xff] %v7073
          %7586 = vst [vmem:[#allocation2 + $0x458] sm:$0xff] %v7074
          %7587 = vst [vmem:[#allocation2 + $0x460] sm:$0xff] %v7075
          %7588 = vst [vmem:[#allocation2 + $0x468] sm:$0xff] %v7076
          %7589 = vst [vmem:[#allocation2 + $0x470] sm:$0xff] %v7077
          %7590 = vst [vmem:[#allocation2 + $0x478] sm:$0xff] %v7078
          %7591 = vst [vmem:[#allocation2 + $0x480] sm:$0xff] %v7079
          %7592 = vst [vmem:[#allocation2 + $0x488] sm:$0xff] %v7080
          %7593 = vst [vmem:[#allocation2 + $0x490] sm:$0xff] %v7081
          %7594 = vst [vmem:[#allocation2 + $0x498] sm:$0xff] %v7082
          %7595 = vst [vmem:[#allocation2 + $0x4a0] sm:$0xff] %v7083
          %7596 = vst [vmem:[#allocation2 + $0x4a8] sm:$0xff] %v7084
          %7597 = vst [vmem:[#allocation2 + $0x4b0] sm:$0xff] %v7085
          %7598 = vst [vmem:[#allocation2 + $0x4b8] sm:$0xff] %v7086
          %7599 = vst [vmem:[#allocation2 + $0x4c0] sm:$0xff] %v7087
          %7600 = vst [vmem:[#allocation2 + $0x4c8] sm:$0xff] %v7088
          %7601 = vst [vmem:[#allocation2 + $0x4d0] sm:$0xff] %v7089
          %7602 = vst [vmem:[#allocation2 + $0x4d8] sm:$0xff] %v7090
          %7603 = vst [vmem:[#allocation2 + $0x4e0] sm:$0xff] %v7091
          %7604 = vst [vmem:[#allocation2 + $0x4e8] sm:$0xff] %v7092
          %7605 = vst [vmem:[#allocation2 + $0x4f0] sm:$0xff] %v7093
          %7606 = vst [vmem:[#allocation2 + $0x4f8] sm:$0xff] %v7094
          %7607 = vst [vmem:[#allocation2 + $0x500] sm:$0xff] %v7095
          %7608 = vst [vmem:[#allocation2 + $0x508] sm:$0xff] %v7096
          %7609 = vst [vmem:[#allocation2 + $0x510] sm:$0xff] %v7097
          %7610 = vst [vmem:[#allocation2 + $0x518] sm:$0xff] %v7098
          %7611 = vst [vmem:[#allocation2 + $0x520] sm:$0xff] %v7099
          %7612 = vst [vmem:[#allocation2 + $0x528] sm:$0xff] %v7100
          %7613 = vst [vmem:[#allocation2 + $0x530] sm:$0xff] %v7101
          %7614 = vst [vmem:[#allocation2 + $0x538] sm:$0xff] %v7102
          %7615 = vst [vmem:[#allocation2 + $0x540] sm:$0xff] %v7103
          %7616 = vst [vmem:[#allocation2 + $0x548] sm:$0xff] %v7104
          %7617 = vst [vmem:[#allocation2 + $0x550] sm:$0xff] %v7105
          %7618 = vst [vmem:[#allocation2 + $0x558] sm:$0xff] %v7106
          %7619 = vst [vmem:[#allocation2 + $0x560] sm:$0xff] %v7107
          %7620 = vst [vmem:[#allocation2 + $0x568] sm:$0xff] %v7108
          %7621 = vst [vmem:[#allocation2 + $0x570] sm:$0xff] %v7109
          %7622 = vst [vmem:[#allocation2 + $0x578] sm:$0xff] %v7110
          %7623 = vst [vmem:[#allocation2 + $0x580] sm:$0xff] %v7111
          %7624 = vst [vmem:[#allocation2 + $0x588] sm:$0xff] %v7112
          %7625 = vst [vmem:[#allocation2 + $0x590] sm:$0xff] %v7113
          %7626 = vst [vmem:[#allocation2 + $0x598] sm:$0xff] %v7114
          %7627 = vst [vmem:[#allocation2 + $0x5a0] sm:$0xff] %v7115
          %7628 = vst [vmem:[#allocation2 + $0x5a8] sm:$0xff] %v7116
          %7629 = vst [vmem:[#allocation2 + $0x5b0] sm:$0xff] %v7117
          %7630 = vst [vmem:[#allocation2 + $0x5b8] sm:$0xff] %v7118
          %7631 = vst [vmem:[#allocation2 + $0x5c0] sm:$0xff] %v7119
          %7632 = vst [vmem:[#allocation2 + $0x5c8] sm:$0xff] %v7120
          %7633 = vst [vmem:[#allocation2 + $0x5d0] sm:$0xff] %v7121
          %7634 = vst [vmem:[#allocation2 + $0x5d8] sm:$0xff] %v7122
          %7635 = vst [vmem:[#allocation2 + $0x5e0] sm:$0xff] %v7123
          %7636 = vst [vmem:[#allocation2 + $0x5e8] sm:$0xff] %v7124
          %7637 = vst [vmem:[#allocation2 + $0x5f0] sm:$0xff] %v7125
          %7638 = vst [vmem:[#allocation2 + $0x5f8] sm:$0xff] %v7126
          %7639 = vst [vmem:[#allocation2 + $0x600] sm:$0xff] %v7127
          %7640 = vst [vmem:[#allocation2 + $0x608] sm:$0xff] %v7128
          %7641 = vst [vmem:[#allocation2 + $0x610] sm:$0xff] %v7129
          %7642 = vst [vmem:[#allocation2 + $0x618] sm:$0xff] %v7130
          %7643 = vst [vmem:[#allocation2 + $0x620] sm:$0xff] %v7131
          %7644 = vst [vmem:[#allocation2 + $0x628] sm:$0xff] %v7132
          %7645 = vst [vmem:[#allocation2 + $0x630] sm:$0xff] %v7133
          %7646 = vst [vmem:[#allocation2 + $0x638] sm:$0xff] %v7134
          %7647 = vst [vmem:[#allocation2 + $0x640] sm:$0xff] %v7135
          %7648 = vst [vmem:[#allocation2 + $0x648] sm:$0xff] %v7136
          %7649 = vst [vmem:[#allocation2 + $0x650] sm:$0xff] %v7137
          %7650 = vst [vmem:[#allocation2 + $0x658] sm:$0xff] %v7138
          %7651 = vst [vmem:[#allocation2 + $0x660] sm:$0xff] %v7139
          %7652 = vst [vmem:[#allocation2 + $0x668] sm:$0xff] %v7140
          %7653 = vst [vmem:[#allocation2 + $0x670] sm:$0xff] %v7141
          %7654 = vst [vmem:[#allocation2 + $0x678] sm:$0xff] %v7142
          %7655 = vst [vmem:[#allocation2 + $0x680] sm:$0xff] %v7143
          %7656 = vst [vmem:[#allocation2 + $0x688] sm:$0xff] %v7144
          %7657 = vst [vmem:[#allocation2 + $0x690] sm:$0xff] %v7145
          %7658 = vst [vmem:[#allocation2 + $0x698] sm:$0xff] %v7146
          %7659 = vst [vmem:[#allocation2 + $0x6a0] sm:$0xff] %v7147
          %7660 = vst [vmem:[#allocation2 + $0x6a8] sm:$0xff] %v7148
          %7661 = vst [vmem:[#allocation2 + $0x6b0] sm:$0xff] %v7149
          %7662 = vst [vmem:[#allocation2 + $0x6b8] sm:$0xff] %v7150
          %7663 = vst [vmem:[#allocation2 + $0x6c0] sm:$0xff] %v7151
          %7664 = vst [vmem:[#allocation2 + $0x6c8] sm:$0xff] %v7152
          %7665 = vst [vmem:[#allocation2 + $0x6d0] sm:$0xff] %v7153
          %7666 = vst [vmem:[#allocation2 + $0x6d8] sm:$0xff] %v7154
          %7667 = vst [vmem:[#allocation2 + $0x6e0] sm:$0xff] %v7155
          %7668 = vst [vmem:[#allocation2 + $0x6e8] sm:$0xff] %v7156
          %7669 = vst [vmem:[#allocation2 + $0x6f0] sm:$0xff] %v7157
          %7670 = vst [vmem:[#allocation2 + $0x6f8] sm:$0xff] %v7158
          %7671 = vst [vmem:[#allocation2 + $0x700] sm:$0xff] %v7159
          %7672 = vst [vmem:[#allocation2 + $0x708] sm:$0xff] %v7160
          %7673 = vst [vmem:[#allocation2 + $0x710] sm:$0xff] %v7161
          %7674 = vst [vmem:[#allocation2 + $0x718] sm:$0xff] %v7162
          %7675 = vst [vmem:[#allocation2 + $0x720] sm:$0xff] %v7163
          %7676 = vst [vmem:[#allocation2 + $0x728] sm:$0xff] %v7164
          %7677 = vst [vmem:[#allocation2 + $0x730] sm:$0xff] %v7165
          %7678 = vst [vmem:[#allocation2 + $0x738] sm:$0xff] %v7166
          %7679 = vst [vmem:[#allocation2 + $0x740] sm:$0xff] %v7167
          %7680 = vst [vmem:[#allocation2 + $0x748] sm:$0xff] %v7168
          %7681 = vst [vmem:[#allocation2 + $0x750] sm:$0xff] %v7169
          %7682 = vst [vmem:[#allocation2 + $0x758] sm:$0xff] %v7170
          %7683 = vst [vmem:[#allocation2 + $0x760] sm:$0xff] %v7171
          %7684 = vst [vmem:[#allocation2 + $0x768] sm:$0xff] %v7172
          %7685 = vst [vmem:[#allocation2 + $0x770] sm:$0xff] %v7173
          %7686 = vst [vmem:[#allocation2 + $0x778] sm:$0xff] %v7174
          %7687 = vst [vmem:[#allocation2 + $0x780] sm:$0xff] %v7175
          %7688 = vst [vmem:[#allocation2 + $0x788] sm:$0xff] %v7176
          %7689 = vst [vmem:[#allocation2 + $0x790] sm:$0xff] %v7177
          %7690 = vst [vmem:[#allocation2 + $0x798] sm:$0xff] %v7178
          %7691 = vst [vmem:[#allocation2 + $0x7a0] sm:$0xff] %v7179
          %7692 = vst [vmem:[#allocation2 + $0x7a8] sm:$0xff] %v7180
          %7693 = vst [vmem:[#allocation2 + $0x7b0] sm:$0xff] %v7181
          %7694 = vst [vmem:[#allocation2 + $0x7b8] sm:$0xff] %v7182
          %7695 = vst [vmem:[#allocation2 + $0x7c0] sm:$0xff] %v7183
          %7696 = vst [vmem:[#allocation2 + $0x7c8] sm:$0xff] %v7184
          %7697 = vst [vmem:[#allocation2 + $0x7d0] sm:$0xff] %v7185
          %7698 = vst [vmem:[#allocation2 + $0x7d8] sm:$0xff] %v7186
          %7699 = vst [vmem:[#allocation2 + $0x7e0] sm:$0xff] %v7187
          %7700 = vst [vmem:[#allocation2 + $0x7e8] sm:$0xff] %v7188
          %7701 = vst [vmem:[#allocation2 + $0x7f0] sm:$0xff] %v7189
          %7702 = vst [vmem:[#allocation2 + $0x7f8] sm:$0xff] %v7190
          %7703 = vst [vmem:[#allocation2 + $0x800] sm:$0xff] %v7191
          %7704 = vst [vmem:[#allocation2 + $0x808] sm:$0xff] %v7192
          %7705 = vst [vmem:[#allocation2 + $0x810] sm:$0xff] %v7193
          %7706 = vst [vmem:[#allocation2 + $0x818] sm:$0xff] %v7194
          %7707 = vst [vmem:[#allocation2 + $0x820] sm:$0xff] %v7195
          %7708 = vst [vmem:[#allocation2 + $0x828] sm:$0xff] %v7196
          %7709 = vst [vmem:[#allocation2 + $0x830] sm:$0xff] %v7197
          %7710 = vst [vmem:[#allocation2 + $0x838] sm:$0xff] %v7198
          %7711 = vst [vmem:[#allocation2 + $0x840] sm:$0xff] %v7199
          %7712 = vst [vmem:[#allocation2 + $0x848] sm:$0xff] %v7200
          %7713 = vst [vmem:[#allocation2 + $0x850] sm:$0xff] %v7201
          %7714 = vst [vmem:[#allocation2 + $0x858] sm:$0xff] %v7202
          %7715 = vst [vmem:[#allocation2 + $0x860] sm:$0xff] %v7203
          %7716 = vst [vmem:[#allocation2 + $0x868] sm:$0xff] %v7204
          %7717 = vst [vmem:[#allocation2 + $0x870] sm:$0xff] %v7205
          %7718 = vst [vmem:[#allocation2 + $0x878] sm:$0xff] %v7206
          %7719 = vst [vmem:[#allocation2 + $0x880] sm:$0xff] %v7207
          %7720 = vst [vmem:[#allocation2 + $0x888] sm:$0xff] %v7208
          %7721 = vst [vmem:[#allocation2 + $0x890] sm:$0xff] %v7209
          %7722 = vst [vmem:[#allocation2 + $0x898] sm:$0xff] %v7210
          %7723 = vst [vmem:[#allocation2 + $0x8a0] sm:$0xff] %v7211
          %7724 = vst [vmem:[#allocation2 + $0x8a8] sm:$0xff] %v7212
          %7725 = vst [vmem:[#allocation2 + $0x8b0] sm:$0xff] %v7213
          %7726 = vst [vmem:[#allocation2 + $0x8b8] sm:$0xff] %v7214
          %7727 = vst [vmem:[#allocation2 + $0x8c0] sm:$0xff] %v7215
          %7728 = vst [vmem:[#allocation2 + $0x8c8] sm:$0xff] %v7216
          %7729 = vst [vmem:[#allocation2 + $0x8d0] sm:$0xff] %v7217
          %7730 = vst [vmem:[#allocation2 + $0x8d8] sm:$0xff] %v7218
          %7731 = vst [vmem:[#allocation2 + $0x8e0] sm:$0xff] %v7219
          %7732 = vst [vmem:[#allocation2 + $0x8e8] sm:$0xff] %v7220
          %7733 = vst [vmem:[#allocation2 + $0x8f0] sm:$0xff] %v7221
          %7734 = vst [vmem:[#allocation2 + $0x8f8] sm:$0xff] %v7222
          %7735 = vst [vmem:[#allocation2 + $0x900] sm:$0xff] %v7223
          %7736 = vst [vmem:[#allocation2 + $0x908] sm:$0xff] %v7224
          %7737 = vst [vmem:[#allocation2 + $0x910] sm:$0xff] %v7225
          %7738 = vst [vmem:[#allocation2 + $0x918] sm:$0xff] %v7226
          %7739 = vst [vmem:[#allocation2 + $0x920] sm:$0xff] %v7227
          %7740 = vst [vmem:[#allocation2 + $0x928] sm:$0xff] %v7228
          %7741 = vst [vmem:[#allocation2 + $0x930] sm:$0xff] %v7229
          %7742 = vst [vmem:[#allocation2 + $0x938] sm:$0xff] %v7230
          %7743 = vst [vmem:[#allocation2 + $0x940] sm:$0xff] %v7231
          %7744 = vst [vmem:[#allocation2 + $0x948] sm:$0xff] %v7232
          %7745 = vst [vmem:[#allocation2 + $0x950] sm:$0xff] %v7233
          %7746 = vst [vmem:[#allocation2 + $0x958] sm:$0xff] %v7234
          %7747 = vst [vmem:[#allocation2 + $0x960] sm:$0xff] %v7235
          %7748 = vst [vmem:[#allocation2 + $0x968] sm:$0xff] %v7236
          %7749 = vst [vmem:[#allocation2 + $0x970] sm:$0xff] %v7237
          %7750 = vst [vmem:[#allocation2 + $0x978] sm:$0xff] %v7238
          %7751 = vst [vmem:[#allocation2 + $0x980] sm:$0xff] %v7239
          %7752 = vst [vmem:[#allocation2 + $0x988] sm:$0xff] %v7240
          %7753 = vst [vmem:[#allocation2 + $0x990] sm:$0xff] %v7241
          %7754 = vst [vmem:[#allocation2 + $0x998] sm:$0xff] %v7242
          %7755 = vst [vmem:[#allocation2 + $0x9a0] sm:$0xff] %v7243
          %7756 = vst [vmem:[#allocation2 + $0x9a8] sm:$0xff] %v7244
          %7757 = vst [vmem:[#allocation2 + $0x9b0] sm:$0xff] %v7245
          %7758 = vst [vmem:[#allocation2 + $0x9b8] sm:$0xff] %v7246
          %7759 = vst [vmem:[#allocation2 + $0x9c0] sm:$0xff] %v7247
          %7760 = vst [vmem:[#allocation2 + $0x9c8] sm:$0xff] %v7248
          %7761 = vst [vmem:[#allocation2 + $0x9d0] sm:$0xff] %v7249
          %7762 = vst [vmem:[#allocation2 + $0x9d8] sm:$0xff] %v7250
          %7763 = vst [vmem:[#allocation2 + $0x9e0] sm:$0xff] %v7251
          %7764 = vst [vmem:[#allocation2 + $0x9e8] sm:$0xff] %v7252
          %7765 = vst [vmem:[#allocation2 + $0x9f0] sm:$0xff] %v7253
          %7766 = vst [vmem:[#allocation2 + $0x9f8] sm:$0xff] %v7254
          %7767 = vst [vmem:[#allocation2 + $0xa00] sm:$0xff] %v7255
          %7768 = vst [vmem:[#allocation2 + $0xa08] sm:$0xff] %v7256
          %7769 = vst [vmem:[#allocation2 + $0xa10] sm:$0xff] %v7257
          %7770 = vst [vmem:[#allocation2 + $0xa18] sm:$0xff] %v7258
          %7771 = vst [vmem:[#allocation2 + $0xa20] sm:$0xff] %v7259
          %7772 = vst [vmem:[#allocation2 + $0xa28] sm:$0xff] %v7260
          %7773 = vst [vmem:[#allocation2 + $0xa30] sm:$0xff] %v7261
          %7774 = vst [vmem:[#allocation2 + $0xa38] sm:$0xff] %v7262
          %7775 = vst [vmem:[#allocation2 + $0xa40] sm:$0xff] %v7263
          %7776 = vst [vmem:[#allocation2 + $0xa48] sm:$0xff] %v7264
          %7777 = vst [vmem:[#allocation2 + $0xa50] sm:$0xff] %v7265
          %7778 = vst [vmem:[#allocation2 + $0xa58] sm:$0xff] %v7266
          %7779 = vst [vmem:[#allocation2 + $0xa60] sm:$0xff] %v7267
          %7780 = vst [vmem:[#allocation2 + $0xa68] sm:$0xff] %v7268
          %7781 = vst [vmem:[#allocation2 + $0xa70] sm:$0xff] %v7269
          %7782 = vst [vmem:[#allocation2 + $0xa78] sm:$0xff] %v7270
          %7783 = vst [vmem:[#allocation2 + $0xa80] sm:$0xff] %v7271
          %7784 = vst [vmem:[#allocation2 + $0xa88] sm:$0xff] %v7272
          %7785 = vst [vmem:[#allocation2 + $0xa90] sm:$0xff] %v7273
          %7786 = vst [vmem:[#allocation2 + $0xa98] sm:$0xff] %v7274
          %7787 = vst [vmem:[#allocation2 + $0xaa0] sm:$0xff] %v7275
          %7788 = vst [vmem:[#allocation2 + $0xaa8] sm:$0xff] %v7276
          %7789 = vst [vmem:[#allocation2 + $0xab0] sm:$0xff] %v7277
          %7790 = vst [vmem:[#allocation2 + $0xab8] sm:$0xff] %v7278
          %7791 = vst [vmem:[#allocation2 + $0xac0] sm:$0xff] %v7279
          %7792 = vst [vmem:[#allocation2 + $0xac8] sm:$0xff] %v7280
          %7793 = vst [vmem:[#allocation2 + $0xad0] sm:$0xff] %v7281
          %7794 = vst [vmem:[#allocation2 + $0xad8] sm:$0xff] %v7282
          %7795 = vst [vmem:[#allocation2 + $0xae0] sm:$0xff] %v7283
          %7796 = vst [vmem:[#allocation2 + $0xae8] sm:$0xff] %v7284
          %7797 = vst [vmem:[#allocation2 + $0xaf0] sm:$0xff] %v7285
          %7798 = vst [vmem:[#allocation2 + $0xaf8] sm:$0xff] %v7286
          %7799 = vst [vmem:[#allocation2 + $0xb00] sm:$0xff] %v7287
          %7800 = vst [vmem:[#allocation2 + $0xb08] sm:$0xff] %v7288
          %7801 = vst [vmem:[#allocation2 + $0xb10] sm:$0xff] %v7289
          %7802 = vst [vmem:[#allocation2 + $0xb18] sm:$0xff] %v7290
          %7803 = vst [vmem:[#allocation2 + $0xb20] sm:$0xff] %v7291
          %7804 = vst [vmem:[#allocation2 + $0xb28] sm:$0xff] %v7292
          %7805 = vst [vmem:[#allocation2 + $0xb30] sm:$0xff] %v7293
          %7806 = vst [vmem:[#allocation2 + $0xb38] sm:$0xff] %v7294
          %7807 = vst [vmem:[#allocation2 + $0xb40] sm:$0xff] %v7295
          %7808 = vst [vmem:[#allocation2 + $0xb48] sm:$0xff] %v7296
          %7809 = vst [vmem:[#allocation2 + $0xb50] sm:$0xff] %v7297
          %7810 = vst [vmem:[#allocation2 + $0xb58] sm:$0xff] %v7298
          %7811 = vst [vmem:[#allocation2 + $0xb60] sm:$0xff] %v7299
          %7812 = vst [vmem:[#allocation2 + $0xb68] sm:$0xff] %v7300
          %7813 = vst [vmem:[#allocation2 + $0xb70] sm:$0xff] %v7301
          %7814 = vst [vmem:[#allocation2 + $0xb78] sm:$0xff] %v7302
          %7815 = vst [vmem:[#allocation2 + $0xb80] sm:$0xff] %v7303
          %7816 = vst [vmem:[#allocation2 + $0xb88] sm:$0xff] %v7304
          %7817 = vst [vmem:[#allocation2 + $0xb90] sm:$0xff] %v7305
          %7818 = vst [vmem:[#allocation2 + $0xb98] sm:$0xff] %v7306
          %7819 = vst [vmem:[#allocation2 + $0xba0] sm:$0xff] %v7307
          %7820 = vst [vmem:[#allocation2 + $0xba8] sm:$0xff] %v7308
          %7821 = vst [vmem:[#allocation2 + $0xbb0] sm:$0xff] %v7309
          %7822 = vst [vmem:[#allocation2 + $0xbb8] sm:$0xff] %v7310
          %7823 = vst [vmem:[#allocation2 + $0xbc0] sm:$0xff] %v7311
          %7824 = vst [vmem:[#allocation2 + $0xbc8] sm:$0xff] %v7312
          %7825 = vst [vmem:[#allocation2 + $0xbd0] sm:$0xff] %v7313
          %7826 = vst [vmem:[#allocation2 + $0xbd8] sm:$0xff] %v7314
          %7827 = vst [vmem:[#allocation2 + $0xbe0] sm:$0xff] %v7315
          %7828 = vst [vmem:[#allocation2 + $0xbe8] sm:$0xff] %v7316
          %7829 = vst [vmem:[#allocation2 + $0xbf0] sm:$0xff] %v7317
          %7830 = vst [vmem:[#allocation2 + $0xbf8] sm:$0xff] %v7318
          %7831 = vst [vmem:[#allocation2 + $0xc00] sm:$0xff] %v7319
          %7832 = vst [vmem:[#allocation2 + $0xc08] sm:$0xff] %v7320
          %7833 = vst [vmem:[#allocation2 + $0xc10] sm:$0xff] %v7321
          %7834 = vst [vmem:[#allocation2 + $0xc18] sm:$0xff] %v7322
          %7835 = vst [vmem:[#allocation2 + $0xc20] sm:$0xff] %v7323
          %7836 = vst [vmem:[#allocation2 + $0xc28] sm:$0xff] %v7324
          %7837 = vst [vmem:[#allocation2 + $0xc30] sm:$0xff] %v7325
          %7838 = vst [vmem:[#allocation2 + $0xc38] sm:$0xff] %v7326
          %7839 = vst [vmem:[#allocation2 + $0xc40] sm:$0xff] %v7327
          %7840 = vst [vmem:[#allocation2 + $0xc48] sm:$0xff] %v7328
          %7841 = vst [vmem:[#allocation2 + $0xc50] sm:$0xff] %v7329
          %7842 = vst [vmem:[#allocation2 + $0xc58] sm:$0xff] %v7330
          %7843 = vst [vmem:[#allocation2 + $0xc60] sm:$0xff] %v7331
          %7844 = vst [vmem:[#allocation2 + $0xc68] sm:$0xff] %v7332
          %7845 = vst [vmem:[#allocation2 + $0xc70] sm:$0xff] %v7333
          %7846 = vst [vmem:[#allocation2 + $0xc78] sm:$0xff] %v7334
          %7847 = vst [vmem:[#allocation2 + $0xc80] sm:$0xff] %v7335
          %7848 = vst [vmem:[#allocation2 + $0xc88] sm:$0xff] %v7336
          %7849 = vst [vmem:[#allocation2 + $0xc90] sm:$0xff] %v7337
          %7850 = vst [vmem:[#allocation2 + $0xc98] sm:$0xff] %v7338
          %7851 = vst [vmem:[#allocation2 + $0xca0] sm:$0xff] %v7339
          %7852 = vst [vmem:[#allocation2 + $0xca8] sm:$0xff] %v7340
          %7853 = vst [vmem:[#allocation2 + $0xcb0] sm:$0xff] %v7341
          %7854 = vst [vmem:[#allocation2 + $0xcb8] sm:$0xff] %v7342
          %7855 = vst [vmem:[#allocation2 + $0xcc0] sm:$0xff] %v7343
          %7856 = vst [vmem:[#allocation2 + $0xcc8] sm:$0xff] %v7344
          %7857 = vst [vmem:[#allocation2 + $0xcd0] sm:$0xff] %v7345
          %7858 = vst [vmem:[#allocation2 + $0xcd8] sm:$0xff] %v7346
          %7859 = vst [vmem:[#allocation2 + $0xce0] sm:$0xff] %v7347
          %7860 = vst [vmem:[#allocation2 + $0xce8] sm:$0xff] %v7348
          %7861 = vst [vmem:[#allocation2 + $0xcf0] sm:$0xff] %v7349
          %7862 = vst [vmem:[#allocation2 + $0xcf8] sm:$0xff] %v7350
          %7863 = vst [vmem:[#allocation2 + $0xd00] sm:$0xff] %v7351
          %7864 = vst [vmem:[#allocation2 + $0xd08] sm:$0xff] %v7352
          %7865 = vst [vmem:[#allocation2 + $0xd10] sm:$0xff] %v7353
          %7866 = vst [vmem:[#allocation2 + $0xd18] sm:$0xff] %v7354
          %7867 = vst [vmem:[#allocation2 + $0xd20] sm:$0xff] %v7355
          %7868 = vst [vmem:[#allocation2 + $0xd28] sm:$0xff] %v7356
          %7869 = vst [vmem:[#allocation2 + $0xd30] sm:$0xff] %v7357
          %7870 = vst [vmem:[#allocation2 + $0xd38] sm:$0xff] %v7358
          %7871 = vst [vmem:[#allocation2 + $0xd40] sm:$0xff] %v7359
          %7872 = vst [vmem:[#allocation2 + $0xd48] sm:$0xff] %v7360
          %7873 = vst [vmem:[#allocation2 + $0xd50] sm:$0xff] %v7361
          %7874 = vst [vmem:[#allocation2 + $0xd58] sm:$0xff] %v7362
          %7875 = vst [vmem:[#allocation2 + $0xd60] sm:$0xff] %v7363
          %7876 = vst [vmem:[#allocation2 + $0xd68] sm:$0xff] %v7364
          %7877 = vst [vmem:[#allocation2 + $0xd70] sm:$0xff] %v7365
          %7878 = vst [vmem:[#allocation2 + $0xd78] sm:$0xff] %v7366
          %7879 = vst [vmem:[#allocation2 + $0xd80] sm:$0xff] %v7367
          %7880 = vst [vmem:[#allocation2 + $0xd88] sm:$0xff] %v7368
          %7881 = vst [vmem:[#allocation2 + $0xd90] sm:$0xff] %v7369
          %7882 = vst [vmem:[#allocation2 + $0xd98] sm:$0xff] %v7370
          %7883 = vst [vmem:[#allocation2 + $0xda0] sm:$0xff] %v7371
          %7884 = vst [vmem:[#allocation2 + $0xda8] sm:$0xff] %v7372
          %7885 = vst [vmem:[#allocation2 + $0xdb0] sm:$0xff] %v7373
          %7886 = vst [vmem:[#allocation2 + $0xdb8] sm:$0xff] %v7374
          %7887 = vst [vmem:[#allocation2 + $0xdc0] sm:$0xff] %v7375
          %7888 = vst [vmem:[#allocation2 + $0xdc8] sm:$0xff] %v7376
          %7889 = vst [vmem:[#allocation2 + $0xdd0] sm:$0xff] %v7377
          %7890 = vst [vmem:[#allocation2 + $0xdd8] sm:$0xff] %v7378
          %7891 = vst [vmem:[#allocation2 + $0xde0] sm:$0xff] %v7379
          %7892 = vst [vmem:[#allocation2 + $0xde8] sm:$0xff] %v7380
          %7893 = vst [vmem:[#allocation2 + $0xdf0] sm:$0xff] %v7381
          %7894 = vst [vmem:[#allocation2 + $0xdf8] sm:$0xff] %v7382
          %7895 = vst [vmem:[#allocation2 + $0xe00] sm:$0xff] %v7383
          %7896 = vst [vmem:[#allocation2 + $0xe08] sm:$0xff] %v7384
          %7897 = vst [vmem:[#allocation2 + $0xe10] sm:$0xff] %v7385
          %7898 = vst [vmem:[#allocation2 + $0xe18] sm:$0xff] %v7386
          %7899 = vst [vmem:[#allocation2 + $0xe20] sm:$0xff] %v7387
          %7900 = vst [vmem:[#allocation2 + $0xe28] sm:$0xff] %v7388
          %7901 = vst [vmem:[#allocation2 + $0xe30] sm:$0xff] %v7389
          %7902 = vst [vmem:[#allocation2 + $0xe38] sm:$0xff] %v7390
          %7903 = vst [vmem:[#allocation2 + $0xe40] sm:$0xff] %v7391
          %7904 = vst [vmem:[#allocation2 + $0xe48] sm:$0xff] %v7392
          %7905 = vst [vmem:[#allocation2 + $0xe50] sm:$0xff] %v7393
          %7906 = vst [vmem:[#allocation2 + $0xe58] sm:$0xff] %v7394
          %7907 = vst [vmem:[#allocation2 + $0xe60] sm:$0xff] %v7395
          %7908 = vst [vmem:[#allocation2 + $0xe68] sm:$0xff] %v7396
          %7909 = vst [vmem:[#allocation2 + $0xe70] sm:$0xff] %v7397
          %7910 = vst [vmem:[#allocation2 + $0xe78] sm:$0xff] %v7398
          %7911 = vst [vmem:[#allocation2 + $0xe80] sm:$0xff] %v7399
          %7912 = vst [vmem:[#allocation2 + $0xe88] sm:$0xff] %v7400
          %7913 = vst [vmem:[#allocation2 + $0xe90] sm:$0xff] %v7401
          %7914 = vst [vmem:[#allocation2 + $0xe98] sm:$0xff] %v7402
          %7915 = vst [vmem:[#allocation2 + $0xea0] sm:$0xff] %v7403
          %7916 = vst [vmem:[#allocation2 + $0xea8] sm:$0xff] %v7404
          %7917 = vst [vmem:[#allocation2 + $0xeb0] sm:$0xff] %v7405
          %7918 = vst [vmem:[#allocation2 + $0xeb8] sm:$0xff] %v7406
          %7919 = vst [vmem:[#allocation2 + $0xec0] sm:$0xff] %v7407
          %7920 = vst [vmem:[#allocation2 + $0xec8] sm:$0xff] %v7408
          %7921 = vst [vmem:[#allocation2 + $0xed0] sm:$0xff] %v7409
          %7922 = vst [vmem:[#allocation2 + $0xed8] sm:$0xff] %v7410
          %7923 = vst [vmem:[#allocation2 + $0xee0] sm:$0xff] %v7411
          %7924 = vst [vmem:[#allocation2 + $0xee8] sm:$0xff] %v7412
          %7925 = vst [vmem:[#allocation2 + $0xef0] sm:$0xff] %v7413
          %7926 = vst [vmem:[#allocation2 + $0xef8] sm:$0xff] %v7414
          %7927 = vst [vmem:[#allocation2 + $0xf00] sm:$0xff] %v7415
          %7928 = vst [vmem:[#allocation2 + $0xf08] sm:$0xff] %v7416
          %7929 = vst [vmem:[#allocation2 + $0xf10] sm:$0xff] %v7417
          %7930 = vst [vmem:[#allocation2 + $0xf18] sm:$0xff] %v7418
          %7931 = vst [vmem:[#allocation2 + $0xf20] sm:$0xff] %v7419
          %7932 = vst [vmem:[#allocation2 + $0xf28] sm:$0xff] %v7420
          %7933 = vst [vmem:[#allocation2 + $0xf30] sm:$0xff] %v7421
          %7934 = vst [vmem:[#allocation2 + $0xf38] sm:$0xff] %v7422
          %7935 = vst [vmem:[#allocation2 + $0xf40] sm:$0xff] %v7423
          %7936 = vst [vmem:[#allocation2 + $0xf48] sm:$0xff] %v7424
          %7937 = vst [vmem:[#allocation2 + $0xf50] sm:$0xff] %v7425
          %7938 = vst [vmem:[#allocation2 + $0xf58] sm:$0xff] %v7426
          %7939 = vst [vmem:[#allocation2 + $0xf60] sm:$0xff] %v7427
          %7940 = vst [vmem:[#allocation2 + $0xf68] sm:$0xff] %v7428
          %7941 = vst [vmem:[#allocation2 + $0xf70] sm:$0xff] %v7429
          %7942 = vst [vmem:[#allocation2 + $0xf78] sm:$0xff] %v7430
          %7943 = vst [vmem:[#allocation2 + $0xf80] sm:$0xff] %v7431
          %7944 = vst [vmem:[#allocation2 + $0xf88] sm:$0xff] %v7432
          %7945 = vst [vmem:[#allocation2 + $0xf90] sm:$0xff] %v7433
          %7946 = vst [vmem:[#allocation2 + $0xf98] sm:$0xff] %v7434
          %7947 = vst [vmem:[#allocation2 + $0xfa0] sm:$0xff] %v7435
          %7948 = vst [vmem:[#allocation2 + $0xfa8] sm:$0xff] %v7436
          %7949 = vst [vmem:[#allocation2 + $0xfb0] sm:$0xff] %v7437
          %7950 = vst [vmem:[#allocation2 + $0xfb8] sm:$0xff] %v7438
          %7951 = vst [vmem:[#allocation2 + $0xfc0] sm:$0xff] %v7439
          %7952 = vst [vmem:[#allocation2 + $0xfc8] sm:$0xff] %v7440
          %7953 = vst [vmem:[#allocation2 + $0xfd0] sm:$0xff] %v7441
          %7954 = vst [vmem:[#allocation2 + $0xfd8] sm:$0xff] %v7442
          %7955 = vst [vmem:[#allocation2 + $0xfe0] sm:$0xff] %v7443
          %7956 = vst [vmem:[#allocation2 + $0xfe8] sm:$0xff] %v7444
          %7957 = vst [vmem:[#allocation2 + $0xff0] sm:$0xff] %v7445
          %7958 = vst [vmem:[#allocation2 + $0xff8] sm:$0xff] %v7446
        $region48: #{tpu_custom_call.1} parent=27 // pred_fallthru
          _
        %p7959 = scmp.eq.s32.totalorder %s25, 1
        // Predicated region
        $region49: #{tpu_custom_call.1} parent=27 // pred_check
          %p7960 = pneg %p7959
        $region50: #{tpu_custom_call.1} parent=27 // pred_check_branch
          %7962 = sbr.rel (%p7960) target = $region52
        $region51: #{tpu_custom_call.1} parent=27 // pred_region
          %v7963 = vld [vmem:[#allocation2] sm:$0xff]
          %v7964 = vld [vmem:[#allocation2 + $0x8] sm:$0xff]
          %v7965 = vld [vmem:[#allocation2 + $0x10] sm:$0xff]
          %v7966 = vld [vmem:[#allocation2 + $0x18] sm:$0xff]
          %v7967 = vld [vmem:[#allocation2 + $0x20] sm:$0xff]
          %v7968 = vld [vmem:[#allocation2 + $0x28] sm:$0xff]
          %v7969 = vld [vmem:[#allocation2 + $0x30] sm:$0xff]
          %v7970 = vld [vmem:[#allocation2 + $0x38] sm:$0xff]
          %v7971 = vld [vmem:[#allocation2 + $0x40] sm:$0xff]
          %v7972 = vld [vmem:[#allocation2 + $0x48] sm:$0xff]
          %v7973 = vld [vmem:[#allocation2 + $0x50] sm:$0xff]
          %v7974 = vld [vmem:[#allocation2 + $0x58] sm:$0xff]
          %v7975 = vld [vmem:[#allocation2 + $0x60] sm:$0xff]
          %v7976 = vld [vmem:[#allocation2 + $0x68] sm:$0xff]
          %v7977 = vld [vmem:[#allocation2 + $0x70] sm:$0xff]
          %v7978 = vld [vmem:[#allocation2 + $0x78] sm:$0xff]
          %v7979 = vld [vmem:[#allocation2 + $0x80] sm:$0xff]
          %v7980 = vld [vmem:[#allocation2 + $0x88] sm:$0xff]
          %v7981 = vld [vmem:[#allocation2 + $0x90] sm:$0xff]
          %v7982 = vld [vmem:[#allocation2 + $0x98] sm:$0xff]
          %v7983 = vld [vmem:[#allocation2 + $0xa0] sm:$0xff]
          %v7984 = vld [vmem:[#allocation2 + $0xa8] sm:$0xff]
          %v7985 = vld [vmem:[#allocation2 + $0xb0] sm:$0xff]
          %v7986 = vld [vmem:[#allocation2 + $0xb8] sm:$0xff]
          %v7987 = vld [vmem:[#allocation2 + $0xc0] sm:$0xff]
          %v7988 = vld [vmem:[#allocation2 + $0xc8] sm:$0xff]
          %v7989 = vld [vmem:[#allocation2 + $0xd0] sm:$0xff]
          %v7990 = vld [vmem:[#allocation2 + $0xd8] sm:$0xff]
          %v7991 = vld [vmem:[#allocation2 + $0xe0] sm:$0xff]
          %v7992 = vld [vmem:[#allocation2 + $0xe8] sm:$0xff]
          %v7993 = vld [vmem:[#allocation2 + $0xf0] sm:$0xff]
          %v7994 = vld [vmem:[#allocation2 + $0xf8] sm:$0xff]
          %v7995 = vld [vmem:[#allocation2 + $0x100] sm:$0xff]
          %v7996 = vld [vmem:[#allocation2 + $0x108] sm:$0xff]
          %v7997 = vld [vmem:[#allocation2 + $0x110] sm:$0xff]
          %v7998 = vld [vmem:[#allocation2 + $0x118] sm:$0xff]
          %v7999 = vld [vmem:[#allocation2 + $0x120] sm:$0xff]
          %v8000 = vld [vmem:[#allocation2 + $0x128] sm:$0xff]
          %v8001 = vld [vmem:[#allocation2 + $0x130] sm:$0xff]
          %v8002 = vld [vmem:[#allocation2 + $0x138] sm:$0xff]
          %v8003 = vld [vmem:[#allocation2 + $0x140] sm:$0xff]
          %v8004 = vld [vmem:[#allocation2 + $0x148] sm:$0xff]
          %v8005 = vld [vmem:[#allocation2 + $0x150] sm:$0xff]
          %v8006 = vld [vmem:[#allocation2 + $0x158] sm:$0xff]
          %v8007 = vld [vmem:[#allocation2 + $0x160] sm:$0xff]
          %v8008 = vld [vmem:[#allocation2 + $0x168] sm:$0xff]
          %v8009 = vld [vmem:[#allocation2 + $0x170] sm:$0xff]
          %v8010 = vld [vmem:[#allocation2 + $0x178] sm:$0xff]
          %v8011 = vld [vmem:[#allocation2 + $0x180] sm:$0xff]
          %v8012 = vld [vmem:[#allocation2 + $0x188] sm:$0xff]
          %v8013 = vld [vmem:[#allocation2 + $0x190] sm:$0xff]
          %v8014 = vld [vmem:[#allocation2 + $0x198] sm:$0xff]
          %v8015 = vld [vmem:[#allocation2 + $0x1a0] sm:$0xff]
          %v8016 = vld [vmem:[#allocation2 + $0x1a8] sm:$0xff]
          %v8017 = vld [vmem:[#allocation2 + $0x1b0] sm:$0xff]
          %v8018 = vld [vmem:[#allocation2 + $0x1b8] sm:$0xff]
          %v8019 = vld [vmem:[#allocation2 + $0x1c0] sm:$0xff]
          %v8020 = vld [vmem:[#allocation2 + $0x1c8] sm:$0xff]
          %v8021 = vld [vmem:[#allocation2 + $0x1d0] sm:$0xff]
          %v8022 = vld [vmem:[#allocation2 + $0x1d8] sm:$0xff]
          %v8023 = vld [vmem:[#allocation2 + $0x1e0] sm:$0xff]
          %v8024 = vld [vmem:[#allocation2 + $0x1e8] sm:$0xff]
          %v8025 = vld [vmem:[#allocation2 + $0x1f0] sm:$0xff]
          %v8026 = vld [vmem:[#allocation2 + $0x1f8] sm:$0xff]
          %v8027 = vld [vmem:[#allocation2 + $0x200] sm:$0xff]
          %v8028 = vld [vmem:[#allocation2 + $0x208] sm:$0xff]
          %v8029 = vld [vmem:[#allocation2 + $0x210] sm:$0xff]
          %v8030 = vld [vmem:[#allocation2 + $0x218] sm:$0xff]
          %v8031 = vld [vmem:[#allocation2 + $0x220] sm:$0xff]
          %v8032 = vld [vmem:[#allocation2 + $0x228] sm:$0xff]
          %v8033 = vld [vmem:[#allocation2 + $0x230] sm:$0xff]
          %v8034 = vld [vmem:[#allocation2 + $0x238] sm:$0xff]
          %v8035 = vld [vmem:[#allocation2 + $0x240] sm:$0xff]
          %v8036 = vld [vmem:[#allocation2 + $0x248] sm:$0xff]
          %v8037 = vld [vmem:[#allocation2 + $0x250] sm:$0xff]
          %v8038 = vld [vmem:[#allocation2 + $0x258] sm:$0xff]
          %v8039 = vld [vmem:[#allocation2 + $0x260] sm:$0xff]
          %v8040 = vld [vmem:[#allocation2 + $0x268] sm:$0xff]
          %v8041 = vld [vmem:[#allocation2 + $0x270] sm:$0xff]
          %v8042 = vld [vmem:[#allocation2 + $0x278] sm:$0xff]
          %v8043 = vld [vmem:[#allocation2 + $0x280] sm:$0xff]
          %v8044 = vld [vmem:[#allocation2 + $0x288] sm:$0xff]
          %v8045 = vld [vmem:[#allocation2 + $0x290] sm:$0xff]
          %v8046 = vld [vmem:[#allocation2 + $0x298] sm:$0xff]
          %v8047 = vld [vmem:[#allocation2 + $0x2a0] sm:$0xff]
          %v8048 = vld [vmem:[#allocation2 + $0x2a8] sm:$0xff]
          %v8049 = vld [vmem:[#allocation2 + $0x2b0] sm:$0xff]
          %v8050 = vld [vmem:[#allocation2 + $0x2b8] sm:$0xff]
          %v8051 = vld [vmem:[#allocation2 + $0x2c0] sm:$0xff]
          %v8052 = vld [vmem:[#allocation2 + $0x2c8] sm:$0xff]
          %v8053 = vld [vmem:[#allocation2 + $0x2d0] sm:$0xff]
          %v8054 = vld [vmem:[#allocation2 + $0x2d8] sm:$0xff]
          %v8055 = vld [vmem:[#allocation2 + $0x2e0] sm:$0xff]
          %v8056 = vld [vmem:[#allocation2 + $0x2e8] sm:$0xff]
          %v8057 = vld [vmem:[#allocation2 + $0x2f0] sm:$0xff]
          %v8058 = vld [vmem:[#allocation2 + $0x2f8] sm:$0xff]
          %v8059 = vld [vmem:[#allocation2 + $0x300] sm:$0xff]
          %v8060 = vld [vmem:[#allocation2 + $0x308] sm:$0xff]
          %v8061 = vld [vmem:[#allocation2 + $0x310] sm:$0xff]
          %v8062 = vld [vmem:[#allocation2 + $0x318] sm:$0xff]
          %v8063 = vld [vmem:[#allocation2 + $0x320] sm:$0xff]
          %v8064 = vld [vmem:[#allocation2 + $0x328] sm:$0xff]
          %v8065 = vld [vmem:[#allocation2 + $0x330] sm:$0xff]
          %v8066 = vld [vmem:[#allocation2 + $0x338] sm:$0xff]
          %v8067 = vld [vmem:[#allocation2 + $0x340] sm:$0xff]
          %v8068 = vld [vmem:[#allocation2 + $0x348] sm:$0xff]
          %v8069 = vld [vmem:[#allocation2 + $0x350] sm:$0xff]
          %v8070 = vld [vmem:[#allocation2 + $0x358] sm:$0xff]
          %v8071 = vld [vmem:[#allocation2 + $0x360] sm:$0xff]
          %v8072 = vld [vmem:[#allocation2 + $0x368] sm:$0xff]
          %v8073 = vld [vmem:[#allocation2 + $0x370] sm:$0xff]
          %v8074 = vld [vmem:[#allocation2 + $0x378] sm:$0xff]
          %v8075 = vld [vmem:[#allocation2 + $0x380] sm:$0xff]
          %v8076 = vld [vmem:[#allocation2 + $0x388] sm:$0xff]
          %v8077 = vld [vmem:[#allocation2 + $0x390] sm:$0xff]
          %v8078 = vld [vmem:[#allocation2 + $0x398] sm:$0xff]
          %v8079 = vld [vmem:[#allocation2 + $0x3a0] sm:$0xff]
          %v8080 = vld [vmem:[#allocation2 + $0x3a8] sm:$0xff]
          %v8081 = vld [vmem:[#allocation2 + $0x3b0] sm:$0xff]
          %v8082 = vld [vmem:[#allocation2 + $0x3b8] sm:$0xff]
          %v8083 = vld [vmem:[#allocation2 + $0x3c0] sm:$0xff]
          %v8084 = vld [vmem:[#allocation2 + $0x3c8] sm:$0xff]
          %v8085 = vld [vmem:[#allocation2 + $0x3d0] sm:$0xff]
          %v8086 = vld [vmem:[#allocation2 + $0x3d8] sm:$0xff]
          %v8087 = vld [vmem:[#allocation2 + $0x3e0] sm:$0xff]
          %v8088 = vld [vmem:[#allocation2 + $0x3e8] sm:$0xff]
          %v8089 = vld [vmem:[#allocation2 + $0x3f0] sm:$0xff]
          %v8090 = vld [vmem:[#allocation2 + $0x3f8] sm:$0xff]
          %v8091 = vld [vmem:[#allocation2 + $0x400] sm:$0xff]
          %v8092 = vld [vmem:[#allocation2 + $0x408] sm:$0xff]
          %v8093 = vld [vmem:[#allocation2 + $0x410] sm:$0xff]
          %v8094 = vld [vmem:[#allocation2 + $0x418] sm:$0xff]
          %v8095 = vld [vmem:[#allocation2 + $0x420] sm:$0xff]
          %v8096 = vld [vmem:[#allocation2 + $0x428] sm:$0xff]
          %v8097 = vld [vmem:[#allocation2 + $0x430] sm:$0xff]
          %v8098 = vld [vmem:[#allocation2 + $0x438] sm:$0xff]
          %v8099 = vld [vmem:[#allocation2 + $0x440] sm:$0xff]
          %v8100 = vld [vmem:[#allocation2 + $0x448] sm:$0xff]
          %v8101 = vld [vmem:[#allocation2 + $0x450] sm:$0xff]
          %v8102 = vld [vmem:[#allocation2 + $0x458] sm:$0xff]
          %v8103 = vld [vmem:[#allocation2 + $0x460] sm:$0xff]
          %v8104 = vld [vmem:[#allocation2 + $0x468] sm:$0xff]
          %v8105 = vld [vmem:[#allocation2 + $0x470] sm:$0xff]
          %v8106 = vld [vmem:[#allocation2 + $0x478] sm:$0xff]
          %v8107 = vld [vmem:[#allocation2 + $0x480] sm:$0xff]
          %v8108 = vld [vmem:[#allocation2 + $0x488] sm:$0xff]
          %v8109 = vld [vmem:[#allocation2 + $0x490] sm:$0xff]
          %v8110 = vld [vmem:[#allocation2 + $0x498] sm:$0xff]
          %v8111 = vld [vmem:[#allocation2 + $0x4a0] sm:$0xff]
          %v8112 = vld [vmem:[#allocation2 + $0x4a8] sm:$0xff]
          %v8113 = vld [vmem:[#allocation2 + $0x4b0] sm:$0xff]
          %v8114 = vld [vmem:[#allocation2 + $0x4b8] sm:$0xff]
          %v8115 = vld [vmem:[#allocation2 + $0x4c0] sm:$0xff]
          %v8116 = vld [vmem:[#allocation2 + $0x4c8] sm:$0xff]
          %v8117 = vld [vmem:[#allocation2 + $0x4d0] sm:$0xff]
          %v8118 = vld [vmem:[#allocation2 + $0x4d8] sm:$0xff]
          %v8119 = vld [vmem:[#allocation2 + $0x4e0] sm:$0xff]
          %v8120 = vld [vmem:[#allocation2 + $0x4e8] sm:$0xff]
          %v8121 = vld [vmem:[#allocation2 + $0x4f0] sm:$0xff]
          %v8122 = vld [vmem:[#allocation2 + $0x4f8] sm:$0xff]
          %v8123 = vld [vmem:[#allocation2 + $0x500] sm:$0xff]
          %v8124 = vld [vmem:[#allocation2 + $0x508] sm:$0xff]
          %v8125 = vld [vmem:[#allocation2 + $0x510] sm:$0xff]
          %v8126 = vld [vmem:[#allocation2 + $0x518] sm:$0xff]
          %v8127 = vld [vmem:[#allocation2 + $0x520] sm:$0xff]
          %v8128 = vld [vmem:[#allocation2 + $0x528] sm:$0xff]
          %v8129 = vld [vmem:[#allocation2 + $0x530] sm:$0xff]
          %v8130 = vld [vmem:[#allocation2 + $0x538] sm:$0xff]
          %v8131 = vld [vmem:[#allocation2 + $0x540] sm:$0xff]
          %v8132 = vld [vmem:[#allocation2 + $0x548] sm:$0xff]
          %v8133 = vld [vmem:[#allocation2 + $0x550] sm:$0xff]
          %v8134 = vld [vmem:[#allocation2 + $0x558] sm:$0xff]
          %v8135 = vld [vmem:[#allocation2 + $0x560] sm:$0xff]
          %v8136 = vld [vmem:[#allocation2 + $0x568] sm:$0xff]
          %v8137 = vld [vmem:[#allocation2 + $0x570] sm:$0xff]
          %v8138 = vld [vmem:[#allocation2 + $0x578] sm:$0xff]
          %v8139 = vld [vmem:[#allocation2 + $0x580] sm:$0xff]
          %v8140 = vld [vmem:[#allocation2 + $0x588] sm:$0xff]
          %v8141 = vld [vmem:[#allocation2 + $0x590] sm:$0xff]
          %v8142 = vld [vmem:[#allocation2 + $0x598] sm:$0xff]
          %v8143 = vld [vmem:[#allocation2 + $0x5a0] sm:$0xff]
          %v8144 = vld [vmem:[#allocation2 + $0x5a8] sm:$0xff]
          %v8145 = vld [vmem:[#allocation2 + $0x5b0] sm:$0xff]
          %v8146 = vld [vmem:[#allocation2 + $0x5b8] sm:$0xff]
          %v8147 = vld [vmem:[#allocation2 + $0x5c0] sm:$0xff]
          %v8148 = vld [vmem:[#allocation2 + $0x5c8] sm:$0xff]
          %v8149 = vld [vmem:[#allocation2 + $0x5d0] sm:$0xff]
          %v8150 = vld [vmem:[#allocation2 + $0x5d8] sm:$0xff]
          %v8151 = vld [vmem:[#allocation2 + $0x5e0] sm:$0xff]
          %v8152 = vld [vmem:[#allocation2 + $0x5e8] sm:$0xff]
          %v8153 = vld [vmem:[#allocation2 + $0x5f0] sm:$0xff]
          %v8154 = vld [vmem:[#allocation2 + $0x5f8] sm:$0xff]
          %v8155 = vld [vmem:[#allocation2 + $0x600] sm:$0xff]
          %v8156 = vld [vmem:[#allocation2 + $0x608] sm:$0xff]
          %v8157 = vld [vmem:[#allocation2 + $0x610] sm:$0xff]
          %v8158 = vld [vmem:[#allocation2 + $0x618] sm:$0xff]
          %v8159 = vld [vmem:[#allocation2 + $0x620] sm:$0xff]
          %v8160 = vld [vmem:[#allocation2 + $0x628] sm:$0xff]
          %v8161 = vld [vmem:[#allocation2 + $0x630] sm:$0xff]
          %v8162 = vld [vmem:[#allocation2 + $0x638] sm:$0xff]
          %v8163 = vld [vmem:[#allocation2 + $0x640] sm:$0xff]
          %v8164 = vld [vmem:[#allocation2 + $0x648] sm:$0xff]
          %v8165 = vld [vmem:[#allocation2 + $0x650] sm:$0xff]
          %v8166 = vld [vmem:[#allocation2 + $0x658] sm:$0xff]
          %v8167 = vld [vmem:[#allocation2 + $0x660] sm:$0xff]
          %v8168 = vld [vmem:[#allocation2 + $0x668] sm:$0xff]
          %v8169 = vld [vmem:[#allocation2 + $0x670] sm:$0xff]
          %v8170 = vld [vmem:[#allocation2 + $0x678] sm:$0xff]
          %v8171 = vld [vmem:[#allocation2 + $0x680] sm:$0xff]
          %v8172 = vld [vmem:[#allocation2 + $0x688] sm:$0xff]
          %v8173 = vld [vmem:[#allocation2 + $0x690] sm:$0xff]
          %v8174 = vld [vmem:[#allocation2 + $0x698] sm:$0xff]
          %v8175 = vld [vmem:[#allocation2 + $0x6a0] sm:$0xff]
          %v8176 = vld [vmem:[#allocation2 + $0x6a8] sm:$0xff]
          %v8177 = vld [vmem:[#allocation2 + $0x6b0] sm:$0xff]
          %v8178 = vld [vmem:[#allocation2 + $0x6b8] sm:$0xff]
          %v8179 = vld [vmem:[#allocation2 + $0x6c0] sm:$0xff]
          %v8180 = vld [vmem:[#allocation2 + $0x6c8] sm:$0xff]
          %v8181 = vld [vmem:[#allocation2 + $0x6d0] sm:$0xff]
          %v8182 = vld [vmem:[#allocation2 + $0x6d8] sm:$0xff]
          %v8183 = vld [vmem:[#allocation2 + $0x6e0] sm:$0xff]
          %v8184 = vld [vmem:[#allocation2 + $0x6e8] sm:$0xff]
          %v8185 = vld [vmem:[#allocation2 + $0x6f0] sm:$0xff]
          %v8186 = vld [vmem:[#allocation2 + $0x6f8] sm:$0xff]
          %v8187 = vld [vmem:[#allocation2 + $0x700] sm:$0xff]
          %v8188 = vld [vmem:[#allocation2 + $0x708] sm:$0xff]
          %v8189 = vld [vmem:[#allocation2 + $0x710] sm:$0xff]
          %v8190 = vld [vmem:[#allocation2 + $0x718] sm:$0xff]
          %v8191 = vld [vmem:[#allocation2 + $0x720] sm:$0xff]
          %v8192 = vld [vmem:[#allocation2 + $0x728] sm:$0xff]
          %v8193 = vld [vmem:[#allocation2 + $0x730] sm:$0xff]
          %v8194 = vld [vmem:[#allocation2 + $0x738] sm:$0xff]
          %v8195 = vld [vmem:[#allocation2 + $0x740] sm:$0xff]
          %v8196 = vld [vmem:[#allocation2 + $0x748] sm:$0xff]
          %v8197 = vld [vmem:[#allocation2 + $0x750] sm:$0xff]
          %v8198 = vld [vmem:[#allocation2 + $0x758] sm:$0xff]
          %v8199 = vld [vmem:[#allocation2 + $0x760] sm:$0xff]
          %v8200 = vld [vmem:[#allocation2 + $0x768] sm:$0xff]
          %v8201 = vld [vmem:[#allocation2 + $0x770] sm:$0xff]
          %v8202 = vld [vmem:[#allocation2 + $0x778] sm:$0xff]
          %v8203 = vld [vmem:[#allocation2 + $0x780] sm:$0xff]
          %v8204 = vld [vmem:[#allocation2 + $0x788] sm:$0xff]
          %v8205 = vld [vmem:[#allocation2 + $0x790] sm:$0xff]
          %v8206 = vld [vmem:[#allocation2 + $0x798] sm:$0xff]
          %v8207 = vld [vmem:[#allocation2 + $0x7a0] sm:$0xff]
          %v8208 = vld [vmem:[#allocation2 + $0x7a8] sm:$0xff]
          %v8209 = vld [vmem:[#allocation2 + $0x7b0] sm:$0xff]
          %v8210 = vld [vmem:[#allocation2 + $0x7b8] sm:$0xff]
          %v8211 = vld [vmem:[#allocation2 + $0x7c0] sm:$0xff]
          %v8212 = vld [vmem:[#allocation2 + $0x7c8] sm:$0xff]
          %v8213 = vld [vmem:[#allocation2 + $0x7d0] sm:$0xff]
          %v8214 = vld [vmem:[#allocation2 + $0x7d8] sm:$0xff]
          %v8215 = vld [vmem:[#allocation2 + $0x7e0] sm:$0xff]
          %v8216 = vld [vmem:[#allocation2 + $0x7e8] sm:$0xff]
          %v8217 = vld [vmem:[#allocation2 + $0x7f0] sm:$0xff]
          %v8218 = vld [vmem:[#allocation2 + $0x7f8] sm:$0xff]
          %v8219 = vld [vmem:[#allocation2 + $0x800] sm:$0xff]
          %v8220 = vld [vmem:[#allocation2 + $0x808] sm:$0xff]
          %v8221 = vld [vmem:[#allocation2 + $0x810] sm:$0xff]
          %v8222 = vld [vmem:[#allocation2 + $0x818] sm:$0xff]
          %v8223 = vld [vmem:[#allocation2 + $0x820] sm:$0xff]
          %v8224 = vld [vmem:[#allocation2 + $0x828] sm:$0xff]
          %v8225 = vld [vmem:[#allocation2 + $0x830] sm:$0xff]
          %v8226 = vld [vmem:[#allocation2 + $0x838] sm:$0xff]
          %v8227 = vld [vmem:[#allocation2 + $0x840] sm:$0xff]
          %v8228 = vld [vmem:[#allocation2 + $0x848] sm:$0xff]
          %v8229 = vld [vmem:[#allocation2 + $0x850] sm:$0xff]
          %v8230 = vld [vmem:[#allocation2 + $0x858] sm:$0xff]
          %v8231 = vld [vmem:[#allocation2 + $0x860] sm:$0xff]
          %v8232 = vld [vmem:[#allocation2 + $0x868] sm:$0xff]
          %v8233 = vld [vmem:[#allocation2 + $0x870] sm:$0xff]
          %v8234 = vld [vmem:[#allocation2 + $0x878] sm:$0xff]
          %v8235 = vld [vmem:[#allocation2 + $0x880] sm:$0xff]
          %v8236 = vld [vmem:[#allocation2 + $0x888] sm:$0xff]
          %v8237 = vld [vmem:[#allocation2 + $0x890] sm:$0xff]
          %v8238 = vld [vmem:[#allocation2 + $0x898] sm:$0xff]
          %v8239 = vld [vmem:[#allocation2 + $0x8a0] sm:$0xff]
          %v8240 = vld [vmem:[#allocation2 + $0x8a8] sm:$0xff]
          %v8241 = vld [vmem:[#allocation2 + $0x8b0] sm:$0xff]
          %v8242 = vld [vmem:[#allocation2 + $0x8b8] sm:$0xff]
          %v8243 = vld [vmem:[#allocation2 + $0x8c0] sm:$0xff]
          %v8244 = vld [vmem:[#allocation2 + $0x8c8] sm:$0xff]
          %v8245 = vld [vmem:[#allocation2 + $0x8d0] sm:$0xff]
          %v8246 = vld [vmem:[#allocation2 + $0x8d8] sm:$0xff]
          %v8247 = vld [vmem:[#allocation2 + $0x8e0] sm:$0xff]
          %v8248 = vld [vmem:[#allocation2 + $0x8e8] sm:$0xff]
          %v8249 = vld [vmem:[#allocation2 + $0x8f0] sm:$0xff]
          %v8250 = vld [vmem:[#allocation2 + $0x8f8] sm:$0xff]
          %v8251 = vld [vmem:[#allocation2 + $0x900] sm:$0xff]
          %v8252 = vld [vmem:[#allocation2 + $0x908] sm:$0xff]
          %v8253 = vld [vmem:[#allocation2 + $0x910] sm:$0xff]
          %v8254 = vld [vmem:[#allocation2 + $0x918] sm:$0xff]
          %v8255 = vld [vmem:[#allocation2 + $0x920] sm:$0xff]
          %v8256 = vld [vmem:[#allocation2 + $0x928] sm:$0xff]
          %v8257 = vld [vmem:[#allocation2 + $0x930] sm:$0xff]
          %v8258 = vld [vmem:[#allocation2 + $0x938] sm:$0xff]
          %v8259 = vld [vmem:[#allocation2 + $0x940] sm:$0xff]
          %v8260 = vld [vmem:[#allocation2 + $0x948] sm:$0xff]
          %v8261 = vld [vmem:[#allocation2 + $0x950] sm:$0xff]
          %v8262 = vld [vmem:[#allocation2 + $0x958] sm:$0xff]
          %v8263 = vld [vmem:[#allocation2 + $0x960] sm:$0xff]
          %v8264 = vld [vmem:[#allocation2 + $0x968] sm:$0xff]
          %v8265 = vld [vmem:[#allocation2 + $0x970] sm:$0xff]
          %v8266 = vld [vmem:[#allocation2 + $0x978] sm:$0xff]
          %v8267 = vld [vmem:[#allocation2 + $0x980] sm:$0xff]
          %v8268 = vld [vmem:[#allocation2 + $0x988] sm:$0xff]
          %v8269 = vld [vmem:[#allocation2 + $0x990] sm:$0xff]
          %v8270 = vld [vmem:[#allocation2 + $0x998] sm:$0xff]
          %v8271 = vld [vmem:[#allocation2 + $0x9a0] sm:$0xff]
          %v8272 = vld [vmem:[#allocation2 + $0x9a8] sm:$0xff]
          %v8273 = vld [vmem:[#allocation2 + $0x9b0] sm:$0xff]
          %v8274 = vld [vmem:[#allocation2 + $0x9b8] sm:$0xff]
          %v8275 = vld [vmem:[#allocation2 + $0x9c0] sm:$0xff]
          %v8276 = vld [vmem:[#allocation2 + $0x9c8] sm:$0xff]
          %v8277 = vld [vmem:[#allocation2 + $0x9d0] sm:$0xff]
          %v8278 = vld [vmem:[#allocation2 + $0x9d8] sm:$0xff]
          %v8279 = vld [vmem:[#allocation2 + $0x9e0] sm:$0xff]
          %v8280 = vld [vmem:[#allocation2 + $0x9e8] sm:$0xff]
          %v8281 = vld [vmem:[#allocation2 + $0x9f0] sm:$0xff]
          %v8282 = vld [vmem:[#allocation2 + $0x9f8] sm:$0xff]
          %v8283 = vld [vmem:[#allocation2 + $0xa00] sm:$0xff]
          %v8284 = vld [vmem:[#allocation2 + $0xa08] sm:$0xff]
          %v8285 = vld [vmem:[#allocation2 + $0xa10] sm:$0xff]
          %v8286 = vld [vmem:[#allocation2 + $0xa18] sm:$0xff]
          %v8287 = vld [vmem:[#allocation2 + $0xa20] sm:$0xff]
          %v8288 = vld [vmem:[#allocation2 + $0xa28] sm:$0xff]
          %v8289 = vld [vmem:[#allocation2 + $0xa30] sm:$0xff]
          %v8290 = vld [vmem:[#allocation2 + $0xa38] sm:$0xff]
          %v8291 = vld [vmem:[#allocation2 + $0xa40] sm:$0xff]
          %v8292 = vld [vmem:[#allocation2 + $0xa48] sm:$0xff]
          %v8293 = vld [vmem:[#allocation2 + $0xa50] sm:$0xff]
          %v8294 = vld [vmem:[#allocation2 + $0xa58] sm:$0xff]
          %v8295 = vld [vmem:[#allocation2 + $0xa60] sm:$0xff]
          %v8296 = vld [vmem:[#allocation2 + $0xa68] sm:$0xff]
          %v8297 = vld [vmem:[#allocation2 + $0xa70] sm:$0xff]
          %v8298 = vld [vmem:[#allocation2 + $0xa78] sm:$0xff]
          %v8299 = vld [vmem:[#allocation2 + $0xa80] sm:$0xff]
          %v8300 = vld [vmem:[#allocation2 + $0xa88] sm:$0xff]
          %v8301 = vld [vmem:[#allocation2 + $0xa90] sm:$0xff]
          %v8302 = vld [vmem:[#allocation2 + $0xa98] sm:$0xff]
          %v8303 = vld [vmem:[#allocation2 + $0xaa0] sm:$0xff]
          %v8304 = vld [vmem:[#allocation2 + $0xaa8] sm:$0xff]
          %v8305 = vld [vmem:[#allocation2 + $0xab0] sm:$0xff]
          %v8306 = vld [vmem:[#allocation2 + $0xab8] sm:$0xff]
          %v8307 = vld [vmem:[#allocation2 + $0xac0] sm:$0xff]
          %v8308 = vld [vmem:[#allocation2 + $0xac8] sm:$0xff]
          %v8309 = vld [vmem:[#allocation2 + $0xad0] sm:$0xff]
          %v8310 = vld [vmem:[#allocation2 + $0xad8] sm:$0xff]
          %v8311 = vld [vmem:[#allocation2 + $0xae0] sm:$0xff]
          %v8312 = vld [vmem:[#allocation2 + $0xae8] sm:$0xff]
          %v8313 = vld [vmem:[#allocation2 + $0xaf0] sm:$0xff]
          %v8314 = vld [vmem:[#allocation2 + $0xaf8] sm:$0xff]
          %v8315 = vld [vmem:[#allocation2 + $0xb00] sm:$0xff]
          %v8316 = vld [vmem:[#allocation2 + $0xb08] sm:$0xff]
          %v8317 = vld [vmem:[#allocation2 + $0xb10] sm:$0xff]
          %v8318 = vld [vmem:[#allocation2 + $0xb18] sm:$0xff]
          %v8319 = vld [vmem:[#allocation2 + $0xb20] sm:$0xff]
          %v8320 = vld [vmem:[#allocation2 + $0xb28] sm:$0xff]
          %v8321 = vld [vmem:[#allocation2 + $0xb30] sm:$0xff]
          %v8322 = vld [vmem:[#allocation2 + $0xb38] sm:$0xff]
          %v8323 = vld [vmem:[#allocation2 + $0xb40] sm:$0xff]
          %v8324 = vld [vmem:[#allocation2 + $0xb48] sm:$0xff]
          %v8325 = vld [vmem:[#allocation2 + $0xb50] sm:$0xff]
          %v8326 = vld [vmem:[#allocation2 + $0xb58] sm:$0xff]
          %v8327 = vld [vmem:[#allocation2 + $0xb60] sm:$0xff]
          %v8328 = vld [vmem:[#allocation2 + $0xb68] sm:$0xff]
          %v8329 = vld [vmem:[#allocation2 + $0xb70] sm:$0xff]
          %v8330 = vld [vmem:[#allocation2 + $0xb78] sm:$0xff]
          %v8331 = vld [vmem:[#allocation2 + $0xb80] sm:$0xff]
          %v8332 = vld [vmem:[#allocation2 + $0xb88] sm:$0xff]
          %v8333 = vld [vmem:[#allocation2 + $0xb90] sm:$0xff]
          %v8334 = vld [vmem:[#allocation2 + $0xb98] sm:$0xff]
          %v8335 = vld [vmem:[#allocation2 + $0xba0] sm:$0xff]
          %v8336 = vld [vmem:[#allocation2 + $0xba8] sm:$0xff]
          %v8337 = vld [vmem:[#allocation2 + $0xbb0] sm:$0xff]
          %v8338 = vld [vmem:[#allocation2 + $0xbb8] sm:$0xff]
          %v8339 = vld [vmem:[#allocation2 + $0xbc0] sm:$0xff]
          %v8340 = vld [vmem:[#allocation2 + $0xbc8] sm:$0xff]
          %v8341 = vld [vmem:[#allocation2 + $0xbd0] sm:$0xff]
          %v8342 = vld [vmem:[#allocation2 + $0xbd8] sm:$0xff]
          %v8343 = vld [vmem:[#allocation2 + $0xbe0] sm:$0xff]
          %v8344 = vld [vmem:[#allocation2 + $0xbe8] sm:$0xff]
          %v8345 = vld [vmem:[#allocation2 + $0xbf0] sm:$0xff]
          %v8346 = vld [vmem:[#allocation2 + $0xbf8] sm:$0xff]
          %v8347 = vld [vmem:[#allocation2 + $0xc00] sm:$0xff]
          %v8348 = vld [vmem:[#allocation2 + $0xc08] sm:$0xff]
          %v8349 = vld [vmem:[#allocation2 + $0xc10] sm:$0xff]
          %v8350 = vld [vmem:[#allocation2 + $0xc18] sm:$0xff]
          %v8351 = vld [vmem:[#allocation2 + $0xc20] sm:$0xff]
          %v8352 = vld [vmem:[#allocation2 + $0xc28] sm:$0xff]
          %v8353 = vld [vmem:[#allocation2 + $0xc30] sm:$0xff]
          %v8354 = vld [vmem:[#allocation2 + $0xc38] sm:$0xff]
          %v8355 = vld [vmem:[#allocation2 + $0xc40] sm:$0xff]
          %v8356 = vld [vmem:[#allocation2 + $0xc48] sm:$0xff]
          %v8357 = vld [vmem:[#allocation2 + $0xc50] sm:$0xff]
          %v8358 = vld [vmem:[#allocation2 + $0xc58] sm:$0xff]
          %v8359 = vld [vmem:[#allocation2 + $0xc60] sm:$0xff]
          %v8360 = vld [vmem:[#allocation2 + $0xc68] sm:$0xff]
          %v8361 = vld [vmem:[#allocation2 + $0xc70] sm:$0xff]
          %v8362 = vld [vmem:[#allocation2 + $0xc78] sm:$0xff]
          %v8363 = vld [vmem:[#allocation2 + $0xc80] sm:$0xff]
          %v8364 = vld [vmem:[#allocation2 + $0xc88] sm:$0xff]
          %v8365 = vld [vmem:[#allocation2 + $0xc90] sm:$0xff]
          %v8366 = vld [vmem:[#allocation2 + $0xc98] sm:$0xff]
          %v8367 = vld [vmem:[#allocation2 + $0xca0] sm:$0xff]
          %v8368 = vld [vmem:[#allocation2 + $0xca8] sm:$0xff]
          %v8369 = vld [vmem:[#allocation2 + $0xcb0] sm:$0xff]
          %v8370 = vld [vmem:[#allocation2 + $0xcb8] sm:$0xff]
          %v8371 = vld [vmem:[#allocation2 + $0xcc0] sm:$0xff]
          %v8372 = vld [vmem:[#allocation2 + $0xcc8] sm:$0xff]
          %v8373 = vld [vmem:[#allocation2 + $0xcd0] sm:$0xff]
          %v8374 = vld [vmem:[#allocation2 + $0xcd8] sm:$0xff]
          %v8375 = vld [vmem:[#allocation2 + $0xce0] sm:$0xff]
          %v8376 = vld [vmem:[#allocation2 + $0xce8] sm:$0xff]
          %v8377 = vld [vmem:[#allocation2 + $0xcf0] sm:$0xff]
          %v8378 = vld [vmem:[#allocation2 + $0xcf8] sm:$0xff]
          %v8379 = vld [vmem:[#allocation2 + $0xd00] sm:$0xff]
          %v8380 = vld [vmem:[#allocation2 + $0xd08] sm:$0xff]
          %v8381 = vld [vmem:[#allocation2 + $0xd10] sm:$0xff]
          %v8382 = vld [vmem:[#allocation2 + $0xd18] sm:$0xff]
          %v8383 = vld [vmem:[#allocation2 + $0xd20] sm:$0xff]
          %v8384 = vld [vmem:[#allocation2 + $0xd28] sm:$0xff]
          %v8385 = vld [vmem:[#allocation2 + $0xd30] sm:$0xff]
          %v8386 = vld [vmem:[#allocation2 + $0xd38] sm:$0xff]
          %v8387 = vld [vmem:[#allocation2 + $0xd40] sm:$0xff]
          %v8388 = vld [vmem:[#allocation2 + $0xd48] sm:$0xff]
          %v8389 = vld [vmem:[#allocation2 + $0xd50] sm:$0xff]
          %v8390 = vld [vmem:[#allocation2 + $0xd58] sm:$0xff]
          %v8391 = vld [vmem:[#allocation2 + $0xd60] sm:$0xff]
          %v8392 = vld [vmem:[#allocation2 + $0xd68] sm:$0xff]
          %v8393 = vld [vmem:[#allocation2 + $0xd70] sm:$0xff]
          %v8394 = vld [vmem:[#allocation2 + $0xd78] sm:$0xff]
          %v8395 = vld [vmem:[#allocation2 + $0xd80] sm:$0xff]
          %v8396 = vld [vmem:[#allocation2 + $0xd88] sm:$0xff]
          %v8397 = vld [vmem:[#allocation2 + $0xd90] sm:$0xff]
          %v8398 = vld [vmem:[#allocation2 + $0xd98] sm:$0xff]
          %v8399 = vld [vmem:[#allocation2 + $0xda0] sm:$0xff]
          %v8400 = vld [vmem:[#allocation2 + $0xda8] sm:$0xff]
          %v8401 = vld [vmem:[#allocation2 + $0xdb0] sm:$0xff]
          %v8402 = vld [vmem:[#allocation2 + $0xdb8] sm:$0xff]
          %v8403 = vld [vmem:[#allocation2 + $0xdc0] sm:$0xff]
          %v8404 = vld [vmem:[#allocation2 + $0xdc8] sm:$0xff]
          %v8405 = vld [vmem:[#allocation2 + $0xdd0] sm:$0xff]
          %v8406 = vld [vmem:[#allocation2 + $0xdd8] sm:$0xff]
          %v8407 = vld [vmem:[#allocation2 + $0xde0] sm:$0xff]
          %v8408 = vld [vmem:[#allocation2 + $0xde8] sm:$0xff]
          %v8409 = vld [vmem:[#allocation2 + $0xdf0] sm:$0xff]
          %v8410 = vld [vmem:[#allocation2 + $0xdf8] sm:$0xff]
          %v8411 = vld [vmem:[#allocation2 + $0xe00] sm:$0xff]
          %v8412 = vld [vmem:[#allocation2 + $0xe08] sm:$0xff]
          %v8413 = vld [vmem:[#allocation2 + $0xe10] sm:$0xff]
          %v8414 = vld [vmem:[#allocation2 + $0xe18] sm:$0xff]
          %v8415 = vld [vmem:[#allocation2 + $0xe20] sm:$0xff]
          %v8416 = vld [vmem:[#allocation2 + $0xe28] sm:$0xff]
          %v8417 = vld [vmem:[#allocation2 + $0xe30] sm:$0xff]
          %v8418 = vld [vmem:[#allocation2 + $0xe38] sm:$0xff]
          %v8419 = vld [vmem:[#allocation2 + $0xe40] sm:$0xff]
          %v8420 = vld [vmem:[#allocation2 + $0xe48] sm:$0xff]
          %v8421 = vld [vmem:[#allocation2 + $0xe50] sm:$0xff]
          %v8422 = vld [vmem:[#allocation2 + $0xe58] sm:$0xff]
          %v8423 = vld [vmem:[#allocation2 + $0xe60] sm:$0xff]
          %v8424 = vld [vmem:[#allocation2 + $0xe68] sm:$0xff]
          %v8425 = vld [vmem:[#allocation2 + $0xe70] sm:$0xff]
          %v8426 = vld [vmem:[#allocation2 + $0xe78] sm:$0xff]
          %v8427 = vld [vmem:[#allocation2 + $0xe80] sm:$0xff]
          %v8428 = vld [vmem:[#allocation2 + $0xe88] sm:$0xff]
          %v8429 = vld [vmem:[#allocation2 + $0xe90] sm:$0xff]
          %v8430 = vld [vmem:[#allocation2 + $0xe98] sm:$0xff]
          %v8431 = vld [vmem:[#allocation2 + $0xea0] sm:$0xff]
          %v8432 = vld [vmem:[#allocation2 + $0xea8] sm:$0xff]
          %v8433 = vld [vmem:[#allocation2 + $0xeb0] sm:$0xff]
          %v8434 = vld [vmem:[#allocation2 + $0xeb8] sm:$0xff]
          %v8435 = vld [vmem:[#allocation2 + $0xec0] sm:$0xff]
          %v8436 = vld [vmem:[#allocation2 + $0xec8] sm:$0xff]
          %v8437 = vld [vmem:[#allocation2 + $0xed0] sm:$0xff]
          %v8438 = vld [vmem:[#allocation2 + $0xed8] sm:$0xff]
          %v8439 = vld [vmem:[#allocation2 + $0xee0] sm:$0xff]
          %v8440 = vld [vmem:[#allocation2 + $0xee8] sm:$0xff]
          %v8441 = vld [vmem:[#allocation2 + $0xef0] sm:$0xff]
          %v8442 = vld [vmem:[#allocation2 + $0xef8] sm:$0xff]
          %v8443 = vld [vmem:[#allocation2 + $0xf00] sm:$0xff]
          %v8444 = vld [vmem:[#allocation2 + $0xf08] sm:$0xff]
          %v8445 = vld [vmem:[#allocation2 + $0xf10] sm:$0xff]
          %v8446 = vld [vmem:[#allocation2 + $0xf18] sm:$0xff]
          %v8447 = vld [vmem:[#allocation2 + $0xf20] sm:$0xff]
          %v8448 = vld [vmem:[#allocation2 + $0xf28] sm:$0xff]
          %v8449 = vld [vmem:[#allocation2 + $0xf30] sm:$0xff]
          %v8450 = vld [vmem:[#allocation2 + $0xf38] sm:$0xff]
          %v8451 = vld [vmem:[#allocation2 + $0xf40] sm:$0xff]
          %v8452 = vld [vmem:[#allocation2 + $0xf48] sm:$0xff]
          %v8453 = vld [vmem:[#allocation2 + $0xf50] sm:$0xff]
          %v8454 = vld [vmem:[#allocation2 + $0xf58] sm:$0xff]
          %v8455 = vld [vmem:[#allocation2 + $0xf60] sm:$0xff]
          %v8456 = vld [vmem:[#allocation2 + $0xf68] sm:$0xff]
          %v8457 = vld [vmem:[#allocation2 + $0xf70] sm:$0xff]
          %v8458 = vld [vmem:[#allocation2 + $0xf78] sm:$0xff]
          %v8459 = vld [vmem:[#allocation2 + $0xf80] sm:$0xff]
          %v8460 = vld [vmem:[#allocation2 + $0xf88] sm:$0xff]
          %v8461 = vld [vmem:[#allocation2 + $0xf90] sm:$0xff]
          %v8462 = vld [vmem:[#allocation2 + $0xf98] sm:$0xff]
          %v8463 = vld [vmem:[#allocation2 + $0xfa0] sm:$0xff]
          %v8464 = vld [vmem:[#allocation2 + $0xfa8] sm:$0xff]
          %v8465 = vld [vmem:[#allocation2 + $0xfb0] sm:$0xff]
          %v8466 = vld [vmem:[#allocation2 + $0xfb8] sm:$0xff]
          %v8467 = vld [vmem:[#allocation2 + $0xfc0] sm:$0xff]
          %v8468 = vld [vmem:[#allocation2 + $0xfc8] sm:$0xff]
          %v8469 = vld [vmem:[#allocation2 + $0xfd0] sm:$0xff]
          %v8470 = vld [vmem:[#allocation2 + $0xfd8] sm:$0xff]
          %v8471 = vld [vmem:[#allocation2 + $0xfe0] sm:$0xff]
          %v8472 = vld [vmem:[#allocation2 + $0xfe8] sm:$0xff]
          %v8473 = vld [vmem:[#allocation2 + $0xff0] sm:$0xff]
          %v8474 = vld [vmem:[#allocation2 + $0xff8] sm:$0xff]
          %v8475 = vadd.f32 %v7963, %v7964
          %v8476 = vadd.f32 %v8475, %v7965
          %v8477 = vadd.f32 %v8476, %v7966
          %v8478 = vadd.f32 %v8477, %v7967
          %v8479 = vadd.f32 %v8478, %v7968
          %v8480 = vadd.f32 %v8479, %v7969
          %v8481 = vadd.f32 %v8480, %v7970
          %v8482 = vadd.f32 %v8481, %v7971
          %v8483 = vadd.f32 %v8482, %v7972
          %v8484 = vadd.f32 %v8483, %v7973
          %v8485 = vadd.f32 %v8484, %v7974
          %v8486 = vadd.f32 %v8485, %v7975
          %v8487 = vadd.f32 %v8486, %v7976
          %v8488 = vadd.f32 %v8487, %v7977
          %v8489 = vadd.f32 %v8488, %v7978
          %v8490 = vadd.f32 %v8489, %v7979
          %v8491 = vadd.f32 %v8490, %v7980
          %v8492 = vadd.f32 %v8491, %v7981
          %v8493 = vadd.f32 %v8492, %v7982
          %v8494 = vadd.f32 %v8493, %v7983
          %v8495 = vadd.f32 %v8494, %v7984
          %v8496 = vadd.f32 %v8495, %v7985
          %v8497 = vadd.f32 %v8496, %v7986
          %v8498 = vadd.f32 %v8497, %v7987
          %v8499 = vadd.f32 %v8498, %v7988
          %v8500 = vadd.f32 %v8499, %v7989
          %v8501 = vadd.f32 %v8500, %v7990
          %v8502 = vadd.f32 %v8501, %v7991
          %v8503 = vadd.f32 %v8502, %v7992
          %v8504 = vadd.f32 %v8503, %v7993
          %v8505 = vadd.f32 %v8504, %v7994
          %v8506 = vadd.f32 %v8505, %v7995
          %v8507 = vadd.f32 %v8506, %v7996
          %v8508 = vadd.f32 %v8507, %v7997
          %v8509 = vadd.f32 %v8508, %v7998
          %v8510 = vadd.f32 %v8509, %v7999
          %v8511 = vadd.f32 %v8510, %v8000
          %v8512 = vadd.f32 %v8511, %v8001
          %v8513 = vadd.f32 %v8512, %v8002
          %v8514 = vadd.f32 %v8513, %v8003
          %v8515 = vadd.f32 %v8514, %v8004
          %v8516 = vadd.f32 %v8515, %v8005
          %v8517 = vadd.f32 %v8516, %v8006
          %v8518 = vadd.f32 %v8517, %v8007
          %v8519 = vadd.f32 %v8518, %v8008
          %v8520 = vadd.f32 %v8519, %v8009
          %v8521 = vadd.f32 %v8520, %v8010
          %v8522 = vadd.f32 %v8521, %v8011
          %v8523 = vadd.f32 %v8522, %v8012
          %v8524 = vadd.f32 %v8523, %v8013
          %v8525 = vadd.f32 %v8524, %v8014
          %v8526 = vadd.f32 %v8525, %v8015
          %v8527 = vadd.f32 %v8526, %v8016
          %v8528 = vadd.f32 %v8527, %v8017
          %v8529 = vadd.f32 %v8528, %v8018
          %v8530 = vadd.f32 %v8529, %v8019
          %v8531 = vadd.f32 %v8530, %v8020
          %v8532 = vadd.f32 %v8531, %v8021
          %v8533 = vadd.f32 %v8532, %v8022
          %v8534 = vadd.f32 %v8533, %v8023
          %v8535 = vadd.f32 %v8534, %v8024
          %v8536 = vadd.f32 %v8535, %v8025
          %v8537 = vadd.f32 %v8536, %v8026
          %v8538 = vadd.f32 %v8537, %v8027
          %v8539 = vadd.f32 %v8538, %v8028
          %v8540 = vadd.f32 %v8539, %v8029
          %v8541 = vadd.f32 %v8540, %v8030
          %v8542 = vadd.f32 %v8541, %v8031
          %v8543 = vadd.f32 %v8542, %v8032
          %v8544 = vadd.f32 %v8543, %v8033
          %v8545 = vadd.f32 %v8544, %v8034
          %v8546 = vadd.f32 %v8545, %v8035
          %v8547 = vadd.f32 %v8546, %v8036
          %v8548 = vadd.f32 %v8547, %v8037
          %v8549 = vadd.f32 %v8548, %v8038
          %v8550 = vadd.f32 %v8549, %v8039
          %v8551 = vadd.f32 %v8550, %v8040
          %v8552 = vadd.f32 %v8551, %v8041
          %v8553 = vadd.f32 %v8552, %v8042
          %v8554 = vadd.f32 %v8553, %v8043
          %v8555 = vadd.f32 %v8554, %v8044
          %v8556 = vadd.f32 %v8555, %v8045
          %v8557 = vadd.f32 %v8556, %v8046
          %v8558 = vadd.f32 %v8557, %v8047
          %v8559 = vadd.f32 %v8558, %v8048
          %v8560 = vadd.f32 %v8559, %v8049
          %v8561 = vadd.f32 %v8560, %v8050
          %v8562 = vadd.f32 %v8561, %v8051
          %v8563 = vadd.f32 %v8562, %v8052
          %v8564 = vadd.f32 %v8563, %v8053
          %v8565 = vadd.f32 %v8564, %v8054
          %v8566 = vadd.f32 %v8565, %v8055
          %v8567 = vadd.f32 %v8566, %v8056
          %v8568 = vadd.f32 %v8567, %v8057
          %v8569 = vadd.f32 %v8568, %v8058
          %v8570 = vadd.f32 %v8569, %v8059
          %v8571 = vadd.f32 %v8570, %v8060
          %v8572 = vadd.f32 %v8571, %v8061
          %v8573 = vadd.f32 %v8572, %v8062
          %v8574 = vadd.f32 %v8573, %v8063
          %v8575 = vadd.f32 %v8574, %v8064
          %v8576 = vadd.f32 %v8575, %v8065
          %v8577 = vadd.f32 %v8576, %v8066
          %v8578 = vadd.f32 %v8577, %v8067
          %v8579 = vadd.f32 %v8578, %v8068
          %v8580 = vadd.f32 %v8579, %v8069
          %v8581 = vadd.f32 %v8580, %v8070
          %v8582 = vadd.f32 %v8581, %v8071
          %v8583 = vadd.f32 %v8582, %v8072
          %v8584 = vadd.f32 %v8583, %v8073
          %v8585 = vadd.f32 %v8584, %v8074
          %v8586 = vadd.f32 %v8585, %v8075
          %v8587 = vadd.f32 %v8586, %v8076
          %v8588 = vadd.f32 %v8587, %v8077
          %v8589 = vadd.f32 %v8588, %v8078
          %v8590 = vadd.f32 %v8589, %v8079
          %v8591 = vadd.f32 %v8590, %v8080
          %v8592 = vadd.f32 %v8591, %v8081
          %v8593 = vadd.f32 %v8592, %v8082
          %v8594 = vadd.f32 %v8593, %v8083
          %v8595 = vadd.f32 %v8594, %v8084
          %v8596 = vadd.f32 %v8595, %v8085
          %v8597 = vadd.f32 %v8596, %v8086
          %v8598 = vadd.f32 %v8597, %v8087
          %v8599 = vadd.f32 %v8598, %v8088
          %v8600 = vadd.f32 %v8599, %v8089
          %v8601 = vadd.f32 %v8600, %v8090
          %v8602 = vadd.f32 %v8601, %v8091
          %v8603 = vadd.f32 %v8602, %v8092
          %v8604 = vadd.f32 %v8603, %v8093
          %v8605 = vadd.f32 %v8604, %v8094
          %v8606 = vadd.f32 %v8605, %v8095
          %v8607 = vadd.f32 %v8606, %v8096
          %v8608 = vadd.f32 %v8607, %v8097
          %v8609 = vadd.f32 %v8608, %v8098
          %v8610 = vadd.f32 %v8609, %v8099
          %v8611 = vadd.f32 %v8610, %v8100
          %v8612 = vadd.f32 %v8611, %v8101
          %v8613 = vadd.f32 %v8612, %v8102
          %v8614 = vadd.f32 %v8613, %v8103
          %v8615 = vadd.f32 %v8614, %v8104
          %v8616 = vadd.f32 %v8615, %v8105
          %v8617 = vadd.f32 %v8616, %v8106
          %v8618 = vadd.f32 %v8617, %v8107
          %v8619 = vadd.f32 %v8618, %v8108
          %v8620 = vadd.f32 %v8619, %v8109
          %v8621 = vadd.f32 %v8620, %v8110
          %v8622 = vadd.f32 %v8621, %v8111
          %v8623 = vadd.f32 %v8622, %v8112
          %v8624 = vadd.f32 %v8623, %v8113
          %v8625 = vadd.f32 %v8624, %v8114
          %v8626 = vadd.f32 %v8625, %v8115
          %v8627 = vadd.f32 %v8626, %v8116
          %v8628 = vadd.f32 %v8627, %v8117
          %v8629 = vadd.f32 %v8628, %v8118
          %v8630 = vadd.f32 %v8629, %v8119
          %v8631 = vadd.f32 %v8630, %v8120
          %v8632 = vadd.f32 %v8631, %v8121
          %v8633 = vadd.f32 %v8632, %v8122
          %v8634 = vadd.f32 %v8633, %v8123
          %v8635 = vadd.f32 %v8634, %v8124
          %v8636 = vadd.f32 %v8635, %v8125
          %v8637 = vadd.f32 %v8636, %v8126
          %v8638 = vadd.f32 %v8637, %v8127
          %v8639 = vadd.f32 %v8638, %v8128
          %v8640 = vadd.f32 %v8639, %v8129
          %v8641 = vadd.f32 %v8640, %v8130
          %v8642 = vadd.f32 %v8641, %v8131
          %v8643 = vadd.f32 %v8642, %v8132
          %v8644 = vadd.f32 %v8643, %v8133
          %v8645 = vadd.f32 %v8644, %v8134
          %v8646 = vadd.f32 %v8645, %v8135
          %v8647 = vadd.f32 %v8646, %v8136
          %v8648 = vadd.f32 %v8647, %v8137
          %v8649 = vadd.f32 %v8648, %v8138
          %v8650 = vadd.f32 %v8649, %v8139
          %v8651 = vadd.f32 %v8650, %v8140
          %v8652 = vadd.f32 %v8651, %v8141
          %v8653 = vadd.f32 %v8652, %v8142
          %v8654 = vadd.f32 %v8653, %v8143
          %v8655 = vadd.f32 %v8654, %v8144
          %v8656 = vadd.f32 %v8655, %v8145
          %v8657 = vadd.f32 %v8656, %v8146
          %v8658 = vadd.f32 %v8657, %v8147
          %v8659 = vadd.f32 %v8658, %v8148
          %v8660 = vadd.f32 %v8659, %v8149
          %v8661 = vadd.f32 %v8660, %v8150
          %v8662 = vadd.f32 %v8661, %v8151
          %v8663 = vadd.f32 %v8662, %v8152
          %v8664 = vadd.f32 %v8663, %v8153
          %v8665 = vadd.f32 %v8664, %v8154
          %v8666 = vadd.f32 %v8665, %v8155
          %v8667 = vadd.f32 %v8666, %v8156
          %v8668 = vadd.f32 %v8667, %v8157
          %v8669 = vadd.f32 %v8668, %v8158
          %v8670 = vadd.f32 %v8669, %v8159
          %v8671 = vadd.f32 %v8670, %v8160
          %v8672 = vadd.f32 %v8671, %v8161
          %v8673 = vadd.f32 %v8672, %v8162
          %v8674 = vadd.f32 %v8673, %v8163
          %v8675 = vadd.f32 %v8674, %v8164
          %v8676 = vadd.f32 %v8675, %v8165
          %v8677 = vadd.f32 %v8676, %v8166
          %v8678 = vadd.f32 %v8677, %v8167
          %v8679 = vadd.f32 %v8678, %v8168
          %v8680 = vadd.f32 %v8679, %v8169
          %v8681 = vadd.f32 %v8680, %v8170
          %v8682 = vadd.f32 %v8681, %v8171
          %v8683 = vadd.f32 %v8682, %v8172
          %v8684 = vadd.f32 %v8683, %v8173
          %v8685 = vadd.f32 %v8684, %v8174
          %v8686 = vadd.f32 %v8685, %v8175
          %v8687 = vadd.f32 %v8686, %v8176
          %v8688 = vadd.f32 %v8687, %v8177
          %v8689 = vadd.f32 %v8688, %v8178
          %v8690 = vadd.f32 %v8689, %v8179
          %v8691 = vadd.f32 %v8690, %v8180
          %v8692 = vadd.f32 %v8691, %v8181
          %v8693 = vadd.f32 %v8692, %v8182
          %v8694 = vadd.f32 %v8693, %v8183
          %v8695 = vadd.f32 %v8694, %v8184
          %v8696 = vadd.f32 %v8695, %v8185
          %v8697 = vadd.f32 %v8696, %v8186
          %v8698 = vadd.f32 %v8697, %v8187
          %v8699 = vadd.f32 %v8698, %v8188
          %v8700 = vadd.f32 %v8699, %v8189
          %v8701 = vadd.f32 %v8700, %v8190
          %v8702 = vadd.f32 %v8701, %v8191
          %v8703 = vadd.f32 %v8702, %v8192
          %v8704 = vadd.f32 %v8703, %v8193
          %v8705 = vadd.f32 %v8704, %v8194
          %v8706 = vadd.f32 %v8705, %v8195
          %v8707 = vadd.f32 %v8706, %v8196
          %v8708 = vadd.f32 %v8707, %v8197
          %v8709 = vadd.f32 %v8708, %v8198
          %v8710 = vadd.f32 %v8709, %v8199
          %v8711 = vadd.f32 %v8710, %v8200
          %v8712 = vadd.f32 %v8711, %v8201
          %v8713 = vadd.f32 %v8712, %v8202
          %v8714 = vadd.f32 %v8713, %v8203
          %v8715 = vadd.f32 %v8714, %v8204
          %v8716 = vadd.f32 %v8715, %v8205
          %v8717 = vadd.f32 %v8716, %v8206
          %v8718 = vadd.f32 %v8717, %v8207
          %v8719 = vadd.f32 %v8718, %v8208
          %v8720 = vadd.f32 %v8719, %v8209
          %v8721 = vadd.f32 %v8720, %v8210
          %v8722 = vadd.f32 %v8721, %v8211
          %v8723 = vadd.f32 %v8722, %v8212
          %v8724 = vadd.f32 %v8723, %v8213
          %v8725 = vadd.f32 %v8724, %v8214
          %v8726 = vadd.f32 %v8725, %v8215
          %v8727 = vadd.f32 %v8726, %v8216
          %v8728 = vadd.f32 %v8727, %v8217
          %v8729 = vadd.f32 %v8728, %v8218
          %v8730 = vadd.f32 %v8729, %v8219
          %v8731 = vadd.f32 %v8730, %v8220
          %v8732 = vadd.f32 %v8731, %v8221
          %v8733 = vadd.f32 %v8732, %v8222
          %v8734 = vadd.f32 %v8733, %v8223
          %v8735 = vadd.f32 %v8734, %v8224
          %v8736 = vadd.f32 %v8735, %v8225
          %v8737 = vadd.f32 %v8736, %v8226
          %v8738 = vadd.f32 %v8737, %v8227
          %v8739 = vadd.f32 %v8738, %v8228
          %v8740 = vadd.f32 %v8739, %v8229
          %v8741 = vadd.f32 %v8740, %v8230
          %v8742 = vadd.f32 %v8741, %v8231
          %v8743 = vadd.f32 %v8742, %v8232
          %v8744 = vadd.f32 %v8743, %v8233
          %v8745 = vadd.f32 %v8744, %v8234
          %v8746 = vadd.f32 %v8745, %v8235
          %v8747 = vadd.f32 %v8746, %v8236
          %v8748 = vadd.f32 %v8747, %v8237
          %v8749 = vadd.f32 %v8748, %v8238
          %v8750 = vadd.f32 %v8749, %v8239
          %v8751 = vadd.f32 %v8750, %v8240
          %v8752 = vadd.f32 %v8751, %v8241
          %v8753 = vadd.f32 %v8752, %v8242
          %v8754 = vadd.f32 %v8753, %v8243
          %v8755 = vadd.f32 %v8754, %v8244
          %v8756 = vadd.f32 %v8755, %v8245
          %v8757 = vadd.f32 %v8756, %v8246
          %v8758 = vadd.f32 %v8757, %v8247
          %v8759 = vadd.f32 %v8758, %v8248
          %v8760 = vadd.f32 %v8759, %v8249
          %v8761 = vadd.f32 %v8760, %v8250
          %v8762 = vadd.f32 %v8761, %v8251
          %v8763 = vadd.f32 %v8762, %v8252
          %v8764 = vadd.f32 %v8763, %v8253
          %v8765 = vadd.f32 %v8764, %v8254
          %v8766 = vadd.f32 %v8765, %v8255
          %v8767 = vadd.f32 %v8766, %v8256
          %v8768 = vadd.f32 %v8767, %v8257
          %v8769 = vadd.f32 %v8768, %v8258
          %v8770 = vadd.f32 %v8769, %v8259
          %v8771 = vadd.f32 %v8770, %v8260
          %v8772 = vadd.f32 %v8771, %v8261
          %v8773 = vadd.f32 %v8772, %v8262
          %v8774 = vadd.f32 %v8773, %v8263
          %v8775 = vadd.f32 %v8774, %v8264
          %v8776 = vadd.f32 %v8775, %v8265
          %v8777 = vadd.f32 %v8776, %v8266
          %v8778 = vadd.f32 %v8777, %v8267
          %v8779 = vadd.f32 %v8778, %v8268
          %v8780 = vadd.f32 %v8779, %v8269
          %v8781 = vadd.f32 %v8780, %v8270
          %v8782 = vadd.f32 %v8781, %v8271
          %v8783 = vadd.f32 %v8782, %v8272
          %v8784 = vadd.f32 %v8783, %v8273
          %v8785 = vadd.f32 %v8784, %v8274
          %v8786 = vadd.f32 %v8785, %v8275
          %v8787 = vadd.f32 %v8786, %v8276
          %v8788 = vadd.f32 %v8787, %v8277
          %v8789 = vadd.f32 %v8788, %v8278
          %v8790 = vadd.f32 %v8789, %v8279
          %v8791 = vadd.f32 %v8790, %v8280
          %v8792 = vadd.f32 %v8791, %v8281
          %v8793 = vadd.f32 %v8792, %v8282
          %v8794 = vadd.f32 %v8793, %v8283
          %v8795 = vadd.f32 %v8794, %v8284
          %v8796 = vadd.f32 %v8795, %v8285
          %v8797 = vadd.f32 %v8796, %v8286
          %v8798 = vadd.f32 %v8797, %v8287
          %v8799 = vadd.f32 %v8798, %v8288
          %v8800 = vadd.f32 %v8799, %v8289
          %v8801 = vadd.f32 %v8800, %v8290
          %v8802 = vadd.f32 %v8801, %v8291
          %v8803 = vadd.f32 %v8802, %v8292
          %v8804 = vadd.f32 %v8803, %v8293
          %v8805 = vadd.f32 %v8804, %v8294
          %v8806 = vadd.f32 %v8805, %v8295
          %v8807 = vadd.f32 %v8806, %v8296
          %v8808 = vadd.f32 %v8807, %v8297
          %v8809 = vadd.f32 %v8808, %v8298
          %v8810 = vadd.f32 %v8809, %v8299
          %v8811 = vadd.f32 %v8810, %v8300
          %v8812 = vadd.f32 %v8811, %v8301
          %v8813 = vadd.f32 %v8812, %v8302
          %v8814 = vadd.f32 %v8813, %v8303
          %v8815 = vadd.f32 %v8814, %v8304
          %v8816 = vadd.f32 %v8815, %v8305
          %v8817 = vadd.f32 %v8816, %v8306
          %v8818 = vadd.f32 %v8817, %v8307
          %v8819 = vadd.f32 %v8818, %v8308
          %v8820 = vadd.f32 %v8819, %v8309
          %v8821 = vadd.f32 %v8820, %v8310
          %v8822 = vadd.f32 %v8821, %v8311
          %v8823 = vadd.f32 %v8822, %v8312
          %v8824 = vadd.f32 %v8823, %v8313
          %v8825 = vadd.f32 %v8824, %v8314
          %v8826 = vadd.f32 %v8825, %v8315
          %v8827 = vadd.f32 %v8826, %v8316
          %v8828 = vadd.f32 %v8827, %v8317
          %v8829 = vadd.f32 %v8828, %v8318
          %v8830 = vadd.f32 %v8829, %v8319
          %v8831 = vadd.f32 %v8830, %v8320
          %v8832 = vadd.f32 %v8831, %v8321
          %v8833 = vadd.f32 %v8832, %v8322
          %v8834 = vadd.f32 %v8833, %v8323
          %v8835 = vadd.f32 %v8834, %v8324
          %v8836 = vadd.f32 %v8835, %v8325
          %v8837 = vadd.f32 %v8836, %v8326
          %v8838 = vadd.f32 %v8837, %v8327
          %v8839 = vadd.f32 %v8838, %v8328
          %v8840 = vadd.f32 %v8839, %v8329
          %v8841 = vadd.f32 %v8840, %v8330
          %v8842 = vadd.f32 %v8841, %v8331
          %v8843 = vadd.f32 %v8842, %v8332
          %v8844 = vadd.f32 %v8843, %v8333
          %v8845 = vadd.f32 %v8844, %v8334
          %v8846 = vadd.f32 %v8845, %v8335
          %v8847 = vadd.f32 %v8846, %v8336
          %v8848 = vadd.f32 %v8847, %v8337
          %v8849 = vadd.f32 %v8848, %v8338
          %v8850 = vadd.f32 %v8849, %v8339
          %v8851 = vadd.f32 %v8850, %v8340
          %v8852 = vadd.f32 %v8851, %v8341
          %v8853 = vadd.f32 %v8852, %v8342
          %v8854 = vadd.f32 %v8853, %v8343
          %v8855 = vadd.f32 %v8854, %v8344
          %v8856 = vadd.f32 %v8855, %v8345
          %v8857 = vadd.f32 %v8856, %v8346
          %v8858 = vadd.f32 %v8857, %v8347
          %v8859 = vadd.f32 %v8858, %v8348
          %v8860 = vadd.f32 %v8859, %v8349
          %v8861 = vadd.f32 %v8860, %v8350
          %v8862 = vadd.f32 %v8861, %v8351
          %v8863 = vadd.f32 %v8862, %v8352
          %v8864 = vadd.f32 %v8863, %v8353
          %v8865 = vadd.f32 %v8864, %v8354
          %v8866 = vadd.f32 %v8865, %v8355
          %v8867 = vadd.f32 %v8866, %v8356
          %v8868 = vadd.f32 %v8867, %v8357
          %v8869 = vadd.f32 %v8868, %v8358
          %v8870 = vadd.f32 %v8869, %v8359
          %v8871 = vadd.f32 %v8870, %v8360
          %v8872 = vadd.f32 %v8871, %v8361
          %v8873 = vadd.f32 %v8872, %v8362
          %v8874 = vadd.f32 %v8873, %v8363
          %v8875 = vadd.f32 %v8874, %v8364
          %v8876 = vadd.f32 %v8875, %v8365
          %v8877 = vadd.f32 %v8876, %v8366
          %v8878 = vadd.f32 %v8877, %v8367
          %v8879 = vadd.f32 %v8878, %v8368
          %v8880 = vadd.f32 %v8879, %v8369
          %v8881 = vadd.f32 %v8880, %v8370
          %v8882 = vadd.f32 %v8881, %v8371
          %v8883 = vadd.f32 %v8882, %v8372
          %v8884 = vadd.f32 %v8883, %v8373
          %v8885 = vadd.f32 %v8884, %v8374
          %v8886 = vadd.f32 %v8885, %v8375
          %v8887 = vadd.f32 %v8886, %v8376
          %v8888 = vadd.f32 %v8887, %v8377
          %v8889 = vadd.f32 %v8888, %v8378
          %v8890 = vadd.f32 %v8889, %v8379
          %v8891 = vadd.f32 %v8890, %v8380
          %v8892 = vadd.f32 %v8891, %v8381
          %v8893 = vadd.f32 %v8892, %v8382
          %v8894 = vadd.f32 %v8893, %v8383
          %v8895 = vadd.f32 %v8894, %v8384
          %v8896 = vadd.f32 %v8895, %v8385
          %v8897 = vadd.f32 %v8896, %v8386
          %v8898 = vadd.f32 %v8897, %v8387
          %v8899 = vadd.f32 %v8898, %v8388
          %v8900 = vadd.f32 %v8899, %v8389
          %v8901 = vadd.f32 %v8900, %v8390
          %v8902 = vadd.f32 %v8901, %v8391
          %v8903 = vadd.f32 %v8902, %v8392
          %v8904 = vadd.f32 %v8903, %v8393
          %v8905 = vadd.f32 %v8904, %v8394
          %v8906 = vadd.f32 %v8905, %v8395
          %v8907 = vadd.f32 %v8906, %v8396
          %v8908 = vadd.f32 %v8907, %v8397
          %v8909 = vadd.f32 %v8908, %v8398
          %v8910 = vadd.f32 %v8909, %v8399
          %v8911 = vadd.f32 %v8910, %v8400
          %v8912 = vadd.f32 %v8911, %v8401
          %v8913 = vadd.f32 %v8912, %v8402
          %v8914 = vadd.f32 %v8913, %v8403
          %v8915 = vadd.f32 %v8914, %v8404
          %v8916 = vadd.f32 %v8915, %v8405
          %v8917 = vadd.f32 %v8916, %v8406
          %v8918 = vadd.f32 %v8917, %v8407
          %v8919 = vadd.f32 %v8918, %v8408
          %v8920 = vadd.f32 %v8919, %v8409
          %v8921 = vadd.f32 %v8920, %v8410
          %v8922 = vadd.f32 %v8921, %v8411
          %v8923 = vadd.f32 %v8922, %v8412
          %v8924 = vadd.f32 %v8923, %v8413
          %v8925 = vadd.f32 %v8924, %v8414
          %v8926 = vadd.f32 %v8925, %v8415
          %v8927 = vadd.f32 %v8926, %v8416
          %v8928 = vadd.f32 %v8927, %v8417
          %v8929 = vadd.f32 %v8928, %v8418
          %v8930 = vadd.f32 %v8929, %v8419
          %v8931 = vadd.f32 %v8930, %v8420
          %v8932 = vadd.f32 %v8931, %v8421
          %v8933 = vadd.f32 %v8932, %v8422
          %v8934 = vadd.f32 %v8933, %v8423
          %v8935 = vadd.f32 %v8934, %v8424
          %v8936 = vadd.f32 %v8935, %v8425
          %v8937 = vadd.f32 %v8936, %v8426
          %v8938 = vadd.f32 %v8937, %v8427
          %v8939 = vadd.f32 %v8938, %v8428
          %v8940 = vadd.f32 %v8939, %v8429
          %v8941 = vadd.f32 %v8940, %v8430
          %v8942 = vadd.f32 %v8941, %v8431
          %v8943 = vadd.f32 %v8942, %v8432
          %v8944 = vadd.f32 %v8943, %v8433
          %v8945 = vadd.f32 %v8944, %v8434
          %v8946 = vadd.f32 %v8945, %v8435
          %v8947 = vadd.f32 %v8946, %v8436
          %v8948 = vadd.f32 %v8947, %v8437
          %v8949 = vadd.f32 %v8948, %v8438
          %v8950 = vadd.f32 %v8949, %v8439
          %v8951 = vadd.f32 %v8950, %v8440
          %v8952 = vadd.f32 %v8951, %v8441
          %v8953 = vadd.f32 %v8952, %v8442
          %v8954 = vadd.f32 %v8953, %v8443
          %v8955 = vadd.f32 %v8954, %v8444
          %v8956 = vadd.f32 %v8955, %v8445
          %v8957 = vadd.f32 %v8956, %v8446
          %v8958 = vadd.f32 %v8957, %v8447
          %v8959 = vadd.f32 %v8958, %v8448
          %v8960 = vadd.f32 %v8959, %v8449
          %v8961 = vadd.f32 %v8960, %v8450
          %v8962 = vadd.f32 %v8961, %v8451
          %v8963 = vadd.f32 %v8962, %v8452
          %v8964 = vadd.f32 %v8963, %v8453
          %v8965 = vadd.f32 %v8964, %v8454
          %v8966 = vadd.f32 %v8965, %v8455
          %v8967 = vadd.f32 %v8966, %v8456
          %v8968 = vadd.f32 %v8967, %v8457
          %v8969 = vadd.f32 %v8968, %v8458
          %v8970 = vadd.f32 %v8969, %v8459
          %v8971 = vadd.f32 %v8970, %v8460
          %v8972 = vadd.f32 %v8971, %v8461
          %v8973 = vadd.f32 %v8972, %v8462
          %v8974 = vadd.f32 %v8973, %v8463
          %v8975 = vadd.f32 %v8974, %v8464
          %v8976 = vadd.f32 %v8975, %v8465
          %v8977 = vadd.f32 %v8976, %v8466
          %v8978 = vadd.f32 %v8977, %v8467
          %v8979 = vadd.f32 %v8978, %v8468
          %v8980 = vadd.f32 %v8979, %v8469
          %v8981 = vadd.f32 %v8980, %v8470
          %v8982 = vadd.f32 %v8981, %v8471
          %v8983 = vadd.f32 %v8982, %v8472
          %v8984 = vadd.f32 %v8983, %v8473
          %v8985 = vadd.f32 %v8984, %v8474
          %v8986 = vrot.slane %v8985, 4
          %v8987 = vadd.f32 %v8985, %v8986
          %v8988 = vrot.slane %v8987, 2
          %v8989 = vadd.f32 %v8987, %v8988
          %v8990 = vrot.slane %v8989, 1
          %v8991 = vadd.f32 %v8989, %v8990
          %8992 = vst [vmem:[#allocation8] sm:$0x1] %v8991
        $region52: #{tpu_custom_call.1} parent=27 // pred_fallthru
          _
        // Predicated region
        $region53: #{tpu_custom_call.1} parent=27 // pred_check
          %p8993 = pneg %p118
        $region54: #{tpu_custom_call.1} parent=27 // pred_check_branch
          %8995 = sbr.rel (%p8993) target = $region56
        $region55: #{tpu_custom_call.1} parent=27 // pred_region
          %s8997 = ssub.s32 16, 16
          %8998 = vsyncadd [#allocation5], %s8997
          %s8999 = smul.addr %s24, 16
          %s9000 = scalar_lea.hbm %s2, %s8999
          %s9002 = sshll.u32 [#allocation8], 4
          %s9003 = int_to_ptr.vmem [resolvable:$true] %s9002
          %9005 = dma.vmem_to_hbm [thread:$0]  %s9003, 16, %s9000, [#allocation5]
        $region56: #{tpu_custom_call.1} parent=27 // pred_fallthru
          _
        // Predicated region
        $region57: #{tpu_custom_call.1} parent=27 // pred_check
          %p9006 = pneg %p118
        $region58: #{tpu_custom_call.1} parent=27 // pred_check_branch
          %9008 = sbr.rel (%p9006) target = $region60
        $region59: #{tpu_custom_call.1} parent=27 // pred_region
          %9009 = dma.done [#allocation5], 16
        $region60: #{tpu_custom_call.1} parent=27 // pred_fallthru
          _
      $region28: #{tpu_custom_call.1} parent=5 // pred_fallthru
        _
      %p9010 = scmp.le.s32.totalorder 2, %s15
      // Predicated region
      $region61: #{tpu_custom_call.1} parent=5 // pred_check
        %p9011 = pneg %p9010
      $region62: #{tpu_custom_call.1} parent=5 // pred_check_branch
        %9013 = sbr.rel (%p9011) target = $region64
      $region63: #{tpu_custom_call.1} parent=5 // pred_region
        %s9014 = ssub.s32 %s15, 2
      $region64: #{tpu_custom_call.1} parent=5 // pred_fallthru
        _
    $region6: #{tpu_custom_call.1} parent=1 // loop_footer
      %s19 = sadd.s32 1, %s15
    $region7: #{tpu_custom_call.1} parent=1 // loop_footer_branch
      %14 = sbr.rel target = $region3
    $region8: #{tpu_custom_call.1} parent=1 // loop_exit
      _
    %9015 = vsyncpa [#allocation4], 1
    %s9016 = scalar_lea.sflag [#allocation4], 1
    %9017 = vsyncpa %s9016, 1
    %9018 = vsyncpa [#allocation7], 1
    %s9019 = scalar_lea.sflag [#allocation7], 1
    %9020 = vsyncpa %s9019, 1
    %9021 = vsyncpa [#allocation5], 1
    %s9022 = scalar_lea.sflag [#allocation5], 1
    %9023 = vsyncpa %s9022, 1

</llo_original>
